<compile_context>
chip_gen: v6e
topology: v6e:2x2x1
jax: 0.10.0
libtpu: 0.0.40
codegen_flags: <defaults>
</compile_context>

<pallas_src>
import jax
import jax.numpy as jnp
from jax import lax
from jax.experimental import pallas as pl
from jax.experimental.pallas import tpu as pltpu


# -----------------------------------------------------------------------------
# The fused Pallas kernel: the entire BarlowTwins forward for both views.
# -----------------------------------------------------------------------------
def _barlow_fused_kernel(
    cols1_ref, w1_ref, b1_ref,          # conv1: host-im2col'd input, reshaped weight, bias
    g2_ref, w2_ref, b2_ref,             # conv2 4x4/s2: selectors, per-tap weights, bias
    g3_ref, w3_ref, b3_ref,             # conv3 3x3/s1: selectors (shared with res blocks), weights, bias
    wr3_ref, wr1_ref,                   # residual blocks: 3x3 (bias-free) and 1x1 (bias-free) weights
    s_ref, v_ref, bfc1_ref,             # projector fc1: spatial selectors, regrouped weight, bias
    wfc2_ref, bfc2_ref,                 # projector fc2: weight, bias (padded to lane-dense width)
    out_ref,
):
    f32 = jnp.float32
    bf16 = jnp.bfloat16

    def mm(a, b):
        # bf16 x bf16 MXU matmul with f32 accumulation.
        return jnp.dot(a, b, preferred_element_type=f32)

    def sel_conv(h, g_ref, get_w, bias, relu):
        # Conv as sum over kernel taps q of (G_q @ h) @ W_q; stride and zero padding are encoded
        # in the 0/1 selector G_q (all-zero rows where the tap falls in padding).
        hb = h.astype(bf16)
        acc = None
        for q in range(g_ref.shape[0]):
            part = mm(mm(g_ref[q], hb).astype(bf16), get_w(q))
            acc = part if acc is None else acc + part
        if bias is not None:
            acc = acc + bias
        if relu:
            acc = jnp.maximum(acc, 0.0)
        return acc

    # conv1 (4x4 / s2 / p1) on the host-im2col'd raw input, + bias + ReLU.
    h = jnp.maximum(mm(cols1_ref[...], w1_ref[...]) + b1_ref[...], 0.0)

    # conv2 (4x4 / s2 / p1) + ReLU.
    h = sel_conv(h, g2_ref, lambda q: w2_ref[q], b2_ref[...], True)

    # conv3 (3x3 / s1 / p1), no activation before the residual stack.
    h = sel_conv(h, g3_ref, lambda q: w3_ref[q], b3_ref[...], False)

    # Residual stack: x + conv1x1(relu(conv3x3(relu(x)))), both convs bias-free.
    for blk in range(wr3_ref.shape[0]):
        t = sel_conv(jnp.maximum(h, 0.0), g3_ref,
                     lambda q, _b=blk: wr3_ref[_b, q], None, True)
        h = h + mm(t.astype(bf16), wr1_ref[blk])
    h = jnp.maximum(h, 0.0)            # trailing ReLU of the residual stack

    # Projector fc1: the NCHW flatten is folded into per-spatial-position (S_r, V_r) pairs:
    #   z[m] = sum_r (S_r @ h)[m] @ V_r,   V_r = fc1_w rows {c*HW + r}  (pre-gathered on host).
    hb = h.astype(bf16)
    z = None
    for r in range(s_ref.shape[0]):
        part = mm(mm(s_ref[r], hb).astype(bf16), v_ref[r])
        z = part if z is None else z + part
    z = jnp.maximum(z + bfc1_ref[...], 0.0)

    # Projector fc2 (+ ReLU, plain_last=False).  Output width padded to a lane-dense 128.
    z = jnp.maximum(mm(z.astype(bf16), wfc2_ref[...]) + bfc2_ref[...], 0.0)
    out_ref[...] = z


def _full_spec(a):
    rank = a.ndim
    return pl.BlockSpec(a.shape, lambda i, _r=rank: (0,) * _r)


def _fused_pallas_forward(cols1, fp):
    inputs = (cols1, fp["w1"], fp["b1"],
              fp["g2"], fp["w2"], fp["b2"],
              fp["g3"], fp["w3"], fp["b3"],
              fp["wr3"], fp["wr1"],
              fp["s"], fp["v"], fp["bfc1"],
              fp["wfc2"], fp["bfc2"])
    m = fp["s"].shape[1]             # 2 * batch
    n_pad = fp["wfc2"].shape[1]      # lane-dense padded projector width (multiple of 128)
    return pl.pallas_call(
        _barlow_fused_kernel,
        out_shape=jax.ShapeDtypeStruct((m, n_pad), jnp.float32),
        grid=(1,),
        in_specs=[_full_spec(a) for a in inputs],
        out_specs=pl.BlockSpec((m, n_pad), lambda i: (0, 0)),
        compiler_params=pltpu.CompilerParams(
            dimension_semantics=("arbitrary",),
            vmem_limit_bytes=32 * 1024 * 1024,   # headroom for scale-up (v5e default is 16 MiB)
        ),
    )(*inputs)


# -----------------------------------------------------------------------------
# Host-side constant preparation (done once at init).
# -----------------------------------------------------------------------------
def _im2col(x, k, stride, pad):
    # x: (N, H, W, C) -> (N*Ho*Wo, k*k*C) with patch ordering (kh, kw, C).  Used for conv1 only.
    n, h, w_, c = x.shape
    xp = jnp.pad(x, ((0, 0), (pad, pad), (pad, pad), (0, 0)))
    ho = (h + 2 * pad - k) // stride + 1
    wo = (w_ + 2 * pad - k) // stride + 1
    cols = []
    for i in range(k):
        for j in range(k):
            cols.append(xp[:, i:i + stride * ho:stride, j:j + stride * wo:stride, :])
    cols = jnp.concatenate(cols, axis=-1)
    return cols.reshape(n * ho * wo, k * k * c), (n, ho, wo)


def _conv_selectors(m, hin, win, k, stride, pad, dtype):
    """0/1 gather matrices G_q, q=(kh,kw): G_q[r_out, r_in] = 1 iff output position r_out reads
    input position r_in for kernel tap q (all-zero rows where the tap hits zero padding)."""
    hout = (hin + 2 * pad - k) // stride + 1
    wout = (win + 2 * pad - k) // stride + 1
    rin = m * hin * win
    mi = jnp.arange(m)[:, None, None]
    ho = jnp.arange(hout)[None, :, None]
    wo = jnp.arange(wout)[None, None, :]
    sels = []
    for kh in range(k):
        for kw in range(k):
            hi = stride * ho - pad + kh
            wi = stride * wo - pad + kw
            valid = (hi >= 0) & (hi < hin) & (wi >= 0) & (wi < win)
            r_in = (mi * hin + jnp.clip(hi, 0, hin - 1)) * win + jnp.clip(wi, 0, win - 1)
            g = jax.nn.one_hot(r_in.reshape(-1), rin, dtype=jnp.float32)
            g = g * jnp.broadcast_to(valid, (m, hout, wout)).reshape(-1, 1)
            sels.append(g)
    return jnp.stack(sels).astype(dtype)


def _fc_spatial_selectors(m, n_spatial, dtype):
    """S_r: (m, m*n_spatial) 0/1 matrices picking encoder row m*n_spatial + r for every sample."""
    rows = jnp.arange(m)[None, :] * n_spatial + jnp.arange(n_spatial)[:, None]
    return jax.nn.one_hot(rows, m * n_spatial, dtype=jnp.float32).astype(dtype)


def prepare_fused_inputs(params, batch, image_size):
    """Pre-reshape / pre-cast every constant once (no per-call reshapes or casts)."""
    bf16, f32 = jnp.bfloat16, jnp.float32
    m = 2 * batch
    in_ch = params["conv1_w"].shape[2]
    c1 = params["conv1_w"].shape[3]
    hidden = params["conv2_w"].shape[3]
    mlp_hidden = params["fc1_w"].shape[1]
    h2, h3 = image_size // 2, image_size // 4
    hw = h3 * h3
    n_pad = ((mlp_hidden + 127) // 128) * 128

    fp = {}
    fp["g2"] = _conv_selectors(m, h2, h2, 4, 2, 1, bf16)          # (16, m*h3*h3, m*h2*h2)
    fp["g3"] = _conv_selectors(m, h3, h3, 3, 1, 1, bf16)          # (9,  m*h3*h3, m*h3*h3)
    fp["s"] = _fc_spatial_selectors(m, hw, bf16)                  # (hw, m, m*hw)

    fp["w1"] = params["conv1_w"].reshape(4 * 4 * in_ch, c1).astype(bf16)
    fp["b1"] = params["conv1_b"].reshape(1, -1).astype(f32)
    fp["w2"] = params["conv2_w"].reshape(4 * 4, c1, hidden).astype(bf16)
    fp["b2"] = params["conv2_b"].reshape(1, -1).astype(f32)
    fp["w3"] = params["conv3_w"].reshape(3 * 3, hidden, hidden).astype(bf16)
    fp["b3"] = params["conv3_b"].reshape(1, -1).astype(f32)
    fp["wr3"] = jnp.stack([rp["w3"].reshape(3 * 3, hidden, -1)
                           for rp in params["res"]]).astype(bf16)
    fp["wr1"] = jnp.stack([rp["w1"].reshape(-1, hidden)
                           for rp in params["res"]]).astype(bf16)

    # fc1: fold the NCHW flatten (flat index = c*HW + r) into per-spatial-r regrouped weights V_r.
    v = jnp.stack([params["fc1_w"][r::hw, :] for r in range(hw)])  # (hw, hidden, mlp_hidden)
    fp["v"] = jnp.pad(v, ((0, 0), (0, 0), (0, n_pad - mlp_hidden))).astype(bf16)
    fp["bfc1"] = jnp.pad(params["fc1_b"], (0, n_pad - mlp_hidden)).reshape(1, -1).astype(f32)
    fp["wfc2"] = jnp.pad(params["fc2_w"],
                         ((0, n_pad - mlp_hidden), (0, n_pad - mlp_hidden))).astype(bf16)
    fp["bfc2"] = jnp.pad(params["fc2_b"], (0, n_pad - mlp_hidden)).reshape(1, -1).astype(f32)
    return fp


# -----------------------------------------------------------------------------
# Parameters (deterministic synthetic init) and the public forward.
# -----------------------------------------------------------------------------
def init_params(key, in_ch, hidden, n_res, res_hidden, image_size, mlp_hidden):
    keys = iter(jax.random.split(key, 10 + 2 * n_res))

    def w(shape, fan_in):
        return jax.random.normal(next(keys), shape, jnp.float32) / jnp.sqrt(float(fan_in))

    def b(shape):
        return 0.1 * jax.random.normal(next(keys), shape, jnp.float32)

    p = {}
    p["conv1_w"] = w((4, 4, in_ch, hidden // 2), 4 * 4 * in_ch)
    p["conv1_b"] = b((hidden // 2,))
    p["conv2_w"] = w((4, 4, hidden // 2, hidden), 4 * 4 * (hidden // 2))
    p["conv2_b"] = b((hidden,))
    p["conv3_w"] = w((3, 3, hidden, hidden), 3 * 3 * hidden)
    p["conv3_b"] = b((hidden,))
    p["res"] = []
    for _ in range(n_res):
        p["res"].append({
            "w3": w((3, 3, hidden, res_hidden), 3 * 3 * hidden),   # bias=False
            "w1": w((1, 1, res_hidden, hidden), res_hidden),       # bias=False
        })
    fmap = image_size // 4
    flat_dim = hidden * fmap * fmap
    p["fc1_w"] = w((flat_dim, mlp_hidden), flat_dim)
    p["fc1_b"] = b((mlp_hidden,))
    p["fc2_w"] = w((mlp_hidden, mlp_hidden), mlp_hidden)
    p["fc2_b"] = b((mlp_hidden,))
    return p


def make_forward(fused, batch, mlp_hidden):
    @jax.jit
    def fwd(x_nchw):
        x = jnp.transpose(x_nchw, (0, 2, 3, 1))                    # NCHW -> NHWC
        # TODO(synk): ViewGenerator's random augmentations have no clean deterministic Pallas
        # equivalent; deterministic views (identity + horizontal flip) are used instead.
        views = jnp.concatenate([x, x[:, :, ::-1, :]], axis=0)     # both views batched
        cols1, _ = _im2col(views.astype(jnp.bfloat16), 4, 2, 1)    # im2col of raw input only
        out = _fused_pallas_forward(cols1, fused)                  # (2*batch, 128) f32
        z = out[:, :mlp_hidden]
        return z[:batch], z[batch:]
    return fwd


# -----------------------------------------------------------------------------
# Pure-JAX/XLA reference (same bf16-input / f32-accumulate rounding) for a self-check.
# -----------------------------------------------------------------------------
def _round_bf16(a):
    return a.astype(jnp.bfloat16).astype(jnp.float32)


def _conv_ref(x, w_hwio, b, stride, pad):
    y = lax.conv_general_dilated(
        _round_bf16(x), _round_bf16(w_hwio),
        window_strides=(stride, stride), padding=[(pad, pad), (pad, pad)],
        dimension_numbers=("NHWC", "HWIO", "NHWC"))
    return y if b is None else y + b


@jax.jit
def reference_forward(params, x_nchw):
    x = jnp.transpose(x_nchw, (0, 2, 3, 1))
    v = jnp.concatenate([x, x[:, :, ::-1, :]], axis=0)
    h = jnp.maximum(_conv_ref(v, params["conv1_w"], params["conv1_b"], 2, 1), 0.0)
    h = jnp.maximum(_conv_ref(h, params["conv2_w"], params["conv2_b"], 2, 1), 0.0)
    h = _conv_ref(h, params["conv3_w"], params["conv3_b"], 1, 1)
    for rp in params["res"]:
        t = jnp.maximum(_conv_ref(jnp.maximum(h, 0.0), rp["w3"], None, 1, 1), 0.0)
        h = h + _conv_ref(t, rp["w1"], None, 1, 0)
    h = jnp.maximum(h, 0.0)
    flat = jnp.transpose(h, (0, 3, 1, 2)).reshape(h.shape[0], -1)   # NCHW flatten
    z = jnp.maximum(jnp.dot(_round_bf16(flat), _round_bf16(params["fc1_w"]),
                            preferred_element_type=jnp.float32) + params["fc1_b"], 0.0)
    z = jnp.maximum(jnp.dot(_round_bf16(z), _round_bf16(params["fc2_w"]),
                            preferred_element_type=jnp.float32) + params["fc2_b"], 0.0)
    b = x_nchw.shape[0]
    return z[:b], z[b:]


# -----------------------------------------------------------------------------
if __name__ == "__main__":
    batch, in_ch, image_size = 2, 4, 16
    hidden_dim, num_residual_layers, residual_hiddens = 16, 2, 8
    mlp_hidden_dim = 32

    key = jax.random.PRNGKey(0)
    k_param, k_x = jax.random.split(key)
    params = init_params(k_param, in_ch, hidden_dim, num_residual_layers,
                         residual_hiddens, image_size, mlp_hidden_dim)
    x = jax.random.normal(k_x, (batch, in_ch, image_size, image_size), jnp.float32)

    fused = prepare_fused_inputs(params, batch, image_size)
    forward = make_forward(fused, batch, mlp_hidden_dim)

    z_a, z_b = forward(x)
    z_a, z_b = jax.block_until_ready(z_a), jax.block_until_ready(z_b)

    assert z_a.shape == (batch, mlp_hidden_dim)
    assert z_b.shape == (batch, mlp_hidden_dim)
    assert bool(jnp.all(jnp.isfinite(z_a))) and bool(jnp.all(jnp.isfinite(z_b)))

    # Numerical cross-check against the pure-JAX reference (matched bf16 rounding).
    r_a, r_b = reference_forward(params, x)
    assert bool(jnp.allclose(z_a, r_a, atol=2e-2, rtol=2e-2))
    assert bool(jnp.allclose(z_b, r_b, atol=2e-2, rtol=2e-2))

    print("KERNEL_OK")
</pallas_src>

<mosaic_0001>
module attributes {stable_mosaic.version = 11 : i64} {
  func.func @_barlow_fused_kernel(%arg0: i32, %arg1: memref<256x64xbf16, #tpu.memory_space<vmem>>, %arg2: memref<64x8xbf16, #tpu.memory_space<vmem>>, %arg3: memref<1x8xf32, #tpu.memory_space<vmem>>, %arg4: memref<16x64x256xbf16, #tpu.memory_space<vmem>>, %arg5: memref<16x8x16xbf16, #tpu.memory_space<vmem>>, %arg6: memref<1x16xf32, #tpu.memory_space<vmem>>, %arg7: memref<9x64x64xbf16, #tpu.memory_space<vmem>>, %arg8: memref<9x16x16xbf16, #tpu.memory_space<vmem>>, %arg9: memref<1x16xf32, #tpu.memory_space<vmem>>, %arg10: memref<2x9x16x8xbf16, #tpu.memory_space<vmem>>, %arg11: memref<2x8x16xbf16, #tpu.memory_space<vmem>>, %arg12: memref<16x4x64xbf16, #tpu.memory_space<vmem>>, %arg13: memref<16x16x128xbf16, #tpu.memory_space<vmem>>, %arg14: memref<1x128xf32, #tpu.memory_space<vmem>>, %arg15: memref<128x128xbf16, #tpu.memory_space<vmem>>, %arg16: memref<1x128xf32, #tpu.memory_space<vmem>>, %arg17: memref<4x128xf32, #tpu.memory_space<vmem>>) attributes {dimension_semantics = [#tpu.dimension_semantics<arbitrary>], iteration_bounds = array<i64: 1>, scalar_prefetch = 0 : i64, scratch_operands = 0 : i64, tpu.core_type = #tpu.core_type<tc>, window_params = [{pipeline_mode = #tpu.pipeline_mode<synchronous>, transform_indices = @transform_0, window_bounds = array<i64: 256, 64>}, {pipeline_mode = #tpu.pipeline_mode<synchronous>, transform_indices = @transform_1, window_bounds = array<i64: 64, 8>}, {pipeline_mode = #tpu.pipeline_mode<synchronous>, transform_indices = @transform_2, window_bounds = array<i64: 1, 8>}, {pipeline_mode = #tpu.pipeline_mode<synchronous>, transform_indices = @transform_3, window_bounds = array<i64: 16, 64, 256>}, {pipeline_mode = #tpu.pipeline_mode<synchronous>, transform_indices = @transform_4, window_bounds = array<i64: 16, 8, 16>}, {pipeline_mode = #tpu.pipeline_mode<synchronous>, transform_indices = @transform_5, window_bounds = array<i64: 1, 16>}, {pipeline_mode = #tpu.pipeline_mode<synchronous>, transform_indices = @transform_6, window_bounds = array<i64: 9, 64, 64>}, {pipeline_mode = #tpu.pipeline_mode<synchronous>, transform_indices = @transform_7, window_bounds = array<i64: 9, 16, 16>}, {pipeline_mode = #tpu.pipeline_mode<synchronous>, transform_indices = @transform_8, window_bounds = array<i64: 1, 16>}, {pipeline_mode = #tpu.pipeline_mode<synchronous>, transform_indices = @transform_9, window_bounds = array<i64: 2, 9, 16, 8>}, {pipeline_mode = #tpu.pipeline_mode<synchronous>, transform_indices = @transform_10, window_bounds = array<i64: 2, 8, 16>}, {pipeline_mode = #tpu.pipeline_mode<synchronous>, transform_indices = @transform_11, window_bounds = array<i64: 16, 4, 64>}, {pipeline_mode = #tpu.pipeline_mode<synchronous>, transform_indices = @transform_12, window_bounds = array<i64: 16, 16, 128>}, {pipeline_mode = #tpu.pipeline_mode<synchronous>, transform_indices = @transform_13, window_bounds = array<i64: 1, 128>}, {pipeline_mode = #tpu.pipeline_mode<synchronous>, transform_indices = @transform_14, window_bounds = array<i64: 128, 128>}, {pipeline_mode = #tpu.pipeline_mode<synchronous>, transform_indices = @transform_15, window_bounds = array<i64: 1, 128>}, {pipeline_mode = #tpu.pipeline_mode<synchronous>, transform_indices = @transform_16, window_bounds = array<i64: 4, 128>}]} {
    %c0 = arith.constant 0 : index
    %c0_0 = arith.constant 0 : index
    %0 = vector.load %arg1[%c0, %c0_0] : memref<256x64xbf16, #tpu.memory_space<vmem>>, vector<256x64xbf16>
    %c0_1 = arith.constant 0 : index
    %c0_2 = arith.constant 0 : index
    %1 = vector.load %arg2[%c0_1, %c0_2] : memref<64x8xbf16, #tpu.memory_space<vmem>>, vector<64x8xbf16>
    %cst = arith.constant dense<0.000000e+00> : vector<256x8xf32>
    %2 = tpu.matmul %0, %1, %cst {dimension_numbers = #tpu.dot_dimension_numbers<[1], [0], [0], [1], [0, 0, 1, 1], [], []>} : vector<256x64xbf16>, vector<64x8xbf16>, vector<256x8xf32> -> vector<256x8xf32>
    %c0_3 = arith.constant 0 : index
    %c0_4 = arith.constant 0 : index
    %3 = vector.load %arg3[%c0_3, %c0_4] : memref<1x8xf32, #tpu.memory_space<vmem>>, vector<1x8xf32>
    %4 = vector.broadcast %3 : vector<1x8xf32> to vector<256x8xf32>
    %5 = arith.addf %2, %4 : vector<256x8xf32>
    %cst_5 = arith.constant 0.000000e+00 : f32
    %6 = vector.broadcast %cst_5 : f32 to vector<256x8xf32>
    %7 = arith.maximumf %5, %6 : vector<256x8xf32>
    %c0_6 = arith.constant 0 : index
    %c0_7 = arith.constant 0 : index
    %8 = vector.load %arg6[%c0_6, %c0_7] : memref<1x16xf32, #tpu.memory_space<vmem>>, vector<1x16xf32>
    %9 = arith.truncf %7 : vector<256x8xf32> to vector<256x8xbf16>
    %c0_8 = arith.constant 0 : index
    %c0_9 = arith.constant 0 : index
    %c0_10 = arith.constant 0 : index
    %10 = vector.load %arg4[%c0_8, %c0_9, %c0_10] : memref<16x64x256xbf16, #tpu.memory_space<vmem>>, vector<1x64x256xbf16>
    %11 = vector.shape_cast %10 : vector<1x64x256xbf16> to vector<64x256xbf16>
    %cst_11 = arith.constant dense<0.000000e+00> : vector<64x8xf32>
    %12 = tpu.matmul %11, %9, %cst_11 {dimension_numbers = #tpu.dot_dimension_numbers<[1], [0], [0], [1], [0, 0, 1, 1], [], []>} : vector<64x256xbf16>, vector<256x8xbf16>, vector<64x8xf32> -> vector<64x8xf32>
    %13 = arith.truncf %12 : vector<64x8xf32> to vector<64x8xbf16>
    %c0_12 = arith.constant 0 : index
    %c0_13 = arith.constant 0 : index
    %c0_14 = arith.constant 0 : index
    %14 = vector.load %arg5[%c0_12, %c0_13, %c0_14] : memref<16x8x16xbf16, #tpu.memory_space<vmem>>, vector<1x8x16xbf16>
    %15 = vector.shape_cast %14 : vector<1x8x16xbf16> to vector<8x16xbf16>
    %cst_15 = arith.constant dense<0.000000e+00> : vector<64x16xf32>
    %16 = tpu.matmul %13, %15, %cst_15 {dimension_numbers = #tpu.dot_dimension_numbers<[1], [0], [0], [1], [0, 0, 1, 1], [], []>} : vector<64x8xbf16>, vector<8x16xbf16>, vector<64x16xf32> -> vector<64x16xf32>
    %c1 = arith.constant 1 : index
    %c0_16 = arith.constant 0 : index
    %c0_17 = arith.constant 0 : index
    %17 = vector.load %arg4[%c1, %c0_16, %c0_17] : memref<16x64x256xbf16, #tpu.memory_space<vmem>>, vector<1x64x256xbf16>
    %18 = vector.shape_cast %17 : vector<1x64x256xbf16> to vector<64x256xbf16>
    %cst_18 = arith.constant dense<0.000000e+00> : vector<64x8xf32>
    %19 = tpu.matmul %18, %9, %cst_18 {dimension_numbers = #tpu.dot_dimension_numbers<[1], [0], [0], [1], [0, 0, 1, 1], [], []>} : vector<64x256xbf16>, vector<256x8xbf16>, vector<64x8xf32> -> vector<64x8xf32>
    %20 = arith.truncf %19 : vector<64x8xf32> to vector<64x8xbf16>
    %c1_19 = arith.constant 1 : index
    %c0_20 = arith.constant 0 : index
    %c0_21 = arith.constant 0 : index
    %21 = vector.load %arg5[%c1_19, %c0_20, %c0_21] : memref<16x8x16xbf16, #tpu.memory_space<vmem>>, vector<1x8x16xbf16>
    %22 = vector.shape_cast %21 : vector<1x8x16xbf16> to vector<8x16xbf16>
    %cst_22 = arith.constant dense<0.000000e+00> : vector<64x16xf32>
    %23 = tpu.matmul %20, %22, %cst_22 {dimension_numbers = #tpu.dot_dimension_numbers<[1], [0], [0], [1], [0, 0, 1, 1], [], []>} : vector<64x8xbf16>, vector<8x16xbf16>, vector<64x16xf32> -> vector<64x16xf32>
    %24 = arith.addf %16, %23 : vector<64x16xf32>
    %c2 = arith.constant 2 : index
    %c0_23 = arith.constant 0 : index
    %c0_24 = arith.constant 0 : index
    %25 = vector.load %arg4[%c2, %c0_23, %c0_24] : memref<16x64x256xbf16, #tpu.memory_space<vmem>>, vector<1x64x256xbf16>
    %26 = vector.shape_cast %25 : vector<1x64x256xbf16> to vector<64x256xbf16>
    %cst_25 = arith.constant dense<0.000000e+00> : vector<64x8xf32>
    %27 = tpu.matmul %26, %9, %cst_25 {dimension_numbers = #tpu.dot_dimension_numbers<[1], [0], [0], [1], [0, 0, 1, 1], [], []>} : vector<64x256xbf16>, vector<256x8xbf16>, vector<64x8xf32> -> vector<64x8xf32>
    %28 = arith.truncf %27 : vector<64x8xf32> to vector<64x8xbf16>
    %c2_26 = arith.constant 2 : index
    %c0_27 = arith.constant 0 : index
    %c0_28 = arith.constant 0 : index
    %29 = vector.load %arg5[%c2_26, %c0_27, %c0_28] : memref<16x8x16xbf16, #tpu.memory_space<vmem>>, vector<1x8x16xbf16>
    %30 = vector.shape_cast %29 : vector<1x8x16xbf16> to vector<8x16xbf16>
    %cst_29 = arith.constant dense<0.000000e+00> : vector<64x16xf32>
    %31 = tpu.matmul %28, %30, %cst_29 {dimension_numbers = #tpu.dot_dimension_numbers<[1], [0], [0], [1], [0, 0, 1, 1], [], []>} : vector<64x8xbf16>, vector<8x16xbf16>, vector<64x16xf32> -> vector<64x16xf32>
    %32 = arith.addf %24, %31 : vector<64x16xf32>
    %c3 = arith.constant 3 : index
    %c0_30 = arith.constant 0 : index
    %c0_31 = arith.constant 0 : index
    %33 = vector.load %arg4[%c3, %c0_30, %c0_31] : memref<16x64x256xbf16, #tpu.memory_space<vmem>>, vector<1x64x256xbf16>
    %34 = vector.shape_cast %33 : vector<1x64x256xbf16> to vector<64x256xbf16>
    %cst_32 = arith.constant dense<0.000000e+00> : vector<64x8xf32>
    %35 = tpu.matmul %34, %9, %cst_32 {dimension_numbers = #tpu.dot_dimension_numbers<[1], [0], [0], [1], [0, 0, 1, 1], [], []>} : vector<64x256xbf16>, vector<256x8xbf16>, vector<64x8xf32> -> vector<64x8xf32>
    %36 = arith.truncf %35 : vector<64x8xf32> to vector<64x8xbf16>
    %c3_33 = arith.constant 3 : index
    %c0_34 = arith.constant 0 : index
    %c0_35 = arith.constant 0 : index
    %37 = vector.load %arg5[%c3_33, %c0_34, %c0_35] : memref<16x8x16xbf16, #tpu.memory_space<vmem>>, vector<1x8x16xbf16>
    %38 = vector.shape_cast %37 : vector<1x8x16xbf16> to vector<8x16xbf16>
    %cst_36 = arith.constant dense<0.000000e+00> : vector<64x16xf32>
    %39 = tpu.matmul %36, %38, %cst_36 {dimension_numbers = #tpu.dot_dimension_numbers<[1], [0], [0], [1], [0, 0, 1, 1], [], []>} : vector<64x8xbf16>, vector<8x16xbf16>, vector<64x16xf32> -> vector<64x16xf32>
    %40 = arith.addf %32, %39 : vector<64x16xf32>
    %c4 = arith.constant 4 : index
    %c0_37 = arith.constant 0 : index
    %c0_38 = arith.constant 0 : index
    %41 = vector.load %arg4[%c4, %c0_37, %c0_38] : memref<16x64x256xbf16, #tpu.memory_space<vmem>>, vector<1x64x256xbf16>
    %42 = vector.shape_cast %41 : vector<1x64x256xbf16> to vector<64x256xbf16>
    %cst_39 = arith.constant dense<0.000000e+00> : vector<64x8xf32>
    %43 = tpu.matmul %42, %9, %cst_39 {dimension_numbers = #tpu.dot_dimension_numbers<[1], [0], [0], [1], [0, 0, 1, 1], [], []>} : vector<64x256xbf16>, vector<256x8xbf16>, vector<64x8xf32> -> vector<64x8xf32>
    %44 = arith.truncf %43 : vector<64x8xf32> to vector<64x8xbf16>
    %c4_40 = arith.constant 4 : index
    %c0_41 = arith.constant 0 : index
    %c0_42 = arith.constant 0 : index
    %45 = vector.load %arg5[%c4_40, %c0_41, %c0_42] : memref<16x8x16xbf16, #tpu.memory_space<vmem>>, vector<1x8x16xbf16>
    %46 = vector.shape_cast %45 : vector<1x8x16xbf16> to vector<8x16xbf16>
    %cst_43 = arith.constant dense<0.000000e+00> : vector<64x16xf32>
    %47 = tpu.matmul %44, %46, %cst_43 {dimension_numbers = #tpu.dot_dimension_numbers<[1], [0], [0], [1], [0, 0, 1, 1], [], []>} : vector<64x8xbf16>, vector<8x16xbf16>, vector<64x16xf32> -> vector<64x16xf32>
    %48 = arith.addf %40, %47 : vector<64x16xf32>
    %c5 = arith.constant 5 : index
    %c0_44 = arith.constant 0 : index
    %c0_45 = arith.constant 0 : index
    %49 = vector.load %arg4[%c5, %c0_44, %c0_45] : memref<16x64x256xbf16, #tpu.memory_space<vmem>>, vector<1x64x256xbf16>
    %50 = vector.shape_cast %49 : vector<1x64x256xbf16> to vector<64x256xbf16>
    %cst_46 = arith.constant dense<0.000000e+00> : vector<64x8xf32>
    %51 = tpu.matmul %50, %9, %cst_46 {dimension_numbers = #tpu.dot_dimension_numbers<[1], [0], [0], [1], [0, 0, 1, 1], [], []>} : vector<64x256xbf16>, vector<256x8xbf16>, vector<64x8xf32> -> vector<64x8xf32>
    %52 = arith.truncf %51 : vector<64x8xf32> to vector<64x8xbf16>
    %c5_47 = arith.constant 5 : index
    %c0_48 = arith.constant 0 : index
    %c0_49 = arith.constant 0 : index
    %53 = vector.load %arg5[%c5_47, %c0_48, %c0_49] : memref<16x8x16xbf16, #tpu.memory_space<vmem>>, vector<1x8x16xbf16>
    %54 = vector.shape_cast %53 : vector<1x8x16xbf16> to vector<8x16xbf16>
    %cst_50 = arith.constant dense<0.000000e+00> : vector<64x16xf32>
    %55 = tpu.matmul %52, %54, %cst_50 {dimension_numbers = #tpu.dot_dimension_numbers<[1], [0], [0], [1], [0, 0, 1, 1], [], []>} : vector<64x8xbf16>, vector<8x16xbf16>, vector<64x16xf32> -> vector<64x16xf32>
    %56 = arith.addf %48, %55 : vector<64x16xf32>
    %c6 = arith.constant 6 : index
    %c0_51 = arith.constant 0 : index
    %c0_52 = arith.constant 0 : index
    %57 = vector.load %arg4[%c6, %c0_51, %c0_52] : memref<16x64x256xbf16, #tpu.memory_space<vmem>>, vector<1x64x256xbf16>
    %58 = vector.shape_cast %57 : vector<1x64x256xbf16> to vector<64x256xbf16>
    %cst_53 = arith.constant dense<0.000000e+00> : vector<64x8xf32>
    %59 = tpu.matmul %58, %9, %cst_53 {dimension_numbers = #tpu.dot_dimension_numbers<[1], [0], [0], [1], [0, 0, 1, 1], [], []>} : vector<64x256xbf16>, vector<256x8xbf16>, vector<64x8xf32> -> vector<64x8xf32>
    %60 = arith.truncf %59 : vector<64x8xf32> to vector<64x8xbf16>
    %c6_54 = arith.constant 6 : index
    %c0_55 = arith.constant 0 : index
    %c0_56 = arith.constant 0 : index
    %61 = vector.load %arg5[%c6_54, %c0_55, %c0_56] : memref<16x8x16xbf16, #tpu.memory_space<vmem>>, vector<1x8x16xbf16>
    %62 = vector.shape_cast %61 : vector<1x8x16xbf16> to vector<8x16xbf16>
    %cst_57 = arith.constant dense<0.000000e+00> : vector<64x16xf32>
    %63 = tpu.matmul %60, %62, %cst_57 {dimension_numbers = #tpu.dot_dimension_numbers<[1], [0], [0], [1], [0, 0, 1, 1], [], []>} : vector<64x8xbf16>, vector<8x16xbf16>, vector<64x16xf32> -> vector<64x16xf32>
    %64 = arith.addf %56, %63 : vector<64x16xf32>
    %c7 = arith.constant 7 : index
    %c0_58 = arith.constant 0 : index
    %c0_59 = arith.constant 0 : index
    %65 = vector.load %arg4[%c7, %c0_58, %c0_59] : memref<16x64x256xbf16, #tpu.memory_space<vmem>>, vector<1x64x256xbf16>
    %66 = vector.shape_cast %65 : vector<1x64x256xbf16> to vector<64x256xbf16>
    %cst_60 = arith.constant dense<0.000000e+00> : vector<64x8xf32>
    %67 = tpu.matmul %66, %9, %cst_60 {dimension_numbers = #tpu.dot_dimension_numbers<[1], [0], [0], [1], [0, 0, 1, 1], [], []>} : vector<64x256xbf16>, vector<256x8xbf16>, vector<64x8xf32> -> vector<64x8xf32>
    %68 = arith.truncf %67 : vector<64x8xf32> to vector<64x8xbf16>
    %c7_61 = arith.constant 7 : index
    %c0_62 = arith.constant 0 : index
    %c0_63 = arith.constant 0 : index
    %69 = vector.load %arg5[%c7_61, %c0_62, %c0_63] : memref<16x8x16xbf16, #tpu.memory_space<vmem>>, vector<1x8x16xbf16>
    %70 = vector.shape_cast %69 : vector<1x8x16xbf16> to vector<8x16xbf16>
    %cst_64 = arith.constant dense<0.000000e+00> : vector<64x16xf32>
    %71 = tpu.matmul %68, %70, %cst_64 {dimension_numbers = #tpu.dot_dimension_numbers<[1], [0], [0], [1], [0, 0, 1, 1], [], []>} : vector<64x8xbf16>, vector<8x16xbf16>, vector<64x16xf32> -> vector<64x16xf32>
    %72 = arith.addf %64, %71 : vector<64x16xf32>
    %c8 = arith.constant 8 : index
    %c0_65 = arith.constant 0 : index
    %c0_66 = arith.constant 0 : index
    %73 = vector.load %arg4[%c8, %c0_65, %c0_66] : memref<16x64x256xbf16, #tpu.memory_space<vmem>>, vector<1x64x256xbf16>
    %74 = vector.shape_cast %73 : vector<1x64x256xbf16> to vector<64x256xbf16>
    %cst_67 = arith.constant dense<0.000000e+00> : vector<64x8xf32>
    %75 = tpu.matmul %74, %9, %cst_67 {dimension_numbers = #tpu.dot_dimension_numbers<[1], [0], [0], [1], [0, 0, 1, 1], [], []>} : vector<64x256xbf16>, vector<256x8xbf16>, vector<64x8xf32> -> vector<64x8xf32>
    %76 = arith.truncf %75 : vector<64x8xf32> to vector<64x8xbf16>
    %c8_68 = arith.constant 8 : index
    %c0_69 = arith.constant 0 : index
    %c0_70 = arith.constant 0 : index
    %77 = vector.load %arg5[%c8_68, %c0_69, %c0_70] : memref<16x8x16xbf16, #tpu.memory_space<vmem>>, vector<1x8x16xbf16>
    %78 = vector.shape_cast %77 : vector<1x8x16xbf16> to vector<8x16xbf16>
    %cst_71 = arith.constant dense<0.000000e+00> : vector<64x16xf32>
    %79 = tpu.matmul %76, %78, %cst_71 {dimension_numbers = #tpu.dot_dimension_numbers<[1], [0], [0], [1], [0, 0, 1, 1], [], []>} : vector<64x8xbf16>, vector<8x16xbf16>, vector<64x16xf32> -> vector<64x16xf32>
    %80 = arith.addf %72, %79 : vector<64x16xf32>
    %c9 = arith.constant 9 : index
    %c0_72 = arith.constant 0 : index
    %c0_73 = arith.constant 0 : index
    %81 = vector.load %arg4[%c9, %c0_72, %c0_73] : memref<16x64x256xbf16, #tpu.memory_space<vmem>>, vector<1x64x256xbf16>
    %82 = vector.shape_cast %81 : vector<1x64x256xbf16> to vector<64x256xbf16>
    %cst_74 = arith.constant dense<0.000000e+00> : vector<64x8xf32>
    %83 = tpu.matmul %82, %9, %cst_74 {dimension_numbers = #tpu.dot_dimension_numbers<[1], [0], [0], [1], [0, 0, 1, 1], [], []>} : vector<64x256xbf16>, vector<256x8xbf16>, vector<64x8xf32> -> vector<64x8xf32>
    %84 = arith.truncf %83 : vector<64x8xf32> to vector<64x8xbf16>
    %c9_75 = arith.constant 9 : index
    %c0_76 = arith.constant 0 : index
    %c0_77 = arith.constant 0 : index
    %85 = vector.load %arg5[%c9_75, %c0_76, %c0_77] : memref<16x8x16xbf16, #tpu.memory_space<vmem>>, vector<1x8x16xbf16>
    %86 = vector.shape_cast %85 : vector<1x8x16xbf16> to vector<8x16xbf16>
    %cst_78 = arith.constant dense<0.000000e+00> : vector<64x16xf32>
    %87 = tpu.matmul %84, %86, %cst_78 {dimension_numbers = #tpu.dot_dimension_numbers<[1], [0], [0], [1], [0, 0, 1, 1], [], []>} : vector<64x8xbf16>, vector<8x16xbf16>, vector<64x16xf32> -> vector<64x16xf32>
    %88 = arith.addf %80, %87 : vector<64x16xf32>
    %c10 = arith.constant 10 : index
    %c0_79 = arith.constant 0 : index
    %c0_80 = arith.constant 0 : index
    %89 = vector.load %arg4[%c10, %c0_79, %c0_80] : memref<16x64x256xbf16, #tpu.memory_space<vmem>>, vector<1x64x256xbf16>
    %90 = vector.shape_cast %89 : vector<1x64x256xbf16> to vector<64x256xbf16>
    %cst_81 = arith.constant dense<0.000000e+00> : vector<64x8xf32>
    %91 = tpu.matmul %90, %9, %cst_81 {dimension_numbers = #tpu.dot_dimension_numbers<[1], [0], [0], [1], [0, 0, 1, 1], [], []>} : vector<64x256xbf16>, vector<256x8xbf16>, vector<64x8xf32> -> vector<64x8xf32>
    %92 = arith.truncf %91 : vector<64x8xf32> to vector<64x8xbf16>
    %c10_82 = arith.constant 10 : index
    %c0_83 = arith.constant 0 : index
    %c0_84 = arith.constant 0 : index
    %93 = vector.load %arg5[%c10_82, %c0_83, %c0_84] : memref<16x8x16xbf16, #tpu.memory_space<vmem>>, vector<1x8x16xbf16>
    %94 = vector.shape_cast %93 : vector<1x8x16xbf16> to vector<8x16xbf16>
    %cst_85 = arith.constant dense<0.000000e+00> : vector<64x16xf32>
    %95 = tpu.matmul %92, %94, %cst_85 {dimension_numbers = #tpu.dot_dimension_numbers<[1], [0], [0], [1], [0, 0, 1, 1], [], []>} : vector<64x8xbf16>, vector<8x16xbf16>, vector<64x16xf32> -> vector<64x16xf32>
    %96 = arith.addf %88, %95 : vector<64x16xf32>
    %c11 = arith.constant 11 : index
    %c0_86 = arith.constant 0 : index
    %c0_87 = arith.constant 0 : index
    %97 = vector.load %arg4[%c11, %c0_86, %c0_87] : memref<16x64x256xbf16, #tpu.memory_space<vmem>>, vector<1x64x256xbf16>
    %98 = vector.shape_cast %97 : vector<1x64x256xbf16> to vector<64x256xbf16>
    %cst_88 = arith.constant dense<0.000000e+00> : vector<64x8xf32>
    %99 = tpu.matmul %98, %9, %cst_88 {dimension_numbers = #tpu.dot_dimension_numbers<[1], [0], [0], [1], [0, 0, 1, 1], [], []>} : vector<64x256xbf16>, vector<256x8xbf16>, vector<64x8xf32> -> vector<64x8xf32>
    %100 = arith.truncf %99 : vector<64x8xf32> to vector<64x8xbf16>
    %c11_89 = arith.constant 11 : index
    %c0_90 = arith.constant 0 : index
    %c0_91 = arith.constant 0 : index
    %101 = vector.load %arg5[%c11_89, %c0_90, %c0_91] : memref<16x8x16xbf16, #tpu.memory_space<vmem>>, vector<1x8x16xbf16>
    %102 = vector.shape_cast %101 : vector<1x8x16xbf16> to vector<8x16xbf16>
    %cst_92 = arith.constant dense<0.000000e+00> : vector<64x16xf32>
    %103 = tpu.matmul %100, %102, %cst_92 {dimension_numbers = #tpu.dot_dimension_numbers<[1], [0], [0], [1], [0, 0, 1, 1], [], []>} : vector<64x8xbf16>, vector<8x16xbf16>, vector<64x16xf32> -> vector<64x16xf32>
    %104 = arith.addf %96, %103 : vector<64x16xf32>
    %c12 = arith.constant 12 : index
    %c0_93 = arith.constant 0 : index
    %c0_94 = arith.constant 0 : index
    %105 = vector.load %arg4[%c12, %c0_93, %c0_94] : memref<16x64x256xbf16, #tpu.memory_space<vmem>>, vector<1x64x256xbf16>
    %106 = vector.shape_cast %105 : vector<1x64x256xbf16> to vector<64x256xbf16>
    %cst_95 = arith.constant dense<0.000000e+00> : vector<64x8xf32>
    %107 = tpu.matmul %106, %9, %cst_95 {dimension_numbers = #tpu.dot_dimension_numbers<[1], [0], [0], [1], [0, 0, 1, 1], [], []>} : vector<64x256xbf16>, vector<256x8xbf16>, vector<64x8xf32> -> vector<64x8xf32>
    %108 = arith.truncf %107 : vector<64x8xf32> to vector<64x8xbf16>
    %c12_96 = arith.constant 12 : index
    %c0_97 = arith.constant 0 : index
    %c0_98 = arith.constant 0 : index
    %109 = vector.load %arg5[%c12_96, %c0_97, %c0_98] : memref<16x8x16xbf16, #tpu.memory_space<vmem>>, vector<1x8x16xbf16>
    %110 = vector.shape_cast %109 : vector<1x8x16xbf16> to vector<8x16xbf16>
    %cst_99 = arith.constant dense<0.000000e+00> : vector<64x16xf32>
    %111 = tpu.matmul %108, %110, %cst_99 {dimension_numbers = #tpu.dot_dimension_numbers<[1], [0], [0], [1], [0, 0, 1, 1], [], []>} : vector<64x8xbf16>, vector<8x16xbf16>, vector<64x16xf32> -> vector<64x16xf32>
    %112 = arith.addf %104, %111 : vector<64x16xf32>
    %c13 = arith.constant 13 : index
    %c0_100 = arith.constant 0 : index
    %c0_101 = arith.constant 0 : index
    %113 = vector.load %arg4[%c13, %c0_100, %c0_101] : memref<16x64x256xbf16, #tpu.memory_space<vmem>>, vector<1x64x256xbf16>
    %114 = vector.shape_cast %113 : vector<1x64x256xbf16> to vector<64x256xbf16>
    %cst_102 = arith.constant dense<0.000000e+00> : vector<64x8xf32>
    %115 = tpu.matmul %114, %9, %cst_102 {dimension_numbers = #tpu.dot_dimension_numbers<[1], [0], [0], [1], [0, 0, 1, 1], [], []>} : vector<64x256xbf16>, vector<256x8xbf16>, vector<64x8xf32> -> vector<64x8xf32>
    %116 = arith.truncf %115 : vector<64x8xf32> to vector<64x8xbf16>
    %c13_103 = arith.constant 13 : index
    %c0_104 = arith.constant 0 : index
    %c0_105 = arith.constant 0 : index
    %117 = vector.load %arg5[%c13_103, %c0_104, %c0_105] : memref<16x8x16xbf16, #tpu.memory_space<vmem>>, vector<1x8x16xbf16>
    %118 = vector.shape_cast %117 : vector<1x8x16xbf16> to vector<8x16xbf16>
    %cst_106 = arith.constant dense<0.000000e+00> : vector<64x16xf32>
    %119 = tpu.matmul %116, %118, %cst_106 {dimension_numbers = #tpu.dot_dimension_numbers<[1], [0], [0], [1], [0, 0, 1, 1], [], []>} : vector<64x8xbf16>, vector<8x16xbf16>, vector<64x16xf32> -> vector<64x16xf32>
    %120 = arith.addf %112, %119 : vector<64x16xf32>
    %c14 = arith.constant 14 : index
    %c0_107 = arith.constant 0 : index
    %c0_108 = arith.constant 0 : index
    %121 = vector.load %arg4[%c14, %c0_107, %c0_108] : memref<16x64x256xbf16, #tpu.memory_space<vmem>>, vector<1x64x256xbf16>
    %122 = vector.shape_cast %121 : vector<1x64x256xbf16> to vector<64x256xbf16>
    %cst_109 = arith.constant dense<0.000000e+00> : vector<64x8xf32>
    %123 = tpu.matmul %122, %9, %cst_109 {dimension_numbers = #tpu.dot_dimension_numbers<[1], [0], [0], [1], [0, 0, 1, 1], [], []>} : vector<64x256xbf16>, vector<256x8xbf16>, vector<64x8xf32> -> vector<64x8xf32>
    %124 = arith.truncf %123 : vector<64x8xf32> to vector<64x8xbf16>
    %c14_110 = arith.constant 14 : index
    %c0_111 = arith.constant 0 : index
    %c0_112 = arith.constant 0 : index
    %125 = vector.load %arg5[%c14_110, %c0_111, %c0_112] : memref<16x8x16xbf16, #tpu.memory_space<vmem>>, vector<1x8x16xbf16>
    %126 = vector.shape_cast %125 : vector<1x8x16xbf16> to vector<8x16xbf16>
    %cst_113 = arith.constant dense<0.000000e+00> : vector<64x16xf32>
    %127 = tpu.matmul %124, %126, %cst_113 {dimension_numbers = #tpu.dot_dimension_numbers<[1], [0], [0], [1], [0, 0, 1, 1], [], []>} : vector<64x8xbf16>, vector<8x16xbf16>, vector<64x16xf32> -> vector<64x16xf32>
    %128 = arith.addf %120, %127 : vector<64x16xf32>
    %c15 = arith.constant 15 : index
    %c0_114 = arith.constant 0 : index
    %c0_115 = arith.constant 0 : index
    %129 = vector.load %arg4[%c15, %c0_114, %c0_115] : memref<16x64x256xbf16, #tpu.memory_space<vmem>>, vector<1x64x256xbf16>
    %130 = vector.shape_cast %129 : vector<1x64x256xbf16> to vector<64x256xbf16>
    %cst_116 = arith.constant dense<0.000000e+00> : vector<64x8xf32>
    %131 = tpu.matmul %130, %9, %cst_116 {dimension_numbers = #tpu.dot_dimension_numbers<[1], [0], [0], [1], [0, 0, 1, 1], [], []>} : vector<64x256xbf16>, vector<256x8xbf16>, vector<64x8xf32> -> vector<64x8xf32>
    %132 = arith.truncf %131 : vector<64x8xf32> to vector<64x8xbf16>
    %c15_117 = arith.constant 15 : index
    %c0_118 = arith.constant 0 : index
    %c0_119 = arith.constant 0 : index
    %133 = vector.load %arg5[%c15_117, %c0_118, %c0_119] : memref<16x8x16xbf16, #tpu.memory_space<vmem>>, vector<1x8x16xbf16>
    %134 = vector.shape_cast %133 : vector<1x8x16xbf16> to vector<8x16xbf16>
    %cst_120 = arith.constant dense<0.000000e+00> : vector<64x16xf32>
    %135 = tpu.matmul %132, %134, %cst_120 {dimension_numbers = #tpu.dot_dimension_numbers<[1], [0], [0], [1], [0, 0, 1, 1], [], []>} : vector<64x8xbf16>, vector<8x16xbf16>, vector<64x16xf32> -> vector<64x16xf32>
    %136 = arith.addf %128, %135 : vector<64x16xf32>
    %137 = vector.broadcast %8 : vector<1x16xf32> to vector<64x16xf32>
    %138 = arith.addf %136, %137 : vector<64x16xf32>
    %cst_121 = arith.constant 0.000000e+00 : f32
    %139 = vector.broadcast %cst_121 : f32 to vector<64x16xf32>
    %140 = arith.maximumf %138, %139 : vector<64x16xf32>
    %c0_122 = arith.constant 0 : index
    %c0_123 = arith.constant 0 : index
    %141 = vector.load %arg9[%c0_122, %c0_123] : memref<1x16xf32, #tpu.memory_space<vmem>>, vector<1x16xf32>
    %142 = arith.truncf %140 : vector<64x16xf32> to vector<64x16xbf16>
    %c0_124 = arith.constant 0 : index
    %c0_125 = arith.constant 0 : index
    %c0_126 = arith.constant 0 : index
    %143 = vector.load %arg7[%c0_124, %c0_125, %c0_126] : memref<9x64x64xbf16, #tpu.memory_space<vmem>>, vector<1x64x64xbf16>
    %144 = vector.shape_cast %143 : vector<1x64x64xbf16> to vector<64x64xbf16>
    %cst_127 = arith.constant dense<0.000000e+00> : vector<64x16xf32>
    %145 = tpu.matmul %144, %142, %cst_127 {dimension_numbers = #tpu.dot_dimension_numbers<[1], [0], [0], [1], [0, 0, 1, 1], [], []>} : vector<64x64xbf16>, vector<64x16xbf16>, vector<64x16xf32> -> vector<64x16xf32>
    %146 = arith.truncf %145 : vector<64x16xf32> to vector<64x16xbf16>
    %c0_128 = arith.constant 0 : index
    %c0_129 = arith.constant 0 : index
    %c0_130 = arith.constant 0 : index
    %147 = vector.load %arg8[%c0_128, %c0_129, %c0_130] : memref<9x16x16xbf16, #tpu.memory_space<vmem>>, vector<1x16x16xbf16>
    %148 = vector.shape_cast %147 : vector<1x16x16xbf16> to vector<16x16xbf16>
    %cst_131 = arith.constant dense<0.000000e+00> : vector<64x16xf32>
    %149 = tpu.matmul %146, %148, %cst_131 {dimension_numbers = #tpu.dot_dimension_numbers<[1], [0], [0], [1], [0, 0, 1, 1], [], []>} : vector<64x16xbf16>, vector<16x16xbf16>, vector<64x16xf32> -> vector<64x16xf32>
    %c1_132 = arith.constant 1 : index
    %c0_133 = arith.constant 0 : index
    %c0_134 = arith.constant 0 : index
    %150 = vector.load %arg7[%c1_132, %c0_133, %c0_134] : memref<9x64x64xbf16, #tpu.memory_space<vmem>>, vector<1x64x64xbf16>
    %151 = vector.shape_cast %150 : vector<1x64x64xbf16> to vector<64x64xbf16>
    %cst_135 = arith.constant dense<0.000000e+00> : vector<64x16xf32>
    %152 = tpu.matmul %151, %142, %cst_135 {dimension_numbers = #tpu.dot_dimension_numbers<[1], [0], [0], [1], [0, 0, 1, 1], [], []>} : vector<64x64xbf16>, vector<64x16xbf16>, vector<64x16xf32> -> vector<64x16xf32>
    %153 = arith.truncf %152 : vector<64x16xf32> to vector<64x16xbf16>
    %c1_136 = arith.constant 1 : index
    %c0_137 = arith.constant 0 : index
    %c0_138 = arith.constant 0 : index
    %154 = vector.load %arg8[%c1_136, %c0_137, %c0_138] : memref<9x16x16xbf16, #tpu.memory_space<vmem>>, vector<1x16x16xbf16>
    %155 = vector.shape_cast %154 : vector<1x16x16xbf16> to vector<16x16xbf16>
    %cst_139 = arith.constant dense<0.000000e+00> : vector<64x16xf32>
    %156 = tpu.matmul %153, %155, %cst_139 {dimension_numbers = #tpu.dot_dimension_numbers<[1], [0], [0], [1], [0, 0, 1, 1], [], []>} : vector<64x16xbf16>, vector<16x16xbf16>, vector<64x16xf32> -> vector<64x16xf32>
    %157 = arith.addf %149, %156 : vector<64x16xf32>
    %c2_140 = arith.constant 2 : index
    %c0_141 = arith.constant 0 : index
    %c0_142 = arith.constant 0 : index
    %158 = vector.load %arg7[%c2_140, %c0_141, %c0_142] : memref<9x64x64xbf16, #tpu.memory_space<vmem>>, vector<1x64x64xbf16>
    %159 = vector.shape_cast %158 : vector<1x64x64xbf16> to vector<64x64xbf16>
    %cst_143 = arith.constant dense<0.000000e+00> : vector<64x16xf32>
    %160 = tpu.matmul %159, %142, %cst_143 {dimension_numbers = #tpu.dot_dimension_numbers<[1], [0], [0], [1], [0, 0, 1, 1], [], []>} : vector<64x64xbf16>, vector<64x16xbf16>, vector<64x16xf32> -> vector<64x16xf32>
    %161 = arith.truncf %160 : vector<64x16xf32> to vector<64x16xbf16>
    %c2_144 = arith.constant 2 : index
    %c0_145 = arith.constant 0 : index
    %c0_146 = arith.constant 0 : index
    %162 = vector.load %arg8[%c2_144, %c0_145, %c0_146] : memref<9x16x16xbf16, #tpu.memory_space<vmem>>, vector<1x16x16xbf16>
    %163 = vector.shape_cast %162 : vector<1x16x16xbf16> to vector<16x16xbf16>
    %cst_147 = arith.constant dense<0.000000e+00> : vector<64x16xf32>
    %164 = tpu.matmul %161, %163, %cst_147 {dimension_numbers = #tpu.dot_dimension_numbers<[1], [0], [0], [1], [0, 0, 1, 1], [], []>} : vector<64x16xbf16>, vector<16x16xbf16>, vector<64x16xf32> -> vector<64x16xf32>
    %165 = arith.addf %157, %164 : vector<64x16xf32>
    %c3_148 = arith.constant 3 : index
    %c0_149 = arith.constant 0 : index
    %c0_150 = arith.constant 0 : index
    %166 = vector.load %arg7[%c3_148, %c0_149, %c0_150] : memref<9x64x64xbf16, #tpu.memory_space<vmem>>, vector<1x64x64xbf16>
    %167 = vector.shape_cast %166 : vector<1x64x64xbf16> to vector<64x64xbf16>
    %cst_151 = arith.constant dense<0.000000e+00> : vector<64x16xf32>
    %168 = tpu.matmul %167, %142, %cst_151 {dimension_numbers = #tpu.dot_dimension_numbers<[1], [0], [0], [1], [0, 0, 1, 1], [], []>} : vector<64x64xbf16>, vector<64x16xbf16>, vector<64x16xf32> -> vector<64x16xf32>
    %169 = arith.truncf %168 : vector<64x16xf32> to vector<64x16xbf16>
    %c3_152 = arith.constant 3 : index
    %c0_153 = arith.constant 0 : index
    %c0_154 = arith.constant 0 : index
    %170 = vector.load %arg8[%c3_152, %c0_153, %c0_154] : memref<9x16x16xbf16, #tpu.memory_space<vmem>>, vector<1x16x16xbf16>
    %171 = vector.shape_cast %170 : vector<1x16x16xbf16> to vector<16x16xbf16>
    %cst_155 = arith.constant dense<0.000000e+00> : vector<64x16xf32>
    %172 = tpu.matmul %169, %171, %cst_155 {dimension_numbers = #tpu.dot_dimension_numbers<[1], [0], [0], [1], [0, 0, 1, 1], [], []>} : vector<64x16xbf16>, vector<16x16xbf16>, vector<64x16xf32> -> vector<64x16xf32>
    %173 = arith.addf %165, %172 : vector<64x16xf32>
    %c4_156 = arith.constant 4 : index
    %c0_157 = arith.constant 0 : index
    %c0_158 = arith.constant 0 : index
    %174 = vector.load %arg7[%c4_156, %c0_157, %c0_158] : memref<9x64x64xbf16, #tpu.memory_space<vmem>>, vector<1x64x64xbf16>
    %175 = vector.shape_cast %174 : vector<1x64x64xbf16> to vector<64x64xbf16>
    %cst_159 = arith.constant dense<0.000000e+00> : vector<64x16xf32>
    %176 = tpu.matmul %175, %142, %cst_159 {dimension_numbers = #tpu.dot_dimension_numbers<[1], [0], [0], [1], [0, 0, 1, 1], [], []>} : vector<64x64xbf16>, vector<64x16xbf16>, vector<64x16xf32> -> vector<64x16xf32>
    %177 = arith.truncf %176 : vector<64x16xf32> to vector<64x16xbf16>
    %c4_160 = arith.constant 4 : index
    %c0_161 = arith.constant 0 : index
    %c0_162 = arith.constant 0 : index
    %178 = vector.load %arg8[%c4_160, %c0_161, %c0_162] : memref<9x16x16xbf16, #tpu.memory_space<vmem>>, vector<1x16x16xbf16>
    %179 = vector.shape_cast %178 : vector<1x16x16xbf16> to vector<16x16xbf16>
    %cst_163 = arith.constant dense<0.000000e+00> : vector<64x16xf32>
    %180 = tpu.matmul %177, %179, %cst_163 {dimension_numbers = #tpu.dot_dimension_numbers<[1], [0], [0], [1], [0, 0, 1, 1], [], []>} : vector<64x16xbf16>, vector<16x16xbf16>, vector<64x16xf32> -> vector<64x16xf32>
    %181 = arith.addf %173, %180 : vector<64x16xf32>
    %c5_164 = arith.constant 5 : index
    %c0_165 = arith.constant 0 : index
    %c0_166 = arith.constant 0 : index
    %182 = vector.load %arg7[%c5_164, %c0_165, %c0_166] : memref<9x64x64xbf16, #tpu.memory_space<vmem>>, vector<1x64x64xbf16>
    %183 = vector.shape_cast %182 : vector<1x64x64xbf16> to vector<64x64xbf16>
    %cst_167 = arith.constant dense<0.000000e+00> : vector<64x16xf32>
    %184 = tpu.matmul %183, %142, %cst_167 {dimension_numbers = #tpu.dot_dimension_numbers<[1], [0], [0], [1], [0, 0, 1, 1], [], []>} : vector<64x64xbf16>, vector<64x16xbf16>, vector<64x16xf32> -> vector<64x16xf32>
    %185 = arith.truncf %184 : vector<64x16xf32> to vector<64x16xbf16>
    %c5_168 = arith.constant 5 : index
    %c0_169 = arith.constant 0 : index
    %c0_170 = arith.constant 0 : index
    %186 = vector.load %arg8[%c5_168, %c0_169, %c0_170] : memref<9x16x16xbf16, #tpu.memory_space<vmem>>, vector<1x16x16xbf16>
    %187 = vector.shape_cast %186 : vector<1x16x16xbf16> to vector<16x16xbf16>
    %cst_171 = arith.constant dense<0.000000e+00> : vector<64x16xf32>
    %188 = tpu.matmul %185, %187, %cst_171 {dimension_numbers = #tpu.dot_dimension_numbers<[1], [0], [0], [1], [0, 0, 1, 1], [], []>} : vector<64x16xbf16>, vector<16x16xbf16>, vector<64x16xf32> -> vector<64x16xf32>
    %189 = arith.addf %181, %188 : vector<64x16xf32>
    %c6_172 = arith.constant 6 : index
    %c0_173 = arith.constant 0 : index
    %c0_174 = arith.constant 0 : index
    %190 = vector.load %arg7[%c6_172, %c0_173, %c0_174] : memref<9x64x64xbf16, #tpu.memory_space<vmem>>, vector<1x64x64xbf16>
    %191 = vector.shape_cast %190 : vector<1x64x64xbf16> to vector<64x64xbf16>
    %cst_175 = arith.constant dense<0.000000e+00> : vector<64x16xf32>
    %192 = tpu.matmul %191, %142, %cst_175 {dimension_numbers = #tpu.dot_dimension_numbers<[1], [0], [0], [1], [0, 0, 1, 1], [], []>} : vector<64x64xbf16>, vector<64x16xbf16>, vector<64x16xf32> -> vector<64x16xf32>
    %193 = arith.truncf %192 : vector<64x16xf32> to vector<64x16xbf16>
    %c6_176 = arith.constant 6 : index
    %c0_177 = arith.constant 0 : index
    %c0_178 = arith.constant 0 : index
    %194 = vector.load %arg8[%c6_176, %c0_177, %c0_178] : memref<9x16x16xbf16, #tpu.memory_space<vmem>>, vector<1x16x16xbf16>
    %195 = vector.shape_cast %194 : vector<1x16x16xbf16> to vector<16x16xbf16>
    %cst_179 = arith.constant dense<0.000000e+00> : vector<64x16xf32>
    %196 = tpu.matmul %193, %195, %cst_179 {dimension_numbers = #tpu.dot_dimension_numbers<[1], [0], [0], [1], [0, 0, 1, 1], [], []>} : vector<64x16xbf16>, vector<16x16xbf16>, vector<64x16xf32> -> vector<64x16xf32>
    %197 = arith.addf %189, %196 : vector<64x16xf32>
    %c7_180 = arith.constant 7 : index
    %c0_181 = arith.constant 0 : index
    %c0_182 = arith.constant 0 : index
    %198 = vector.load %arg7[%c7_180, %c0_181, %c0_182] : memref<9x64x64xbf16, #tpu.memory_space<vmem>>, vector<1x64x64xbf16>
    %199 = vector.shape_cast %198 : vector<1x64x64xbf16> to vector<64x64xbf16>
    %cst_183 = arith.constant dense<0.000000e+00> : vector<64x16xf32>
    %200 = tpu.matmul %199, %142, %cst_183 {dimension_numbers = #tpu.dot_dimension_numbers<[1], [0], [0], [1], [0, 0, 1, 1], [], []>} : vector<64x64xbf16>, vector<64x16xbf16>, vector<64x16xf32> -> vector<64x16xf32>
    %201 = arith.truncf %200 : vector<64x16xf32> to vector<64x16xbf16>
    %c7_184 = arith.constant 7 : index
    %c0_185 = arith.constant 0 : index
    %c0_186 = arith.constant 0 : index
    %202 = vector.load %arg8[%c7_184, %c0_185, %c0_186] : memref<9x16x16xbf16, #tpu.memory_space<vmem>>, vector<1x16x16xbf16>
    %203 = vector.shape_cast %202 : vector<1x16x16xbf16> to vector<16x16xbf16>
    %cst_187 = arith.constant dense<0.000000e+00> : vector<64x16xf32>
    %204 = tpu.matmul %201, %203, %cst_187 {dimension_numbers = #tpu.dot_dimension_numbers<[1], [0], [0], [1], [0, 0, 1, 1], [], []>} : vector<64x16xbf16>, vector<16x16xbf16>, vector<64x16xf32> -> vector<64x16xf32>
    %205 = arith.addf %197, %204 : vector<64x16xf32>
    %c8_188 = arith.constant 8 : index
    %c0_189 = arith.constant 0 : index
    %c0_190 = arith.constant 0 : index
    %206 = vector.load %arg7[%c8_188, %c0_189, %c0_190] : memref<9x64x64xbf16, #tpu.memory_space<vmem>>, vector<1x64x64xbf16>
    %207 = vector.shape_cast %206 : vector<1x64x64xbf16> to vector<64x64xbf16>
    %cst_191 = arith.constant dense<0.000000e+00> : vector<64x16xf32>
    %208 = tpu.matmul %207, %142, %cst_191 {dimension_numbers = #tpu.dot_dimension_numbers<[1], [0], [0], [1], [0, 0, 1, 1], [], []>} : vector<64x64xbf16>, vector<64x16xbf16>, vector<64x16xf32> -> vector<64x16xf32>
    %209 = arith.truncf %208 : vector<64x16xf32> to vector<64x16xbf16>
    %c8_192 = arith.constant 8 : index
    %c0_193 = arith.constant 0 : index
    %c0_194 = arith.constant 0 : index
    %210 = vector.load %arg8[%c8_192, %c0_193, %c0_194] : memref<9x16x16xbf16, #tpu.memory_space<vmem>>, vector<1x16x16xbf16>
    %211 = vector.shape_cast %210 : vector<1x16x16xbf16> to vector<16x16xbf16>
    %cst_195 = arith.constant dense<0.000000e+00> : vector<64x16xf32>
    %212 = tpu.matmul %209, %211, %cst_195 {dimension_numbers = #tpu.dot_dimension_numbers<[1], [0], [0], [1], [0, 0, 1, 1], [], []>} : vector<64x16xbf16>, vector<16x16xbf16>, vector<64x16xf32> -> vector<64x16xf32>
    %213 = arith.addf %205, %212 : vector<64x16xf32>
    %214 = vector.broadcast %141 : vector<1x16xf32> to vector<64x16xf32>
    %215 = arith.addf %213, %214 : vector<64x16xf32>
    %cst_196 = arith.constant 0.000000e+00 : f32
    %216 = vector.broadcast %cst_196 : f32 to vector<64x16xf32>
    %217 = arith.maximumf %215, %216 : vector<64x16xf32>
    %218 = arith.truncf %217 : vector<64x16xf32> to vector<64x16xbf16>
    %c0_197 = arith.constant 0 : index
    %c0_198 = arith.constant 0 : index
    %c0_199 = arith.constant 0 : index
    %219 = vector.load %arg7[%c0_197, %c0_198, %c0_199] : memref<9x64x64xbf16, #tpu.memory_space<vmem>>, vector<1x64x64xbf16>
    %220 = vector.shape_cast %219 : vector<1x64x64xbf16> to vector<64x64xbf16>
    %cst_200 = arith.constant dense<0.000000e+00> : vector<64x16xf32>
    %221 = tpu.matmul %220, %218, %cst_200 {dimension_numbers = #tpu.dot_dimension_numbers<[1], [0], [0], [1], [0, 0, 1, 1], [], []>} : vector<64x64xbf16>, vector<64x16xbf16>, vector<64x16xf32> -> vector<64x16xf32>
    %222 = arith.truncf %221 : vector<64x16xf32> to vector<64x16xbf16>
    %c0_201 = arith.constant 0 : index
    %c0_202 = arith.constant 0 : index
    %c0_203 = arith.constant 0 : index
    %c0_204 = arith.constant 0 : index
    %223 = vector.load %arg10[%c0_201, %c0_202, %c0_203, %c0_204] : memref<2x9x16x8xbf16, #tpu.memory_space<vmem>>, vector<1x1x16x8xbf16>
    %224 = vector.shape_cast %223 : vector<1x1x16x8xbf16> to vector<16x8xbf16>
    %cst_205 = arith.constant dense<0.000000e+00> : vector<64x8xf32>
    %225 = tpu.matmul %222, %224, %cst_205 {dimension_numbers = #tpu.dot_dimension_numbers<[1], [0], [0], [1], [0, 0, 1, 1], [], []>} : vector<64x16xbf16>, vector<16x8xbf16>, vector<64x8xf32> -> vector<64x8xf32>
    %c1_206 = arith.constant 1 : index
    %c0_207 = arith.constant 0 : index
    %c0_208 = arith.constant 0 : index
    %226 = vector.load %arg7[%c1_206, %c0_207, %c0_208] : memref<9x64x64xbf16, #tpu.memory_space<vmem>>, vector<1x64x64xbf16>
    %227 = vector.shape_cast %226 : vector<1x64x64xbf16> to vector<64x64xbf16>
    %cst_209 = arith.constant dense<0.000000e+00> : vector<64x16xf32>
    %228 = tpu.matmul %227, %218, %cst_209 {dimension_numbers = #tpu.dot_dimension_numbers<[1], [0], [0], [1], [0, 0, 1, 1], [], []>} : vector<64x64xbf16>, vector<64x16xbf16>, vector<64x16xf32> -> vector<64x16xf32>
    %229 = arith.truncf %228 : vector<64x16xf32> to vector<64x16xbf16>
    %c0_210 = arith.constant 0 : index
    %c1_211 = arith.constant 1 : index
    %c0_212 = arith.constant 0 : index
    %c0_213 = arith.constant 0 : index
    %230 = vector.load %arg10[%c0_210, %c1_211, %c0_212, %c0_213] : memref<2x9x16x8xbf16, #tpu.memory_space<vmem>>, vector<1x1x16x8xbf16>
    %231 = vector.shape_cast %230 : vector<1x1x16x8xbf16> to vector<16x8xbf16>
    %cst_214 = arith.constant dense<0.000000e+00> : vector<64x8xf32>
    %232 = tpu.matmul %229, %231, %cst_214 {dimension_numbers = #tpu.dot_dimension_numbers<[1], [0], [0], [1], [0, 0, 1, 1], [], []>} : vector<64x16xbf16>, vector<16x8xbf16>, vector<64x8xf32> -> vector<64x8xf32>
    %233 = arith.addf %225, %232 : vector<64x8xf32>
    %c2_215 = arith.constant 2 : index
    %c0_216 = arith.constant 0 : index
    %c0_217 = arith.constant 0 : index
    %234 = vector.load %arg7[%c2_215, %c0_216, %c0_217] : memref<9x64x64xbf16, #tpu.memory_space<vmem>>, vector<1x64x64xbf16>
    %235 = vector.shape_cast %234 : vector<1x64x64xbf16> to vector<64x64xbf16>
    %cst_218 = arith.constant dense<0.000000e+00> : vector<64x16xf32>
    %236 = tpu.matmul %235, %218, %cst_218 {dimension_numbers = #tpu.dot_dimension_numbers<[1], [0], [0], [1], [0, 0, 1, 1], [], []>} : vector<64x64xbf16>, vector<64x16xbf16>, vector<64x16xf32> -> vector<64x16xf32>
    %237 = arith.truncf %236 : vector<64x16xf32> to vector<64x16xbf16>
    %c0_219 = arith.constant 0 : index
    %c2_220 = arith.constant 2 : index
    %c0_221 = arith.constant 0 : index
    %c0_222 = arith.constant 0 : index
    %238 = vector.load %arg10[%c0_219, %c2_220, %c0_221, %c0_222] : memref<2x9x16x8xbf16, #tpu.memory_space<vmem>>, vector<1x1x16x8xbf16>
    %239 = vector.shape_cast %238 : vector<1x1x16x8xbf16> to vector<16x8xbf16>
    %cst_223 = arith.constant dense<0.000000e+00> : vector<64x8xf32>
    %240 = tpu.matmul %237, %239, %cst_223 {dimension_numbers = #tpu.dot_dimension_numbers<[1], [0], [0], [1], [0, 0, 1, 1], [], []>} : vector<64x16xbf16>, vector<16x8xbf16>, vector<64x8xf32> -> vector<64x8xf32>
    %241 = arith.addf %233, %240 : vector<64x8xf32>
    %c3_224 = arith.constant 3 : index
    %c0_225 = arith.constant 0 : index
    %c0_226 = arith.constant 0 : index
    %242 = vector.load %arg7[%c3_224, %c0_225, %c0_226] : memref<9x64x64xbf16, #tpu.memory_space<vmem>>, vector<1x64x64xbf16>
    %243 = vector.shape_cast %242 : vector<1x64x64xbf16> to vector<64x64xbf16>
    %cst_227 = arith.constant dense<0.000000e+00> : vector<64x16xf32>
    %244 = tpu.matmul %243, %218, %cst_227 {dimension_numbers = #tpu.dot_dimension_numbers<[1], [0], [0], [1], [0, 0, 1, 1], [], []>} : vector<64x64xbf16>, vector<64x16xbf16>, vector<64x16xf32> -> vector<64x16xf32>
    %245 = arith.truncf %244 : vector<64x16xf32> to vector<64x16xbf16>
    %c0_228 = arith.constant 0 : index
    %c3_229 = arith.constant 3 : index
    %c0_230 = arith.constant 0 : index
    %c0_231 = arith.constant 0 : index
    %246 = vector.load %arg10[%c0_228, %c3_229, %c0_230, %c0_231] : memref<2x9x16x8xbf16, #tpu.memory_space<vmem>>, vector<1x1x16x8xbf16>
    %247 = vector.shape_cast %246 : vector<1x1x16x8xbf16> to vector<16x8xbf16>
    %cst_232 = arith.constant dense<0.000000e+00> : vector<64x8xf32>
    %248 = tpu.matmul %245, %247, %cst_232 {dimension_numbers = #tpu.dot_dimension_numbers<[1], [0], [0], [1], [0, 0, 1, 1], [], []>} : vector<64x16xbf16>, vector<16x8xbf16>, vector<64x8xf32> -> vector<64x8xf32>
    %249 = arith.addf %241, %248 : vector<64x8xf32>
    %c4_233 = arith.constant 4 : index
    %c0_234 = arith.constant 0 : index
    %c0_235 = arith.constant 0 : index
    %250 = vector.load %arg7[%c4_233, %c0_234, %c0_235] : memref<9x64x64xbf16, #tpu.memory_space<vmem>>, vector<1x64x64xbf16>
    %251 = vector.shape_cast %250 : vector<1x64x64xbf16> to vector<64x64xbf16>
    %cst_236 = arith.constant dense<0.000000e+00> : vector<64x16xf32>
    %252 = tpu.matmul %251, %218, %cst_236 {dimension_numbers = #tpu.dot_dimension_numbers<[1], [0], [0], [1], [0, 0, 1, 1], [], []>} : vector<64x64xbf16>, vector<64x16xbf16>, vector<64x16xf32> -> vector<64x16xf32>
    %253 = arith.truncf %252 : vector<64x16xf32> to vector<64x16xbf16>
    %c0_237 = arith.constant 0 : index
    %c4_238 = arith.constant 4 : index
    %c0_239 = arith.constant 0 : index
    %c0_240 = arith.constant 0 : index
    %254 = vector.load %arg10[%c0_237, %c4_238, %c0_239, %c0_240] : memref<2x9x16x8xbf16, #tpu.memory_space<vmem>>, vector<1x1x16x8xbf16>
    %255 = vector.shape_cast %254 : vector<1x1x16x8xbf16> to vector<16x8xbf16>
    %cst_241 = arith.constant dense<0.000000e+00> : vector<64x8xf32>
    %256 = tpu.matmul %253, %255, %cst_241 {dimension_numbers = #tpu.dot_dimension_numbers<[1], [0], [0], [1], [0, 0, 1, 1], [], []>} : vector<64x16xbf16>, vector<16x8xbf16>, vector<64x8xf32> -> vector<64x8xf32>
    %257 = arith.addf %249, %256 : vector<64x8xf32>
    %c5_242 = arith.constant 5 : index
    %c0_243 = arith.constant 0 : index
    %c0_244 = arith.constant 0 : index
    %258 = vector.load %arg7[%c5_242, %c0_243, %c0_244] : memref<9x64x64xbf16, #tpu.memory_space<vmem>>, vector<1x64x64xbf16>
    %259 = vector.shape_cast %258 : vector<1x64x64xbf16> to vector<64x64xbf16>
    %cst_245 = arith.constant dense<0.000000e+00> : vector<64x16xf32>
    %260 = tpu.matmul %259, %218, %cst_245 {dimension_numbers = #tpu.dot_dimension_numbers<[1], [0], [0], [1], [0, 0, 1, 1], [], []>} : vector<64x64xbf16>, vector<64x16xbf16>, vector<64x16xf32> -> vector<64x16xf32>
    %261 = arith.truncf %260 : vector<64x16xf32> to vector<64x16xbf16>
    %c0_246 = arith.constant 0 : index
    %c5_247 = arith.constant 5 : index
    %c0_248 = arith.constant 0 : index
    %c0_249 = arith.constant 0 : index
    %262 = vector.load %arg10[%c0_246, %c5_247, %c0_248, %c0_249] : memref<2x9x16x8xbf16, #tpu.memory_space<vmem>>, vector<1x1x16x8xbf16>
    %263 = vector.shape_cast %262 : vector<1x1x16x8xbf16> to vector<16x8xbf16>
    %cst_250 = arith.constant dense<0.000000e+00> : vector<64x8xf32>
    %264 = tpu.matmul %261, %263, %cst_250 {dimension_numbers = #tpu.dot_dimension_numbers<[1], [0], [0], [1], [0, 0, 1, 1], [], []>} : vector<64x16xbf16>, vector<16x8xbf16>, vector<64x8xf32> -> vector<64x8xf32>
    %265 = arith.addf %257, %264 : vector<64x8xf32>
    %c6_251 = arith.constant 6 : index
    %c0_252 = arith.constant 0 : index
    %c0_253 = arith.constant 0 : index
    %266 = vector.load %arg7[%c6_251, %c0_252, %c0_253] : memref<9x64x64xbf16, #tpu.memory_space<vmem>>, vector<1x64x64xbf16>
    %267 = vector.shape_cast %266 : vector<1x64x64xbf16> to vector<64x64xbf16>
    %cst_254 = arith.constant dense<0.000000e+00> : vector<64x16xf32>
    %268 = tpu.matmul %267, %218, %cst_254 {dimension_numbers = #tpu.dot_dimension_numbers<[1], [0], [0], [1], [0, 0, 1, 1], [], []>} : vector<64x64xbf16>, vector<64x16xbf16>, vector<64x16xf32> -> vector<64x16xf32>
    %269 = arith.truncf %268 : vector<64x16xf32> to vector<64x16xbf16>
    %c0_255 = arith.constant 0 : index
    %c6_256 = arith.constant 6 : index
    %c0_257 = arith.constant 0 : index
    %c0_258 = arith.constant 0 : index
    %270 = vector.load %arg10[%c0_255, %c6_256, %c0_257, %c0_258] : memref<2x9x16x8xbf16, #tpu.memory_space<vmem>>, vector<1x1x16x8xbf16>
    %271 = vector.shape_cast %270 : vector<1x1x16x8xbf16> to vector<16x8xbf16>
    %cst_259 = arith.constant dense<0.000000e+00> : vector<64x8xf32>
    %272 = tpu.matmul %269, %271, %cst_259 {dimension_numbers = #tpu.dot_dimension_numbers<[1], [0], [0], [1], [0, 0, 1, 1], [], []>} : vector<64x16xbf16>, vector<16x8xbf16>, vector<64x8xf32> -> vector<64x8xf32>
    %273 = arith.addf %265, %272 : vector<64x8xf32>
    %c7_260 = arith.constant 7 : index
    %c0_261 = arith.constant 0 : index
    %c0_262 = arith.constant 0 : index
    %274 = vector.load %arg7[%c7_260, %c0_261, %c0_262] : memref<9x64x64xbf16, #tpu.memory_space<vmem>>, vector<1x64x64xbf16>
    %275 = vector.shape_cast %274 : vector<1x64x64xbf16> to vector<64x64xbf16>
    %cst_263 = arith.constant dense<0.000000e+00> : vector<64x16xf32>
    %276 = tpu.matmul %275, %218, %cst_263 {dimension_numbers = #tpu.dot_dimension_numbers<[1], [0], [0], [1], [0, 0, 1, 1], [], []>} : vector<64x64xbf16>, vector<64x16xbf16>, vector<64x16xf32> -> vector<64x16xf32>
    %277 = arith.truncf %276 : vector<64x16xf32> to vector<64x16xbf16>
    %c0_264 = arith.constant 0 : index
    %c7_265 = arith.constant 7 : index
    %c0_266 = arith.constant 0 : index
    %c0_267 = arith.constant 0 : index
    %278 = vector.load %arg10[%c0_264, %c7_265, %c0_266, %c0_267] : memref<2x9x16x8xbf16, #tpu.memory_space<vmem>>, vector<1x1x16x8xbf16>
    %279 = vector.shape_cast %278 : vector<1x1x16x8xbf16> to vector<16x8xbf16>
    %cst_268 = arith.constant dense<0.000000e+00> : vector<64x8xf32>
    %280 = tpu.matmul %277, %279, %cst_268 {dimension_numbers = #tpu.dot_dimension_numbers<[1], [0], [0], [1], [0, 0, 1, 1], [], []>} : vector<64x16xbf16>, vector<16x8xbf16>, vector<64x8xf32> -> vector<64x8xf32>
    %281 = arith.addf %273, %280 : vector<64x8xf32>
    %c8_269 = arith.constant 8 : index
    %c0_270 = arith.constant 0 : index
    %c0_271 = arith.constant 0 : index
    %282 = vector.load %arg7[%c8_269, %c0_270, %c0_271] : memref<9x64x64xbf16, #tpu.memory_space<vmem>>, vector<1x64x64xbf16>
    %283 = vector.shape_cast %282 : vector<1x64x64xbf16> to vector<64x64xbf16>
    %cst_272 = arith.constant dense<0.000000e+00> : vector<64x16xf32>
    %284 = tpu.matmul %283, %218, %cst_272 {dimension_numbers = #tpu.dot_dimension_numbers<[1], [0], [0], [1], [0, 0, 1, 1], [], []>} : vector<64x64xbf16>, vector<64x16xbf16>, vector<64x16xf32> -> vector<64x16xf32>
    %285 = arith.truncf %284 : vector<64x16xf32> to vector<64x16xbf16>
    %c0_273 = arith.constant 0 : index
    %c8_274 = arith.constant 8 : index
    %c0_275 = arith.constant 0 : index
    %c0_276 = arith.constant 0 : index
    %286 = vector.load %arg10[%c0_273, %c8_274, %c0_275, %c0_276] : memref<2x9x16x8xbf16, #tpu.memory_space<vmem>>, vector<1x1x16x8xbf16>
    %287 = vector.shape_cast %286 : vector<1x1x16x8xbf16> to vector<16x8xbf16>
    %cst_277 = arith.constant dense<0.000000e+00> : vector<64x8xf32>
    %288 = tpu.matmul %285, %287, %cst_277 {dimension_numbers = #tpu.dot_dimension_numbers<[1], [0], [0], [1], [0, 0, 1, 1], [], []>} : vector<64x16xbf16>, vector<16x8xbf16>, vector<64x8xf32> -> vector<64x8xf32>
    %289 = arith.addf %281, %288 : vector<64x8xf32>
    %cst_278 = arith.constant 0.000000e+00 : f32
    %290 = vector.broadcast %cst_278 : f32 to vector<64x8xf32>
    %291 = arith.maximumf %289, %290 : vector<64x8xf32>
    %292 = arith.truncf %291 : vector<64x8xf32> to vector<64x8xbf16>
    %c0_279 = arith.constant 0 : index
    %c0_280 = arith.constant 0 : index
    %c0_281 = arith.constant 0 : index
    %293 = vector.load %arg11[%c0_279, %c0_280, %c0_281] : memref<2x8x16xbf16, #tpu.memory_space<vmem>>, vector<1x8x16xbf16>
    %294 = vector.shape_cast %293 : vector<1x8x16xbf16> to vector<8x16xbf16>
    %cst_282 = arith.constant dense<0.000000e+00> : vector<64x16xf32>
    %295 = tpu.matmul %292, %294, %cst_282 {dimension_numbers = #tpu.dot_dimension_numbers<[1], [0], [0], [1], [0, 0, 1, 1], [], []>} : vector<64x8xbf16>, vector<8x16xbf16>, vector<64x16xf32> -> vector<64x16xf32>
    %296 = arith.addf %215, %295 : vector<64x16xf32>
    %cst_283 = arith.constant 0.000000e+00 : f32
    %297 = vector.broadcast %cst_283 : f32 to vector<64x16xf32>
    %298 = arith.maximumf %296, %297 : vector<64x16xf32>
    %299 = arith.truncf %298 : vector<64x16xf32> to vector<64x16xbf16>
    %c0_284 = arith.constant 0 : index
    %c0_285 = arith.constant 0 : index
    %c0_286 = arith.constant 0 : index
    %300 = vector.load %arg7[%c0_284, %c0_285, %c0_286] : memref<9x64x64xbf16, #tpu.memory_space<vmem>>, vector<1x64x64xbf16>
    %301 = vector.shape_cast %300 : vector<1x64x64xbf16> to vector<64x64xbf16>
    %cst_287 = arith.constant dense<0.000000e+00> : vector<64x16xf32>
    %302 = tpu.matmul %301, %299, %cst_287 {dimension_numbers = #tpu.dot_dimension_numbers<[1], [0], [0], [1], [0, 0, 1, 1], [], []>} : vector<64x64xbf16>, vector<64x16xbf16>, vector<64x16xf32> -> vector<64x16xf32>
    %303 = arith.truncf %302 : vector<64x16xf32> to vector<64x16xbf16>
    %c1_288 = arith.constant 1 : index
    %c0_289 = arith.constant 0 : index
    %c0_290 = arith.constant 0 : index
    %c0_291 = arith.constant 0 : index
    %304 = vector.load %arg10[%c1_288, %c0_289, %c0_290, %c0_291] : memref<2x9x16x8xbf16, #tpu.memory_space<vmem>>, vector<1x1x16x8xbf16>
    %305 = vector.shape_cast %304 : vector<1x1x16x8xbf16> to vector<16x8xbf16>
    %cst_292 = arith.constant dense<0.000000e+00> : vector<64x8xf32>
    %306 = tpu.matmul %303, %305, %cst_292 {dimension_numbers = #tpu.dot_dimension_numbers<[1], [0], [0], [1], [0, 0, 1, 1], [], []>} : vector<64x16xbf16>, vector<16x8xbf16>, vector<64x8xf32> -> vector<64x8xf32>
    %c1_293 = arith.constant 1 : index
    %c0_294 = arith.constant 0 : index
    %c0_295 = arith.constant 0 : index
    %307 = vector.load %arg7[%c1_293, %c0_294, %c0_295] : memref<9x64x64xbf16, #tpu.memory_space<vmem>>, vector<1x64x64xbf16>
    %308 = vector.shape_cast %307 : vector<1x64x64xbf16> to vector<64x64xbf16>
    %cst_296 = arith.constant dense<0.000000e+00> : vector<64x16xf32>
    %309 = tpu.matmul %308, %299, %cst_296 {dimension_numbers = #tpu.dot_dimension_numbers<[1], [0], [0], [1], [0, 0, 1, 1], [], []>} : vector<64x64xbf16>, vector<64x16xbf16>, vector<64x16xf32> -> vector<64x16xf32>
    %310 = arith.truncf %309 : vector<64x16xf32> to vector<64x16xbf16>
    %c1_297 = arith.constant 1 : index
    %c1_298 = arith.constant 1 : index
    %c0_299 = arith.constant 0 : index
    %c0_300 = arith.constant 0 : index
    %311 = vector.load %arg10[%c1_297, %c1_298, %c0_299, %c0_300] : memref<2x9x16x8xbf16, #tpu.memory_space<vmem>>, vector<1x1x16x8xbf16>
    %312 = vector.shape_cast %311 : vector<1x1x16x8xbf16> to vector<16x8xbf16>
    %cst_301 = arith.constant dense<0.000000e+00> : vector<64x8xf32>
    %313 = tpu.matmul %310, %312, %cst_301 {dimension_numbers = #tpu.dot_dimension_numbers<[1], [0], [0], [1], [0, 0, 1, 1], [], []>} : vector<64x16xbf16>, vector<16x8xbf16>, vector<64x8xf32> -> vector<64x8xf32>
    %314 = arith.addf %306, %313 : vector<64x8xf32>
    %c2_302 = arith.constant 2 : index
    %c0_303 = arith.constant 0 : index
    %c0_304 = arith.constant 0 : index
    %315 = vector.load %arg7[%c2_302, %c0_303, %c0_304] : memref<9x64x64xbf16, #tpu.memory_space<vmem>>, vector<1x64x64xbf16>
    %316 = vector.shape_cast %315 : vector<1x64x64xbf16> to vector<64x64xbf16>
    %cst_305 = arith.constant dense<0.000000e+00> : vector<64x16xf32>
    %317 = tpu.matmul %316, %299, %cst_305 {dimension_numbers = #tpu.dot_dimension_numbers<[1], [0], [0], [1], [0, 0, 1, 1], [], []>} : vector<64x64xbf16>, vector<64x16xbf16>, vector<64x16xf32> -> vector<64x16xf32>
    %318 = arith.truncf %317 : vector<64x16xf32> to vector<64x16xbf16>
    %c1_306 = arith.constant 1 : index
    %c2_307 = arith.constant 2 : index
    %c0_308 = arith.constant 0 : index
    %c0_309 = arith.constant 0 : index
    %319 = vector.load %arg10[%c1_306, %c2_307, %c0_308, %c0_309] : memref<2x9x16x8xbf16, #tpu.memory_space<vmem>>, vector<1x1x16x8xbf16>
    %320 = vector.shape_cast %319 : vector<1x1x16x8xbf16> to vector<16x8xbf16>
    %cst_310 = arith.constant dense<0.000000e+00> : vector<64x8xf32>
    %321 = tpu.matmul %318, %320, %cst_310 {dimension_numbers = #tpu.dot_dimension_numbers<[1], [0], [0], [1], [0, 0, 1, 1], [], []>} : vector<64x16xbf16>, vector<16x8xbf16>, vector<64x8xf32> -> vector<64x8xf32>
    %322 = arith.addf %314, %321 : vector<64x8xf32>
    %c3_311 = arith.constant 3 : index
    %c0_312 = arith.constant 0 : index
    %c0_313 = arith.constant 0 : index
    %323 = vector.load %arg7[%c3_311, %c0_312, %c0_313] : memref<9x64x64xbf16, #tpu.memory_space<vmem>>, vector<1x64x64xbf16>
    %324 = vector.shape_cast %323 : vector<1x64x64xbf16> to vector<64x64xbf16>
    %cst_314 = arith.constant dense<0.000000e+00> : vector<64x16xf32>
    %325 = tpu.matmul %324, %299, %cst_314 {dimension_numbers = #tpu.dot_dimension_numbers<[1], [0], [0], [1], [0, 0, 1, 1], [], []>} : vector<64x64xbf16>, vector<64x16xbf16>, vector<64x16xf32> -> vector<64x16xf32>
    %326 = arith.truncf %325 : vector<64x16xf32> to vector<64x16xbf16>
    %c1_315 = arith.constant 1 : index
    %c3_316 = arith.constant 3 : index
    %c0_317 = arith.constant 0 : index
    %c0_318 = arith.constant 0 : index
    %327 = vector.load %arg10[%c1_315, %c3_316, %c0_317, %c0_318] : memref<2x9x16x8xbf16, #tpu.memory_space<vmem>>, vector<1x1x16x8xbf16>
    %328 = vector.shape_cast %327 : vector<1x1x16x8xbf16> to vector<16x8xbf16>
    %cst_319 = arith.constant dense<0.000000e+00> : vector<64x8xf32>
    %329 = tpu.matmul %326, %328, %cst_319 {dimension_numbers = #tpu.dot_dimension_numbers<[1], [0], [0], [1], [0, 0, 1, 1], [], []>} : vector<64x16xbf16>, vector<16x8xbf16>, vector<64x8xf32> -> vector<64x8xf32>
    %330 = arith.addf %322, %329 : vector<64x8xf32>
    %c4_320 = arith.constant 4 : index
    %c0_321 = arith.constant 0 : index
    %c0_322 = arith.constant 0 : index
    %331 = vector.load %arg7[%c4_320, %c0_321, %c0_322] : memref<9x64x64xbf16, #tpu.memory_space<vmem>>, vector<1x64x64xbf16>
    %332 = vector.shape_cast %331 : vector<1x64x64xbf16> to vector<64x64xbf16>
    %cst_323 = arith.constant dense<0.000000e+00> : vector<64x16xf32>
    %333 = tpu.matmul %332, %299, %cst_323 {dimension_numbers = #tpu.dot_dimension_numbers<[1], [0], [0], [1], [0, 0, 1, 1], [], []>} : vector<64x64xbf16>, vector<64x16xbf16>, vector<64x16xf32> -> vector<64x16xf32>
    %334 = arith.truncf %333 : vector<64x16xf32> to vector<64x16xbf16>
    %c1_324 = arith.constant 1 : index
    %c4_325 = arith.constant 4 : index
    %c0_326 = arith.constant 0 : index
    %c0_327 = arith.constant 0 : index
    %335 = vector.load %arg10[%c1_324, %c4_325, %c0_326, %c0_327] : memref<2x9x16x8xbf16, #tpu.memory_space<vmem>>, vector<1x1x16x8xbf16>
    %336 = vector.shape_cast %335 : vector<1x1x16x8xbf16> to vector<16x8xbf16>
    %cst_328 = arith.constant dense<0.000000e+00> : vector<64x8xf32>
    %337 = tpu.matmul %334, %336, %cst_328 {dimension_numbers = #tpu.dot_dimension_numbers<[1], [0], [0], [1], [0, 0, 1, 1], [], []>} : vector<64x16xbf16>, vector<16x8xbf16>, vector<64x8xf32> -> vector<64x8xf32>
    %338 = arith.addf %330, %337 : vector<64x8xf32>
    %c5_329 = arith.constant 5 : index
    %c0_330 = arith.constant 0 : index
    %c0_331 = arith.constant 0 : index
    %339 = vector.load %arg7[%c5_329, %c0_330, %c0_331] : memref<9x64x64xbf16, #tpu.memory_space<vmem>>, vector<1x64x64xbf16>
    %340 = vector.shape_cast %339 : vector<1x64x64xbf16> to vector<64x64xbf16>
    %cst_332 = arith.constant dense<0.000000e+00> : vector<64x16xf32>
    %341 = tpu.matmul %340, %299, %cst_332 {dimension_numbers = #tpu.dot_dimension_numbers<[1], [0], [0], [1], [0, 0, 1, 1], [], []>} : vector<64x64xbf16>, vector<64x16xbf16>, vector<64x16xf32> -> vector<64x16xf32>
    %342 = arith.truncf %341 : vector<64x16xf32> to vector<64x16xbf16>
    %c1_333 = arith.constant 1 : index
    %c5_334 = arith.constant 5 : index
    %c0_335 = arith.constant 0 : index
    %c0_336 = arith.constant 0 : index
    %343 = vector.load %arg10[%c1_333, %c5_334, %c0_335, %c0_336] : memref<2x9x16x8xbf16, #tpu.memory_space<vmem>>, vector<1x1x16x8xbf16>
    %344 = vector.shape_cast %343 : vector<1x1x16x8xbf16> to vector<16x8xbf16>
    %cst_337 = arith.constant dense<0.000000e+00> : vector<64x8xf32>
    %345 = tpu.matmul %342, %344, %cst_337 {dimension_numbers = #tpu.dot_dimension_numbers<[1], [0], [0], [1], [0, 0, 1, 1], [], []>} : vector<64x16xbf16>, vector<16x8xbf16>, vector<64x8xf32> -> vector<64x8xf32>
    %346 = arith.addf %338, %345 : vector<64x8xf32>
    %c6_338 = arith.constant 6 : index
    %c0_339 = arith.constant 0 : index
    %c0_340 = arith.constant 0 : index
    %347 = vector.load %arg7[%c6_338, %c0_339, %c0_340] : memref<9x64x64xbf16, #tpu.memory_space<vmem>>, vector<1x64x64xbf16>
    %348 = vector.shape_cast %347 : vector<1x64x64xbf16> to vector<64x64xbf16>
    %cst_341 = arith.constant dense<0.000000e+00> : vector<64x16xf32>
    %349 = tpu.matmul %348, %299, %cst_341 {dimension_numbers = #tpu.dot_dimension_numbers<[1], [0], [0], [1], [0, 0, 1, 1], [], []>} : vector<64x64xbf16>, vector<64x16xbf16>, vector<64x16xf32> -> vector<64x16xf32>
    %350 = arith.truncf %349 : vector<64x16xf32> to vector<64x16xbf16>
    %c1_342 = arith.constant 1 : index
    %c6_343 = arith.constant 6 : index
    %c0_344 = arith.constant 0 : index
    %c0_345 = arith.constant 0 : index
    %351 = vector.load %arg10[%c1_342, %c6_343, %c0_344, %c0_345] : memref<2x9x16x8xbf16, #tpu.memory_space<vmem>>, vector<1x1x16x8xbf16>
    %352 = vector.shape_cast %351 : vector<1x1x16x8xbf16> to vector<16x8xbf16>
    %cst_346 = arith.constant dense<0.000000e+00> : vector<64x8xf32>
    %353 = tpu.matmul %350, %352, %cst_346 {dimension_numbers = #tpu.dot_dimension_numbers<[1], [0], [0], [1], [0, 0, 1, 1], [], []>} : vector<64x16xbf16>, vector<16x8xbf16>, vector<64x8xf32> -> vector<64x8xf32>
    %354 = arith.addf %346, %353 : vector<64x8xf32>
    %c7_347 = arith.constant 7 : index
    %c0_348 = arith.constant 0 : index
    %c0_349 = arith.constant 0 : index
    %355 = vector.load %arg7[%c7_347, %c0_348, %c0_349] : memref<9x64x64xbf16, #tpu.memory_space<vmem>>, vector<1x64x64xbf16>
    %356 = vector.shape_cast %355 : vector<1x64x64xbf16> to vector<64x64xbf16>
    %cst_350 = arith.constant dense<0.000000e+00> : vector<64x16xf32>
    %357 = tpu.matmul %356, %299, %cst_350 {dimension_numbers = #tpu.dot_dimension_numbers<[1], [0], [0], [1], [0, 0, 1, 1], [], []>} : vector<64x64xbf16>, vector<64x16xbf16>, vector<64x16xf32> -> vector<64x16xf32>
    %358 = arith.truncf %357 : vector<64x16xf32> to vector<64x16xbf16>
    %c1_351 = arith.constant 1 : index
    %c7_352 = arith.constant 7 : index
    %c0_353 = arith.constant 0 : index
    %c0_354 = arith.constant 0 : index
    %359 = vector.load %arg10[%c1_351, %c7_352, %c0_353, %c0_354] : memref<2x9x16x8xbf16, #tpu.memory_space<vmem>>, vector<1x1x16x8xbf16>
    %360 = vector.shape_cast %359 : vector<1x1x16x8xbf16> to vector<16x8xbf16>
    %cst_355 = arith.constant dense<0.000000e+00> : vector<64x8xf32>
    %361 = tpu.matmul %358, %360, %cst_355 {dimension_numbers = #tpu.dot_dimension_numbers<[1], [0], [0], [1], [0, 0, 1, 1], [], []>} : vector<64x16xbf16>, vector<16x8xbf16>, vector<64x8xf32> -> vector<64x8xf32>
    %362 = arith.addf %354, %361 : vector<64x8xf32>
    %c8_356 = arith.constant 8 : index
    %c0_357 = arith.constant 0 : index
    %c0_358 = arith.constant 0 : index
    %363 = vector.load %arg7[%c8_356, %c0_357, %c0_358] : memref<9x64x64xbf16, #tpu.memory_space<vmem>>, vector<1x64x64xbf16>
    %364 = vector.shape_cast %363 : vector<1x64x64xbf16> to vector<64x64xbf16>
    %cst_359 = arith.constant dense<0.000000e+00> : vector<64x16xf32>
    %365 = tpu.matmul %364, %299, %cst_359 {dimension_numbers = #tpu.dot_dimension_numbers<[1], [0], [0], [1], [0, 0, 1, 1], [], []>} : vector<64x64xbf16>, vector<64x16xbf16>, vector<64x16xf32> -> vector<64x16xf32>
    %366 = arith.truncf %365 : vector<64x16xf32> to vector<64x16xbf16>
    %c1_360 = arith.constant 1 : index
    %c8_361 = arith.constant 8 : index
    %c0_362 = arith.constant 0 : index
    %c0_363 = arith.constant 0 : index
    %367 = vector.load %arg10[%c1_360, %c8_361, %c0_362, %c0_363] : memref<2x9x16x8xbf16, #tpu.memory_space<vmem>>, vector<1x1x16x8xbf16>
    %368 = vector.shape_cast %367 : vector<1x1x16x8xbf16> to vector<16x8xbf16>
    %cst_364 = arith.constant dense<0.000000e+00> : vector<64x8xf32>
    %369 = tpu.matmul %366, %368, %cst_364 {dimension_numbers = #tpu.dot_dimension_numbers<[1], [0], [0], [1], [0, 0, 1, 1], [], []>} : vector<64x16xbf16>, vector<16x8xbf16>, vector<64x8xf32> -> vector<64x8xf32>
    %370 = arith.addf %362, %369 : vector<64x8xf32>
    %cst_365 = arith.constant 0.000000e+00 : f32
    %371 = vector.broadcast %cst_365 : f32 to vector<64x8xf32>
    %372 = arith.maximumf %370, %371 : vector<64x8xf32>
    %373 = arith.truncf %372 : vector<64x8xf32> to vector<64x8xbf16>
    %c1_366 = arith.constant 1 : index
    %c0_367 = arith.constant 0 : index
    %c0_368 = arith.constant 0 : index
    %374 = vector.load %arg11[%c1_366, %c0_367, %c0_368] : memref<2x8x16xbf16, #tpu.memory_space<vmem>>, vector<1x8x16xbf16>
    %375 = vector.shape_cast %374 : vector<1x8x16xbf16> to vector<8x16xbf16>
    %cst_369 = arith.constant dense<0.000000e+00> : vector<64x16xf32>
    %376 = tpu.matmul %373, %375, %cst_369 {dimension_numbers = #tpu.dot_dimension_numbers<[1], [0], [0], [1], [0, 0, 1, 1], [], []>} : vector<64x8xbf16>, vector<8x16xbf16>, vector<64x16xf32> -> vector<64x16xf32>
    %377 = arith.addf %296, %376 : vector<64x16xf32>
    %cst_370 = arith.constant 0.000000e+00 : f32
    %378 = vector.broadcast %cst_370 : f32 to vector<64x16xf32>
    %379 = arith.maximumf %377, %378 : vector<64x16xf32>
    %380 = arith.truncf %379 : vector<64x16xf32> to vector<64x16xbf16>
    %c0_371 = arith.constant 0 : index
    %c0_372 = arith.constant 0 : index
    %c0_373 = arith.constant 0 : index
    %381 = vector.load %arg12[%c0_371, %c0_372, %c0_373] : memref<16x4x64xbf16, #tpu.memory_space<vmem>>, vector<1x4x64xbf16>
    %382 = vector.shape_cast %381 : vector<1x4x64xbf16> to vector<4x64xbf16>
    %cst_374 = arith.constant dense<0.000000e+00> : vector<4x16xf32>
    %383 = tpu.matmul %382, %380, %cst_374 {dimension_numbers = #tpu.dot_dimension_numbers<[1], [0], [0], [1], [0, 0, 1, 1], [], []>} : vector<4x64xbf16>, vector<64x16xbf16>, vector<4x16xf32> -> vector<4x16xf32>
    %384 = arith.truncf %383 : vector<4x16xf32> to vector<4x16xbf16>
    %c0_375 = arith.constant 0 : index
    %c0_376 = arith.constant 0 : index
    %c0_377 = arith.constant 0 : index
    %385 = vector.load %arg13[%c0_375, %c0_376, %c0_377] : memref<16x16x128xbf16, #tpu.memory_space<vmem>>, vector<1x16x128xbf16>
    %386 = vector.shape_cast %385 : vector<1x16x128xbf16> to vector<16x128xbf16>
    %cst_378 = arith.constant dense<0.000000e+00> : vector<4x128xf32>
    %387 = tpu.matmul %384, %386, %cst_378 {dimension_numbers = #tpu.dot_dimension_numbers<[1], [0], [0], [1], [0, 0, 1, 1], [], []>} : vector<4x16xbf16>, vector<16x128xbf16>, vector<4x128xf32> -> vector<4x128xf32>
    %c1_379 = arith.constant 1 : index
    %c0_380 = arith.constant 0 : index
    %c0_381 = arith.constant 0 : index
    %388 = vector.load %arg12[%c1_379, %c0_380, %c0_381] : memref<16x4x64xbf16, #tpu.memory_space<vmem>>, vector<1x4x64xbf16>
    %389 = vector.shape_cast %388 : vector<1x4x64xbf16> to vector<4x64xbf16>
    %cst_382 = arith.constant dense<0.000000e+00> : vector<4x16xf32>
    %390 = tpu.matmul %389, %380, %cst_382 {dimension_numbers = #tpu.dot_dimension_numbers<[1], [0], [0], [1], [0, 0, 1, 1], [], []>} : vector<4x64xbf16>, vector<64x16xbf16>, vector<4x16xf32> -> vector<4x16xf32>
    %391 = arith.truncf %390 : vector<4x16xf32> to vector<4x16xbf16>
    %c1_383 = arith.constant 1 : index
    %c0_384 = arith.constant 0 : index
    %c0_385 = arith.constant 0 : index
    %392 = vector.load %arg13[%c1_383, %c0_384, %c0_385] : memref<16x16x128xbf16, #tpu.memory_space<vmem>>, vector<1x16x128xbf16>
    %393 = vector.shape_cast %392 : vector<1x16x128xbf16> to vector<16x128xbf16>
    %cst_386 = arith.constant dense<0.000000e+00> : vector<4x128xf32>
    %394 = tpu.matmul %391, %393, %cst_386 {dimension_numbers = #tpu.dot_dimension_numbers<[1], [0], [0], [1], [0, 0, 1, 1], [], []>} : vector<4x16xbf16>, vector<16x128xbf16>, vector<4x128xf32> -> vector<4x128xf32>
    %395 = arith.addf %387, %394 : vector<4x128xf32>
    %c2_387 = arith.constant 2 : index
    %c0_388 = arith.constant 0 : index
    %c0_389 = arith.constant 0 : index
    %396 = vector.load %arg12[%c2_387, %c0_388, %c0_389] : memref<16x4x64xbf16, #tpu.memory_space<vmem>>, vector<1x4x64xbf16>
    %397 = vector.shape_cast %396 : vector<1x4x64xbf16> to vector<4x64xbf16>
    %cst_390 = arith.constant dense<0.000000e+00> : vector<4x16xf32>
    %398 = tpu.matmul %397, %380, %cst_390 {dimension_numbers = #tpu.dot_dimension_numbers<[1], [0], [0], [1], [0, 0, 1, 1], [], []>} : vector<4x64xbf16>, vector<64x16xbf16>, vector<4x16xf32> -> vector<4x16xf32>
    %399 = arith.truncf %398 : vector<4x16xf32> to vector<4x16xbf16>
    %c2_391 = arith.constant 2 : index
    %c0_392 = arith.constant 0 : index
    %c0_393 = arith.constant 0 : index
    %400 = vector.load %arg13[%c2_391, %c0_392, %c0_393] : memref<16x16x128xbf16, #tpu.memory_space<vmem>>, vector<1x16x128xbf16>
    %401 = vector.shape_cast %400 : vector<1x16x128xbf16> to vector<16x128xbf16>
    %cst_394 = arith.constant dense<0.000000e+00> : vector<4x128xf32>
    %402 = tpu.matmul %399, %401, %cst_394 {dimension_numbers = #tpu.dot_dimension_numbers<[1], [0], [0], [1], [0, 0, 1, 1], [], []>} : vector<4x16xbf16>, vector<16x128xbf16>, vector<4x128xf32> -> vector<4x128xf32>
    %403 = arith.addf %395, %402 : vector<4x128xf32>
    %c3_395 = arith.constant 3 : index
    %c0_396 = arith.constant 0 : index
    %c0_397 = arith.constant 0 : index
    %404 = vector.load %arg12[%c3_395, %c0_396, %c0_397] : memref<16x4x64xbf16, #tpu.memory_space<vmem>>, vector<1x4x64xbf16>
    %405 = vector.shape_cast %404 : vector<1x4x64xbf16> to vector<4x64xbf16>
    %cst_398 = arith.constant dense<0.000000e+00> : vector<4x16xf32>
    %406 = tpu.matmul %405, %380, %cst_398 {dimension_numbers = #tpu.dot_dimension_numbers<[1], [0], [0], [1], [0, 0, 1, 1], [], []>} : vector<4x64xbf16>, vector<64x16xbf16>, vector<4x16xf32> -> vector<4x16xf32>
    %407 = arith.truncf %406 : vector<4x16xf32> to vector<4x16xbf16>
    %c3_399 = arith.constant 3 : index
    %c0_400 = arith.constant 0 : index
    %c0_401 = arith.constant 0 : index
    %408 = vector.load %arg13[%c3_399, %c0_400, %c0_401] : memref<16x16x128xbf16, #tpu.memory_space<vmem>>, vector<1x16x128xbf16>
    %409 = vector.shape_cast %408 : vector<1x16x128xbf16> to vector<16x128xbf16>
    %cst_402 = arith.constant dense<0.000000e+00> : vector<4x128xf32>
    %410 = tpu.matmul %407, %409, %cst_402 {dimension_numbers = #tpu.dot_dimension_numbers<[1], [0], [0], [1], [0, 0, 1, 1], [], []>} : vector<4x16xbf16>, vector<16x128xbf16>, vector<4x128xf32> -> vector<4x128xf32>
    %411 = arith.addf %403, %410 : vector<4x128xf32>
    %c4_403 = arith.constant 4 : index
    %c0_404 = arith.constant 0 : index
    %c0_405 = arith.constant 0 : index
    %412 = vector.load %arg12[%c4_403, %c0_404, %c0_405] : memref<16x4x64xbf16, #tpu.memory_space<vmem>>, vector<1x4x64xbf16>
    %413 = vector.shape_cast %412 : vector<1x4x64xbf16> to vector<4x64xbf16>
    %cst_406 = arith.constant dense<0.000000e+00> : vector<4x16xf32>
    %414 = tpu.matmul %413, %380, %cst_406 {dimension_numbers = #tpu.dot_dimension_numbers<[1], [0], [0], [1], [0, 0, 1, 1], [], []>} : vector<4x64xbf16>, vector<64x16xbf16>, vector<4x16xf32> -> vector<4x16xf32>
    %415 = arith.truncf %414 : vector<4x16xf32> to vector<4x16xbf16>
    %c4_407 = arith.constant 4 : index
    %c0_408 = arith.constant 0 : index
    %c0_409 = arith.constant 0 : index
    %416 = vector.load %arg13[%c4_407, %c0_408, %c0_409] : memref<16x16x128xbf16, #tpu.memory_space<vmem>>, vector<1x16x128xbf16>
    %417 = vector.shape_cast %416 : vector<1x16x128xbf16> to vector<16x128xbf16>
    %cst_410 = arith.constant dense<0.000000e+00> : vector<4x128xf32>
    %418 = tpu.matmul %415, %417, %cst_410 {dimension_numbers = #tpu.dot_dimension_numbers<[1], [0], [0], [1], [0, 0, 1, 1], [], []>} : vector<4x16xbf16>, vector<16x128xbf16>, vector<4x128xf32> -> vector<4x128xf32>
    %419 = arith.addf %411, %418 : vector<4x128xf32>
    %c5_411 = arith.constant 5 : index
    %c0_412 = arith.constant 0 : index
    %c0_413 = arith.constant 0 : index
    %420 = vector.load %arg12[%c5_411, %c0_412, %c0_413] : memref<16x4x64xbf16, #tpu.memory_space<vmem>>, vector<1x4x64xbf16>
    %421 = vector.shape_cast %420 : vector<1x4x64xbf16> to vector<4x64xbf16>
    %cst_414 = arith.constant dense<0.000000e+00> : vector<4x16xf32>
    %422 = tpu.matmul %421, %380, %cst_414 {dimension_numbers = #tpu.dot_dimension_numbers<[1], [0], [0], [1], [0, 0, 1, 1], [], []>} : vector<4x64xbf16>, vector<64x16xbf16>, vector<4x16xf32> -> vector<4x16xf32>
    %423 = arith.truncf %422 : vector<4x16xf32> to vector<4x16xbf16>
    %c5_415 = arith.constant 5 : index
    %c0_416 = arith.constant 0 : index
    %c0_417 = arith.constant 0 : index
    %424 = vector.load %arg13[%c5_415, %c0_416, %c0_417] : memref<16x16x128xbf16, #tpu.memory_space<vmem>>, vector<1x16x128xbf16>
    %425 = vector.shape_cast %424 : vector<1x16x128xbf16> to vector<16x128xbf16>
    %cst_418 = arith.constant dense<0.000000e+00> : vector<4x128xf32>
    %426 = tpu.matmul %423, %425, %cst_418 {dimension_numbers = #tpu.dot_dimension_numbers<[1], [0], [0], [1], [0, 0, 1, 1], [], []>} : vector<4x16xbf16>, vector<16x128xbf16>, vector<4x128xf32> -> vector<4x128xf32>
    %427 = arith.addf %419, %426 : vector<4x128xf32>
    %c6_419 = arith.constant 6 : index
    %c0_420 = arith.constant 0 : index
    %c0_421 = arith.constant 0 : index
    %428 = vector.load %arg12[%c6_419, %c0_420, %c0_421] : memref<16x4x64xbf16, #tpu.memory_space<vmem>>, vector<1x4x64xbf16>
    %429 = vector.shape_cast %428 : vector<1x4x64xbf16> to vector<4x64xbf16>
    %cst_422 = arith.constant dense<0.000000e+00> : vector<4x16xf32>
    %430 = tpu.matmul %429, %380, %cst_422 {dimension_numbers = #tpu.dot_dimension_numbers<[1], [0], [0], [1], [0, 0, 1, 1], [], []>} : vector<4x64xbf16>, vector<64x16xbf16>, vector<4x16xf32> -> vector<4x16xf32>
    %431 = arith.truncf %430 : vector<4x16xf32> to vector<4x16xbf16>
    %c6_423 = arith.constant 6 : index
    %c0_424 = arith.constant 0 : index
    %c0_425 = arith.constant 0 : index
    %432 = vector.load %arg13[%c6_423, %c0_424, %c0_425] : memref<16x16x128xbf16, #tpu.memory_space<vmem>>, vector<1x16x128xbf16>
    %433 = vector.shape_cast %432 : vector<1x16x128xbf16> to vector<16x128xbf16>
    %cst_426 = arith.constant dense<0.000000e+00> : vector<4x128xf32>
    %434 = tpu.matmul %431, %433, %cst_426 {dimension_numbers = #tpu.dot_dimension_numbers<[1], [0], [0], [1], [0, 0, 1, 1], [], []>} : vector<4x16xbf16>, vector<16x128xbf16>, vector<4x128xf32> -> vector<4x128xf32>
    %435 = arith.addf %427, %434 : vector<4x128xf32>
    %c7_427 = arith.constant 7 : index
    %c0_428 = arith.constant 0 : index
    %c0_429 = arith.constant 0 : index
    %436 = vector.load %arg12[%c7_427, %c0_428, %c0_429] : memref<16x4x64xbf16, #tpu.memory_space<vmem>>, vector<1x4x64xbf16>
    %437 = vector.shape_cast %436 : vector<1x4x64xbf16> to vector<4x64xbf16>
    %cst_430 = arith.constant dense<0.000000e+00> : vector<4x16xf32>
    %438 = tpu.matmul %437, %380, %cst_430 {dimension_numbers = #tpu.dot_dimension_numbers<[1], [0], [0], [1], [0, 0, 1, 1], [], []>} : vector<4x64xbf16>, vector<64x16xbf16>, vector<4x16xf32> -> vector<4x16xf32>
    %439 = arith.truncf %438 : vector<4x16xf32> to vector<4x16xbf16>
    %c7_431 = arith.constant 7 : index
    %c0_432 = arith.constant 0 : index
    %c0_433 = arith.constant 0 : index
    %440 = vector.load %arg13[%c7_431, %c0_432, %c0_433] : memref<16x16x128xbf16, #tpu.memory_space<vmem>>, vector<1x16x128xbf16>
    %441 = vector.shape_cast %440 : vector<1x16x128xbf16> to vector<16x128xbf16>
    %cst_434 = arith.constant dense<0.000000e+00> : vector<4x128xf32>
    %442 = tpu.matmul %439, %441, %cst_434 {dimension_numbers = #tpu.dot_dimension_numbers<[1], [0], [0], [1], [0, 0, 1, 1], [], []>} : vector<4x16xbf16>, vector<16x128xbf16>, vector<4x128xf32> -> vector<4x128xf32>
    %443 = arith.addf %435, %442 : vector<4x128xf32>
    %c8_435 = arith.constant 8 : index
    %c0_436 = arith.constant 0 : index
    %c0_437 = arith.constant 0 : index
    %444 = vector.load %arg12[%c8_435, %c0_436, %c0_437] : memref<16x4x64xbf16, #tpu.memory_space<vmem>>, vector<1x4x64xbf16>
    %445 = vector.shape_cast %444 : vector<1x4x64xbf16> to vector<4x64xbf16>
    %cst_438 = arith.constant dense<0.000000e+00> : vector<4x16xf32>
    %446 = tpu.matmul %445, %380, %cst_438 {dimension_numbers = #tpu.dot_dimension_numbers<[1], [0], [0], [1], [0, 0, 1, 1], [], []>} : vector<4x64xbf16>, vector<64x16xbf16>, vector<4x16xf32> -> vector<4x16xf32>
    %447 = arith.truncf %446 : vector<4x16xf32> to vector<4x16xbf16>
    %c8_439 = arith.constant 8 : index
    %c0_440 = arith.constant 0 : index
    %c0_441 = arith.constant 0 : index
    %448 = vector.load %arg13[%c8_439, %c0_440, %c0_441] : memref<16x16x128xbf16, #tpu.memory_space<vmem>>, vector<1x16x128xbf16>
    %449 = vector.shape_cast %448 : vector<1x16x128xbf16> to vector<16x128xbf16>
    %cst_442 = arith.constant dense<0.000000e+00> : vector<4x128xf32>
    %450 = tpu.matmul %447, %449, %cst_442 {dimension_numbers = #tpu.dot_dimension_numbers<[1], [0], [0], [1], [0, 0, 1, 1], [], []>} : vector<4x16xbf16>, vector<16x128xbf16>, vector<4x128xf32> -> vector<4x128xf32>
    %451 = arith.addf %443, %450 : vector<4x128xf32>
    %c9_443 = arith.constant 9 : index
    %c0_444 = arith.constant 0 : index
    %c0_445 = arith.constant 0 : index
    %452 = vector.load %arg12[%c9_443, %c0_444, %c0_445] : memref<16x4x64xbf16, #tpu.memory_space<vmem>>, vector<1x4x64xbf16>
    %453 = vector.shape_cast %452 : vector<1x4x64xbf16> to vector<4x64xbf16>
    %cst_446 = arith.constant dense<0.000000e+00> : vector<4x16xf32>
    %454 = tpu.matmul %453, %380, %cst_446 {dimension_numbers = #tpu.dot_dimension_numbers<[1], [0], [0], [1], [0, 0, 1, 1], [], []>} : vector<4x64xbf16>, vector<64x16xbf16>, vector<4x16xf32> -> vector<4x16xf32>
    %455 = arith.truncf %454 : vector<4x16xf32> to vector<4x16xbf16>
    %c9_447 = arith.constant 9 : index
    %c0_448 = arith.constant 0 : index
    %c0_449 = arith.constant 0 : index
    %456 = vector.load %arg13[%c9_447, %c0_448, %c0_449] : memref<16x16x128xbf16, #tpu.memory_space<vmem>>, vector<1x16x128xbf16>
    %457 = vector.shape_cast %456 : vector<1x16x128xbf16> to vector<16x128xbf16>
    %cst_450 = arith.constant dense<0.000000e+00> : vector<4x128xf32>
    %458 = tpu.matmul %455, %457, %cst_450 {dimension_numbers = #tpu.dot_dimension_numbers<[1], [0], [0], [1], [0, 0, 1, 1], [], []>} : vector<4x16xbf16>, vector<16x128xbf16>, vector<4x128xf32> -> vector<4x128xf32>
    %459 = arith.addf %451, %458 : vector<4x128xf32>
    %c10_451 = arith.constant 10 : index
    %c0_452 = arith.constant 0 : index
    %c0_453 = arith.constant 0 : index
    %460 = vector.load %arg12[%c10_451, %c0_452, %c0_453] : memref<16x4x64xbf16, #tpu.memory_space<vmem>>, vector<1x4x64xbf16>
    %461 = vector.shape_cast %460 : vector<1x4x64xbf16> to vector<4x64xbf16>
    %cst_454 = arith.constant dense<0.000000e+00> : vector<4x16xf32>
    %462 = tpu.matmul %461, %380, %cst_454 {dimension_numbers = #tpu.dot_dimension_numbers<[1], [0], [0], [1], [0, 0, 1, 1], [], []>} : vector<4x64xbf16>, vector<64x16xbf16>, vector<4x16xf32> -> vector<4x16xf32>
    %463 = arith.truncf %462 : vector<4x16xf32> to vector<4x16xbf16>
    %c10_455 = arith.constant 10 : index
    %c0_456 = arith.constant 0 : index
    %c0_457 = arith.constant 0 : index
    %464 = vector.load %arg13[%c10_455, %c0_456, %c0_457] : memref<16x16x128xbf16, #tpu.memory_space<vmem>>, vector<1x16x128xbf16>
    %465 = vector.shape_cast %464 : vector<1x16x128xbf16> to vector<16x128xbf16>
    %cst_458 = arith.constant dense<0.000000e+00> : vector<4x128xf32>
    %466 = tpu.matmul %463, %465, %cst_458 {dimension_numbers = #tpu.dot_dimension_numbers<[1], [0], [0], [1], [0, 0, 1, 1], [], []>} : vector<4x16xbf16>, vector<16x128xbf16>, vector<4x128xf32> -> vector<4x128xf32>
    %467 = arith.addf %459, %466 : vector<4x128xf32>
    %c11_459 = arith.constant 11 : index
    %c0_460 = arith.constant 0 : index
    %c0_461 = arith.constant 0 : index
    %468 = vector.load %arg12[%c11_459, %c0_460, %c0_461] : memref<16x4x64xbf16, #tpu.memory_space<vmem>>, vector<1x4x64xbf16>
    %469 = vector.shape_cast %468 : vector<1x4x64xbf16> to vector<4x64xbf16>
    %cst_462 = arith.constant dense<0.000000e+00> : vector<4x16xf32>
    %470 = tpu.matmul %469, %380, %cst_462 {dimension_numbers = #tpu.dot_dimension_numbers<[1], [0], [0], [1], [0, 0, 1, 1], [], []>} : vector<4x64xbf16>, vector<64x16xbf16>, vector<4x16xf32> -> vector<4x16xf32>
    %471 = arith.truncf %470 : vector<4x16xf32> to vector<4x16xbf16>
    %c11_463 = arith.constant 11 : index
    %c0_464 = arith.constant 0 : index
    %c0_465 = arith.constant 0 : index
    %472 = vector.load %arg13[%c11_463, %c0_464, %c0_465] : memref<16x16x128xbf16, #tpu.memory_space<vmem>>, vector<1x16x128xbf16>
    %473 = vector.shape_cast %472 : vector<1x16x128xbf16> to vector<16x128xbf16>
    %cst_466 = arith.constant dense<0.000000e+00> : vector<4x128xf32>
    %474 = tpu.matmul %471, %473, %cst_466 {dimension_numbers = #tpu.dot_dimension_numbers<[1], [0], [0], [1], [0, 0, 1, 1], [], []>} : vector<4x16xbf16>, vector<16x128xbf16>, vector<4x128xf32> -> vector<4x128xf32>
    %475 = arith.addf %467, %474 : vector<4x128xf32>
    %c12_467 = arith.constant 12 : index
    %c0_468 = arith.constant 0 : index
    %c0_469 = arith.constant 0 : index
    %476 = vector.load %arg12[%c12_467, %c0_468, %c0_469] : memref<16x4x64xbf16, #tpu.memory_space<vmem>>, vector<1x4x64xbf16>
    %477 = vector.shape_cast %476 : vector<1x4x64xbf16> to vector<4x64xbf16>
    %cst_470 = arith.constant dense<0.000000e+00> : vector<4x16xf32>
    %478 = tpu.matmul %477, %380, %cst_470 {dimension_numbers = #tpu.dot_dimension_numbers<[1], [0], [0], [1], [0, 0, 1, 1], [], []>} : vector<4x64xbf16>, vector<64x16xbf16>, vector<4x16xf32> -> vector<4x16xf32>
    %479 = arith.truncf %478 : vector<4x16xf32> to vector<4x16xbf16>
    %c12_471 = arith.constant 12 : index
    %c0_472 = arith.constant 0 : index
    %c0_473 = arith.constant 0 : index
    %480 = vector.load %arg13[%c12_471, %c0_472, %c0_473] : memref<16x16x128xbf16, #tpu.memory_space<vmem>>, vector<1x16x128xbf16>
    %481 = vector.shape_cast %480 : vector<1x16x128xbf16> to vector<16x128xbf16>
    %cst_474 = arith.constant dense<0.000000e+00> : vector<4x128xf32>
    %482 = tpu.matmul %479, %481, %cst_474 {dimension_numbers = #tpu.dot_dimension_numbers<[1], [0], [0], [1], [0, 0, 1, 1], [], []>} : vector<4x16xbf16>, vector<16x128xbf16>, vector<4x128xf32> -> vector<4x128xf32>
    %483 = arith.addf %475, %482 : vector<4x128xf32>
    %c13_475 = arith.constant 13 : index
    %c0_476 = arith.constant 0 : index
    %c0_477 = arith.constant 0 : index
    %484 = vector.load %arg12[%c13_475, %c0_476, %c0_477] : memref<16x4x64xbf16, #tpu.memory_space<vmem>>, vector<1x4x64xbf16>
    %485 = vector.shape_cast %484 : vector<1x4x64xbf16> to vector<4x64xbf16>
    %cst_478 = arith.constant dense<0.000000e+00> : vector<4x16xf32>
    %486 = tpu.matmul %485, %380, %cst_478 {dimension_numbers = #tpu.dot_dimension_numbers<[1], [0], [0], [1], [0, 0, 1, 1], [], []>} : vector<4x64xbf16>, vector<64x16xbf16>, vector<4x16xf32> -> vector<4x16xf32>
    %487 = arith.truncf %486 : vector<4x16xf32> to vector<4x16xbf16>
    %c13_479 = arith.constant 13 : index
    %c0_480 = arith.constant 0 : index
    %c0_481 = arith.constant 0 : index
    %488 = vector.load %arg13[%c13_479, %c0_480, %c0_481] : memref<16x16x128xbf16, #tpu.memory_space<vmem>>, vector<1x16x128xbf16>
    %489 = vector.shape_cast %488 : vector<1x16x128xbf16> to vector<16x128xbf16>
    %cst_482 = arith.constant dense<0.000000e+00> : vector<4x128xf32>
    %490 = tpu.matmul %487, %489, %cst_482 {dimension_numbers = #tpu.dot_dimension_numbers<[1], [0], [0], [1], [0, 0, 1, 1], [], []>} : vector<4x16xbf16>, vector<16x128xbf16>, vector<4x128xf32> -> vector<4x128xf32>
    %491 = arith.addf %483, %490 : vector<4x128xf32>
    %c14_483 = arith.constant 14 : index
    %c0_484 = arith.constant 0 : index
    %c0_485 = arith.constant 0 : index
    %492 = vector.load %arg12[%c14_483, %c0_484, %c0_485] : memref<16x4x64xbf16, #tpu.memory_space<vmem>>, vector<1x4x64xbf16>
    %493 = vector.shape_cast %492 : vector<1x4x64xbf16> to vector<4x64xbf16>
    %cst_486 = arith.constant dense<0.000000e+00> : vector<4x16xf32>
    %494 = tpu.matmul %493, %380, %cst_486 {dimension_numbers = #tpu.dot_dimension_numbers<[1], [0], [0], [1], [0, 0, 1, 1], [], []>} : vector<4x64xbf16>, vector<64x16xbf16>, vector<4x16xf32> -> vector<4x16xf32>
    %495 = arith.truncf %494 : vector<4x16xf32> to vector<4x16xbf16>
    %c14_487 = arith.constant 14 : index
    %c0_488 = arith.constant 0 : index
    %c0_489 = arith.constant 0 : index
    %496 = vector.load %arg13[%c14_487, %c0_488, %c0_489] : memref<16x16x128xbf16, #tpu.memory_space<vmem>>, vector<1x16x128xbf16>
    %497 = vector.shape_cast %496 : vector<1x16x128xbf16> to vector<16x128xbf16>
    %cst_490 = arith.constant dense<0.000000e+00> : vector<4x128xf32>
    %498 = tpu.matmul %495, %497, %cst_490 {dimension_numbers = #tpu.dot_dimension_numbers<[1], [0], [0], [1], [0, 0, 1, 1], [], []>} : vector<4x16xbf16>, vector<16x128xbf16>, vector<4x128xf32> -> vector<4x128xf32>
    %499 = arith.addf %491, %498 : vector<4x128xf32>
    %c15_491 = arith.constant 15 : index
    %c0_492 = arith.constant 0 : index
    %c0_493 = arith.constant 0 : index
    %500 = vector.load %arg12[%c15_491, %c0_492, %c0_493] : memref<16x4x64xbf16, #tpu.memory_space<vmem>>, vector<1x4x64xbf16>
    %501 = vector.shape_cast %500 : vector<1x4x64xbf16> to vector<4x64xbf16>
    %cst_494 = arith.constant dense<0.000000e+00> : vector<4x16xf32>
    %502 = tpu.matmul %501, %380, %cst_494 {dimension_numbers = #tpu.dot_dimension_numbers<[1], [0], [0], [1], [0, 0, 1, 1], [], []>} : vector<4x64xbf16>, vector<64x16xbf16>, vector<4x16xf32> -> vector<4x16xf32>
    %503 = arith.truncf %502 : vector<4x16xf32> to vector<4x16xbf16>
    %c15_495 = arith.constant 15 : index
    %c0_496 = arith.constant 0 : index
    %c0_497 = arith.constant 0 : index
    %504 = vector.load %arg13[%c15_495, %c0_496, %c0_497] : memref<16x16x128xbf16, #tpu.memory_space<vmem>>, vector<1x16x128xbf16>
    %505 = vector.shape_cast %504 : vector<1x16x128xbf16> to vector<16x128xbf16>
    %cst_498 = arith.constant dense<0.000000e+00> : vector<4x128xf32>
    %506 = tpu.matmul %503, %505, %cst_498 {dimension_numbers = #tpu.dot_dimension_numbers<[1], [0], [0], [1], [0, 0, 1, 1], [], []>} : vector<4x16xbf16>, vector<16x128xbf16>, vector<4x128xf32> -> vector<4x128xf32>
    %507 = arith.addf %499, %506 : vector<4x128xf32>
    %c0_499 = arith.constant 0 : index
    %c0_500 = arith.constant 0 : index
    %508 = vector.load %arg14[%c0_499, %c0_500] : memref<1x128xf32, #tpu.memory_space<vmem>>, vector<1x128xf32>
    %509 = vector.broadcast %508 : vector<1x128xf32> to vector<4x128xf32>
    %510 = arith.addf %507, %509 : vector<4x128xf32>
    %cst_501 = arith.constant 0.000000e+00 : f32
    %511 = vector.broadcast %cst_501 : f32 to vector<4x128xf32>
    %512 = arith.maximumf %510, %511 : vector<4x128xf32>
    %513 = arith.truncf %512 : vector<4x128xf32> to vector<4x128xbf16>
    %c0_502 = arith.constant 0 : index
    %c0_503 = arith.constant 0 : index
    %514 = vector.load %arg15[%c0_502, %c0_503] : memref<128x128xbf16, #tpu.memory_space<vmem>>, vector<128x128xbf16>
    %cst_504 = arith.constant dense<0.000000e+00> : vector<4x128xf32>
    %515 = tpu.matmul %513, %514, %cst_504 {dimension_numbers = #tpu.dot_dimension_numbers<[1], [0], [0], [1], [0, 0, 1, 1], [], []>} : vector<4x128xbf16>, vector<128x128xbf16>, vector<4x128xf32> -> vector<4x128xf32>
    %c0_505 = arith.constant 0 : index
    %c0_506 = arith.constant 0 : index
    %516 = vector.load %arg16[%c0_505, %c0_506] : memref<1x128xf32, #tpu.memory_space<vmem>>, vector<1x128xf32>
    %517 = vector.broadcast %516 : vector<1x128xf32> to vector<4x128xf32>
    %518 = arith.addf %515, %517 : vector<4x128xf32>
    %cst_507 = arith.constant 0.000000e+00 : f32
    %519 = vector.broadcast %cst_507 : f32 to vector<4x128xf32>
    %520 = arith.maximumf %518, %519 : vector<4x128xf32>
    %c0_508 = arith.constant 0 : index
    %c0_509 = arith.constant 0 : index
    %521 = vector.load %arg17[%c0_508, %c0_509] : memref<4x128xf32, #tpu.memory_space<vmem>>, vector<4x128xf32>
    tpu.vector_store %arg17[%c0_508, %c0_509], %520 {strides = array<i32>} : memref<4x128xf32, #tpu.memory_space<vmem>>, vector<4x128xf32>,
    return
  }
  func.func @transform_0(%arg0: i32) -> (i32, i32) {
    %c0_i32 = arith.constant 0 : i32
    %c0_i32_0 = arith.constant 0 : i32
    %c0_i32_1 = arith.constant 0 : i32
    return %c0_i32, %c0_i32_0 : i32, i32
  }
  func.func @transform_1(%arg0: i32) -> (i32, i32) {
    %c0_i32 = arith.constant 0 : i32
    %c0_i32_0 = arith.constant 0 : i32
    %c0_i32_1 = arith.constant 0 : i32
    return %c0_i32, %c0_i32_0 : i32, i32
  }
  func.func @transform_2(%arg0: i32) -> (i32, i32) {
    %c0_i32 = arith.constant 0 : i32
    %c0_i32_0 = arith.constant 0 : i32
    %c0_i32_1 = arith.constant 0 : i32
    return %c0_i32, %c0_i32_0 : i32, i32
  }
  func.func @transform_3(%arg0: i32) -> (i32, i32, i32) {
    %c0_i32 = arith.constant 0 : i32
    %c0_i32_0 = arith.constant 0 : i32
    %c0_i32_1 = arith.constant 0 : i32
    %c0_i32_2 = arith.constant 0 : i32
    return %c0_i32, %c0_i32_0, %c0_i32_1 : i32, i32, i32
  }
  func.func @transform_4(%arg0: i32) -> (i32, i32, i32) {
    %c0_i32 = arith.constant 0 : i32
    %c0_i32_0 = arith.constant 0 : i32
    %c0_i32_1 = arith.constant 0 : i32
    %c0_i32_2 = arith.constant 0 : i32
    return %c0_i32, %c0_i32_0, %c0_i32_1 : i32, i32, i32
  }
  func.func @transform_5(%arg0: i32) -> (i32, i32) {
    %c0_i32 = arith.constant 0 : i32
    %c0_i32_0 = arith.constant 0 : i32
    %c0_i32_1 = arith.constant 0 : i32
    return %c0_i32, %c0_i32_0 : i32, i32
  }
  func.func @transform_6(%arg0: i32) -> (i32, i32, i32) {
    %c0_i32 = arith.constant 0 : i32
    %c0_i32_0 = arith.constant 0 : i32
    %c0_i32_1 = arith.constant 0 : i32
    %c0_i32_2 = arith.constant 0 : i32
    return %c0_i32, %c0_i32_0, %c0_i32_1 : i32, i32, i32
  }
  func.func @transform_7(%arg0: i32) -> (i32, i32, i32) {
    %c0_i32 = arith.constant 0 : i32
    %c0_i32_0 = arith.constant 0 : i32
    %c0_i32_1 = arith.constant 0 : i32
    %c0_i32_2 = arith.constant 0 : i32
    return %c0_i32, %c0_i32_0, %c0_i32_1 : i32, i32, i32
  }
  func.func @transform_8(%arg0: i32) -> (i32, i32) {
    %c0_i32 = arith.constant 0 : i32
    %c0_i32_0 = arith.constant 0 : i32
    %c0_i32_1 = arith.constant 0 : i32
    return %c0_i32, %c0_i32_0 : i32, i32
  }
  func.func @transform_9(%arg0: i32) -> (i32, i32, i32, i32) {
    %c0_i32 = arith.constant 0 : i32
    %c0_i32_0 = arith.constant 0 : i32
    %c0_i32_1 = arith.constant 0 : i32
    %c0_i32_2 = arith.constant 0 : i32
    %c0_i32_3 = arith.constant 0 : i32
    return %c0_i32, %c0_i32_0, %c0_i32_1, %c0_i32_2 : i32, i32, i32, i32
  }
  func.func @transform_10(%arg0: i32) -> (i32, i32, i32) {
    %c0_i32 = arith.constant 0 : i32
    %c0_i32_0 = arith.constant 0 : i32
    %c0_i32_1 = arith.constant 0 : i32
    %c0_i32_2 = arith.constant 0 : i32
    return %c0_i32, %c0_i32_0, %c0_i32_1 : i32, i32, i32
  }
  func.func @transform_11(%arg0: i32) -> (i32, i32, i32) {
    %c0_i32 = arith.constant 0 : i32
    %c0_i32_0 = arith.constant 0 : i32
    %c0_i32_1 = arith.constant 0 : i32
    %c0_i32_2 = arith.constant 0 : i32
    return %c0_i32, %c0_i32_0, %c0_i32_1 : i32, i32, i32
  }
  func.func @transform_12(%arg0: i32) -> (i32, i32, i32) {
    %c0_i32 = arith.constant 0 : i32
    %c0_i32_0 = arith.constant 0 : i32
    %c0_i32_1 = arith.constant 0 : i32
    %c0_i32_2 = arith.constant 0 : i32
    return %c0_i32, %c0_i32_0, %c0_i32_1 : i32, i32, i32
  }
  func.func @transform_13(%arg0: i32) -> (i32, i32) {
    %c0_i32 = arith.constant 0 : i32
    %c0_i32_0 = arith.constant 0 : i32
    %c0_i32_1 = arith.constant 0 : i32
    return %c0_i32, %c0_i32_0 : i32, i32
  }
  func.func @transform_14(%arg0: i32) -> (i32, i32) {
    %c0_i32 = arith.constant 0 : i32
    %c0_i32_0 = arith.constant 0 : i32
    %c0_i32_1 = arith.constant 0 : i32
    return %c0_i32, %c0_i32_0 : i32, i32
  }
  func.func @transform_15(%arg0: i32) -> (i32, i32) {
    %c0_i32 = arith.constant 0 : i32
    %c0_i32_0 = arith.constant 0 : i32
    %c0_i32_1 = arith.constant 0 : i32
    return %c0_i32, %c0_i32_0 : i32, i32
  }
  func.func @transform_16(%arg0: i32) -> (i32, i32) {
    %c0_i32 = arith.constant 0 : i32
    %c0_i32_0 = arith.constant 0 : i32
    %c0_i32_1 = arith.constant 0 : i32
    return %c0_i32, %c0_i32_0 : i32, i32
  }
}

</mosaic_0001>

<llo_original>
// kernel: fwd.1
$region0: #{fwd.1}
  #allocation0 [shape = 'u32[]', space=smem, size = 0x4, offset = 0x4, fixed_abs, tag = 'smem constant byte address 0x4 - core index']
  #allocation1 [shape = 'u32[144,128]{1,0:T(1,128)}', space=vmem, size = 0x12000, scoped, tag = 'internal scratch']
  %s0 = inlined_call_operand.vmem [shape: bf16[256,64], index: 0, kind: input, shape index: {}]
  %s1 = inlined_call_operand.vmem [shape: bf16[64,8], index: 1, kind: input, shape index: {}]
  %s2 = inlined_call_operand.vmem [shape: f32[1,8], index: 2, kind: input, shape index: {}]
  %s3 = inlined_call_operand.vmem [shape: bf16[16,64,256], index: 3, kind: input, shape index: {}]
  %s4 = inlined_call_operand.vmem [shape: bf16[16,8,16], index: 4, kind: input, shape index: {}]
  %s5 = inlined_call_operand.vmem [shape: f32[1,16], index: 5, kind: input, shape index: {}]
  %s6 = inlined_call_operand.vmem [shape: bf16[9,64,64], index: 6, kind: input, shape index: {}]
  %s7 = inlined_call_operand.vmem [shape: bf16[9,16,16], index: 7, kind: input, shape index: {}]
  %s8 = inlined_call_operand.vmem [shape: f32[1,16], index: 8, kind: input, shape index: {}]
  %s9 = inlined_call_operand.vmem [shape: bf16[2,9,16,8], index: 9, kind: input, shape index: {}]
  %s10 = inlined_call_operand.vmem [shape: bf16[2,8,16], index: 10, kind: input, shape index: {}]
  %s11 = inlined_call_operand.vmem [shape: bf16[16,4,64], index: 11, kind: input, shape index: {}]
  %s12 = inlined_call_operand.vmem [shape: bf16[16,16,128], index: 12, kind: input, shape index: {}]
  %s13 = inlined_call_operand.vmem [shape: f32[1,128], index: 13, kind: input, shape index: {}]
  %s14 = inlined_call_operand.vmem [shape: bf16[128,128], index: 14, kind: input, shape index: {}]
  %s15 = inlined_call_operand.vmem [shape: f32[1,128], index: 15, kind: input, shape index: {}]
  %s16 = inlined_call_operand.vmem [shape: f32[4,128], index: 16, kind: output, shape index: {}]
  %s17 = sld [smem:[#allocation0]]
  $region74: #{fwd.1} parent=0
    _
  %s19 = ssub.s32 1, %s17
  %s20 = scalar_select 0, %s19, %s17
  // Predicated region
  $region2: #{fwd.1} parent=0 // pred_check
    _
  $region3: #{fwd.1} parent=0 // pred_check_branch
    %22 = sbr.rel (0) target = $region5
  $region4: #{fwd.1} parent=0 // pred_region
    _
  $region5: #{fwd.1} parent=0 // pred_fallthru
    _
  // Predicated region
  $region6: #{fwd.1} parent=0 // pred_check
    _
  $region7: #{fwd.1} parent=0 // pred_check_branch
    %24 = sbr.rel (0) target = $region9
  $region8: #{fwd.1} parent=0 // pred_region
    _
  $region9: #{fwd.1} parent=0 // pred_fallthru
    _
  // Predicated region
  $region10: #{fwd.1} parent=0 // pred_check
    _
  $region11: #{fwd.1} parent=0 // pred_check_branch
    %26 = sbr.rel (0) target = $region13
  $region12: #{fwd.1} parent=0 // pred_region
    _
  $region13: #{fwd.1} parent=0 // pred_fallthru
    _
  // Predicated region
  $region14: #{fwd.1} parent=0 // pred_check
    _
  $region15: #{fwd.1} parent=0 // pred_check_branch
    %28 = sbr.rel (0) target = $region17
  $region16: #{fwd.1} parent=0 // pred_region
    _
  $region17: #{fwd.1} parent=0 // pred_fallthru
    _
  // Predicated region
  $region18: #{fwd.1} parent=0 // pred_check
    _
  $region19: #{fwd.1} parent=0 // pred_check_branch
    %30 = sbr.rel (0) target = $region21
  $region20: #{fwd.1} parent=0 // pred_region
    _
  $region21: #{fwd.1} parent=0 // pred_fallthru
    _
  // Predicated region
  $region22: #{fwd.1} parent=0 // pred_check
    _
  $region23: #{fwd.1} parent=0 // pred_check_branch
    %32 = sbr.rel (0) target = $region25
  $region24: #{fwd.1} parent=0 // pred_region
    _
  $region25: #{fwd.1} parent=0 // pred_fallthru
    _
  // Predicated region
  $region26: #{fwd.1} parent=0 // pred_check
    _
  $region27: #{fwd.1} parent=0 // pred_check_branch
    %34 = sbr.rel (0) target = $region29
  $region28: #{fwd.1} parent=0 // pred_region
    _
  $region29: #{fwd.1} parent=0 // pred_fallthru
    _
  // Predicated region
  $region30: #{fwd.1} parent=0 // pred_check
    _
  $region31: #{fwd.1} parent=0 // pred_check_branch
    %36 = sbr.rel (0) target = $region33
  $region32: #{fwd.1} parent=0 // pred_region
    _
  $region33: #{fwd.1} parent=0 // pred_fallthru
    _
  // Predicated region
  $region34: #{fwd.1} parent=0 // pred_check
    _
  $region35: #{fwd.1} parent=0 // pred_check_branch
    %38 = sbr.rel (0) target = $region37
  $region36: #{fwd.1} parent=0 // pred_region
    _
  $region37: #{fwd.1} parent=0 // pred_fallthru
    _
  // Predicated region
  $region38: #{fwd.1} parent=0 // pred_check
    _
  $region39: #{fwd.1} parent=0 // pred_check_branch
    %40 = sbr.rel (0) target = $region41
  $region40: #{fwd.1} parent=0 // pred_region
    _
  $region41: #{fwd.1} parent=0 // pred_fallthru
    _
  // Predicated region
  $region42: #{fwd.1} parent=0 // pred_check
    _
  $region43: #{fwd.1} parent=0 // pred_check_branch
    %42 = sbr.rel (0) target = $region45
  $region44: #{fwd.1} parent=0 // pred_region
    _
  $region45: #{fwd.1} parent=0 // pred_fallthru
    _
  // Predicated region
  $region46: #{fwd.1} parent=0 // pred_check
    _
  $region47: #{fwd.1} parent=0 // pred_check_branch
    %44 = sbr.rel (0) target = $region49
  $region48: #{fwd.1} parent=0 // pred_region
    _
  $region49: #{fwd.1} parent=0 // pred_fallthru
    _
  // Predicated region
  $region50: #{fwd.1} parent=0 // pred_check
    _
  $region51: #{fwd.1} parent=0 // pred_check_branch
    %46 = sbr.rel (0) target = $region53
  $region52: #{fwd.1} parent=0 // pred_region
    _
  $region53: #{fwd.1} parent=0 // pred_fallthru
    _
  // Predicated region
  $region54: #{fwd.1} parent=0 // pred_check
    _
  $region55: #{fwd.1} parent=0 // pred_check_branch
    %48 = sbr.rel (0) target = $region57
  $region56: #{fwd.1} parent=0 // pred_region
    _
  $region57: #{fwd.1} parent=0 // pred_fallthru
    _
  // Predicated region
  $region58: #{fwd.1} parent=0 // pred_check
    _
  $region59: #{fwd.1} parent=0 // pred_check_branch
    %50 = sbr.rel (0) target = $region61
  $region60: #{fwd.1} parent=0 // pred_region
    _
  $region61: #{fwd.1} parent=0 // pred_fallthru
    _
  // Predicated region
  $region62: #{fwd.1} parent=0 // pred_check
    _
  $region63: #{fwd.1} parent=0 // pred_check_branch
    %52 = sbr.rel (0) target = $region65
  $region64: #{fwd.1} parent=0 // pred_region
    _
  $region65: #{fwd.1} parent=0 // pred_fallthru
    _
  %v54 = vld [vmem:[%s0] sm:$0xf]
  %v55 = vld [vmem:[%s0 + $0x4] sm:$0xf]
  %v56 = vld [vmem:[%s0 + $0x8] sm:$0xf]
  %v57 = vld [vmem:[%s0 + $0xc] sm:$0xf]
  %v58 = vld [vmem:[%s0 + $0x10] sm:$0xf]
  %v59 = vld [vmem:[%s0 + $0x14] sm:$0xf]
  %v60 = vld [vmem:[%s0 + $0x18] sm:$0xf]
  %v61 = vld [vmem:[%s0 + $0x1c] sm:$0xf]
  %v62 = vld [vmem:[%s0 + $0x20] sm:$0xf]
  %v63 = vld [vmem:[%s0 + $0x24] sm:$0xf]
  %v64 = vld [vmem:[%s0 + $0x28] sm:$0xf]
  %v65 = vld [vmem:[%s0 + $0x2c] sm:$0xf]
  %v66 = vld [vmem:[%s0 + $0x30] sm:$0xf]
  %v67 = vld [vmem:[%s0 + $0x34] sm:$0xf]
  %v68 = vld [vmem:[%s0 + $0x38] sm:$0xf]
  %v69 = vld [vmem:[%s0 + $0x3c] sm:$0xf]
  %v70 = vld [vmem:[%s0 + $0x40] sm:$0xf]
  %v71 = vld [vmem:[%s0 + $0x44] sm:$0xf]
  %v72 = vld [vmem:[%s0 + $0x48] sm:$0xf]
  %v73 = vld [vmem:[%s0 + $0x4c] sm:$0xf]
  %v74 = vld [vmem:[%s0 + $0x50] sm:$0xf]
  %v75 = vld [vmem:[%s0 + $0x54] sm:$0xf]
  %v76 = vld [vmem:[%s0 + $0x58] sm:$0xf]
  %v77 = vld [vmem:[%s0 + $0x5c] sm:$0xf]
  %v78 = vld [vmem:[%s0 + $0x60] sm:$0xf]
  %v79 = vld [vmem:[%s0 + $0x64] sm:$0xf]
  %v80 = vld [vmem:[%s0 + $0x68] sm:$0xf]
  %v81 = vld [vmem:[%s0 + $0x6c] sm:$0xf]
  %v82 = vld [vmem:[%s0 + $0x70] sm:$0xf]
  %v83 = vld [vmem:[%s0 + $0x74] sm:$0xf]
  %v84 = vld [vmem:[%s0 + $0x78] sm:$0xf]
  %v85 = vld [vmem:[%s0 + $0x7c] sm:$0xf]
  %v86 = vld [vmem:[%s1] sm:$0xf]
  %v87 = vld [vmem:[%s1 + $0x4] sm:$0xf]
  %v88 = vld [vmem:[%s1 + $0x8] sm:$0xf]
  %v89 = vld [vmem:[%s1 + $0xc] sm:$0xf]
  %v90 = vld [vmem:[%s1 + $0x10] sm:$0xf]
  %v91 = vld [vmem:[%s1 + $0x14] sm:$0xf]
  %v92 = vld [vmem:[%s1 + $0x18] sm:$0xf]
  %v93 = vld [vmem:[%s1 + $0x1c] sm:$0xf]
  %v94 = vld [vmem:[%s2] sm:$0x1]
  %v96 = vlaneseq
  %v97 = vshrl.u32 %v96, 7
  %v98 = vsub.s32 0, %v97
  %v99 = vrot.slane %v94, %v98
  %v133 = vunpack.c.l.b16 %v54
  %v134 = vunpack.c.l.b16 %v55
  %v135 = vunpack.c.l.b16 %v56
  %v136 = vunpack.c.l.b16 %v57
  %v137 = vunpack.c.l.b16 %v58
  %v138 = vunpack.c.l.b16 %v59
  %v139 = vunpack.c.l.b16 %v60
  %v140 = vunpack.c.l.b16 %v61
  %v141 = vunpack.c.l.b16 %v62
  %v142 = vunpack.c.l.b16 %v63
  %v143 = vunpack.c.l.b16 %v64
  %v144 = vunpack.c.l.b16 %v65
  %v145 = vunpack.c.l.b16 %v66
  %v146 = vunpack.c.l.b16 %v67
  %v147 = vunpack.c.l.b16 %v68
  %v148 = vunpack.c.l.b16 %v69
  %v149 = vunpack.c.l.b16 %v70
  %v150 = vunpack.c.l.b16 %v71
  %v151 = vunpack.c.l.b16 %v72
  %v152 = vunpack.c.l.b16 %v73
  %v153 = vunpack.c.l.b16 %v74
  %v154 = vunpack.c.l.b16 %v75
  %v155 = vunpack.c.l.b16 %v76
  %v156 = vunpack.c.l.b16 %v77
  %v157 = vunpack.c.l.b16 %v78
  %v158 = vunpack.c.l.b16 %v79
  %v159 = vunpack.c.l.b16 %v80
  %v160 = vunpack.c.l.b16 %v81
  %v161 = vunpack.c.l.b16 %v82
  %v162 = vunpack.c.l.b16 %v83
  %v163 = vunpack.c.l.b16 %v84
  %v164 = vunpack.c.l.b16 %v85
  %v165 = vpack.c.b16 %v134, %v133
  %v166 = vpack.c.b16 %v136, %v135
  %v167 = vpack.c.b16 %v138, %v137
  %v168 = vpack.c.b16 %v140, %v139
  %v169 = vpack.c.b16 %v142, %v141
  %v170 = vpack.c.b16 %v144, %v143
  %v171 = vpack.c.b16 %v146, %v145
  %v172 = vpack.c.b16 %v148, %v147
  %v173 = vpack.c.b16 %v150, %v149
  %v174 = vpack.c.b16 %v152, %v151
  %v175 = vpack.c.b16 %v154, %v153
  %v176 = vpack.c.b16 %v156, %v155
  %v177 = vpack.c.b16 %v158, %v157
  %v178 = vpack.c.b16 %v160, %v159
  %v179 = vpack.c.b16 %v162, %v161
  %v180 = vpack.c.b16 %v164, %v163
  %v189 = vunpack.c.l.b16 %v86
  %v190 = vunpack.c.l.b16 %v87
  %v191 = vunpack.c.l.b16 %v88
  %v192 = vunpack.c.l.b16 %v89
  %v193 = vunpack.c.l.b16 %v90
  %v194 = vunpack.c.l.b16 %v91
  %v195 = vunpack.c.l.b16 %v92
  %v196 = vunpack.c.l.b16 %v93
  %v197 = vpack.c.b16 %v190, %v189
  %v198 = vpack.c.b16 %v192, %v191
  %v199 = vpack.c.b16 %v194, %v193
  %v200 = vpack.c.b16 %v196, %v195
  %vm205 = vcmask 523264
  %v207 = vsel %vm205, %v165, 0
  %v210 = vsel %vm205, %v166, 0
  %v213 = vsel %vm205, %v167, 0
  %v216 = vsel %vm205, %v168, 0
  %v219 = vsel %vm205, %v169, 0
  %v222 = vsel %vm205, %v170, 0
  %v225 = vsel %vm205, %v171, 0
  %v228 = vsel %vm205, %v172, 0
  %v231 = vsel %vm205, %v173, 0
  %v234 = vsel %vm205, %v174, 0
  %v237 = vsel %vm205, %v175, 0
  %v240 = vsel %vm205, %v176, 0
  %v243 = vsel %vm205, %v177, 0
  %v246 = vsel %vm205, %v178, 0
  %v249 = vsel %vm205, %v179, 0
  %v252 = vsel %vm205, %v180, 0
  %254 = vmatprep.subr.bf16.mxu0 0
  %255 = vmatpush1.bf16.msra.mxu0 0
  %256 = vmatprep.subr.bf16.mxu0 0
  %257 = vmatpush1.bf16.msra.mxu0 0
  %258 = vmatprep.subr.bf16.mxu0 0
  %259 = vmatpush1.bf16.msra.mxu0 0
  %260 = vmatprep.subr.bf16.mxu0 0
  %261 = vmatpush1.bf16.msra.mxu0 0
  %262 = vmatprep.subr.bf16.mxu0 0
  %263 = vmatpush1.bf16.msra.mxu0 %v200
  %264 = vmatprep.subr.bf16.mxu0 0
  %265 = vmatpush1.bf16.msra.mxu0 %v199
  %266 = vmatprep.subr.bf16.mxu0 0
  %267 = vmatpush1.bf16.msra.mxu0 %v198
  %268 = vmatprep.subr.bf16.mxu0 0
  %269 = vmatpush1.bf16.msra.mxu0 %v197
  %270 = vmatprep.subr.bf16.mxu0 0
  %271 = vmatpush2.bf16.msra.mxu0 0
  %272 = vmatprep.subr.bf16.mxu0 0
  %273 = vmatpush2.bf16.msra.mxu0 0
  %274 = vmatprep.subr.bf16.mxu0 0
  %275 = vmatpush2.bf16.msra.mxu0 0
  %276 = vmatprep.subr.bf16.mxu0 0
  %277 = vmatpush2.bf16.msra.mxu0 0
  %278 = vmatprep.subr.bf16.mxu0 0
  %279 = vmatpush2.bf16.msra.mxu0 0
  %280 = vmatprep.subr.bf16.mxu0 0
  %281 = vmatpush2.bf16.msra.mxu0 0
  %282 = vmatprep.subr.bf16.mxu0 0
  %283 = vmatpush2.bf16.msra.mxu0 0
  %284 = vmatprep.subr.bf16.mxu0 0
  %285 = vmatpush2.bf16.msra.mxu0 0
  %286 = vmatprep.mubr.bf16.mxu0 0
  %287 = vmatmul.mubr.bf16.gmra.mxu0 %v207
  %v288 = vpop.f32.mrf.mxu0
  %v289 = vadd.f32 %v99, %v288
  %v290 = vpop.f32.mrf.mxu0
  %v291 = vpop.f32.mrf.mxu0
  %v292 = vadd.f32 %v99, %v291
  %v293 = vpop.f32.mrf.mxu0
  %294 = vmatprep.mubr.bf16.mxu0 0
  %295 = vmatmul.mubr.bf16.gmra.mxu0 %v210
  %v296 = vpop.f32.mrf.mxu0
  %v297 = vadd.f32 %v99, %v296
  %v298 = vpop.f32.mrf.mxu0
  %v299 = vpop.f32.mrf.mxu0
  %v300 = vadd.f32 %v99, %v299
  %v301 = vpop.f32.mrf.mxu0
  %302 = vmatprep.mubr.bf16.mxu0 0
  %303 = vmatmul.mubr.bf16.gmra.mxu0 %v213
  %v304 = vpop.f32.mrf.mxu0
  %v305 = vadd.f32 %v99, %v304
  %v306 = vpop.f32.mrf.mxu0
  %v307 = vpop.f32.mrf.mxu0
  %v308 = vadd.f32 %v99, %v307
  %v309 = vpop.f32.mrf.mxu0
  %310 = vmatprep.mubr.bf16.mxu0 0
  %311 = vmatmul.mubr.bf16.gmra.mxu0 %v216
  %v312 = vpop.f32.mrf.mxu0
  %v313 = vadd.f32 %v99, %v312
  %v314 = vpop.f32.mrf.mxu0
  %v315 = vpop.f32.mrf.mxu0
  %v316 = vadd.f32 %v99, %v315
  %v317 = vpop.f32.mrf.mxu0
  %318 = vmatprep.mubr.bf16.mxu0 0
  %319 = vmatmul.mubr.bf16.gmra.mxu0 %v219
  %v320 = vpop.f32.mrf.mxu0
  %v321 = vadd.f32 %v99, %v320
  %v322 = vpop.f32.mrf.mxu0
  %v323 = vpop.f32.mrf.mxu0
  %v324 = vadd.f32 %v99, %v323
  %v325 = vpop.f32.mrf.mxu0
  %326 = vmatprep.mubr.bf16.mxu0 0
  %327 = vmatmul.mubr.bf16.gmra.mxu0 %v222
  %v328 = vpop.f32.mrf.mxu0
  %v329 = vadd.f32 %v99, %v328
  %v330 = vpop.f32.mrf.mxu0
  %v331 = vpop.f32.mrf.mxu0
  %v332 = vadd.f32 %v99, %v331
  %v333 = vpop.f32.mrf.mxu0
  %334 = vmatprep.mubr.bf16.mxu0 0
  %335 = vmatmul.mubr.bf16.gmra.mxu0 %v225
  %v336 = vpop.f32.mrf.mxu0
  %v337 = vadd.f32 %v99, %v336
  %v338 = vpop.f32.mrf.mxu0
  %v339 = vpop.f32.mrf.mxu0
  %v340 = vadd.f32 %v99, %v339
  %v341 = vpop.f32.mrf.mxu0
  %342 = vmatprep.mubr.bf16.mxu0 0
  %343 = vmatmul.mubr.bf16.gmra.mxu0 %v228
  %v344 = vpop.f32.mrf.mxu0
  %v345 = vadd.f32 %v99, %v344
  %v346 = vpop.f32.mrf.mxu0
  %v347 = vpop.f32.mrf.mxu0
  %v348 = vadd.f32 %v99, %v347
  %v349 = vpop.f32.mrf.mxu0
  %350 = vmatprep.mubr.bf16.mxu0 0
  %351 = vmatmul.mubr.bf16.gmra.mxu0 %v231
  %v352 = vpop.f32.mrf.mxu0
  %v353 = vadd.f32 %v99, %v352
  %v354 = vpop.f32.mrf.mxu0
  %v355 = vpop.f32.mrf.mxu0
  %v356 = vadd.f32 %v99, %v355
  %v357 = vpop.f32.mrf.mxu0
  %358 = vmatprep.mubr.bf16.mxu0 0
  %359 = vmatmul.mubr.bf16.gmra.mxu0 %v234
  %v360 = vpop.f32.mrf.mxu0
  %v361 = vadd.f32 %v99, %v360
  %v362 = vpop.f32.mrf.mxu0
  %v363 = vpop.f32.mrf.mxu0
  %v364 = vadd.f32 %v99, %v363
  %v365 = vpop.f32.mrf.mxu0
  %366 = vmatprep.mubr.bf16.mxu0 0
  %367 = vmatmul.mubr.bf16.gmra.mxu0 %v237
  %v368 = vpop.f32.mrf.mxu0
  %v369 = vadd.f32 %v99, %v368
  %v370 = vpop.f32.mrf.mxu0
  %v371 = vpop.f32.mrf.mxu0
  %v372 = vadd.f32 %v99, %v371
  %v373 = vpop.f32.mrf.mxu0
  %374 = vmatprep.mubr.bf16.mxu0 0
  %375 = vmatmul.mubr.bf16.gmra.mxu0 %v240
  %v376 = vpop.f32.mrf.mxu0
  %v377 = vadd.f32 %v99, %v376
  %v378 = vpop.f32.mrf.mxu0
  %v379 = vpop.f32.mrf.mxu0
  %v380 = vadd.f32 %v99, %v379
  %v381 = vpop.f32.mrf.mxu0
  %382 = vmatprep.mubr.bf16.mxu0 0
  %383 = vmatmul.mubr.bf16.gmra.mxu0 %v243
  %v384 = vpop.f32.mrf.mxu0
  %v385 = vadd.f32 %v99, %v384
  %v386 = vpop.f32.mrf.mxu0
  %v387 = vpop.f32.mrf.mxu0
  %v388 = vadd.f32 %v99, %v387
  %v389 = vpop.f32.mrf.mxu0
  %390 = vmatprep.mubr.bf16.mxu0 0
  %391 = vmatmul.mubr.bf16.gmra.mxu0 %v246
  %v392 = vpop.f32.mrf.mxu0
  %v393 = vadd.f32 %v99, %v392
  %v394 = vpop.f32.mrf.mxu0
  %v395 = vpop.f32.mrf.mxu0
  %v396 = vadd.f32 %v99, %v395
  %v397 = vpop.f32.mrf.mxu0
  %398 = vmatprep.mubr.bf16.mxu0 0
  %399 = vmatmul.mubr.bf16.gmra.mxu0 %v249
  %v400 = vpop.f32.mrf.mxu0
  %v401 = vadd.f32 %v99, %v400
  %v402 = vpop.f32.mrf.mxu0
  %v403 = vpop.f32.mrf.mxu0
  %v404 = vadd.f32 %v99, %v403
  %v405 = vpop.f32.mrf.mxu0
  %406 = vmatprep.mubr.bf16.mxu0 0
  %407 = vmatmul.mubr.bf16.gmra.mxu0 %v252
  %v408 = vpop.f32.mrf.mxu0
  %v409 = vadd.f32 %v99, %v408
  %v410 = vpop.f32.mrf.mxu0
  %v411 = vpop.f32.mrf.mxu0
  %v412 = vadd.f32 %v99, %v411
  %v413 = vpop.f32.mrf.mxu0
  %414 = vdwg.mxu0
  %v415 = vmax.f32 %v289, 0.0
  %v416 = vmax.f32 %v292, 0.0
  %v417 = vmax.f32 %v297, 0.0
  %v418 = vmax.f32 %v300, 0.0
  %v419 = vmax.f32 %v305, 0.0
  %v420 = vmax.f32 %v308, 0.0
  %v421 = vmax.f32 %v313, 0.0
  %v422 = vmax.f32 %v316, 0.0
  %v423 = vmax.f32 %v321, 0.0
  %v424 = vmax.f32 %v324, 0.0
  %v425 = vmax.f32 %v329, 0.0
  %v426 = vmax.f32 %v332, 0.0
  %v427 = vmax.f32 %v337, 0.0
  %v428 = vmax.f32 %v340, 0.0
  %v429 = vmax.f32 %v345, 0.0
  %v430 = vmax.f32 %v348, 0.0
  %v431 = vmax.f32 %v353, 0.0
  %v432 = vmax.f32 %v356, 0.0
  %v433 = vmax.f32 %v361, 0.0
  %v434 = vmax.f32 %v364, 0.0
  %v435 = vmax.f32 %v369, 0.0
  %v436 = vmax.f32 %v372, 0.0
  %v437 = vmax.f32 %v377, 0.0
  %v438 = vmax.f32 %v380, 0.0
  %v439 = vmax.f32 %v385, 0.0
  %v440 = vmax.f32 %v388, 0.0
  %v441 = vmax.f32 %v393, 0.0
  %v442 = vmax.f32 %v396, 0.0
  %v443 = vmax.f32 %v401, 0.0
  %v444 = vmax.f32 %v404, 0.0
  %v445 = vmax.f32 %v409, 0.0
  %v446 = vmax.f32 %v412, 0.0
  %v447 = vld [vmem:[%s5] sm:$0x1]
  %v448 = vpack.c.bf16 %v416, %v415
  %v449 = vpack.c.bf16 %v418, %v417
  %v450 = vpack.c.bf16 %v420, %v419
  %v451 = vpack.c.bf16 %v422, %v421
  %v452 = vpack.c.bf16 %v424, %v423
  %v453 = vpack.c.bf16 %v426, %v425
  %v454 = vpack.c.bf16 %v428, %v427
  %v455 = vpack.c.bf16 %v430, %v429
  %v456 = vpack.c.bf16 %v432, %v431
  %v457 = vpack.c.bf16 %v434, %v433
  %v458 = vpack.c.bf16 %v436, %v435
  %v459 = vpack.c.bf16 %v438, %v437
  %v460 = vpack.c.bf16 %v440, %v439
  %v461 = vpack.c.bf16 %v442, %v441
  %v462 = vpack.c.bf16 %v444, %v443
  %v463 = vpack.c.bf16 %v446, %v445
  %v464 = vld [vmem:[%s3] sm:$0xff]
  %v465 = vld [vmem:[%s3 + $0x8] sm:$0xff]
  %v466 = vld [vmem:[%s3 + $0x10] sm:$0xff]
  %v467 = vld [vmem:[%s3 + $0x18] sm:$0xff]
  %v468 = vld [vmem:[%s3 + $0x20] sm:$0xff]
  %v469 = vld [vmem:[%s3 + $0x28] sm:$0xff]
  %v470 = vld [vmem:[%s3 + $0x30] sm:$0xff]
  %v471 = vld [vmem:[%s3 + $0x38] sm:$0xff]
  %v480 = vunpack.c.l.b16 %v464
  %v481 = vunpack.c.h.b16 %v464
  %v482 = vunpack.c.l.b16 %v465
  %v483 = vunpack.c.h.b16 %v465
  %v484 = vunpack.c.l.b16 %v466
  %v485 = vunpack.c.h.b16 %v466
  %v486 = vunpack.c.l.b16 %v467
  %v487 = vunpack.c.h.b16 %v467
  %v488 = vunpack.c.l.b16 %v468
  %v489 = vunpack.c.h.b16 %v468
  %v490 = vunpack.c.l.b16 %v469
  %v491 = vunpack.c.h.b16 %v469
  %v492 = vunpack.c.l.b16 %v470
  %v493 = vunpack.c.h.b16 %v470
  %v494 = vunpack.c.l.b16 %v471
  %v495 = vunpack.c.h.b16 %v471
  %v496 = vpack.c.b16 %v482, %v480
  %v497 = vpack.c.b16 %v483, %v481
  %v498 = vpack.c.b16 %v486, %v484
  %v499 = vpack.c.b16 %v487, %v485
  %v500 = vpack.c.b16 %v490, %v488
  %v501 = vpack.c.b16 %v491, %v489
  %v502 = vpack.c.b16 %v494, %v492
  %v503 = vpack.c.b16 %v495, %v493
  %512 = vmatprep.subr.bf16.mxu0 0
  %513 = vmatpush1.bf16.msra.mxu0 %v455
  %514 = vmatprep.subr.bf16.mxu0 0
  %515 = vmatpush1.bf16.msra.mxu0 %v454
  %516 = vmatprep.subr.bf16.mxu0 0
  %517 = vmatpush1.bf16.msra.mxu0 %v453
  %518 = vmatprep.subr.bf16.mxu0 0
  %519 = vmatpush1.bf16.msra.mxu0 %v452
  %520 = vmatprep.subr.bf16.mxu0 0
  %521 = vmatpush1.bf16.msra.mxu0 %v451
  %522 = vmatprep.subr.bf16.mxu0 0
  %523 = vmatpush1.bf16.msra.mxu0 %v450
  %524 = vmatprep.subr.bf16.mxu0 0
  %525 = vmatpush1.bf16.msra.mxu0 %v449
  %526 = vmatprep.subr.bf16.mxu0 0
  %527 = vmatpush1.bf16.msra.mxu0 %v448
  %528 = vmatprep.subr.bf16.mxu0 0
  %529 = vmatpush2.bf16.msra.mxu0 %v463
  %530 = vmatprep.subr.bf16.mxu0 0
  %531 = vmatpush2.bf16.msra.mxu0 %v462
  %532 = vmatprep.subr.bf16.mxu0 0
  %533 = vmatpush2.bf16.msra.mxu0 %v461
  %534 = vmatprep.subr.bf16.mxu0 0
  %535 = vmatpush2.bf16.msra.mxu0 %v460
  %536 = vmatprep.subr.bf16.mxu0 0
  %537 = vmatpush2.bf16.msra.mxu0 %v459
  %538 = vmatprep.subr.bf16.mxu0 0
  %539 = vmatpush2.bf16.msra.mxu0 %v458
  %540 = vmatprep.subr.bf16.mxu0 0
  %541 = vmatpush2.bf16.msra.mxu0 %v457
  %542 = vmatprep.subr.bf16.mxu0 0
  %543 = vmatpush2.bf16.msra.mxu0 %v456
  %544 = vmatprep.mubr.bf16.mxu0 %v497
  %545 = vmatmul.mubr.bf16.gmra.mxu0 %v496
  %v546 = vpop.f32.mrf.mxu0
  %v547 = vadd.f32 0.0, %v546
  %v548 = vpop.f32.mrf.mxu0
  %v549 = vpop.f32.mrf.mxu0
  %v550 = vadd.f32 0.0, %v549
  %v551 = vpop.f32.mrf.mxu0
  %552 = vmatprep.mubr.bf16.mxu0 %v499
  %553 = vmatmul.mubr.bf16.gmra.mxu0 %v498
  %v554 = vpop.f32.mrf.mxu0
  %v555 = vadd.f32 0.0, %v554
  %v556 = vpop.f32.mrf.mxu0
  %v557 = vpop.f32.mrf.mxu0
  %v558 = vadd.f32 0.0, %v557
  %v559 = vpop.f32.mrf.mxu0
  %560 = vmatprep.mubr.bf16.mxu0 %v501
  %561 = vmatmul.mubr.bf16.gmra.mxu0 %v500
  %v562 = vpop.f32.mrf.mxu0
  %v563 = vadd.f32 0.0, %v562
  %v564 = vpop.f32.mrf.mxu0
  %v565 = vpop.f32.mrf.mxu0
  %v566 = vadd.f32 0.0, %v565
  %v567 = vpop.f32.mrf.mxu0
  %568 = vmatprep.mubr.bf16.mxu0 %v503
  %569 = vmatmul.mubr.bf16.gmra.mxu0 %v502
  %v570 = vpop.f32.mrf.mxu0
  %v571 = vadd.f32 0.0, %v570
  %v572 = vpop.f32.mrf.mxu0
  %v573 = vpop.f32.mrf.mxu0
  %v574 = vadd.f32 0.0, %v573
  %v575 = vpop.f32.mrf.mxu0
  %576 = vdwg.mxu0
  %v577 = vpack.c.bf16 %v550, %v547
  %v578 = vpack.c.bf16 %v558, %v555
  %v579 = vpack.c.bf16 %v566, %v563
  %v580 = vpack.c.bf16 %v574, %v571
  %v581 = vld [vmem:[%s4] sm:$0xf]
  %s582 = scalar_lea.vmem %s3, 64
  %v583 = vld [vmem:[%s582] sm:$0xff]
  %v584 = vld [vmem:[%s582 + $0x8] sm:$0xff]
  %v585 = vld [vmem:[%s582 + $0x10] sm:$0xff]
  %v586 = vld [vmem:[%s582 + $0x18] sm:$0xff]
  %v587 = vld [vmem:[%s582 + $0x20] sm:$0xff]
  %v588 = vld [vmem:[%s582 + $0x28] sm:$0xff]
  %v589 = vld [vmem:[%s582 + $0x30] sm:$0xff]
  %v590 = vld [vmem:[%s582 + $0x38] sm:$0xff]
  %v599 = vunpack.c.l.b16 %v583
  %v600 = vunpack.c.h.b16 %v583
  %v601 = vunpack.c.l.b16 %v584
  %v602 = vunpack.c.h.b16 %v584
  %v603 = vunpack.c.l.b16 %v585
  %v604 = vunpack.c.h.b16 %v585
  %v605 = vunpack.c.l.b16 %v586
  %v606 = vunpack.c.h.b16 %v586
  %v607 = vunpack.c.l.b16 %v587
  %v608 = vunpack.c.h.b16 %v587
  %v609 = vunpack.c.l.b16 %v588
  %v610 = vunpack.c.h.b16 %v588
  %v611 = vunpack.c.l.b16 %v589
  %v612 = vunpack.c.h.b16 %v589
  %v613 = vunpack.c.l.b16 %v590
  %v614 = vunpack.c.h.b16 %v590
  %v615 = vpack.c.b16 %v601, %v599
  %v616 = vpack.c.b16 %v602, %v600
  %v617 = vpack.c.b16 %v605, %v603
  %v618 = vpack.c.b16 %v606, %v604
  %v619 = vpack.c.b16 %v609, %v607
  %v620 = vpack.c.b16 %v610, %v608
  %v621 = vpack.c.b16 %v613, %v611
  %v622 = vpack.c.b16 %v614, %v612
  %631 = vmatprep.subr.bf16.mxu0 0
  %632 = vmatpush1.bf16.msra.mxu0 %v455
  %633 = vmatprep.subr.bf16.mxu0 0
  %634 = vmatpush1.bf16.msra.mxu0 %v454
  %635 = vmatprep.subr.bf16.mxu0 0
  %636 = vmatpush1.bf16.msra.mxu0 %v453
  %637 = vmatprep.subr.bf16.mxu0 0
  %638 = vmatpush1.bf16.msra.mxu0 %v452
  %639 = vmatprep.subr.bf16.mxu0 0
  %640 = vmatpush1.bf16.msra.mxu0 %v451
  %641 = vmatprep.subr.bf16.mxu0 0
  %642 = vmatpush1.bf16.msra.mxu0 %v450
  %643 = vmatprep.subr.bf16.mxu0 0
  %644 = vmatpush1.bf16.msra.mxu0 %v449
  %645 = vmatprep.subr.bf16.mxu0 0
  %646 = vmatpush1.bf16.msra.mxu0 %v448
  %647 = vmatprep.subr.bf16.mxu0 0
  %648 = vmatpush2.bf16.msra.mxu0 %v463
  %649 = vmatprep.subr.bf16.mxu0 0
  %650 = vmatpush2.bf16.msra.mxu0 %v462
  %651 = vmatprep.subr.bf16.mxu0 0
  %652 = vmatpush2.bf16.msra.mxu0 %v461
  %653 = vmatprep.subr.bf16.mxu0 0
  %654 = vmatpush2.bf16.msra.mxu0 %v460
  %655 = vmatprep.subr.bf16.mxu0 0
  %656 = vmatpush2.bf16.msra.mxu0 %v459
  %657 = vmatprep.subr.bf16.mxu0 0
  %658 = vmatpush2.bf16.msra.mxu0 %v458
  %659 = vmatprep.subr.bf16.mxu0 0
  %660 = vmatpush2.bf16.msra.mxu0 %v457
  %661 = vmatprep.subr.bf16.mxu0 0
  %662 = vmatpush2.bf16.msra.mxu0 %v456
  %663 = vmatprep.mubr.bf16.mxu0 %v616
  %664 = vmatmul.mubr.bf16.gmra.mxu0 %v615
  %v665 = vpop.f32.mrf.mxu0
  %v666 = vadd.f32 0.0, %v665
  %v667 = vpop.f32.mrf.mxu0
  %v668 = vpop.f32.mrf.mxu0
  %v669 = vadd.f32 0.0, %v668
  %v670 = vpop.f32.mrf.mxu0
  %671 = vmatprep.mubr.bf16.mxu0 %v618
  %672 = vmatmul.mubr.bf16.gmra.mxu0 %v617
  %v673 = vpop.f32.mrf.mxu0
  %v674 = vadd.f32 0.0, %v673
  %v675 = vpop.f32.mrf.mxu0
  %v676 = vpop.f32.mrf.mxu0
  %v677 = vadd.f32 0.0, %v676
  %v678 = vpop.f32.mrf.mxu0
  %679 = vmatprep.mubr.bf16.mxu0 %v620
  %680 = vmatmul.mubr.bf16.gmra.mxu0 %v619
  %v681 = vpop.f32.mrf.mxu0
  %v682 = vadd.f32 0.0, %v681
  %v683 = vpop.f32.mrf.mxu0
  %v684 = vpop.f32.mrf.mxu0
  %v685 = vadd.f32 0.0, %v684
  %v686 = vpop.f32.mrf.mxu0
  %687 = vmatprep.mubr.bf16.mxu0 %v622
  %688 = vmatmul.mubr.bf16.gmra.mxu0 %v621
  %v689 = vpop.f32.mrf.mxu0
  %v690 = vadd.f32 0.0, %v689
  %v691 = vpop.f32.mrf.mxu0
  %v692 = vpop.f32.mrf.mxu0
  %v693 = vadd.f32 0.0, %v692
  %v694 = vpop.f32.mrf.mxu0
  %695 = vdwg.mxu0
  %v696 = vpack.c.bf16 %v669, %v666
  %v697 = vpack.c.bf16 %v677, %v674
  %v698 = vpack.c.bf16 %v685, %v682
  %v699 = vpack.c.bf16 %v693, %v690
  %s700 = scalar_lea.vmem %s4, 4
  %v701 = vld [vmem:[%s700] sm:$0xf]
  %vm702 = vcmask 64512
  %v704 = vsel %vm702, %v696, 0
  %v707 = vsel %vm702, %v697, 0
  %v710 = vsel %vm702, %v698, 0
  %v713 = vsel %vm702, %v699, 0
  %vm715 = vcmask 1043456
  %v717 = vsel %vm715, %v701, 0
  %719 = vmatprep.subr.bf16.mxu0 0
  %720 = vmatpush1.bf16.msra.mxu0 0
  %721 = vmatprep.subr.bf16.mxu0 0
  %722 = vmatpush1.bf16.msra.mxu0 0
  %723 = vmatprep.subr.bf16.mxu0 0
  %724 = vmatpush1.bf16.msra.mxu0 0
  %725 = vmatprep.subr.bf16.mxu0 0
  %726 = vmatpush1.bf16.msra.mxu0 0
  %727 = vmatprep.subr.bf16.mxu0 0
  %728 = vmatpush1.bf16.msra.mxu0 0
  %729 = vmatprep.subr.bf16.mxu0 0
  %730 = vmatpush1.bf16.msra.mxu0 0
  %731 = vmatprep.subr.bf16.mxu0 0
  %732 = vmatpush1.bf16.msra.mxu0 0
  %733 = vmatprep.subr.bf16.mxu0 0
  %734 = vmatpush1.bf16.msra.mxu0 %v717
  %735 = vmatprep.subr.bf16.mxu0 0
  %736 = vmatpush2.bf16.msra.mxu0 0
  %737 = vmatprep.subr.bf16.mxu0 0
  %738 = vmatpush2.bf16.msra.mxu0 0
  %739 = vmatprep.subr.bf16.mxu0 0
  %740 = vmatpush2.bf16.msra.mxu0 0
  %741 = vmatprep.subr.bf16.mxu0 0
  %742 = vmatpush2.bf16.msra.mxu0 0
  %743 = vmatprep.subr.bf16.mxu0 0
  %744 = vmatpush2.bf16.msra.mxu0 0
  %745 = vmatprep.subr.bf16.mxu0 0
  %746 = vmatpush2.bf16.msra.mxu0 0
  %747 = vmatprep.subr.bf16.mxu0 0
  %748 = vmatpush2.bf16.msra.mxu0 0
  %749 = vmatprep.subr.bf16.mxu0 0
  %750 = vmatpush2.bf16.msra.mxu0 0
  %751 = vmatprep.mubr.bf16.mxu0 0
  %752 = vmatmul.mubr.bf16.gmra.mxu0 %v704
  %v753 = vpop.f32.mrf.mxu0
  %v754 = vadd.f32 0.0, %v753
  %v755 = vpop.f32.mrf.mxu0
  %v756 = vpop.f32.mrf.mxu0
  %v757 = vadd.f32 0.0, %v756
  %v758 = vpop.f32.mrf.mxu0
  %759 = vmatprep.mubr.bf16.mxu0 0
  %760 = vmatmul.mubr.bf16.gmra.mxu0 %v707
  %v761 = vpop.f32.mrf.mxu0
  %v762 = vadd.f32 0.0, %v761
  %v763 = vpop.f32.mrf.mxu0
  %v764 = vpop.f32.mrf.mxu0
  %v765 = vadd.f32 0.0, %v764
  %v766 = vpop.f32.mrf.mxu0
  %767 = vmatprep.mubr.bf16.mxu0 0
  %768 = vmatmul.mubr.bf16.gmra.mxu0 %v710
  %v769 = vpop.f32.mrf.mxu0
  %v770 = vadd.f32 0.0, %v769
  %v771 = vpop.f32.mrf.mxu0
  %v772 = vpop.f32.mrf.mxu0
  %v773 = vadd.f32 0.0, %v772
  %v774 = vpop.f32.mrf.mxu0
  %775 = vmatprep.mubr.bf16.mxu0 0
  %776 = vmatmul.mubr.bf16.gmra.mxu0 %v713
  %v777 = vpop.f32.mrf.mxu0
  %v778 = vadd.f32 0.0, %v777
  %v779 = vpop.f32.mrf.mxu0
  %v780 = vpop.f32.mrf.mxu0
  %v781 = vadd.f32 0.0, %v780
  %v782 = vpop.f32.mrf.mxu0
  %783 = vdwg.mxu0
  %v785 = vsel %vm702, %v577, 0
  %v788 = vsel %vm702, %v578, 0
  %v791 = vsel %vm702, %v579, 0
  %v794 = vsel %vm702, %v580, 0
  %v797 = vsel %vm715, %v581, 0
  %799 = vmatprep.subr.bf16.mxu0 0
  %800 = vmatpush1.bf16.msra.mxu0 0
  %801 = vmatprep.subr.bf16.mxu0 0
  %802 = vmatpush1.bf16.msra.mxu0 0
  %803 = vmatprep.subr.bf16.mxu0 0
  %804 = vmatpush1.bf16.msra.mxu0 0
  %805 = vmatprep.subr.bf16.mxu0 0
  %806 = vmatpush1.bf16.msra.mxu0 0
  %807 = vmatprep.subr.bf16.mxu0 0
  %808 = vmatpush1.bf16.msra.mxu0 0
  %809 = vmatprep.subr.bf16.mxu0 0
  %810 = vmatpush1.bf16.msra.mxu0 0
  %811 = vmatprep.subr.bf16.mxu0 0
  %812 = vmatpush1.bf16.msra.mxu0 0
  %813 = vmatprep.subr.bf16.mxu0 0
  %814 = vmatpush1.bf16.msra.mxu0 %v797
  %815 = vmatprep.subr.bf16.mxu0 0
  %816 = vmatpush2.bf16.msra.mxu0 0
  %817 = vmatprep.subr.bf16.mxu0 0
  %818 = vmatpush2.bf16.msra.mxu0 0
  %819 = vmatprep.subr.bf16.mxu0 0
  %820 = vmatpush2.bf16.msra.mxu0 0
  %821 = vmatprep.subr.bf16.mxu0 0
  %822 = vmatpush2.bf16.msra.mxu0 0
  %823 = vmatprep.subr.bf16.mxu0 0
  %824 = vmatpush2.bf16.msra.mxu0 0
  %825 = vmatprep.subr.bf16.mxu0 0
  %826 = vmatpush2.bf16.msra.mxu0 0
  %827 = vmatprep.subr.bf16.mxu0 0
  %828 = vmatpush2.bf16.msra.mxu0 0
  %829 = vmatprep.subr.bf16.mxu0 0
  %830 = vmatpush2.bf16.msra.mxu0 0
  %831 = vmatprep.mubr.bf16.mxu0 0
  %832 = vmatmul.mubr.bf16.gmra.mxu0 %v785
  %v833 = vpop.f32.mrf.mxu0
  %v834 = vadd.f32 %v754, %v833
  %v835 = vpop.f32.mrf.mxu0
  %v836 = vpop.f32.mrf.mxu0
  %v837 = vadd.f32 %v757, %v836
  %v838 = vpop.f32.mrf.mxu0
  %839 = vmatprep.mubr.bf16.mxu0 0
  %840 = vmatmul.mubr.bf16.gmra.mxu0 %v788
  %v841 = vpop.f32.mrf.mxu0
  %v842 = vadd.f32 %v762, %v841
  %v843 = vpop.f32.mrf.mxu0
  %v844 = vpop.f32.mrf.mxu0
  %v845 = vadd.f32 %v765, %v844
  %v846 = vpop.f32.mrf.mxu0
  %847 = vmatprep.mubr.bf16.mxu0 0
  %848 = vmatmul.mubr.bf16.gmra.mxu0 %v791
  %v849 = vpop.f32.mrf.mxu0
  %v850 = vadd.f32 %v770, %v849
  %v851 = vpop.f32.mrf.mxu0
  %v852 = vpop.f32.mrf.mxu0
  %v853 = vadd.f32 %v773, %v852
  %v854 = vpop.f32.mrf.mxu0
  %855 = vmatprep.mubr.bf16.mxu0 0
  %856 = vmatmul.mubr.bf16.gmra.mxu0 %v794
  %v857 = vpop.f32.mrf.mxu0
  %v858 = vadd.f32 %v778, %v857
  %v859 = vpop.f32.mrf.mxu0
  %v860 = vpop.f32.mrf.mxu0
  %v861 = vadd.f32 %v781, %v860
  %v862 = vpop.f32.mrf.mxu0
  %863 = vdwg.mxu0
  %s864 = scalar_lea.vmem %s3, 128
  %v865 = vld [vmem:[%s864] sm:$0xff]
  %v866 = vld [vmem:[%s864 + $0x8] sm:$0xff]
  %v867 = vld [vmem:[%s864 + $0x10] sm:$0xff]
  %v868 = vld [vmem:[%s864 + $0x18] sm:$0xff]
  %v869 = vld [vmem:[%s864 + $0x20] sm:$0xff]
  %v870 = vld [vmem:[%s864 + $0x28] sm:$0xff]
  %v871 = vld [vmem:[%s864 + $0x30] sm:$0xff]
  %v872 = vld [vmem:[%s864 + $0x38] sm:$0xff]
  %v881 = vunpack.c.l.b16 %v865
  %v882 = vunpack.c.h.b16 %v865
  %v883 = vunpack.c.l.b16 %v866
  %v884 = vunpack.c.h.b16 %v866
  %v885 = vunpack.c.l.b16 %v867
  %v886 = vunpack.c.h.b16 %v867
  %v887 = vunpack.c.l.b16 %v868
  %v888 = vunpack.c.h.b16 %v868
  %v889 = vunpack.c.l.b16 %v869
  %v890 = vunpack.c.h.b16 %v869
  %v891 = vunpack.c.l.b16 %v870
  %v892 = vunpack.c.h.b16 %v870
  %v893 = vunpack.c.l.b16 %v871
  %v894 = vunpack.c.h.b16 %v871
  %v895 = vunpack.c.l.b16 %v872
  %v896 = vunpack.c.h.b16 %v872
  %v897 = vpack.c.b16 %v883, %v881
  %v898 = vpack.c.b16 %v884, %v882
  %v899 = vpack.c.b16 %v887, %v885
  %v900 = vpack.c.b16 %v888, %v886
  %v901 = vpack.c.b16 %v891, %v889
  %v902 = vpack.c.b16 %v892, %v890
  %v903 = vpack.c.b16 %v895, %v893
  %v904 = vpack.c.b16 %v896, %v894
  %913 = vmatprep.subr.bf16.mxu0 0
  %914 = vmatpush1.bf16.msra.mxu0 %v455
  %915 = vmatprep.subr.bf16.mxu0 0
  %916 = vmatpush1.bf16.msra.mxu0 %v454
  %917 = vmatprep.subr.bf16.mxu0 0
  %918 = vmatpush1.bf16.msra.mxu0 %v453
  %919 = vmatprep.subr.bf16.mxu0 0
  %920 = vmatpush1.bf16.msra.mxu0 %v452
  %921 = vmatprep.subr.bf16.mxu0 0
  %922 = vmatpush1.bf16.msra.mxu0 %v451
  %923 = vmatprep.subr.bf16.mxu0 0
  %924 = vmatpush1.bf16.msra.mxu0 %v450
  %925 = vmatprep.subr.bf16.mxu0 0
  %926 = vmatpush1.bf16.msra.mxu0 %v449
  %927 = vmatprep.subr.bf16.mxu0 0
  %928 = vmatpush1.bf16.msra.mxu0 %v448
  %929 = vmatprep.subr.bf16.mxu0 0
  %930 = vmatpush2.bf16.msra.mxu0 %v463
  %931 = vmatprep.subr.bf16.mxu0 0
  %932 = vmatpush2.bf16.msra.mxu0 %v462
  %933 = vmatprep.subr.bf16.mxu0 0
  %934 = vmatpush2.bf16.msra.mxu0 %v461
  %935 = vmatprep.subr.bf16.mxu0 0
  %936 = vmatpush2.bf16.msra.mxu0 %v460
  %937 = vmatprep.subr.bf16.mxu0 0
  %938 = vmatpush2.bf16.msra.mxu0 %v459
  %939 = vmatprep.subr.bf16.mxu0 0
  %940 = vmatpush2.bf16.msra.mxu0 %v458
  %941 = vmatprep.subr.bf16.mxu0 0
  %942 = vmatpush2.bf16.msra.mxu0 %v457
  %943 = vmatprep.subr.bf16.mxu0 0
  %944 = vmatpush2.bf16.msra.mxu0 %v456
  %945 = vmatprep.mubr.bf16.mxu0 %v898
  %946 = vmatmul.mubr.bf16.gmra.mxu0 %v897
  %v947 = vpop.f32.mrf.mxu0
  %v948 = vadd.f32 0.0, %v947
  %v949 = vpop.f32.mrf.mxu0
  %v950 = vpop.f32.mrf.mxu0
  %v951 = vadd.f32 0.0, %v950
  %v952 = vpop.f32.mrf.mxu0
  %953 = vmatprep.mubr.bf16.mxu0 %v900
  %954 = vmatmul.mubr.bf16.gmra.mxu0 %v899
  %v955 = vpop.f32.mrf.mxu0
  %v956 = vadd.f32 0.0, %v955
  %v957 = vpop.f32.mrf.mxu0
  %v958 = vpop.f32.mrf.mxu0
  %v959 = vadd.f32 0.0, %v958
  %v960 = vpop.f32.mrf.mxu0
  %961 = vmatprep.mubr.bf16.mxu0 %v902
  %962 = vmatmul.mubr.bf16.gmra.mxu0 %v901
  %v963 = vpop.f32.mrf.mxu0
  %v964 = vadd.f32 0.0, %v963
  %v965 = vpop.f32.mrf.mxu0
  %v966 = vpop.f32.mrf.mxu0
  %v967 = vadd.f32 0.0, %v966
  %v968 = vpop.f32.mrf.mxu0
  %969 = vmatprep.mubr.bf16.mxu0 %v904
  %970 = vmatmul.mubr.bf16.gmra.mxu0 %v903
  %v971 = vpop.f32.mrf.mxu0
  %v972 = vadd.f32 0.0, %v971
  %v973 = vpop.f32.mrf.mxu0
  %v974 = vpop.f32.mrf.mxu0
  %v975 = vadd.f32 0.0, %v974
  %v976 = vpop.f32.mrf.mxu0
  %977 = vdwg.mxu0
  %v978 = vpack.c.bf16 %v951, %v948
  %v979 = vpack.c.bf16 %v959, %v956
  %v980 = vpack.c.bf16 %v967, %v964
  %v981 = vpack.c.bf16 %v975, %v972
  %s982 = scalar_lea.vmem %s4, 8
  %v983 = vld [vmem:[%s982] sm:$0xf]
  %v985 = vsel %vm702, %v978, 0
  %v988 = vsel %vm702, %v979, 0
  %v991 = vsel %vm702, %v980, 0
  %v994 = vsel %vm702, %v981, 0
  %v997 = vsel %vm715, %v983, 0
  %999 = vmatprep.subr.bf16.mxu0 0
  %1000 = vmatpush1.bf16.msra.mxu0 0
  %1001 = vmatprep.subr.bf16.mxu0 0
  %1002 = vmatpush1.bf16.msra.mxu0 0
  %1003 = vmatprep.subr.bf16.mxu0 0
  %1004 = vmatpush1.bf16.msra.mxu0 0
  %1005 = vmatprep.subr.bf16.mxu0 0
  %1006 = vmatpush1.bf16.msra.mxu0 0
  %1007 = vmatprep.subr.bf16.mxu0 0
  %1008 = vmatpush1.bf16.msra.mxu0 0
  %1009 = vmatprep.subr.bf16.mxu0 0
  %1010 = vmatpush1.bf16.msra.mxu0 0
  %1011 = vmatprep.subr.bf16.mxu0 0
  %1012 = vmatpush1.bf16.msra.mxu0 0
  %1013 = vmatprep.subr.bf16.mxu0 0
  %1014 = vmatpush1.bf16.msra.mxu0 %v997
  %1015 = vmatprep.subr.bf16.mxu0 0
  %1016 = vmatpush2.bf16.msra.mxu0 0
  %1017 = vmatprep.subr.bf16.mxu0 0
  %1018 = vmatpush2.bf16.msra.mxu0 0
  %1019 = vmatprep.subr.bf16.mxu0 0
  %1020 = vmatpush2.bf16.msra.mxu0 0
  %1021 = vmatprep.subr.bf16.mxu0 0
  %1022 = vmatpush2.bf16.msra.mxu0 0
  %1023 = vmatprep.subr.bf16.mxu0 0
  %1024 = vmatpush2.bf16.msra.mxu0 0
  %1025 = vmatprep.subr.bf16.mxu0 0
  %1026 = vmatpush2.bf16.msra.mxu0 0
  %1027 = vmatprep.subr.bf16.mxu0 0
  %1028 = vmatpush2.bf16.msra.mxu0 0
  %1029 = vmatprep.subr.bf16.mxu0 0
  %1030 = vmatpush2.bf16.msra.mxu0 0
  %1031 = vmatprep.mubr.bf16.mxu0 0
  %1032 = vmatmul.mubr.bf16.gmra.mxu0 %v985
  %v1033 = vpop.f32.mrf.mxu0
  %v1034 = vadd.f32 0.0, %v1033
  %v1035 = vpop.f32.mrf.mxu0
  %v1036 = vpop.f32.mrf.mxu0
  %v1037 = vadd.f32 0.0, %v1036
  %v1038 = vpop.f32.mrf.mxu0
  %1039 = vmatprep.mubr.bf16.mxu0 0
  %1040 = vmatmul.mubr.bf16.gmra.mxu0 %v988
  %v1041 = vpop.f32.mrf.mxu0
  %v1042 = vadd.f32 0.0, %v1041
  %v1043 = vpop.f32.mrf.mxu0
  %v1044 = vpop.f32.mrf.mxu0
  %v1045 = vadd.f32 0.0, %v1044
  %v1046 = vpop.f32.mrf.mxu0
  %1047 = vmatprep.mubr.bf16.mxu0 0
  %1048 = vmatmul.mubr.bf16.gmra.mxu0 %v991
  %v1049 = vpop.f32.mrf.mxu0
  %v1050 = vadd.f32 0.0, %v1049
  %v1051 = vpop.f32.mrf.mxu0
  %v1052 = vpop.f32.mrf.mxu0
  %v1053 = vadd.f32 0.0, %v1052
  %v1054 = vpop.f32.mrf.mxu0
  %1055 = vmatprep.mubr.bf16.mxu0 0
  %1056 = vmatmul.mubr.bf16.gmra.mxu0 %v994
  %v1057 = vpop.f32.mrf.mxu0
  %v1058 = vadd.f32 0.0, %v1057
  %v1059 = vpop.f32.mrf.mxu0
  %v1060 = vpop.f32.mrf.mxu0
  %v1061 = vadd.f32 0.0, %v1060
  %v1062 = vpop.f32.mrf.mxu0
  %1063 = vdwg.mxu0
  %v1064 = vadd.f32 %v834, %v1034
  %v1065 = vadd.f32 %v837, %v1037
  %v1066 = vadd.f32 %v842, %v1042
  %v1067 = vadd.f32 %v845, %v1045
  %v1068 = vadd.f32 %v850, %v1050
  %v1069 = vadd.f32 %v853, %v1053
  %v1070 = vadd.f32 %v858, %v1058
  %v1071 = vadd.f32 %v861, %v1061
  %s1072 = scalar_lea.vmem %s3, 192
  %v1073 = vld [vmem:[%s1072] sm:$0xff]
  %v1074 = vld [vmem:[%s1072 + $0x8] sm:$0xff]
  %v1075 = vld [vmem:[%s1072 + $0x10] sm:$0xff]
  %v1076 = vld [vmem:[%s1072 + $0x18] sm:$0xff]
  %v1077 = vld [vmem:[%s1072 + $0x20] sm:$0xff]
  %v1078 = vld [vmem:[%s1072 + $0x28] sm:$0xff]
  %v1079 = vld [vmem:[%s1072 + $0x30] sm:$0xff]
  %v1080 = vld [vmem:[%s1072 + $0x38] sm:$0xff]
  %v1089 = vunpack.c.l.b16 %v1073
  %v1090 = vunpack.c.h.b16 %v1073
  %v1091 = vunpack.c.l.b16 %v1074
  %v1092 = vunpack.c.h.b16 %v1074
  %v1093 = vunpack.c.l.b16 %v1075
  %v1094 = vunpack.c.h.b16 %v1075
  %v1095 = vunpack.c.l.b16 %v1076
  %v1096 = vunpack.c.h.b16 %v1076
  %v1097 = vunpack.c.l.b16 %v1077
  %v1098 = vunpack.c.h.b16 %v1077
  %v1099 = vunpack.c.l.b16 %v1078
  %v1100 = vunpack.c.h.b16 %v1078
  %v1101 = vunpack.c.l.b16 %v1079
  %v1102 = vunpack.c.h.b16 %v1079
  %v1103 = vunpack.c.l.b16 %v1080
  %v1104 = vunpack.c.h.b16 %v1080
  %v1105 = vpack.c.b16 %v1091, %v1089
  %v1106 = vpack.c.b16 %v1092, %v1090
  %v1107 = vpack.c.b16 %v1095, %v1093
  %v1108 = vpack.c.b16 %v1096, %v1094
  %v1109 = vpack.c.b16 %v1099, %v1097
  %v1110 = vpack.c.b16 %v1100, %v1098
  %v1111 = vpack.c.b16 %v1103, %v1101
  %v1112 = vpack.c.b16 %v1104, %v1102
  %1121 = vmatprep.subr.bf16.mxu0 0
  %1122 = vmatpush1.bf16.msra.mxu0 %v455
  %1123 = vmatprep.subr.bf16.mxu0 0
  %1124 = vmatpush1.bf16.msra.mxu0 %v454
  %1125 = vmatprep.subr.bf16.mxu0 0
  %1126 = vmatpush1.bf16.msra.mxu0 %v453
  %1127 = vmatprep.subr.bf16.mxu0 0
  %1128 = vmatpush1.bf16.msra.mxu0 %v452
  %1129 = vmatprep.subr.bf16.mxu0 0
  %1130 = vmatpush1.bf16.msra.mxu0 %v451
  %1131 = vmatprep.subr.bf16.mxu0 0
  %1132 = vmatpush1.bf16.msra.mxu0 %v450
  %1133 = vmatprep.subr.bf16.mxu0 0
  %1134 = vmatpush1.bf16.msra.mxu0 %v449
  %1135 = vmatprep.subr.bf16.mxu0 0
  %1136 = vmatpush1.bf16.msra.mxu0 %v448
  %1137 = vmatprep.subr.bf16.mxu0 0
  %1138 = vmatpush2.bf16.msra.mxu0 %v463
  %1139 = vmatprep.subr.bf16.mxu0 0
  %1140 = vmatpush2.bf16.msra.mxu0 %v462
  %1141 = vmatprep.subr.bf16.mxu0 0
  %1142 = vmatpush2.bf16.msra.mxu0 %v461
  %1143 = vmatprep.subr.bf16.mxu0 0
  %1144 = vmatpush2.bf16.msra.mxu0 %v460
  %1145 = vmatprep.subr.bf16.mxu0 0
  %1146 = vmatpush2.bf16.msra.mxu0 %v459
  %1147 = vmatprep.subr.bf16.mxu0 0
  %1148 = vmatpush2.bf16.msra.mxu0 %v458
  %1149 = vmatprep.subr.bf16.mxu0 0
  %1150 = vmatpush2.bf16.msra.mxu0 %v457
  %1151 = vmatprep.subr.bf16.mxu0 0
  %1152 = vmatpush2.bf16.msra.mxu0 %v456
  %1153 = vmatprep.mubr.bf16.mxu0 %v1106
  %1154 = vmatmul.mubr.bf16.gmra.mxu0 %v1105
  %v1155 = vpop.f32.mrf.mxu0
  %v1156 = vadd.f32 0.0, %v1155
  %v1157 = vpop.f32.mrf.mxu0
  %v1158 = vpop.f32.mrf.mxu0
  %v1159 = vadd.f32 0.0, %v1158
  %v1160 = vpop.f32.mrf.mxu0
  %1161 = vmatprep.mubr.bf16.mxu0 %v1108
  %1162 = vmatmul.mubr.bf16.gmra.mxu0 %v1107
  %v1163 = vpop.f32.mrf.mxu0
  %v1164 = vadd.f32 0.0, %v1163
  %v1165 = vpop.f32.mrf.mxu0
  %v1166 = vpop.f32.mrf.mxu0
  %v1167 = vadd.f32 0.0, %v1166
  %v1168 = vpop.f32.mrf.mxu0
  %1169 = vmatprep.mubr.bf16.mxu0 %v1110
  %1170 = vmatmul.mubr.bf16.gmra.mxu0 %v1109
  %v1171 = vpop.f32.mrf.mxu0
  %v1172 = vadd.f32 0.0, %v1171
  %v1173 = vpop.f32.mrf.mxu0
  %v1174 = vpop.f32.mrf.mxu0
  %v1175 = vadd.f32 0.0, %v1174
  %v1176 = vpop.f32.mrf.mxu0
  %1177 = vmatprep.mubr.bf16.mxu0 %v1112
  %1178 = vmatmul.mubr.bf16.gmra.mxu0 %v1111
  %v1179 = vpop.f32.mrf.mxu0
  %v1180 = vadd.f32 0.0, %v1179
  %v1181 = vpop.f32.mrf.mxu0
  %v1182 = vpop.f32.mrf.mxu0
  %v1183 = vadd.f32 0.0, %v1182
  %v1184 = vpop.f32.mrf.mxu0
  %1185 = vdwg.mxu0
  %v1186 = vpack.c.bf16 %v1159, %v1156
  %v1187 = vpack.c.bf16 %v1167, %v1164
  %v1188 = vpack.c.bf16 %v1175, %v1172
  %v1189 = vpack.c.bf16 %v1183, %v1180
  %s1190 = scalar_lea.vmem %s4, 12
  %v1191 = vld [vmem:[%s1190] sm:$0xf]
  %v1193 = vsel %vm702, %v1186, 0
  %v1196 = vsel %vm702, %v1187, 0
  %v1199 = vsel %vm702, %v1188, 0
  %v1202 = vsel %vm702, %v1189, 0
  %v1205 = vsel %vm715, %v1191, 0
  %1207 = vmatprep.subr.bf16.mxu0 0
  %1208 = vmatpush1.bf16.msra.mxu0 0
  %1209 = vmatprep.subr.bf16.mxu0 0
  %1210 = vmatpush1.bf16.msra.mxu0 0
  %1211 = vmatprep.subr.bf16.mxu0 0
  %1212 = vmatpush1.bf16.msra.mxu0 0
  %1213 = vmatprep.subr.bf16.mxu0 0
  %1214 = vmatpush1.bf16.msra.mxu0 0
  %1215 = vmatprep.subr.bf16.mxu0 0
  %1216 = vmatpush1.bf16.msra.mxu0 0
  %1217 = vmatprep.subr.bf16.mxu0 0
  %1218 = vmatpush1.bf16.msra.mxu0 0
  %1219 = vmatprep.subr.bf16.mxu0 0
  %1220 = vmatpush1.bf16.msra.mxu0 0
  %1221 = vmatprep.subr.bf16.mxu0 0
  %1222 = vmatpush1.bf16.msra.mxu0 %v1205
  %1223 = vmatprep.subr.bf16.mxu0 0
  %1224 = vmatpush2.bf16.msra.mxu0 0
  %1225 = vmatprep.subr.bf16.mxu0 0
  %1226 = vmatpush2.bf16.msra.mxu0 0
  %1227 = vmatprep.subr.bf16.mxu0 0
  %1228 = vmatpush2.bf16.msra.mxu0 0
  %1229 = vmatprep.subr.bf16.mxu0 0
  %1230 = vmatpush2.bf16.msra.mxu0 0
  %1231 = vmatprep.subr.bf16.mxu0 0
  %1232 = vmatpush2.bf16.msra.mxu0 0
  %1233 = vmatprep.subr.bf16.mxu0 0
  %1234 = vmatpush2.bf16.msra.mxu0 0
  %1235 = vmatprep.subr.bf16.mxu0 0
  %1236 = vmatpush2.bf16.msra.mxu0 0
  %1237 = vmatprep.subr.bf16.mxu0 0
  %1238 = vmatpush2.bf16.msra.mxu0 0
  %1239 = vmatprep.mubr.bf16.mxu0 0
  %1240 = vmatmul.mubr.bf16.gmra.mxu0 %v1193
  %v1241 = vpop.f32.mrf.mxu0
  %v1242 = vadd.f32 0.0, %v1241
  %v1243 = vpop.f32.mrf.mxu0
  %v1244 = vpop.f32.mrf.mxu0
  %v1245 = vadd.f32 0.0, %v1244
  %v1246 = vpop.f32.mrf.mxu0
  %1247 = vmatprep.mubr.bf16.mxu0 0
  %1248 = vmatmul.mubr.bf16.gmra.mxu0 %v1196
  %v1249 = vpop.f32.mrf.mxu0
  %v1250 = vadd.f32 0.0, %v1249
  %v1251 = vpop.f32.mrf.mxu0
  %v1252 = vpop.f32.mrf.mxu0
  %v1253 = vadd.f32 0.0, %v1252
  %v1254 = vpop.f32.mrf.mxu0
  %1255 = vmatprep.mubr.bf16.mxu0 0
  %1256 = vmatmul.mubr.bf16.gmra.mxu0 %v1199
  %v1257 = vpop.f32.mrf.mxu0
  %v1258 = vadd.f32 0.0, %v1257
  %v1259 = vpop.f32.mrf.mxu0
  %v1260 = vpop.f32.mrf.mxu0
  %v1261 = vadd.f32 0.0, %v1260
  %v1262 = vpop.f32.mrf.mxu0
  %1263 = vmatprep.mubr.bf16.mxu0 0
  %1264 = vmatmul.mubr.bf16.gmra.mxu0 %v1202
  %v1265 = vpop.f32.mrf.mxu0
  %v1266 = vadd.f32 0.0, %v1265
  %v1267 = vpop.f32.mrf.mxu0
  %v1268 = vpop.f32.mrf.mxu0
  %v1269 = vadd.f32 0.0, %v1268
  %v1270 = vpop.f32.mrf.mxu0
  %1271 = vdwg.mxu0
  %v1272 = vadd.f32 %v1064, %v1242
  %v1273 = vadd.f32 %v1065, %v1245
  %v1274 = vadd.f32 %v1066, %v1250
  %v1275 = vadd.f32 %v1067, %v1253
  %v1276 = vadd.f32 %v1068, %v1258
  %v1277 = vadd.f32 %v1069, %v1261
  %v1278 = vadd.f32 %v1070, %v1266
  %v1279 = vadd.f32 %v1071, %v1269
  %s1280 = scalar_lea.vmem %s3, 256
  %v1281 = vld [vmem:[%s1280] sm:$0xff]
  %v1282 = vld [vmem:[%s1280 + $0x8] sm:$0xff]
  %v1283 = vld [vmem:[%s1280 + $0x10] sm:$0xff]
  %v1284 = vld [vmem:[%s1280 + $0x18] sm:$0xff]
  %v1285 = vld [vmem:[%s1280 + $0x20] sm:$0xff]
  %v1286 = vld [vmem:[%s1280 + $0x28] sm:$0xff]
  %v1287 = vld [vmem:[%s1280 + $0x30] sm:$0xff]
  %v1288 = vld [vmem:[%s1280 + $0x38] sm:$0xff]
  %v1297 = vunpack.c.l.b16 %v1281
  %v1298 = vunpack.c.h.b16 %v1281
  %v1299 = vunpack.c.l.b16 %v1282
  %v1300 = vunpack.c.h.b16 %v1282
  %v1301 = vunpack.c.l.b16 %v1283
  %v1302 = vunpack.c.h.b16 %v1283
  %v1303 = vunpack.c.l.b16 %v1284
  %v1304 = vunpack.c.h.b16 %v1284
  %v1305 = vunpack.c.l.b16 %v1285
  %v1306 = vunpack.c.h.b16 %v1285
  %v1307 = vunpack.c.l.b16 %v1286
  %v1308 = vunpack.c.h.b16 %v1286
  %v1309 = vunpack.c.l.b16 %v1287
  %v1310 = vunpack.c.h.b16 %v1287
  %v1311 = vunpack.c.l.b16 %v1288
  %v1312 = vunpack.c.h.b16 %v1288
  %v1313 = vpack.c.b16 %v1299, %v1297
  %v1314 = vpack.c.b16 %v1300, %v1298
  %v1315 = vpack.c.b16 %v1303, %v1301
  %v1316 = vpack.c.b16 %v1304, %v1302
  %v1317 = vpack.c.b16 %v1307, %v1305
  %v1318 = vpack.c.b16 %v1308, %v1306
  %v1319 = vpack.c.b16 %v1311, %v1309
  %v1320 = vpack.c.b16 %v1312, %v1310
  %1329 = vmatprep.subr.bf16.mxu0 0
  %1330 = vmatpush1.bf16.msra.mxu0 %v455
  %1331 = vmatprep.subr.bf16.mxu0 0
  %1332 = vmatpush1.bf16.msra.mxu0 %v454
  %1333 = vmatprep.subr.bf16.mxu0 0
  %1334 = vmatpush1.bf16.msra.mxu0 %v453
  %1335 = vmatprep.subr.bf16.mxu0 0
  %1336 = vmatpush1.bf16.msra.mxu0 %v452
  %1337 = vmatprep.subr.bf16.mxu0 0
  %1338 = vmatpush1.bf16.msra.mxu0 %v451
  %1339 = vmatprep.subr.bf16.mxu0 0
  %1340 = vmatpush1.bf16.msra.mxu0 %v450
  %1341 = vmatprep.subr.bf16.mxu0 0
  %1342 = vmatpush1.bf16.msra.mxu0 %v449
  %1343 = vmatprep.subr.bf16.mxu0 0
  %1344 = vmatpush1.bf16.msra.mxu0 %v448
  %1345 = vmatprep.subr.bf16.mxu0 0
  %1346 = vmatpush2.bf16.msra.mxu0 %v463
  %1347 = vmatprep.subr.bf16.mxu0 0
  %1348 = vmatpush2.bf16.msra.mxu0 %v462
  %1349 = vmatprep.subr.bf16.mxu0 0
  %1350 = vmatpush2.bf16.msra.mxu0 %v461
  %1351 = vmatprep.subr.bf16.mxu0 0
  %1352 = vmatpush2.bf16.msra.mxu0 %v460
  %1353 = vmatprep.subr.bf16.mxu0 0
  %1354 = vmatpush2.bf16.msra.mxu0 %v459
  %1355 = vmatprep.subr.bf16.mxu0 0
  %1356 = vmatpush2.bf16.msra.mxu0 %v458
  %1357 = vmatprep.subr.bf16.mxu0 0
  %1358 = vmatpush2.bf16.msra.mxu0 %v457
  %1359 = vmatprep.subr.bf16.mxu0 0
  %1360 = vmatpush2.bf16.msra.mxu0 %v456
  %1361 = vmatprep.mubr.bf16.mxu0 %v1314
  %1362 = vmatmul.mubr.bf16.gmra.mxu0 %v1313
  %v1363 = vpop.f32.mrf.mxu0
  %v1364 = vadd.f32 0.0, %v1363
  %v1365 = vpop.f32.mrf.mxu0
  %v1366 = vpop.f32.mrf.mxu0
  %v1367 = vadd.f32 0.0, %v1366
  %v1368 = vpop.f32.mrf.mxu0
  %1369 = vmatprep.mubr.bf16.mxu0 %v1316
  %1370 = vmatmul.mubr.bf16.gmra.mxu0 %v1315
  %v1371 = vpop.f32.mrf.mxu0
  %v1372 = vadd.f32 0.0, %v1371
  %v1373 = vpop.f32.mrf.mxu0
  %v1374 = vpop.f32.mrf.mxu0
  %v1375 = vadd.f32 0.0, %v1374
  %v1376 = vpop.f32.mrf.mxu0
  %1377 = vmatprep.mubr.bf16.mxu0 %v1318
  %1378 = vmatmul.mubr.bf16.gmra.mxu0 %v1317
  %v1379 = vpop.f32.mrf.mxu0
  %v1380 = vadd.f32 0.0, %v1379
  %v1381 = vpop.f32.mrf.mxu0
  %v1382 = vpop.f32.mrf.mxu0
  %v1383 = vadd.f32 0.0, %v1382
  %v1384 = vpop.f32.mrf.mxu0
  %1385 = vmatprep.mubr.bf16.mxu0 %v1320
  %1386 = vmatmul.mubr.bf16.gmra.mxu0 %v1319
  %v1387 = vpop.f32.mrf.mxu0
  %v1388 = vadd.f32 0.0, %v1387
  %v1389 = vpop.f32.mrf.mxu0
  %v1390 = vpop.f32.mrf.mxu0
  %v1391 = vadd.f32 0.0, %v1390
  %v1392 = vpop.f32.mrf.mxu0
  %1393 = vdwg.mxu0
  %v1394 = vpack.c.bf16 %v1367, %v1364
  %v1395 = vpack.c.bf16 %v1375, %v1372
  %v1396 = vpack.c.bf16 %v1383, %v1380
  %v1397 = vpack.c.bf16 %v1391, %v1388
  %s1398 = scalar_lea.vmem %s4, 16
  %v1399 = vld [vmem:[%s1398] sm:$0xf]
  %v1401 = vsel %vm702, %v1394, 0
  %v1404 = vsel %vm702, %v1395, 0
  %v1407 = vsel %vm702, %v1396, 0
  %v1410 = vsel %vm702, %v1397, 0
  %v1413 = vsel %vm715, %v1399, 0
  %1415 = vmatprep.subr.bf16.mxu0 0
  %1416 = vmatpush1.bf16.msra.mxu0 0
  %1417 = vmatprep.subr.bf16.mxu0 0
  %1418 = vmatpush1.bf16.msra.mxu0 0
  %1419 = vmatprep.subr.bf16.mxu0 0
  %1420 = vmatpush1.bf16.msra.mxu0 0
  %1421 = vmatprep.subr.bf16.mxu0 0
  %1422 = vmatpush1.bf16.msra.mxu0 0
  %1423 = vmatprep.subr.bf16.mxu0 0
  %1424 = vmatpush1.bf16.msra.mxu0 0
  %1425 = vmatprep.subr.bf16.mxu0 0
  %1426 = vmatpush1.bf16.msra.mxu0 0
  %1427 = vmatprep.subr.bf16.mxu0 0
  %1428 = vmatpush1.bf16.msra.mxu0 0
  %1429 = vmatprep.subr.bf16.mxu0 0
  %1430 = vmatpush1.bf16.msra.mxu0 %v1413
  %1431 = vmatprep.subr.bf16.mxu0 0
  %1432 = vmatpush2.bf16.msra.mxu0 0
  %1433 = vmatprep.subr.bf16.mxu0 0
  %1434 = vmatpush2.bf16.msra.mxu0 0
  %1435 = vmatprep.subr.bf16.mxu0 0
  %1436 = vmatpush2.bf16.msra.mxu0 0
  %1437 = vmatprep.subr.bf16.mxu0 0
  %1438 = vmatpush2.bf16.msra.mxu0 0
  %1439 = vmatprep.subr.bf16.mxu0 0
  %1440 = vmatpush2.bf16.msra.mxu0 0
  %1441 = vmatprep.subr.bf16.mxu0 0
  %1442 = vmatpush2.bf16.msra.mxu0 0
  %1443 = vmatprep.subr.bf16.mxu0 0
  %1444 = vmatpush2.bf16.msra.mxu0 0
  %1445 = vmatprep.subr.bf16.mxu0 0
  %1446 = vmatpush2.bf16.msra.mxu0 0
  %1447 = vmatprep.mubr.bf16.mxu0 0
  %1448 = vmatmul.mubr.bf16.gmra.mxu0 %v1401
  %v1449 = vpop.f32.mrf.mxu0
  %v1450 = vadd.f32 0.0, %v1449
  %v1451 = vpop.f32.mrf.mxu0
  %v1452 = vpop.f32.mrf.mxu0
  %v1453 = vadd.f32 0.0, %v1452
  %v1454 = vpop.f32.mrf.mxu0
  %1455 = vmatprep.mubr.bf16.mxu0 0
  %1456 = vmatmul.mubr.bf16.gmra.mxu0 %v1404
  %v1457 = vpop.f32.mrf.mxu0
  %v1458 = vadd.f32 0.0, %v1457
  %v1459 = vpop.f32.mrf.mxu0
  %v1460 = vpop.f32.mrf.mxu0
  %v1461 = vadd.f32 0.0, %v1460
  %v1462 = vpop.f32.mrf.mxu0
  %1463 = vmatprep.mubr.bf16.mxu0 0
  %1464 = vmatmul.mubr.bf16.gmra.mxu0 %v1407
  %v1465 = vpop.f32.mrf.mxu0
  %v1466 = vadd.f32 0.0, %v1465
  %v1467 = vpop.f32.mrf.mxu0
  %v1468 = vpop.f32.mrf.mxu0
  %v1469 = vadd.f32 0.0, %v1468
  %v1470 = vpop.f32.mrf.mxu0
  %1471 = vmatprep.mubr.bf16.mxu0 0
  %1472 = vmatmul.mubr.bf16.gmra.mxu0 %v1410
  %v1473 = vpop.f32.mrf.mxu0
  %v1474 = vadd.f32 0.0, %v1473
  %v1475 = vpop.f32.mrf.mxu0
  %v1476 = vpop.f32.mrf.mxu0
  %v1477 = vadd.f32 0.0, %v1476
  %v1478 = vpop.f32.mrf.mxu0
  %1479 = vdwg.mxu0
  %v1480 = vadd.f32 %v1272, %v1450
  %v1481 = vadd.f32 %v1273, %v1453
  %v1482 = vadd.f32 %v1274, %v1458
  %v1483 = vadd.f32 %v1275, %v1461
  %v1484 = vadd.f32 %v1276, %v1466
  %v1485 = vadd.f32 %v1277, %v1469
  %v1486 = vadd.f32 %v1278, %v1474
  %v1487 = vadd.f32 %v1279, %v1477
  %s1488 = scalar_lea.vmem %s3, 320
  %v1489 = vld [vmem:[%s1488] sm:$0xff]
  %v1490 = vld [vmem:[%s1488 + $0x8] sm:$0xff]
  %v1491 = vld [vmem:[%s1488 + $0x10] sm:$0xff]
  %v1492 = vld [vmem:[%s1488 + $0x18] sm:$0xff]
  %v1493 = vld [vmem:[%s1488 + $0x20] sm:$0xff]
  %v1494 = vld [vmem:[%s1488 + $0x28] sm:$0xff]
  %v1495 = vld [vmem:[%s1488 + $0x30] sm:$0xff]
  %v1496 = vld [vmem:[%s1488 + $0x38] sm:$0xff]
  %v1505 = vunpack.c.l.b16 %v1489
  %v1506 = vunpack.c.h.b16 %v1489
  %v1507 = vunpack.c.l.b16 %v1490
  %v1508 = vunpack.c.h.b16 %v1490
  %v1509 = vunpack.c.l.b16 %v1491
  %v1510 = vunpack.c.h.b16 %v1491
  %v1511 = vunpack.c.l.b16 %v1492
  %v1512 = vunpack.c.h.b16 %v1492
  %v1513 = vunpack.c.l.b16 %v1493
  %v1514 = vunpack.c.h.b16 %v1493
  %v1515 = vunpack.c.l.b16 %v1494
  %v1516 = vunpack.c.h.b16 %v1494
  %v1517 = vunpack.c.l.b16 %v1495
  %v1518 = vunpack.c.h.b16 %v1495
  %v1519 = vunpack.c.l.b16 %v1496
  %v1520 = vunpack.c.h.b16 %v1496
  %v1521 = vpack.c.b16 %v1507, %v1505
  %v1522 = vpack.c.b16 %v1508, %v1506
  %v1523 = vpack.c.b16 %v1511, %v1509
  %v1524 = vpack.c.b16 %v1512, %v1510
  %v1525 = vpack.c.b16 %v1515, %v1513
  %v1526 = vpack.c.b16 %v1516, %v1514
  %v1527 = vpack.c.b16 %v1519, %v1517
  %v1528 = vpack.c.b16 %v1520, %v1518
  %1537 = vmatprep.subr.bf16.mxu0 0
  %1538 = vmatpush1.bf16.msra.mxu0 %v455
  %1539 = vmatprep.subr.bf16.mxu0 0
  %1540 = vmatpush1.bf16.msra.mxu0 %v454
  %1541 = vmatprep.subr.bf16.mxu0 0
  %1542 = vmatpush1.bf16.msra.mxu0 %v453
  %1543 = vmatprep.subr.bf16.mxu0 0
  %1544 = vmatpush1.bf16.msra.mxu0 %v452
  %1545 = vmatprep.subr.bf16.mxu0 0
  %1546 = vmatpush1.bf16.msra.mxu0 %v451
  %1547 = vmatprep.subr.bf16.mxu0 0
  %1548 = vmatpush1.bf16.msra.mxu0 %v450
  %1549 = vmatprep.subr.bf16.mxu0 0
  %1550 = vmatpush1.bf16.msra.mxu0 %v449
  %1551 = vmatprep.subr.bf16.mxu0 0
  %1552 = vmatpush1.bf16.msra.mxu0 %v448
  %1553 = vmatprep.subr.bf16.mxu0 0
  %1554 = vmatpush2.bf16.msra.mxu0 %v463
  %1555 = vmatprep.subr.bf16.mxu0 0
  %1556 = vmatpush2.bf16.msra.mxu0 %v462
  %1557 = vmatprep.subr.bf16.mxu0 0
  %1558 = vmatpush2.bf16.msra.mxu0 %v461
  %1559 = vmatprep.subr.bf16.mxu0 0
  %1560 = vmatpush2.bf16.msra.mxu0 %v460
  %1561 = vmatprep.subr.bf16.mxu0 0
  %1562 = vmatpush2.bf16.msra.mxu0 %v459
  %1563 = vmatprep.subr.bf16.mxu0 0
  %1564 = vmatpush2.bf16.msra.mxu0 %v458
  %1565 = vmatprep.subr.bf16.mxu0 0
  %1566 = vmatpush2.bf16.msra.mxu0 %v457
  %1567 = vmatprep.subr.bf16.mxu0 0
  %1568 = vmatpush2.bf16.msra.mxu0 %v456
  %1569 = vmatprep.mubr.bf16.mxu0 %v1522
  %1570 = vmatmul.mubr.bf16.gmra.mxu0 %v1521
  %v1571 = vpop.f32.mrf.mxu0
  %v1572 = vadd.f32 0.0, %v1571
  %v1573 = vpop.f32.mrf.mxu0
  %v1574 = vpop.f32.mrf.mxu0
  %v1575 = vadd.f32 0.0, %v1574
  %v1576 = vpop.f32.mrf.mxu0
  %1577 = vmatprep.mubr.bf16.mxu0 %v1524
  %1578 = vmatmul.mubr.bf16.gmra.mxu0 %v1523
  %v1579 = vpop.f32.mrf.mxu0
  %v1580 = vadd.f32 0.0, %v1579
  %v1581 = vpop.f32.mrf.mxu0
  %v1582 = vpop.f32.mrf.mxu0
  %v1583 = vadd.f32 0.0, %v1582
  %v1584 = vpop.f32.mrf.mxu0
  %1585 = vmatprep.mubr.bf16.mxu0 %v1526
  %1586 = vmatmul.mubr.bf16.gmra.mxu0 %v1525
  %v1587 = vpop.f32.mrf.mxu0
  %v1588 = vadd.f32 0.0, %v1587
  %v1589 = vpop.f32.mrf.mxu0
  %v1590 = vpop.f32.mrf.mxu0
  %v1591 = vadd.f32 0.0, %v1590
  %v1592 = vpop.f32.mrf.mxu0
  %1593 = vmatprep.mubr.bf16.mxu0 %v1528
  %1594 = vmatmul.mubr.bf16.gmra.mxu0 %v1527
  %v1595 = vpop.f32.mrf.mxu0
  %v1596 = vadd.f32 0.0, %v1595
  %v1597 = vpop.f32.mrf.mxu0
  %v1598 = vpop.f32.mrf.mxu0
  %v1599 = vadd.f32 0.0, %v1598
  %v1600 = vpop.f32.mrf.mxu0
  %1601 = vdwg.mxu0
  %v1602 = vpack.c.bf16 %v1575, %v1572
  %v1603 = vpack.c.bf16 %v1583, %v1580
  %v1604 = vpack.c.bf16 %v1591, %v1588
  %v1605 = vpack.c.bf16 %v1599, %v1596
  %s1606 = scalar_lea.vmem %s4, 20
  %v1607 = vld [vmem:[%s1606] sm:$0xf]
  %v1609 = vsel %vm702, %v1602, 0
  %v1612 = vsel %vm702, %v1603, 0
  %v1615 = vsel %vm702, %v1604, 0
  %v1618 = vsel %vm702, %v1605, 0
  %v1621 = vsel %vm715, %v1607, 0
  %1623 = vmatprep.subr.bf16.mxu0 0
  %1624 = vmatpush1.bf16.msra.mxu0 0
  %1625 = vmatprep.subr.bf16.mxu0 0
  %1626 = vmatpush1.bf16.msra.mxu0 0
  %1627 = vmatprep.subr.bf16.mxu0 0
  %1628 = vmatpush1.bf16.msra.mxu0 0
  %1629 = vmatprep.subr.bf16.mxu0 0
  %1630 = vmatpush1.bf16.msra.mxu0 0
  %1631 = vmatprep.subr.bf16.mxu0 0
  %1632 = vmatpush1.bf16.msra.mxu0 0
  %1633 = vmatprep.subr.bf16.mxu0 0
  %1634 = vmatpush1.bf16.msra.mxu0 0
  %1635 = vmatprep.subr.bf16.mxu0 0
  %1636 = vmatpush1.bf16.msra.mxu0 0
  %1637 = vmatprep.subr.bf16.mxu0 0
  %1638 = vmatpush1.bf16.msra.mxu0 %v1621
  %1639 = vmatprep.subr.bf16.mxu0 0
  %1640 = vmatpush2.bf16.msra.mxu0 0
  %1641 = vmatprep.subr.bf16.mxu0 0
  %1642 = vmatpush2.bf16.msra.mxu0 0
  %1643 = vmatprep.subr.bf16.mxu0 0
  %1644 = vmatpush2.bf16.msra.mxu0 0
  %1645 = vmatprep.subr.bf16.mxu0 0
  %1646 = vmatpush2.bf16.msra.mxu0 0
  %1647 = vmatprep.subr.bf16.mxu0 0
  %1648 = vmatpush2.bf16.msra.mxu0 0
  %1649 = vmatprep.subr.bf16.mxu0 0
  %1650 = vmatpush2.bf16.msra.mxu0 0
  %1651 = vmatprep.subr.bf16.mxu0 0
  %1652 = vmatpush2.bf16.msra.mxu0 0
  %1653 = vmatprep.subr.bf16.mxu0 0
  %1654 = vmatpush2.bf16.msra.mxu0 0
  %1655 = vmatprep.mubr.bf16.mxu0 0
  %1656 = vmatmul.mubr.bf16.gmra.mxu0 %v1609
  %v1657 = vpop.f32.mrf.mxu0
  %v1658 = vadd.f32 0.0, %v1657
  %v1659 = vpop.f32.mrf.mxu0
  %v1660 = vpop.f32.mrf.mxu0
  %v1661 = vadd.f32 0.0, %v1660
  %v1662 = vpop.f32.mrf.mxu0
  %1663 = vmatprep.mubr.bf16.mxu0 0
  %1664 = vmatmul.mubr.bf16.gmra.mxu0 %v1612
  %v1665 = vpop.f32.mrf.mxu0
  %v1666 = vadd.f32 0.0, %v1665
  %v1667 = vpop.f32.mrf.mxu0
  %v1668 = vpop.f32.mrf.mxu0
  %v1669 = vadd.f32 0.0, %v1668
  %v1670 = vpop.f32.mrf.mxu0
  %1671 = vmatprep.mubr.bf16.mxu0 0
  %1672 = vmatmul.mubr.bf16.gmra.mxu0 %v1615
  %v1673 = vpop.f32.mrf.mxu0
  %v1674 = vadd.f32 0.0, %v1673
  %v1675 = vpop.f32.mrf.mxu0
  %v1676 = vpop.f32.mrf.mxu0
  %v1677 = vadd.f32 0.0, %v1676
  %v1678 = vpop.f32.mrf.mxu0
  %1679 = vmatprep.mubr.bf16.mxu0 0
  %1680 = vmatmul.mubr.bf16.gmra.mxu0 %v1618
  %v1681 = vpop.f32.mrf.mxu0
  %v1682 = vadd.f32 0.0, %v1681
  %v1683 = vpop.f32.mrf.mxu0
  %v1684 = vpop.f32.mrf.mxu0
  %v1685 = vadd.f32 0.0, %v1684
  %v1686 = vpop.f32.mrf.mxu0
  %1687 = vdwg.mxu0
  %v1688 = vadd.f32 %v1480, %v1658
  %v1689 = vadd.f32 %v1481, %v1661
  %v1690 = vadd.f32 %v1482, %v1666
  %v1691 = vadd.f32 %v1483, %v1669
  %v1692 = vadd.f32 %v1484, %v1674
  %v1693 = vadd.f32 %v1485, %v1677
  %v1694 = vadd.f32 %v1486, %v1682
  %v1695 = vadd.f32 %v1487, %v1685
  %s1696 = scalar_lea.vmem %s3, 384
  %v1697 = vld [vmem:[%s1696] sm:$0xff]
  %v1698 = vld [vmem:[%s1696 + $0x8] sm:$0xff]
  %v1699 = vld [vmem:[%s1696 + $0x10] sm:$0xff]
  %v1700 = vld [vmem:[%s1696 + $0x18] sm:$0xff]
  %v1701 = vld [vmem:[%s1696 + $0x20] sm:$0xff]
  %v1702 = vld [vmem:[%s1696 + $0x28] sm:$0xff]
  %v1703 = vld [vmem:[%s1696 + $0x30] sm:$0xff]
  %v1704 = vld [vmem:[%s1696 + $0x38] sm:$0xff]
  %v1713 = vunpack.c.l.b16 %v1697
  %v1714 = vunpack.c.h.b16 %v1697
  %v1715 = vunpack.c.l.b16 %v1698
  %v1716 = vunpack.c.h.b16 %v1698
  %v1717 = vunpack.c.l.b16 %v1699
  %v1718 = vunpack.c.h.b16 %v1699
  %v1719 = vunpack.c.l.b16 %v1700
  %v1720 = vunpack.c.h.b16 %v1700
  %v1721 = vunpack.c.l.b16 %v1701
  %v1722 = vunpack.c.h.b16 %v1701
  %v1723 = vunpack.c.l.b16 %v1702
  %v1724 = vunpack.c.h.b16 %v1702
  %v1725 = vunpack.c.l.b16 %v1703
  %v1726 = vunpack.c.h.b16 %v1703
  %v1727 = vunpack.c.l.b16 %v1704
  %v1728 = vunpack.c.h.b16 %v1704
  %v1729 = vpack.c.b16 %v1715, %v1713
  %v1730 = vpack.c.b16 %v1716, %v1714
  %v1731 = vpack.c.b16 %v1719, %v1717
  %v1732 = vpack.c.b16 %v1720, %v1718
  %v1733 = vpack.c.b16 %v1723, %v1721
  %v1734 = vpack.c.b16 %v1724, %v1722
  %v1735 = vpack.c.b16 %v1727, %v1725
  %v1736 = vpack.c.b16 %v1728, %v1726
  %1745 = vmatprep.subr.bf16.mxu0 0
  %1746 = vmatpush1.bf16.msra.mxu0 %v455
  %1747 = vmatprep.subr.bf16.mxu0 0
  %1748 = vmatpush1.bf16.msra.mxu0 %v454
  %1749 = vmatprep.subr.bf16.mxu0 0
  %1750 = vmatpush1.bf16.msra.mxu0 %v453
  %1751 = vmatprep.subr.bf16.mxu0 0
  %1752 = vmatpush1.bf16.msra.mxu0 %v452
  %1753 = vmatprep.subr.bf16.mxu0 0
  %1754 = vmatpush1.bf16.msra.mxu0 %v451
  %1755 = vmatprep.subr.bf16.mxu0 0
  %1756 = vmatpush1.bf16.msra.mxu0 %v450
  %1757 = vmatprep.subr.bf16.mxu0 0
  %1758 = vmatpush1.bf16.msra.mxu0 %v449
  %1759 = vmatprep.subr.bf16.mxu0 0
  %1760 = vmatpush1.bf16.msra.mxu0 %v448
  %1761 = vmatprep.subr.bf16.mxu0 0
  %1762 = vmatpush2.bf16.msra.mxu0 %v463
  %1763 = vmatprep.subr.bf16.mxu0 0
  %1764 = vmatpush2.bf16.msra.mxu0 %v462
  %1765 = vmatprep.subr.bf16.mxu0 0
  %1766 = vmatpush2.bf16.msra.mxu0 %v461
  %1767 = vmatprep.subr.bf16.mxu0 0
  %1768 = vmatpush2.bf16.msra.mxu0 %v460
  %1769 = vmatprep.subr.bf16.mxu0 0
  %1770 = vmatpush2.bf16.msra.mxu0 %v459
  %1771 = vmatprep.subr.bf16.mxu0 0
  %1772 = vmatpush2.bf16.msra.mxu0 %v458
  %1773 = vmatprep.subr.bf16.mxu0 0
  %1774 = vmatpush2.bf16.msra.mxu0 %v457
  %1775 = vmatprep.subr.bf16.mxu0 0
  %1776 = vmatpush2.bf16.msra.mxu0 %v456
  %1777 = vmatprep.mubr.bf16.mxu0 %v1730
  %1778 = vmatmul.mubr.bf16.gmra.mxu0 %v1729
  %v1779 = vpop.f32.mrf.mxu0
  %v1780 = vadd.f32 0.0, %v1779
  %v1781 = vpop.f32.mrf.mxu0
  %v1782 = vpop.f32.mrf.mxu0
  %v1783 = vadd.f32 0.0, %v1782
  %v1784 = vpop.f32.mrf.mxu0
  %1785 = vmatprep.mubr.bf16.mxu0 %v1732
  %1786 = vmatmul.mubr.bf16.gmra.mxu0 %v1731
  %v1787 = vpop.f32.mrf.mxu0
  %v1788 = vadd.f32 0.0, %v1787
  %v1789 = vpop.f32.mrf.mxu0
  %v1790 = vpop.f32.mrf.mxu0
  %v1791 = vadd.f32 0.0, %v1790
  %v1792 = vpop.f32.mrf.mxu0
  %1793 = vmatprep.mubr.bf16.mxu0 %v1734
  %1794 = vmatmul.mubr.bf16.gmra.mxu0 %v1733
  %v1795 = vpop.f32.mrf.mxu0
  %v1796 = vadd.f32 0.0, %v1795
  %v1797 = vpop.f32.mrf.mxu0
  %v1798 = vpop.f32.mrf.mxu0
  %v1799 = vadd.f32 0.0, %v1798
  %v1800 = vpop.f32.mrf.mxu0
  %1801 = vmatprep.mubr.bf16.mxu0 %v1736
  %1802 = vmatmul.mubr.bf16.gmra.mxu0 %v1735
  %v1803 = vpop.f32.mrf.mxu0
  %v1804 = vadd.f32 0.0, %v1803
  %v1805 = vpop.f32.mrf.mxu0
  %v1806 = vpop.f32.mrf.mxu0
  %v1807 = vadd.f32 0.0, %v1806
  %v1808 = vpop.f32.mrf.mxu0
  %1809 = vdwg.mxu0
  %v1810 = vpack.c.bf16 %v1783, %v1780
  %v1811 = vpack.c.bf16 %v1791, %v1788
  %v1812 = vpack.c.bf16 %v1799, %v1796
  %v1813 = vpack.c.bf16 %v1807, %v1804
  %s1814 = scalar_lea.vmem %s4, 24
  %v1815 = vld [vmem:[%s1814] sm:$0xf]
  %v1817 = vsel %vm702, %v1810, 0
  %v1820 = vsel %vm702, %v1811, 0
  %v1823 = vsel %vm702, %v1812, 0
  %v1826 = vsel %vm702, %v1813, 0
  %v1829 = vsel %vm715, %v1815, 0
  %1831 = vmatprep.subr.bf16.mxu0 0
  %1832 = vmatpush1.bf16.msra.mxu0 0
  %1833 = vmatprep.subr.bf16.mxu0 0
  %1834 = vmatpush1.bf16.msra.mxu0 0
  %1835 = vmatprep.subr.bf16.mxu0 0
  %1836 = vmatpush1.bf16.msra.mxu0 0
  %1837 = vmatprep.subr.bf16.mxu0 0
  %1838 = vmatpush1.bf16.msra.mxu0 0
  %1839 = vmatprep.subr.bf16.mxu0 0
  %1840 = vmatpush1.bf16.msra.mxu0 0
  %1841 = vmatprep.subr.bf16.mxu0 0
  %1842 = vmatpush1.bf16.msra.mxu0 0
  %1843 = vmatprep.subr.bf16.mxu0 0
  %1844 = vmatpush1.bf16.msra.mxu0 0
  %1845 = vmatprep.subr.bf16.mxu0 0
  %1846 = vmatpush1.bf16.msra.mxu0 %v1829
  %1847 = vmatprep.subr.bf16.mxu0 0
  %1848 = vmatpush2.bf16.msra.mxu0 0
  %1849 = vmatprep.subr.bf16.mxu0 0
  %1850 = vmatpush2.bf16.msra.mxu0 0
  %1851 = vmatprep.subr.bf16.mxu0 0
  %1852 = vmatpush2.bf16.msra.mxu0 0
  %1853 = vmatprep.subr.bf16.mxu0 0
  %1854 = vmatpush2.bf16.msra.mxu0 0
  %1855 = vmatprep.subr.bf16.mxu0 0
  %1856 = vmatpush2.bf16.msra.mxu0 0
  %1857 = vmatprep.subr.bf16.mxu0 0
  %1858 = vmatpush2.bf16.msra.mxu0 0
  %1859 = vmatprep.subr.bf16.mxu0 0
  %1860 = vmatpush2.bf16.msra.mxu0 0
  %1861 = vmatprep.subr.bf16.mxu0 0
  %1862 = vmatpush2.bf16.msra.mxu0 0
  %1863 = vmatprep.mubr.bf16.mxu0 0
  %1864 = vmatmul.mubr.bf16.gmra.mxu0 %v1817
  %v1865 = vpop.f32.mrf.mxu0
  %v1866 = vadd.f32 0.0, %v1865
  %v1867 = vpop.f32.mrf.mxu0
  %v1868 = vpop.f32.mrf.mxu0
  %v1869 = vadd.f32 0.0, %v1868
  %v1870 = vpop.f32.mrf.mxu0
  %1871 = vmatprep.mubr.bf16.mxu0 0
  %1872 = vmatmul.mubr.bf16.gmra.mxu0 %v1820
  %v1873 = vpop.f32.mrf.mxu0
  %v1874 = vadd.f32 0.0, %v1873
  %v1875 = vpop.f32.mrf.mxu0
  %v1876 = vpop.f32.mrf.mxu0
  %v1877 = vadd.f32 0.0, %v1876
  %v1878 = vpop.f32.mrf.mxu0
  %1879 = vmatprep.mubr.bf16.mxu0 0
  %1880 = vmatmul.mubr.bf16.gmra.mxu0 %v1823
  %v1881 = vpop.f32.mrf.mxu0
  %v1882 = vadd.f32 0.0, %v1881
  %v1883 = vpop.f32.mrf.mxu0
  %v1884 = vpop.f32.mrf.mxu0
  %v1885 = vadd.f32 0.0, %v1884
  %v1886 = vpop.f32.mrf.mxu0
  %1887 = vmatprep.mubr.bf16.mxu0 0
  %1888 = vmatmul.mubr.bf16.gmra.mxu0 %v1826
  %v1889 = vpop.f32.mrf.mxu0
  %v1890 = vadd.f32 0.0, %v1889
  %v1891 = vpop.f32.mrf.mxu0
  %v1892 = vpop.f32.mrf.mxu0
  %v1893 = vadd.f32 0.0, %v1892
  %v1894 = vpop.f32.mrf.mxu0
  %1895 = vdwg.mxu0
  %v1896 = vadd.f32 %v1688, %v1866
  %v1897 = vadd.f32 %v1689, %v1869
  %v1898 = vadd.f32 %v1690, %v1874
  %v1899 = vadd.f32 %v1691, %v1877
  %v1900 = vadd.f32 %v1692, %v1882
  %v1901 = vadd.f32 %v1693, %v1885
  %v1902 = vadd.f32 %v1694, %v1890
  %v1903 = vadd.f32 %v1695, %v1893
  %s1904 = scalar_lea.vmem %s3, 448
  %v1905 = vld [vmem:[%s1904] sm:$0xff]
  %v1906 = vld [vmem:[%s1904 + $0x8] sm:$0xff]
  %v1907 = vld [vmem:[%s1904 + $0x10] sm:$0xff]
  %v1908 = vld [vmem:[%s1904 + $0x18] sm:$0xff]
  %v1909 = vld [vmem:[%s1904 + $0x20] sm:$0xff]
  %v1910 = vld [vmem:[%s1904 + $0x28] sm:$0xff]
  %v1911 = vld [vmem:[%s1904 + $0x30] sm:$0xff]
  %v1912 = vld [vmem:[%s1904 + $0x38] sm:$0xff]
  %v1921 = vunpack.c.l.b16 %v1905
  %v1922 = vunpack.c.h.b16 %v1905
  %v1923 = vunpack.c.l.b16 %v1906
  %v1924 = vunpack.c.h.b16 %v1906
  %v1925 = vunpack.c.l.b16 %v1907
  %v1926 = vunpack.c.h.b16 %v1907
  %v1927 = vunpack.c.l.b16 %v1908
  %v1928 = vunpack.c.h.b16 %v1908
  %v1929 = vunpack.c.l.b16 %v1909
  %v1930 = vunpack.c.h.b16 %v1909
  %v1931 = vunpack.c.l.b16 %v1910
  %v1932 = vunpack.c.h.b16 %v1910
  %v1933 = vunpack.c.l.b16 %v1911
  %v1934 = vunpack.c.h.b16 %v1911
  %v1935 = vunpack.c.l.b16 %v1912
  %v1936 = vunpack.c.h.b16 %v1912
  %v1937 = vpack.c.b16 %v1923, %v1921
  %v1938 = vpack.c.b16 %v1924, %v1922
  %v1939 = vpack.c.b16 %v1927, %v1925
  %v1940 = vpack.c.b16 %v1928, %v1926
  %v1941 = vpack.c.b16 %v1931, %v1929
  %v1942 = vpack.c.b16 %v1932, %v1930
  %v1943 = vpack.c.b16 %v1935, %v1933
  %v1944 = vpack.c.b16 %v1936, %v1934
  %1953 = vmatprep.subr.bf16.mxu0 0
  %1954 = vmatpush1.bf16.msra.mxu0 %v455
  %1955 = vmatprep.subr.bf16.mxu0 0
  %1956 = vmatpush1.bf16.msra.mxu0 %v454
  %1957 = vmatprep.subr.bf16.mxu0 0
  %1958 = vmatpush1.bf16.msra.mxu0 %v453
  %1959 = vmatprep.subr.bf16.mxu0 0
  %1960 = vmatpush1.bf16.msra.mxu0 %v452
  %1961 = vmatprep.subr.bf16.mxu0 0
  %1962 = vmatpush1.bf16.msra.mxu0 %v451
  %1963 = vmatprep.subr.bf16.mxu0 0
  %1964 = vmatpush1.bf16.msra.mxu0 %v450
  %1965 = vmatprep.subr.bf16.mxu0 0
  %1966 = vmatpush1.bf16.msra.mxu0 %v449
  %1967 = vmatprep.subr.bf16.mxu0 0
  %1968 = vmatpush1.bf16.msra.mxu0 %v448
  %1969 = vmatprep.subr.bf16.mxu0 0
  %1970 = vmatpush2.bf16.msra.mxu0 %v463
  %1971 = vmatprep.subr.bf16.mxu0 0
  %1972 = vmatpush2.bf16.msra.mxu0 %v462
  %1973 = vmatprep.subr.bf16.mxu0 0
  %1974 = vmatpush2.bf16.msra.mxu0 %v461
  %1975 = vmatprep.subr.bf16.mxu0 0
  %1976 = vmatpush2.bf16.msra.mxu0 %v460
  %1977 = vmatprep.subr.bf16.mxu0 0
  %1978 = vmatpush2.bf16.msra.mxu0 %v459
  %1979 = vmatprep.subr.bf16.mxu0 0
  %1980 = vmatpush2.bf16.msra.mxu0 %v458
  %1981 = vmatprep.subr.bf16.mxu0 0
  %1982 = vmatpush2.bf16.msra.mxu0 %v457
  %1983 = vmatprep.subr.bf16.mxu0 0
  %1984 = vmatpush2.bf16.msra.mxu0 %v456
  %1985 = vmatprep.mubr.bf16.mxu0 %v1938
  %1986 = vmatmul.mubr.bf16.gmra.mxu0 %v1937
  %v1987 = vpop.f32.mrf.mxu0
  %v1988 = vadd.f32 0.0, %v1987
  %v1989 = vpop.f32.mrf.mxu0
  %v1990 = vpop.f32.mrf.mxu0
  %v1991 = vadd.f32 0.0, %v1990
  %v1992 = vpop.f32.mrf.mxu0
  %1993 = vmatprep.mubr.bf16.mxu0 %v1940
  %1994 = vmatmul.mubr.bf16.gmra.mxu0 %v1939
  %v1995 = vpop.f32.mrf.mxu0
  %v1996 = vadd.f32 0.0, %v1995
  %v1997 = vpop.f32.mrf.mxu0
  %v1998 = vpop.f32.mrf.mxu0
  %v1999 = vadd.f32 0.0, %v1998
  %v2000 = vpop.f32.mrf.mxu0
  %2001 = vmatprep.mubr.bf16.mxu0 %v1942
  %2002 = vmatmul.mubr.bf16.gmra.mxu0 %v1941
  %v2003 = vpop.f32.mrf.mxu0
  %v2004 = vadd.f32 0.0, %v2003
  %v2005 = vpop.f32.mrf.mxu0
  %v2006 = vpop.f32.mrf.mxu0
  %v2007 = vadd.f32 0.0, %v2006
  %v2008 = vpop.f32.mrf.mxu0
  %2009 = vmatprep.mubr.bf16.mxu0 %v1944
  %2010 = vmatmul.mubr.bf16.gmra.mxu0 %v1943
  %v2011 = vpop.f32.mrf.mxu0
  %v2012 = vadd.f32 0.0, %v2011
  %v2013 = vpop.f32.mrf.mxu0
  %v2014 = vpop.f32.mrf.mxu0
  %v2015 = vadd.f32 0.0, %v2014
  %v2016 = vpop.f32.mrf.mxu0
  %2017 = vdwg.mxu0
  %v2018 = vpack.c.bf16 %v1991, %v1988
  %v2019 = vpack.c.bf16 %v1999, %v1996
  %v2020 = vpack.c.bf16 %v2007, %v2004
  %v2021 = vpack.c.bf16 %v2015, %v2012
  %s2022 = scalar_lea.vmem %s4, 28
  %v2023 = vld [vmem:[%s2022] sm:$0xf]
  %v2025 = vsel %vm702, %v2018, 0
  %v2028 = vsel %vm702, %v2019, 0
  %v2031 = vsel %vm702, %v2020, 0
  %v2034 = vsel %vm702, %v2021, 0
  %v2037 = vsel %vm715, %v2023, 0
  %2039 = vmatprep.subr.bf16.mxu0 0
  %2040 = vmatpush1.bf16.msra.mxu0 0
  %2041 = vmatprep.subr.bf16.mxu0 0
  %2042 = vmatpush1.bf16.msra.mxu0 0
  %2043 = vmatprep.subr.bf16.mxu0 0
  %2044 = vmatpush1.bf16.msra.mxu0 0
  %2045 = vmatprep.subr.bf16.mxu0 0
  %2046 = vmatpush1.bf16.msra.mxu0 0
  %2047 = vmatprep.subr.bf16.mxu0 0
  %2048 = vmatpush1.bf16.msra.mxu0 0
  %2049 = vmatprep.subr.bf16.mxu0 0
  %2050 = vmatpush1.bf16.msra.mxu0 0
  %2051 = vmatprep.subr.bf16.mxu0 0
  %2052 = vmatpush1.bf16.msra.mxu0 0
  %2053 = vmatprep.subr.bf16.mxu0 0
  %2054 = vmatpush1.bf16.msra.mxu0 %v2037
  %2055 = vmatprep.subr.bf16.mxu0 0
  %2056 = vmatpush2.bf16.msra.mxu0 0
  %2057 = vmatprep.subr.bf16.mxu0 0
  %2058 = vmatpush2.bf16.msra.mxu0 0
  %2059 = vmatprep.subr.bf16.mxu0 0
  %2060 = vmatpush2.bf16.msra.mxu0 0
  %2061 = vmatprep.subr.bf16.mxu0 0
  %2062 = vmatpush2.bf16.msra.mxu0 0
  %2063 = vmatprep.subr.bf16.mxu0 0
  %2064 = vmatpush2.bf16.msra.mxu0 0
  %2065 = vmatprep.subr.bf16.mxu0 0
  %2066 = vmatpush2.bf16.msra.mxu0 0
  %2067 = vmatprep.subr.bf16.mxu0 0
  %2068 = vmatpush2.bf16.msra.mxu0 0
  %2069 = vmatprep.subr.bf16.mxu0 0
  %2070 = vmatpush2.bf16.msra.mxu0 0
  %2071 = vmatprep.mubr.bf16.mxu0 0
  %2072 = vmatmul.mubr.bf16.gmra.mxu0 %v2025
  %v2073 = vpop.f32.mrf.mxu0
  %v2074 = vadd.f32 0.0, %v2073
  %v2075 = vpop.f32.mrf.mxu0
  %v2076 = vpop.f32.mrf.mxu0
  %v2077 = vadd.f32 0.0, %v2076
  %v2078 = vpop.f32.mrf.mxu0
  %2079 = vmatprep.mubr.bf16.mxu0 0
  %2080 = vmatmul.mubr.bf16.gmra.mxu0 %v2028
  %v2081 = vpop.f32.mrf.mxu0
  %v2082 = vadd.f32 0.0, %v2081
  %v2083 = vpop.f32.mrf.mxu0
  %v2084 = vpop.f32.mrf.mxu0
  %v2085 = vadd.f32 0.0, %v2084
  %v2086 = vpop.f32.mrf.mxu0
  %2087 = vmatprep.mubr.bf16.mxu0 0
  %2088 = vmatmul.mubr.bf16.gmra.mxu0 %v2031
  %v2089 = vpop.f32.mrf.mxu0
  %v2090 = vadd.f32 0.0, %v2089
  %v2091 = vpop.f32.mrf.mxu0
  %v2092 = vpop.f32.mrf.mxu0
  %v2093 = vadd.f32 0.0, %v2092
  %v2094 = vpop.f32.mrf.mxu0
  %2095 = vmatprep.mubr.bf16.mxu0 0
  %2096 = vmatmul.mubr.bf16.gmra.mxu0 %v2034
  %v2097 = vpop.f32.mrf.mxu0
  %v2098 = vadd.f32 0.0, %v2097
  %v2099 = vpop.f32.mrf.mxu0
  %v2100 = vpop.f32.mrf.mxu0
  %v2101 = vadd.f32 0.0, %v2100
  %v2102 = vpop.f32.mrf.mxu0
  %2103 = vdwg.mxu0
  %v2104 = vadd.f32 %v1896, %v2074
  %v2105 = vadd.f32 %v1897, %v2077
  %v2106 = vadd.f32 %v1898, %v2082
  %v2107 = vadd.f32 %v1899, %v2085
  %v2108 = vadd.f32 %v1900, %v2090
  %v2109 = vadd.f32 %v1901, %v2093
  %v2110 = vadd.f32 %v1902, %v2098
  %v2111 = vadd.f32 %v1903, %v2101
  %s2112 = scalar_lea.vmem %s3, 512
  %v2113 = vld [vmem:[%s2112] sm:$0xff]
  %v2114 = vld [vmem:[%s2112 + $0x8] sm:$0xff]
  %v2115 = vld [vmem:[%s2112 + $0x10] sm:$0xff]
  %v2116 = vld [vmem:[%s2112 + $0x18] sm:$0xff]
  %v2117 = vld [vmem:[%s2112 + $0x20] sm:$0xff]
  %v2118 = vld [vmem:[%s2112 + $0x28] sm:$0xff]
  %v2119 = vld [vmem:[%s2112 + $0x30] sm:$0xff]
  %v2120 = vld [vmem:[%s2112 + $0x38] sm:$0xff]
  %v2129 = vunpack.c.l.b16 %v2113
  %v2130 = vunpack.c.h.b16 %v2113
  %v2131 = vunpack.c.l.b16 %v2114
  %v2132 = vunpack.c.h.b16 %v2114
  %v2133 = vunpack.c.l.b16 %v2115
  %v2134 = vunpack.c.h.b16 %v2115
  %v2135 = vunpack.c.l.b16 %v2116
  %v2136 = vunpack.c.h.b16 %v2116
  %v2137 = vunpack.c.l.b16 %v2117
  %v2138 = vunpack.c.h.b16 %v2117
  %v2139 = vunpack.c.l.b16 %v2118
  %v2140 = vunpack.c.h.b16 %v2118
  %v2141 = vunpack.c.l.b16 %v2119
  %v2142 = vunpack.c.h.b16 %v2119
  %v2143 = vunpack.c.l.b16 %v2120
  %v2144 = vunpack.c.h.b16 %v2120
  %v2145 = vpack.c.b16 %v2131, %v2129
  %v2146 = vpack.c.b16 %v2132, %v2130
  %v2147 = vpack.c.b16 %v2135, %v2133
  %v2148 = vpack.c.b16 %v2136, %v2134
  %v2149 = vpack.c.b16 %v2139, %v2137
  %v2150 = vpack.c.b16 %v2140, %v2138
  %v2151 = vpack.c.b16 %v2143, %v2141
  %v2152 = vpack.c.b16 %v2144, %v2142
  %2161 = vmatprep.subr.bf16.mxu0 0
  %2162 = vmatpush1.bf16.msra.mxu0 %v455
  %2163 = vmatprep.subr.bf16.mxu0 0
  %2164 = vmatpush1.bf16.msra.mxu0 %v454
  %2165 = vmatprep.subr.bf16.mxu0 0
  %2166 = vmatpush1.bf16.msra.mxu0 %v453
  %2167 = vmatprep.subr.bf16.mxu0 0
  %2168 = vmatpush1.bf16.msra.mxu0 %v452
  %2169 = vmatprep.subr.bf16.mxu0 0
  %2170 = vmatpush1.bf16.msra.mxu0 %v451
  %2171 = vmatprep.subr.bf16.mxu0 0
  %2172 = vmatpush1.bf16.msra.mxu0 %v450
  %2173 = vmatprep.subr.bf16.mxu0 0
  %2174 = vmatpush1.bf16.msra.mxu0 %v449
  %2175 = vmatprep.subr.bf16.mxu0 0
  %2176 = vmatpush1.bf16.msra.mxu0 %v448
  %2177 = vmatprep.subr.bf16.mxu0 0
  %2178 = vmatpush2.bf16.msra.mxu0 %v463
  %2179 = vmatprep.subr.bf16.mxu0 0
  %2180 = vmatpush2.bf16.msra.mxu0 %v462
  %2181 = vmatprep.subr.bf16.mxu0 0
  %2182 = vmatpush2.bf16.msra.mxu0 %v461
  %2183 = vmatprep.subr.bf16.mxu0 0
  %2184 = vmatpush2.bf16.msra.mxu0 %v460
  %2185 = vmatprep.subr.bf16.mxu0 0
  %2186 = vmatpush2.bf16.msra.mxu0 %v459
  %2187 = vmatprep.subr.bf16.mxu0 0
  %2188 = vmatpush2.bf16.msra.mxu0 %v458
  %2189 = vmatprep.subr.bf16.mxu0 0
  %2190 = vmatpush2.bf16.msra.mxu0 %v457
  %2191 = vmatprep.subr.bf16.mxu0 0
  %2192 = vmatpush2.bf16.msra.mxu0 %v456
  %2193 = vmatprep.mubr.bf16.mxu0 %v2146
  %2194 = vmatmul.mubr.bf16.gmra.mxu0 %v2145
  %v2195 = vpop.f32.mrf.mxu0
  %v2196 = vadd.f32 0.0, %v2195
  %v2197 = vpop.f32.mrf.mxu0
  %v2198 = vpop.f32.mrf.mxu0
  %v2199 = vadd.f32 0.0, %v2198
  %v2200 = vpop.f32.mrf.mxu0
  %2201 = vmatprep.mubr.bf16.mxu0 %v2148
  %2202 = vmatmul.mubr.bf16.gmra.mxu0 %v2147
  %v2203 = vpop.f32.mrf.mxu0
  %v2204 = vadd.f32 0.0, %v2203
  %v2205 = vpop.f32.mrf.mxu0
  %v2206 = vpop.f32.mrf.mxu0
  %v2207 = vadd.f32 0.0, %v2206
  %v2208 = vpop.f32.mrf.mxu0
  %2209 = vmatprep.mubr.bf16.mxu0 %v2150
  %2210 = vmatmul.mubr.bf16.gmra.mxu0 %v2149
  %v2211 = vpop.f32.mrf.mxu0
  %v2212 = vadd.f32 0.0, %v2211
  %v2213 = vpop.f32.mrf.mxu0
  %v2214 = vpop.f32.mrf.mxu0
  %v2215 = vadd.f32 0.0, %v2214
  %v2216 = vpop.f32.mrf.mxu0
  %2217 = vmatprep.mubr.bf16.mxu0 %v2152
  %2218 = vmatmul.mubr.bf16.gmra.mxu0 %v2151
  %v2219 = vpop.f32.mrf.mxu0
  %v2220 = vadd.f32 0.0, %v2219
  %v2221 = vpop.f32.mrf.mxu0
  %v2222 = vpop.f32.mrf.mxu0
  %v2223 = vadd.f32 0.0, %v2222
  %v2224 = vpop.f32.mrf.mxu0
  %2225 = vdwg.mxu0
  %v2226 = vpack.c.bf16 %v2199, %v2196
  %v2227 = vpack.c.bf16 %v2207, %v2204
  %v2228 = vpack.c.bf16 %v2215, %v2212
  %v2229 = vpack.c.bf16 %v2223, %v2220
  %s2230 = scalar_lea.vmem %s4, 32
  %v2231 = vld [vmem:[%s2230] sm:$0xf]
  %v2233 = vsel %vm702, %v2226, 0
  %v2236 = vsel %vm702, %v2227, 0
  %v2239 = vsel %vm702, %v2228, 0
  %v2242 = vsel %vm702, %v2229, 0
  %v2245 = vsel %vm715, %v2231, 0
  %2247 = vmatprep.subr.bf16.mxu0 0
  %2248 = vmatpush1.bf16.msra.mxu0 0
  %2249 = vmatprep.subr.bf16.mxu0 0
  %2250 = vmatpush1.bf16.msra.mxu0 0
  %2251 = vmatprep.subr.bf16.mxu0 0
  %2252 = vmatpush1.bf16.msra.mxu0 0
  %2253 = vmatprep.subr.bf16.mxu0 0
  %2254 = vmatpush1.bf16.msra.mxu0 0
  %2255 = vmatprep.subr.bf16.mxu0 0
  %2256 = vmatpush1.bf16.msra.mxu0 0
  %2257 = vmatprep.subr.bf16.mxu0 0
  %2258 = vmatpush1.bf16.msra.mxu0 0
  %2259 = vmatprep.subr.bf16.mxu0 0
  %2260 = vmatpush1.bf16.msra.mxu0 0
  %2261 = vmatprep.subr.bf16.mxu0 0
  %2262 = vmatpush1.bf16.msra.mxu0 %v2245
  %2263 = vmatprep.subr.bf16.mxu0 0
  %2264 = vmatpush2.bf16.msra.mxu0 0
  %2265 = vmatprep.subr.bf16.mxu0 0
  %2266 = vmatpush2.bf16.msra.mxu0 0
  %2267 = vmatprep.subr.bf16.mxu0 0
  %2268 = vmatpush2.bf16.msra.mxu0 0
  %2269 = vmatprep.subr.bf16.mxu0 0
  %2270 = vmatpush2.bf16.msra.mxu0 0
  %2271 = vmatprep.subr.bf16.mxu0 0
  %2272 = vmatpush2.bf16.msra.mxu0 0
  %2273 = vmatprep.subr.bf16.mxu0 0
  %2274 = vmatpush2.bf16.msra.mxu0 0
  %2275 = vmatprep.subr.bf16.mxu0 0
  %2276 = vmatpush2.bf16.msra.mxu0 0
  %2277 = vmatprep.subr.bf16.mxu0 0
  %2278 = vmatpush2.bf16.msra.mxu0 0
  %2279 = vmatprep.mubr.bf16.mxu0 0
  %2280 = vmatmul.mubr.bf16.gmra.mxu0 %v2233
  %v2281 = vpop.f32.mrf.mxu0
  %v2282 = vadd.f32 0.0, %v2281
  %v2283 = vpop.f32.mrf.mxu0
  %v2284 = vpop.f32.mrf.mxu0
  %v2285 = vadd.f32 0.0, %v2284
  %v2286 = vpop.f32.mrf.mxu0
  %2287 = vmatprep.mubr.bf16.mxu0 0
  %2288 = vmatmul.mubr.bf16.gmra.mxu0 %v2236
  %v2289 = vpop.f32.mrf.mxu0
  %v2290 = vadd.f32 0.0, %v2289
  %v2291 = vpop.f32.mrf.mxu0
  %v2292 = vpop.f32.mrf.mxu0
  %v2293 = vadd.f32 0.0, %v2292
  %v2294 = vpop.f32.mrf.mxu0
  %2295 = vmatprep.mubr.bf16.mxu0 0
  %2296 = vmatmul.mubr.bf16.gmra.mxu0 %v2239
  %v2297 = vpop.f32.mrf.mxu0
  %v2298 = vadd.f32 0.0, %v2297
  %v2299 = vpop.f32.mrf.mxu0
  %v2300 = vpop.f32.mrf.mxu0
  %v2301 = vadd.f32 0.0, %v2300
  %v2302 = vpop.f32.mrf.mxu0
  %2303 = vmatprep.mubr.bf16.mxu0 0
  %2304 = vmatmul.mubr.bf16.gmra.mxu0 %v2242
  %v2305 = vpop.f32.mrf.mxu0
  %v2306 = vadd.f32 0.0, %v2305
  %v2307 = vpop.f32.mrf.mxu0
  %v2308 = vpop.f32.mrf.mxu0
  %v2309 = vadd.f32 0.0, %v2308
  %v2310 = vpop.f32.mrf.mxu0
  %2311 = vdwg.mxu0
  %v2312 = vadd.f32 %v2104, %v2282
  %v2313 = vadd.f32 %v2105, %v2285
  %v2314 = vadd.f32 %v2106, %v2290
  %v2315 = vadd.f32 %v2107, %v2293
  %v2316 = vadd.f32 %v2108, %v2298
  %v2317 = vadd.f32 %v2109, %v2301
  %v2318 = vadd.f32 %v2110, %v2306
  %v2319 = vadd.f32 %v2111, %v2309
  %s2320 = scalar_lea.vmem %s3, 576
  %v2321 = vld [vmem:[%s2320] sm:$0xff]
  %v2322 = vld [vmem:[%s2320 + $0x8] sm:$0xff]
  %v2323 = vld [vmem:[%s2320 + $0x10] sm:$0xff]
  %v2324 = vld [vmem:[%s2320 + $0x18] sm:$0xff]
  %v2325 = vld [vmem:[%s2320 + $0x20] sm:$0xff]
  %v2326 = vld [vmem:[%s2320 + $0x28] sm:$0xff]
  %v2327 = vld [vmem:[%s2320 + $0x30] sm:$0xff]
  %v2328 = vld [vmem:[%s2320 + $0x38] sm:$0xff]
  %v2337 = vunpack.c.l.b16 %v2321
  %v2338 = vunpack.c.h.b16 %v2321
  %v2339 = vunpack.c.l.b16 %v2322
  %v2340 = vunpack.c.h.b16 %v2322
  %v2341 = vunpack.c.l.b16 %v2323
  %v2342 = vunpack.c.h.b16 %v2323
  %v2343 = vunpack.c.l.b16 %v2324
  %v2344 = vunpack.c.h.b16 %v2324
  %v2345 = vunpack.c.l.b16 %v2325
  %v2346 = vunpack.c.h.b16 %v2325
  %v2347 = vunpack.c.l.b16 %v2326
  %v2348 = vunpack.c.h.b16 %v2326
  %v2349 = vunpack.c.l.b16 %v2327
  %v2350 = vunpack.c.h.b16 %v2327
  %v2351 = vunpack.c.l.b16 %v2328
  %v2352 = vunpack.c.h.b16 %v2328
  %v2353 = vpack.c.b16 %v2339, %v2337
  %v2354 = vpack.c.b16 %v2340, %v2338
  %v2355 = vpack.c.b16 %v2343, %v2341
  %v2356 = vpack.c.b16 %v2344, %v2342
  %v2357 = vpack.c.b16 %v2347, %v2345
  %v2358 = vpack.c.b16 %v2348, %v2346
  %v2359 = vpack.c.b16 %v2351, %v2349
  %v2360 = vpack.c.b16 %v2352, %v2350
  %2369 = vmatprep.subr.bf16.mxu0 0
  %2370 = vmatpush1.bf16.msra.mxu0 %v455
  %2371 = vmatprep.subr.bf16.mxu0 0
  %2372 = vmatpush1.bf16.msra.mxu0 %v454
  %2373 = vmatprep.subr.bf16.mxu0 0
  %2374 = vmatpush1.bf16.msra.mxu0 %v453
  %2375 = vmatprep.subr.bf16.mxu0 0
  %2376 = vmatpush1.bf16.msra.mxu0 %v452
  %2377 = vmatprep.subr.bf16.mxu0 0
  %2378 = vmatpush1.bf16.msra.mxu0 %v451
  %2379 = vmatprep.subr.bf16.mxu0 0
  %2380 = vmatpush1.bf16.msra.mxu0 %v450
  %2381 = vmatprep.subr.bf16.mxu0 0
  %2382 = vmatpush1.bf16.msra.mxu0 %v449
  %2383 = vmatprep.subr.bf16.mxu0 0
  %2384 = vmatpush1.bf16.msra.mxu0 %v448
  %2385 = vmatprep.subr.bf16.mxu0 0
  %2386 = vmatpush2.bf16.msra.mxu0 %v463
  %2387 = vmatprep.subr.bf16.mxu0 0
  %2388 = vmatpush2.bf16.msra.mxu0 %v462
  %2389 = vmatprep.subr.bf16.mxu0 0
  %2390 = vmatpush2.bf16.msra.mxu0 %v461
  %2391 = vmatprep.subr.bf16.mxu0 0
  %2392 = vmatpush2.bf16.msra.mxu0 %v460
  %2393 = vmatprep.subr.bf16.mxu0 0
  %2394 = vmatpush2.bf16.msra.mxu0 %v459
  %2395 = vmatprep.subr.bf16.mxu0 0
  %2396 = vmatpush2.bf16.msra.mxu0 %v458
  %2397 = vmatprep.subr.bf16.mxu0 0
  %2398 = vmatpush2.bf16.msra.mxu0 %v457
  %2399 = vmatprep.subr.bf16.mxu0 0
  %2400 = vmatpush2.bf16.msra.mxu0 %v456
  %2401 = vmatprep.mubr.bf16.mxu0 %v2354
  %2402 = vmatmul.mubr.bf16.gmra.mxu0 %v2353
  %v2403 = vpop.f32.mrf.mxu0
  %v2404 = vadd.f32 0.0, %v2403
  %v2405 = vpop.f32.mrf.mxu0
  %v2406 = vpop.f32.mrf.mxu0
  %v2407 = vadd.f32 0.0, %v2406
  %v2408 = vpop.f32.mrf.mxu0
  %2409 = vmatprep.mubr.bf16.mxu0 %v2356
  %2410 = vmatmul.mubr.bf16.gmra.mxu0 %v2355
  %v2411 = vpop.f32.mrf.mxu0
  %v2412 = vadd.f32 0.0, %v2411
  %v2413 = vpop.f32.mrf.mxu0
  %v2414 = vpop.f32.mrf.mxu0
  %v2415 = vadd.f32 0.0, %v2414
  %v2416 = vpop.f32.mrf.mxu0
  %2417 = vmatprep.mubr.bf16.mxu0 %v2358
  %2418 = vmatmul.mubr.bf16.gmra.mxu0 %v2357
  %v2419 = vpop.f32.mrf.mxu0
  %v2420 = vadd.f32 0.0, %v2419
  %v2421 = vpop.f32.mrf.mxu0
  %v2422 = vpop.f32.mrf.mxu0
  %v2423 = vadd.f32 0.0, %v2422
  %v2424 = vpop.f32.mrf.mxu0
  %2425 = vmatprep.mubr.bf16.mxu0 %v2360
  %2426 = vmatmul.mubr.bf16.gmra.mxu0 %v2359
  %v2427 = vpop.f32.mrf.mxu0
  %v2428 = vadd.f32 0.0, %v2427
  %v2429 = vpop.f32.mrf.mxu0
  %v2430 = vpop.f32.mrf.mxu0
  %v2431 = vadd.f32 0.0, %v2430
  %v2432 = vpop.f32.mrf.mxu0
  %2433 = vdwg.mxu0
  %v2434 = vpack.c.bf16 %v2407, %v2404
  %v2435 = vpack.c.bf16 %v2415, %v2412
  %v2436 = vpack.c.bf16 %v2423, %v2420
  %v2437 = vpack.c.bf16 %v2431, %v2428
  %s2438 = scalar_lea.vmem %s4, 36
  %v2439 = vld [vmem:[%s2438] sm:$0xf]
  %v2441 = vsel %vm702, %v2434, 0
  %v2444 = vsel %vm702, %v2435, 0
  %v2447 = vsel %vm702, %v2436, 0
  %v2450 = vsel %vm702, %v2437, 0
  %v2453 = vsel %vm715, %v2439, 0
  %2455 = vmatprep.subr.bf16.mxu0 0
  %2456 = vmatpush1.bf16.msra.mxu0 0
  %2457 = vmatprep.subr.bf16.mxu0 0
  %2458 = vmatpush1.bf16.msra.mxu0 0
  %2459 = vmatprep.subr.bf16.mxu0 0
  %2460 = vmatpush1.bf16.msra.mxu0 0
  %2461 = vmatprep.subr.bf16.mxu0 0
  %2462 = vmatpush1.bf16.msra.mxu0 0
  %2463 = vmatprep.subr.bf16.mxu0 0
  %2464 = vmatpush1.bf16.msra.mxu0 0
  %2465 = vmatprep.subr.bf16.mxu0 0
  %2466 = vmatpush1.bf16.msra.mxu0 0
  %2467 = vmatprep.subr.bf16.mxu0 0
  %2468 = vmatpush1.bf16.msra.mxu0 0
  %2469 = vmatprep.subr.bf16.mxu0 0
  %2470 = vmatpush1.bf16.msra.mxu0 %v2453
  %2471 = vmatprep.subr.bf16.mxu0 0
  %2472 = vmatpush2.bf16.msra.mxu0 0
  %2473 = vmatprep.subr.bf16.mxu0 0
  %2474 = vmatpush2.bf16.msra.mxu0 0
  %2475 = vmatprep.subr.bf16.mxu0 0
  %2476 = vmatpush2.bf16.msra.mxu0 0
  %2477 = vmatprep.subr.bf16.mxu0 0
  %2478 = vmatpush2.bf16.msra.mxu0 0
  %2479 = vmatprep.subr.bf16.mxu0 0
  %2480 = vmatpush2.bf16.msra.mxu0 0
  %2481 = vmatprep.subr.bf16.mxu0 0
  %2482 = vmatpush2.bf16.msra.mxu0 0
  %2483 = vmatprep.subr.bf16.mxu0 0
  %2484 = vmatpush2.bf16.msra.mxu0 0
  %2485 = vmatprep.subr.bf16.mxu0 0
  %2486 = vmatpush2.bf16.msra.mxu0 0
  %2487 = vmatprep.mubr.bf16.mxu0 0
  %2488 = vmatmul.mubr.bf16.gmra.mxu0 %v2441
  %v2489 = vpop.f32.mrf.mxu0
  %v2490 = vadd.f32 0.0, %v2489
  %v2491 = vpop.f32.mrf.mxu0
  %v2492 = vpop.f32.mrf.mxu0
  %v2493 = vadd.f32 0.0, %v2492
  %v2494 = vpop.f32.mrf.mxu0
  %2495 = vmatprep.mubr.bf16.mxu0 0
  %2496 = vmatmul.mubr.bf16.gmra.mxu0 %v2444
  %v2497 = vpop.f32.mrf.mxu0
  %v2498 = vadd.f32 0.0, %v2497
  %v2499 = vpop.f32.mrf.mxu0
  %v2500 = vpop.f32.mrf.mxu0
  %v2501 = vadd.f32 0.0, %v2500
  %v2502 = vpop.f32.mrf.mxu0
  %2503 = vmatprep.mubr.bf16.mxu0 0
  %2504 = vmatmul.mubr.bf16.gmra.mxu0 %v2447
  %v2505 = vpop.f32.mrf.mxu0
  %v2506 = vadd.f32 0.0, %v2505
  %v2507 = vpop.f32.mrf.mxu0
  %v2508 = vpop.f32.mrf.mxu0
  %v2509 = vadd.f32 0.0, %v2508
  %v2510 = vpop.f32.mrf.mxu0
  %2511 = vmatprep.mubr.bf16.mxu0 0
  %2512 = vmatmul.mubr.bf16.gmra.mxu0 %v2450
  %v2513 = vpop.f32.mrf.mxu0
  %v2514 = vadd.f32 0.0, %v2513
  %v2515 = vpop.f32.mrf.mxu0
  %v2516 = vpop.f32.mrf.mxu0
  %v2517 = vadd.f32 0.0, %v2516
  %v2518 = vpop.f32.mrf.mxu0
  %2519 = vdwg.mxu0
  %v2520 = vadd.f32 %v2312, %v2490
  %v2521 = vadd.f32 %v2313, %v2493
  %v2522 = vadd.f32 %v2314, %v2498
  %v2523 = vadd.f32 %v2315, %v2501
  %v2524 = vadd.f32 %v2316, %v2506
  %v2525 = vadd.f32 %v2317, %v2509
  %v2526 = vadd.f32 %v2318, %v2514
  %v2527 = vadd.f32 %v2319, %v2517
  %s2528 = scalar_lea.vmem %s3, 640
  %v2529 = vld [vmem:[%s2528] sm:$0xff]
  %v2530 = vld [vmem:[%s2528 + $0x8] sm:$0xff]
  %v2531 = vld [vmem:[%s2528 + $0x10] sm:$0xff]
  %v2532 = vld [vmem:[%s2528 + $0x18] sm:$0xff]
  %v2533 = vld [vmem:[%s2528 + $0x20] sm:$0xff]
  %v2534 = vld [vmem:[%s2528 + $0x28] sm:$0xff]
  %v2535 = vld [vmem:[%s2528 + $0x30] sm:$0xff]
  %v2536 = vld [vmem:[%s2528 + $0x38] sm:$0xff]
  %v2545 = vunpack.c.l.b16 %v2529
  %v2546 = vunpack.c.h.b16 %v2529
  %v2547 = vunpack.c.l.b16 %v2530
  %v2548 = vunpack.c.h.b16 %v2530
  %v2549 = vunpack.c.l.b16 %v2531
  %v2550 = vunpack.c.h.b16 %v2531
  %v2551 = vunpack.c.l.b16 %v2532
  %v2552 = vunpack.c.h.b16 %v2532
  %v2553 = vunpack.c.l.b16 %v2533
  %v2554 = vunpack.c.h.b16 %v2533
  %v2555 = vunpack.c.l.b16 %v2534
  %v2556 = vunpack.c.h.b16 %v2534
  %v2557 = vunpack.c.l.b16 %v2535
  %v2558 = vunpack.c.h.b16 %v2535
  %v2559 = vunpack.c.l.b16 %v2536
  %v2560 = vunpack.c.h.b16 %v2536
  %v2561 = vpack.c.b16 %v2547, %v2545
  %v2562 = vpack.c.b16 %v2548, %v2546
  %v2563 = vpack.c.b16 %v2551, %v2549
  %v2564 = vpack.c.b16 %v2552, %v2550
  %v2565 = vpack.c.b16 %v2555, %v2553
  %v2566 = vpack.c.b16 %v2556, %v2554
  %v2567 = vpack.c.b16 %v2559, %v2557
  %v2568 = vpack.c.b16 %v2560, %v2558
  %2577 = vmatprep.subr.bf16.mxu0 0
  %2578 = vmatpush1.bf16.msra.mxu0 %v455
  %2579 = vmatprep.subr.bf16.mxu0 0
  %2580 = vmatpush1.bf16.msra.mxu0 %v454
  %2581 = vmatprep.subr.bf16.mxu0 0
  %2582 = vmatpush1.bf16.msra.mxu0 %v453
  %2583 = vmatprep.subr.bf16.mxu0 0
  %2584 = vmatpush1.bf16.msra.mxu0 %v452
  %2585 = vmatprep.subr.bf16.mxu0 0
  %2586 = vmatpush1.bf16.msra.mxu0 %v451
  %2587 = vmatprep.subr.bf16.mxu0 0
  %2588 = vmatpush1.bf16.msra.mxu0 %v450
  %2589 = vmatprep.subr.bf16.mxu0 0
  %2590 = vmatpush1.bf16.msra.mxu0 %v449
  %2591 = vmatprep.subr.bf16.mxu0 0
  %2592 = vmatpush1.bf16.msra.mxu0 %v448
  %2593 = vmatprep.subr.bf16.mxu0 0
  %2594 = vmatpush2.bf16.msra.mxu0 %v463
  %2595 = vmatprep.subr.bf16.mxu0 0
  %2596 = vmatpush2.bf16.msra.mxu0 %v462
  %2597 = vmatprep.subr.bf16.mxu0 0
  %2598 = vmatpush2.bf16.msra.mxu0 %v461
  %2599 = vmatprep.subr.bf16.mxu0 0
  %2600 = vmatpush2.bf16.msra.mxu0 %v460
  %2601 = vmatprep.subr.bf16.mxu0 0
  %2602 = vmatpush2.bf16.msra.mxu0 %v459
  %2603 = vmatprep.subr.bf16.mxu0 0
  %2604 = vmatpush2.bf16.msra.mxu0 %v458
  %2605 = vmatprep.subr.bf16.mxu0 0
  %2606 = vmatpush2.bf16.msra.mxu0 %v457
  %2607 = vmatprep.subr.bf16.mxu0 0
  %2608 = vmatpush2.bf16.msra.mxu0 %v456
  %2609 = vmatprep.mubr.bf16.mxu0 %v2562
  %2610 = vmatmul.mubr.bf16.gmra.mxu0 %v2561
  %v2611 = vpop.f32.mrf.mxu0
  %v2612 = vadd.f32 0.0, %v2611
  %v2613 = vpop.f32.mrf.mxu0
  %v2614 = vpop.f32.mrf.mxu0
  %v2615 = vadd.f32 0.0, %v2614
  %v2616 = vpop.f32.mrf.mxu0
  %2617 = vmatprep.mubr.bf16.mxu0 %v2564
  %2618 = vmatmul.mubr.bf16.gmra.mxu0 %v2563
  %v2619 = vpop.f32.mrf.mxu0
  %v2620 = vadd.f32 0.0, %v2619
  %v2621 = vpop.f32.mrf.mxu0
  %v2622 = vpop.f32.mrf.mxu0
  %v2623 = vadd.f32 0.0, %v2622
  %v2624 = vpop.f32.mrf.mxu0
  %2625 = vmatprep.mubr.bf16.mxu0 %v2566
  %2626 = vmatmul.mubr.bf16.gmra.mxu0 %v2565
  %v2627 = vpop.f32.mrf.mxu0
  %v2628 = vadd.f32 0.0, %v2627
  %v2629 = vpop.f32.mrf.mxu0
  %v2630 = vpop.f32.mrf.mxu0
  %v2631 = vadd.f32 0.0, %v2630
  %v2632 = vpop.f32.mrf.mxu0
  %2633 = vmatprep.mubr.bf16.mxu0 %v2568
  %2634 = vmatmul.mubr.bf16.gmra.mxu0 %v2567
  %v2635 = vpop.f32.mrf.mxu0
  %v2636 = vadd.f32 0.0, %v2635
  %v2637 = vpop.f32.mrf.mxu0
  %v2638 = vpop.f32.mrf.mxu0
  %v2639 = vadd.f32 0.0, %v2638
  %v2640 = vpop.f32.mrf.mxu0
  %2641 = vdwg.mxu0
  %v2642 = vpack.c.bf16 %v2615, %v2612
  %v2643 = vpack.c.bf16 %v2623, %v2620
  %v2644 = vpack.c.bf16 %v2631, %v2628
  %v2645 = vpack.c.bf16 %v2639, %v2636
  %s2646 = scalar_lea.vmem %s4, 40
  %v2647 = vld [vmem:[%s2646] sm:$0xf]
  %v2649 = vsel %vm702, %v2642, 0
  %v2652 = vsel %vm702, %v2643, 0
  %v2655 = vsel %vm702, %v2644, 0
  %v2658 = vsel %vm702, %v2645, 0
  %v2661 = vsel %vm715, %v2647, 0
  %2663 = vmatprep.subr.bf16.mxu0 0
  %2664 = vmatpush1.bf16.msra.mxu0 0
  %2665 = vmatprep.subr.bf16.mxu0 0
  %2666 = vmatpush1.bf16.msra.mxu0 0
  %2667 = vmatprep.subr.bf16.mxu0 0
  %2668 = vmatpush1.bf16.msra.mxu0 0
  %2669 = vmatprep.subr.bf16.mxu0 0
  %2670 = vmatpush1.bf16.msra.mxu0 0
  %2671 = vmatprep.subr.bf16.mxu0 0
  %2672 = vmatpush1.bf16.msra.mxu0 0
  %2673 = vmatprep.subr.bf16.mxu0 0
  %2674 = vmatpush1.bf16.msra.mxu0 0
  %2675 = vmatprep.subr.bf16.mxu0 0
  %2676 = vmatpush1.bf16.msra.mxu0 0
  %2677 = vmatprep.subr.bf16.mxu0 0
  %2678 = vmatpush1.bf16.msra.mxu0 %v2661
  %2679 = vmatprep.subr.bf16.mxu0 0
  %2680 = vmatpush2.bf16.msra.mxu0 0
  %2681 = vmatprep.subr.bf16.mxu0 0
  %2682 = vmatpush2.bf16.msra.mxu0 0
  %2683 = vmatprep.subr.bf16.mxu0 0
  %2684 = vmatpush2.bf16.msra.mxu0 0
  %2685 = vmatprep.subr.bf16.mxu0 0
  %2686 = vmatpush2.bf16.msra.mxu0 0
  %2687 = vmatprep.subr.bf16.mxu0 0
  %2688 = vmatpush2.bf16.msra.mxu0 0
  %2689 = vmatprep.subr.bf16.mxu0 0
  %2690 = vmatpush2.bf16.msra.mxu0 0
  %2691 = vmatprep.subr.bf16.mxu0 0
  %2692 = vmatpush2.bf16.msra.mxu0 0
  %2693 = vmatprep.subr.bf16.mxu0 0
  %2694 = vmatpush2.bf16.msra.mxu0 0
  %2695 = vmatprep.mubr.bf16.mxu0 0
  %2696 = vmatmul.mubr.bf16.gmra.mxu0 %v2649
  %v2697 = vpop.f32.mrf.mxu0
  %v2698 = vadd.f32 0.0, %v2697
  %v2699 = vpop.f32.mrf.mxu0
  %v2700 = vpop.f32.mrf.mxu0
  %v2701 = vadd.f32 0.0, %v2700
  %v2702 = vpop.f32.mrf.mxu0
  %2703 = vmatprep.mubr.bf16.mxu0 0
  %2704 = vmatmul.mubr.bf16.gmra.mxu0 %v2652
  %v2705 = vpop.f32.mrf.mxu0
  %v2706 = vadd.f32 0.0, %v2705
  %v2707 = vpop.f32.mrf.mxu0
  %v2708 = vpop.f32.mrf.mxu0
  %v2709 = vadd.f32 0.0, %v2708
  %v2710 = vpop.f32.mrf.mxu0
  %2711 = vmatprep.mubr.bf16.mxu0 0
  %2712 = vmatmul.mubr.bf16.gmra.mxu0 %v2655
  %v2713 = vpop.f32.mrf.mxu0
  %v2714 = vadd.f32 0.0, %v2713
  %v2715 = vpop.f32.mrf.mxu0
  %v2716 = vpop.f32.mrf.mxu0
  %v2717 = vadd.f32 0.0, %v2716
  %v2718 = vpop.f32.mrf.mxu0
  %2719 = vmatprep.mubr.bf16.mxu0 0
  %2720 = vmatmul.mubr.bf16.gmra.mxu0 %v2658
  %v2721 = vpop.f32.mrf.mxu0
  %v2722 = vadd.f32 0.0, %v2721
  %v2723 = vpop.f32.mrf.mxu0
  %v2724 = vpop.f32.mrf.mxu0
  %v2725 = vadd.f32 0.0, %v2724
  %v2726 = vpop.f32.mrf.mxu0
  %2727 = vdwg.mxu0
  %v2728 = vadd.f32 %v2520, %v2698
  %v2729 = vadd.f32 %v2521, %v2701
  %v2730 = vadd.f32 %v2522, %v2706
  %v2731 = vadd.f32 %v2523, %v2709
  %v2732 = vadd.f32 %v2524, %v2714
  %v2733 = vadd.f32 %v2525, %v2717
  %v2734 = vadd.f32 %v2526, %v2722
  %v2735 = vadd.f32 %v2527, %v2725
  %s2736 = scalar_lea.vmem %s3, 704
  %v2737 = vld [vmem:[%s2736] sm:$0xff]
  %v2738 = vld [vmem:[%s2736 + $0x8] sm:$0xff]
  %v2739 = vld [vmem:[%s2736 + $0x10] sm:$0xff]
  %v2740 = vld [vmem:[%s2736 + $0x18] sm:$0xff]
  %v2741 = vld [vmem:[%s2736 + $0x20] sm:$0xff]
  %v2742 = vld [vmem:[%s2736 + $0x28] sm:$0xff]
  %v2743 = vld [vmem:[%s2736 + $0x30] sm:$0xff]
  %v2744 = vld [vmem:[%s2736 + $0x38] sm:$0xff]
  %v2753 = vunpack.c.l.b16 %v2737
  %v2754 = vunpack.c.h.b16 %v2737
  %v2755 = vunpack.c.l.b16 %v2738
  %v2756 = vunpack.c.h.b16 %v2738
  %v2757 = vunpack.c.l.b16 %v2739
  %v2758 = vunpack.c.h.b16 %v2739
  %v2759 = vunpack.c.l.b16 %v2740
  %v2760 = vunpack.c.h.b16 %v2740
  %v2761 = vunpack.c.l.b16 %v2741
  %v2762 = vunpack.c.h.b16 %v2741
  %v2763 = vunpack.c.l.b16 %v2742
  %v2764 = vunpack.c.h.b16 %v2742
  %v2765 = vunpack.c.l.b16 %v2743
  %v2766 = vunpack.c.h.b16 %v2743
  %v2767 = vunpack.c.l.b16 %v2744
  %v2768 = vunpack.c.h.b16 %v2744
  %v2769 = vpack.c.b16 %v2755, %v2753
  %v2770 = vpack.c.b16 %v2756, %v2754
  %v2771 = vpack.c.b16 %v2759, %v2757
  %v2772 = vpack.c.b16 %v2760, %v2758
  %v2773 = vpack.c.b16 %v2763, %v2761
  %v2774 = vpack.c.b16 %v2764, %v2762
  %v2775 = vpack.c.b16 %v2767, %v2765
  %v2776 = vpack.c.b16 %v2768, %v2766
  %2785 = vmatprep.subr.bf16.mxu0 0
  %2786 = vmatpush1.bf16.msra.mxu0 %v455
  %2787 = vmatprep.subr.bf16.mxu0 0
  %2788 = vmatpush1.bf16.msra.mxu0 %v454
  %2789 = vmatprep.subr.bf16.mxu0 0
  %2790 = vmatpush1.bf16.msra.mxu0 %v453
  %2791 = vmatprep.subr.bf16.mxu0 0
  %2792 = vmatpush1.bf16.msra.mxu0 %v452
  %2793 = vmatprep.subr.bf16.mxu0 0
  %2794 = vmatpush1.bf16.msra.mxu0 %v451
  %2795 = vmatprep.subr.bf16.mxu0 0
  %2796 = vmatpush1.bf16.msra.mxu0 %v450
  %2797 = vmatprep.subr.bf16.mxu0 0
  %2798 = vmatpush1.bf16.msra.mxu0 %v449
  %2799 = vmatprep.subr.bf16.mxu0 0
  %2800 = vmatpush1.bf16.msra.mxu0 %v448
  %2801 = vmatprep.subr.bf16.mxu0 0
  %2802 = vmatpush2.bf16.msra.mxu0 %v463
  %2803 = vmatprep.subr.bf16.mxu0 0
  %2804 = vmatpush2.bf16.msra.mxu0 %v462
  %2805 = vmatprep.subr.bf16.mxu0 0
  %2806 = vmatpush2.bf16.msra.mxu0 %v461
  %2807 = vmatprep.subr.bf16.mxu0 0
  %2808 = vmatpush2.bf16.msra.mxu0 %v460
  %2809 = vmatprep.subr.bf16.mxu0 0
  %2810 = vmatpush2.bf16.msra.mxu0 %v459
  %2811 = vmatprep.subr.bf16.mxu0 0
  %2812 = vmatpush2.bf16.msra.mxu0 %v458
  %2813 = vmatprep.subr.bf16.mxu0 0
  %2814 = vmatpush2.bf16.msra.mxu0 %v457
  %2815 = vmatprep.subr.bf16.mxu0 0
  %2816 = vmatpush2.bf16.msra.mxu0 %v456
  %2817 = vmatprep.mubr.bf16.mxu0 %v2770
  %2818 = vmatmul.mubr.bf16.gmra.mxu0 %v2769
  %v2819 = vpop.f32.mrf.mxu0
  %v2820 = vadd.f32 0.0, %v2819
  %v2821 = vpop.f32.mrf.mxu0
  %v2822 = vpop.f32.mrf.mxu0
  %v2823 = vadd.f32 0.0, %v2822
  %v2824 = vpop.f32.mrf.mxu0
  %2825 = vmatprep.mubr.bf16.mxu0 %v2772
  %2826 = vmatmul.mubr.bf16.gmra.mxu0 %v2771
  %v2827 = vpop.f32.mrf.mxu0
  %v2828 = vadd.f32 0.0, %v2827
  %v2829 = vpop.f32.mrf.mxu0
  %v2830 = vpop.f32.mrf.mxu0
  %v2831 = vadd.f32 0.0, %v2830
  %v2832 = vpop.f32.mrf.mxu0
  %2833 = vmatprep.mubr.bf16.mxu0 %v2774
  %2834 = vmatmul.mubr.bf16.gmra.mxu0 %v2773
  %v2835 = vpop.f32.mrf.mxu0
  %v2836 = vadd.f32 0.0, %v2835
  %v2837 = vpop.f32.mrf.mxu0
  %v2838 = vpop.f32.mrf.mxu0
  %v2839 = vadd.f32 0.0, %v2838
  %v2840 = vpop.f32.mrf.mxu0
  %2841 = vmatprep.mubr.bf16.mxu0 %v2776
  %2842 = vmatmul.mubr.bf16.gmra.mxu0 %v2775
  %v2843 = vpop.f32.mrf.mxu0
  %v2844 = vadd.f32 0.0, %v2843
  %v2845 = vpop.f32.mrf.mxu0
  %v2846 = vpop.f32.mrf.mxu0
  %v2847 = vadd.f32 0.0, %v2846
  %v2848 = vpop.f32.mrf.mxu0
  %2849 = vdwg.mxu0
  %v2850 = vpack.c.bf16 %v2823, %v2820
  %v2851 = vpack.c.bf16 %v2831, %v2828
  %v2852 = vpack.c.bf16 %v2839, %v2836
  %v2853 = vpack.c.bf16 %v2847, %v2844
  %s2854 = scalar_lea.vmem %s4, 44
  %v2855 = vld [vmem:[%s2854] sm:$0xf]
  %v2857 = vsel %vm702, %v2850, 0
  %v2860 = vsel %vm702, %v2851, 0
  %v2863 = vsel %vm702, %v2852, 0
  %v2866 = vsel %vm702, %v2853, 0
  %v2869 = vsel %vm715, %v2855, 0
  %2871 = vmatprep.subr.bf16.mxu0 0
  %2872 = vmatpush1.bf16.msra.mxu0 0
  %2873 = vmatprep.subr.bf16.mxu0 0
  %2874 = vmatpush1.bf16.msra.mxu0 0
  %2875 = vmatprep.subr.bf16.mxu0 0
  %2876 = vmatpush1.bf16.msra.mxu0 0
  %2877 = vmatprep.subr.bf16.mxu0 0
  %2878 = vmatpush1.bf16.msra.mxu0 0
  %2879 = vmatprep.subr.bf16.mxu0 0
  %2880 = vmatpush1.bf16.msra.mxu0 0
  %2881 = vmatprep.subr.bf16.mxu0 0
  %2882 = vmatpush1.bf16.msra.mxu0 0
  %2883 = vmatprep.subr.bf16.mxu0 0
  %2884 = vmatpush1.bf16.msra.mxu0 0
  %2885 = vmatprep.subr.bf16.mxu0 0
  %2886 = vmatpush1.bf16.msra.mxu0 %v2869
  %2887 = vmatprep.subr.bf16.mxu0 0
  %2888 = vmatpush2.bf16.msra.mxu0 0
  %2889 = vmatprep.subr.bf16.mxu0 0
  %2890 = vmatpush2.bf16.msra.mxu0 0
  %2891 = vmatprep.subr.bf16.mxu0 0
  %2892 = vmatpush2.bf16.msra.mxu0 0
  %2893 = vmatprep.subr.bf16.mxu0 0
  %2894 = vmatpush2.bf16.msra.mxu0 0
  %2895 = vmatprep.subr.bf16.mxu0 0
  %2896 = vmatpush2.bf16.msra.mxu0 0
  %2897 = vmatprep.subr.bf16.mxu0 0
  %2898 = vmatpush2.bf16.msra.mxu0 0
  %2899 = vmatprep.subr.bf16.mxu0 0
  %2900 = vmatpush2.bf16.msra.mxu0 0
  %2901 = vmatprep.subr.bf16.mxu0 0
  %2902 = vmatpush2.bf16.msra.mxu0 0
  %2903 = vmatprep.mubr.bf16.mxu0 0
  %2904 = vmatmul.mubr.bf16.gmra.mxu0 %v2857
  %v2905 = vpop.f32.mrf.mxu0
  %v2906 = vadd.f32 0.0, %v2905
  %v2907 = vpop.f32.mrf.mxu0
  %v2908 = vpop.f32.mrf.mxu0
  %v2909 = vadd.f32 0.0, %v2908
  %v2910 = vpop.f32.mrf.mxu0
  %2911 = vmatprep.mubr.bf16.mxu0 0
  %2912 = vmatmul.mubr.bf16.gmra.mxu0 %v2860
  %v2913 = vpop.f32.mrf.mxu0
  %v2914 = vadd.f32 0.0, %v2913
  %v2915 = vpop.f32.mrf.mxu0
  %v2916 = vpop.f32.mrf.mxu0
  %v2917 = vadd.f32 0.0, %v2916
  %v2918 = vpop.f32.mrf.mxu0
  %2919 = vmatprep.mubr.bf16.mxu0 0
  %2920 = vmatmul.mubr.bf16.gmra.mxu0 %v2863
  %v2921 = vpop.f32.mrf.mxu0
  %v2922 = vadd.f32 0.0, %v2921
  %v2923 = vpop.f32.mrf.mxu0
  %v2924 = vpop.f32.mrf.mxu0
  %v2925 = vadd.f32 0.0, %v2924
  %v2926 = vpop.f32.mrf.mxu0
  %2927 = vmatprep.mubr.bf16.mxu0 0
  %2928 = vmatmul.mubr.bf16.gmra.mxu0 %v2866
  %v2929 = vpop.f32.mrf.mxu0
  %v2930 = vadd.f32 0.0, %v2929
  %v2931 = vpop.f32.mrf.mxu0
  %v2932 = vpop.f32.mrf.mxu0
  %v2933 = vadd.f32 0.0, %v2932
  %v2934 = vpop.f32.mrf.mxu0
  %2935 = vdwg.mxu0
  %v2936 = vadd.f32 %v2728, %v2906
  %v2937 = vadd.f32 %v2729, %v2909
  %v2938 = vadd.f32 %v2730, %v2914
  %v2939 = vadd.f32 %v2731, %v2917
  %v2940 = vadd.f32 %v2732, %v2922
  %v2941 = vadd.f32 %v2733, %v2925
  %v2942 = vadd.f32 %v2734, %v2930
  %v2943 = vadd.f32 %v2735, %v2933
  %s2944 = scalar_lea.vmem %s3, 768
  %v2945 = vld [vmem:[%s2944] sm:$0xff]
  %v2946 = vld [vmem:[%s2944 + $0x8] sm:$0xff]
  %v2947 = vld [vmem:[%s2944 + $0x10] sm:$0xff]
  %v2948 = vld [vmem:[%s2944 + $0x18] sm:$0xff]
  %v2949 = vld [vmem:[%s2944 + $0x20] sm:$0xff]
  %v2950 = vld [vmem:[%s2944 + $0x28] sm:$0xff]
  %v2951 = vld [vmem:[%s2944 + $0x30] sm:$0xff]
  %v2952 = vld [vmem:[%s2944 + $0x38] sm:$0xff]
  %v2961 = vunpack.c.l.b16 %v2945
  %v2962 = vunpack.c.h.b16 %v2945
  %v2963 = vunpack.c.l.b16 %v2946
  %v2964 = vunpack.c.h.b16 %v2946
  %v2965 = vunpack.c.l.b16 %v2947
  %v2966 = vunpack.c.h.b16 %v2947
  %v2967 = vunpack.c.l.b16 %v2948
  %v2968 = vunpack.c.h.b16 %v2948
  %v2969 = vunpack.c.l.b16 %v2949
  %v2970 = vunpack.c.h.b16 %v2949
  %v2971 = vunpack.c.l.b16 %v2950
  %v2972 = vunpack.c.h.b16 %v2950
  %v2973 = vunpack.c.l.b16 %v2951
  %v2974 = vunpack.c.h.b16 %v2951
  %v2975 = vunpack.c.l.b16 %v2952
  %v2976 = vunpack.c.h.b16 %v2952
  %v2977 = vpack.c.b16 %v2963, %v2961
  %v2978 = vpack.c.b16 %v2964, %v2962
  %v2979 = vpack.c.b16 %v2967, %v2965
  %v2980 = vpack.c.b16 %v2968, %v2966
  %v2981 = vpack.c.b16 %v2971, %v2969
  %v2982 = vpack.c.b16 %v2972, %v2970
  %v2983 = vpack.c.b16 %v2975, %v2973
  %v2984 = vpack.c.b16 %v2976, %v2974
  %2993 = vmatprep.subr.bf16.mxu0 0
  %2994 = vmatpush1.bf16.msra.mxu0 %v455
  %2995 = vmatprep.subr.bf16.mxu0 0
  %2996 = vmatpush1.bf16.msra.mxu0 %v454
  %2997 = vmatprep.subr.bf16.mxu0 0
  %2998 = vmatpush1.bf16.msra.mxu0 %v453
  %2999 = vmatprep.subr.bf16.mxu0 0
  %3000 = vmatpush1.bf16.msra.mxu0 %v452
  %3001 = vmatprep.subr.bf16.mxu0 0
  %3002 = vmatpush1.bf16.msra.mxu0 %v451
  %3003 = vmatprep.subr.bf16.mxu0 0
  %3004 = vmatpush1.bf16.msra.mxu0 %v450
  %3005 = vmatprep.subr.bf16.mxu0 0
  %3006 = vmatpush1.bf16.msra.mxu0 %v449
  %3007 = vmatprep.subr.bf16.mxu0 0
  %3008 = vmatpush1.bf16.msra.mxu0 %v448
  %3009 = vmatprep.subr.bf16.mxu0 0
  %3010 = vmatpush2.bf16.msra.mxu0 %v463
  %3011 = vmatprep.subr.bf16.mxu0 0
  %3012 = vmatpush2.bf16.msra.mxu0 %v462
  %3013 = vmatprep.subr.bf16.mxu0 0
  %3014 = vmatpush2.bf16.msra.mxu0 %v461
  %3015 = vmatprep.subr.bf16.mxu0 0
  %3016 = vmatpush2.bf16.msra.mxu0 %v460
  %3017 = vmatprep.subr.bf16.mxu0 0
  %3018 = vmatpush2.bf16.msra.mxu0 %v459
  %3019 = vmatprep.subr.bf16.mxu0 0
  %3020 = vmatpush2.bf16.msra.mxu0 %v458
  %3021 = vmatprep.subr.bf16.mxu0 0
  %3022 = vmatpush2.bf16.msra.mxu0 %v457
  %3023 = vmatprep.subr.bf16.mxu0 0
  %3024 = vmatpush2.bf16.msra.mxu0 %v456
  %3025 = vmatprep.mubr.bf16.mxu0 %v2978
  %3026 = vmatmul.mubr.bf16.gmra.mxu0 %v2977
  %v3027 = vpop.f32.mrf.mxu0
  %v3028 = vadd.f32 0.0, %v3027
  %v3029 = vpop.f32.mrf.mxu0
  %v3030 = vpop.f32.mrf.mxu0
  %v3031 = vadd.f32 0.0, %v3030
  %v3032 = vpop.f32.mrf.mxu0
  %3033 = vmatprep.mubr.bf16.mxu0 %v2980
  %3034 = vmatmul.mubr.bf16.gmra.mxu0 %v2979
  %v3035 = vpop.f32.mrf.mxu0
  %v3036 = vadd.f32 0.0, %v3035
  %v3037 = vpop.f32.mrf.mxu0
  %v3038 = vpop.f32.mrf.mxu0
  %v3039 = vadd.f32 0.0, %v3038
  %v3040 = vpop.f32.mrf.mxu0
  %3041 = vmatprep.mubr.bf16.mxu0 %v2982
  %3042 = vmatmul.mubr.bf16.gmra.mxu0 %v2981
  %v3043 = vpop.f32.mrf.mxu0
  %v3044 = vadd.f32 0.0, %v3043
  %v3045 = vpop.f32.mrf.mxu0
  %v3046 = vpop.f32.mrf.mxu0
  %v3047 = vadd.f32 0.0, %v3046
  %v3048 = vpop.f32.mrf.mxu0
  %3049 = vmatprep.mubr.bf16.mxu0 %v2984
  %3050 = vmatmul.mubr.bf16.gmra.mxu0 %v2983
  %v3051 = vpop.f32.mrf.mxu0
  %v3052 = vadd.f32 0.0, %v3051
  %v3053 = vpop.f32.mrf.mxu0
  %v3054 = vpop.f32.mrf.mxu0
  %v3055 = vadd.f32 0.0, %v3054
  %v3056 = vpop.f32.mrf.mxu0
  %3057 = vdwg.mxu0
  %v3058 = vpack.c.bf16 %v3031, %v3028
  %v3059 = vpack.c.bf16 %v3039, %v3036
  %v3060 = vpack.c.bf16 %v3047, %v3044
  %v3061 = vpack.c.bf16 %v3055, %v3052
  %s3062 = scalar_lea.vmem %s4, 48
  %v3063 = vld [vmem:[%s3062] sm:$0xf]
  %v3065 = vsel %vm702, %v3058, 0
  %v3068 = vsel %vm702, %v3059, 0
  %v3071 = vsel %vm702, %v3060, 0
  %v3074 = vsel %vm702, %v3061, 0
  %v3077 = vsel %vm715, %v3063, 0
  %3079 = vmatprep.subr.bf16.mxu0 0
  %3080 = vmatpush1.bf16.msra.mxu0 0
  %3081 = vmatprep.subr.bf16.mxu0 0
  %3082 = vmatpush1.bf16.msra.mxu0 0
  %3083 = vmatprep.subr.bf16.mxu0 0
  %3084 = vmatpush1.bf16.msra.mxu0 0
  %3085 = vmatprep.subr.bf16.mxu0 0
  %3086 = vmatpush1.bf16.msra.mxu0 0
  %3087 = vmatprep.subr.bf16.mxu0 0
  %3088 = vmatpush1.bf16.msra.mxu0 0
  %3089 = vmatprep.subr.bf16.mxu0 0
  %3090 = vmatpush1.bf16.msra.mxu0 0
  %3091 = vmatprep.subr.bf16.mxu0 0
  %3092 = vmatpush1.bf16.msra.mxu0 0
  %3093 = vmatprep.subr.bf16.mxu0 0
  %3094 = vmatpush1.bf16.msra.mxu0 %v3077
  %3095 = vmatprep.subr.bf16.mxu0 0
  %3096 = vmatpush2.bf16.msra.mxu0 0
  %3097 = vmatprep.subr.bf16.mxu0 0
  %3098 = vmatpush2.bf16.msra.mxu0 0
  %3099 = vmatprep.subr.bf16.mxu0 0
  %3100 = vmatpush2.bf16.msra.mxu0 0
  %3101 = vmatprep.subr.bf16.mxu0 0
  %3102 = vmatpush2.bf16.msra.mxu0 0
  %3103 = vmatprep.subr.bf16.mxu0 0
  %3104 = vmatpush2.bf16.msra.mxu0 0
  %3105 = vmatprep.subr.bf16.mxu0 0
  %3106 = vmatpush2.bf16.msra.mxu0 0
  %3107 = vmatprep.subr.bf16.mxu0 0
  %3108 = vmatpush2.bf16.msra.mxu0 0
  %3109 = vmatprep.subr.bf16.mxu0 0
  %3110 = vmatpush2.bf16.msra.mxu0 0
  %3111 = vmatprep.mubr.bf16.mxu0 0
  %3112 = vmatmul.mubr.bf16.gmra.mxu0 %v3065
  %v3113 = vpop.f32.mrf.mxu0
  %v3114 = vadd.f32 0.0, %v3113
  %v3115 = vpop.f32.mrf.mxu0
  %v3116 = vpop.f32.mrf.mxu0
  %v3117 = vadd.f32 0.0, %v3116
  %v3118 = vpop.f32.mrf.mxu0
  %3119 = vmatprep.mubr.bf16.mxu0 0
  %3120 = vmatmul.mubr.bf16.gmra.mxu0 %v3068
  %v3121 = vpop.f32.mrf.mxu0
  %v3122 = vadd.f32 0.0, %v3121
  %v3123 = vpop.f32.mrf.mxu0
  %v3124 = vpop.f32.mrf.mxu0
  %v3125 = vadd.f32 0.0, %v3124
  %v3126 = vpop.f32.mrf.mxu0
  %3127 = vmatprep.mubr.bf16.mxu0 0
  %3128 = vmatmul.mubr.bf16.gmra.mxu0 %v3071
  %v3129 = vpop.f32.mrf.mxu0
  %v3130 = vadd.f32 0.0, %v3129
  %v3131 = vpop.f32.mrf.mxu0
  %v3132 = vpop.f32.mrf.mxu0
  %v3133 = vadd.f32 0.0, %v3132
  %v3134 = vpop.f32.mrf.mxu0
  %3135 = vmatprep.mubr.bf16.mxu0 0
  %3136 = vmatmul.mubr.bf16.gmra.mxu0 %v3074
  %v3137 = vpop.f32.mrf.mxu0
  %v3138 = vadd.f32 0.0, %v3137
  %v3139 = vpop.f32.mrf.mxu0
  %v3140 = vpop.f32.mrf.mxu0
  %v3141 = vadd.f32 0.0, %v3140
  %v3142 = vpop.f32.mrf.mxu0
  %3143 = vdwg.mxu0
  %v3144 = vadd.f32 %v2936, %v3114
  %v3145 = vadd.f32 %v2937, %v3117
  %v3146 = vadd.f32 %v2938, %v3122
  %v3147 = vadd.f32 %v2939, %v3125
  %v3148 = vadd.f32 %v2940, %v3130
  %v3149 = vadd.f32 %v2941, %v3133
  %v3150 = vadd.f32 %v2942, %v3138
  %v3151 = vadd.f32 %v2943, %v3141
  %s3152 = scalar_lea.vmem %s3, 832
  %v3153 = vld [vmem:[%s3152] sm:$0xff]
  %v3154 = vld [vmem:[%s3152 + $0x8] sm:$0xff]
  %v3155 = vld [vmem:[%s3152 + $0x10] sm:$0xff]
  %v3156 = vld [vmem:[%s3152 + $0x18] sm:$0xff]
  %v3157 = vld [vmem:[%s3152 + $0x20] sm:$0xff]
  %v3158 = vld [vmem:[%s3152 + $0x28] sm:$0xff]
  %v3159 = vld [vmem:[%s3152 + $0x30] sm:$0xff]
  %v3160 = vld [vmem:[%s3152 + $0x38] sm:$0xff]
  %v3169 = vunpack.c.l.b16 %v3153
  %v3170 = vunpack.c.h.b16 %v3153
  %v3171 = vunpack.c.l.b16 %v3154
  %v3172 = vunpack.c.h.b16 %v3154
  %v3173 = vunpack.c.l.b16 %v3155
  %v3174 = vunpack.c.h.b16 %v3155
  %v3175 = vunpack.c.l.b16 %v3156
  %v3176 = vunpack.c.h.b16 %v3156
  %v3177 = vunpack.c.l.b16 %v3157
  %v3178 = vunpack.c.h.b16 %v3157
  %v3179 = vunpack.c.l.b16 %v3158
  %v3180 = vunpack.c.h.b16 %v3158
  %v3181 = vunpack.c.l.b16 %v3159
  %v3182 = vunpack.c.h.b16 %v3159
  %v3183 = vunpack.c.l.b16 %v3160
  %v3184 = vunpack.c.h.b16 %v3160
  %v3185 = vpack.c.b16 %v3171, %v3169
  %v3186 = vpack.c.b16 %v3172, %v3170
  %v3187 = vpack.c.b16 %v3175, %v3173
  %v3188 = vpack.c.b16 %v3176, %v3174
  %v3189 = vpack.c.b16 %v3179, %v3177
  %v3190 = vpack.c.b16 %v3180, %v3178
  %v3191 = vpack.c.b16 %v3183, %v3181
  %v3192 = vpack.c.b16 %v3184, %v3182
  %3201 = vmatprep.subr.bf16.mxu0 0
  %3202 = vmatpush1.bf16.msra.mxu0 %v455
  %3203 = vmatprep.subr.bf16.mxu0 0
  %3204 = vmatpush1.bf16.msra.mxu0 %v454
  %3205 = vmatprep.subr.bf16.mxu0 0
  %3206 = vmatpush1.bf16.msra.mxu0 %v453
  %3207 = vmatprep.subr.bf16.mxu0 0
  %3208 = vmatpush1.bf16.msra.mxu0 %v452
  %3209 = vmatprep.subr.bf16.mxu0 0
  %3210 = vmatpush1.bf16.msra.mxu0 %v451
  %3211 = vmatprep.subr.bf16.mxu0 0
  %3212 = vmatpush1.bf16.msra.mxu0 %v450
  %3213 = vmatprep.subr.bf16.mxu0 0
  %3214 = vmatpush1.bf16.msra.mxu0 %v449
  %3215 = vmatprep.subr.bf16.mxu0 0
  %3216 = vmatpush1.bf16.msra.mxu0 %v448
  %3217 = vmatprep.subr.bf16.mxu0 0
  %3218 = vmatpush2.bf16.msra.mxu0 %v463
  %3219 = vmatprep.subr.bf16.mxu0 0
  %3220 = vmatpush2.bf16.msra.mxu0 %v462
  %3221 = vmatprep.subr.bf16.mxu0 0
  %3222 = vmatpush2.bf16.msra.mxu0 %v461
  %3223 = vmatprep.subr.bf16.mxu0 0
  %3224 = vmatpush2.bf16.msra.mxu0 %v460
  %3225 = vmatprep.subr.bf16.mxu0 0
  %3226 = vmatpush2.bf16.msra.mxu0 %v459
  %3227 = vmatprep.subr.bf16.mxu0 0
  %3228 = vmatpush2.bf16.msra.mxu0 %v458
  %3229 = vmatprep.subr.bf16.mxu0 0
  %3230 = vmatpush2.bf16.msra.mxu0 %v457
  %3231 = vmatprep.subr.bf16.mxu0 0
  %3232 = vmatpush2.bf16.msra.mxu0 %v456
  %3233 = vmatprep.mubr.bf16.mxu0 %v3186
  %3234 = vmatmul.mubr.bf16.gmra.mxu0 %v3185
  %v3235 = vpop.f32.mrf.mxu0
  %v3236 = vadd.f32 0.0, %v3235
  %v3237 = vpop.f32.mrf.mxu0
  %v3238 = vpop.f32.mrf.mxu0
  %v3239 = vadd.f32 0.0, %v3238
  %v3240 = vpop.f32.mrf.mxu0
  %3241 = vmatprep.mubr.bf16.mxu0 %v3188
  %3242 = vmatmul.mubr.bf16.gmra.mxu0 %v3187
  %v3243 = vpop.f32.mrf.mxu0
  %v3244 = vadd.f32 0.0, %v3243
  %v3245 = vpop.f32.mrf.mxu0
  %v3246 = vpop.f32.mrf.mxu0
  %v3247 = vadd.f32 0.0, %v3246
  %v3248 = vpop.f32.mrf.mxu0
  %3249 = vmatprep.mubr.bf16.mxu0 %v3190
  %3250 = vmatmul.mubr.bf16.gmra.mxu0 %v3189
  %v3251 = vpop.f32.mrf.mxu0
  %v3252 = vadd.f32 0.0, %v3251
  %v3253 = vpop.f32.mrf.mxu0
  %v3254 = vpop.f32.mrf.mxu0
  %v3255 = vadd.f32 0.0, %v3254
  %v3256 = vpop.f32.mrf.mxu0
  %3257 = vmatprep.mubr.bf16.mxu0 %v3192
  %3258 = vmatmul.mubr.bf16.gmra.mxu0 %v3191
  %v3259 = vpop.f32.mrf.mxu0
  %v3260 = vadd.f32 0.0, %v3259
  %v3261 = vpop.f32.mrf.mxu0
  %v3262 = vpop.f32.mrf.mxu0
  %v3263 = vadd.f32 0.0, %v3262
  %v3264 = vpop.f32.mrf.mxu0
  %3265 = vdwg.mxu0
  %v3266 = vpack.c.bf16 %v3239, %v3236
  %v3267 = vpack.c.bf16 %v3247, %v3244
  %v3268 = vpack.c.bf16 %v3255, %v3252
  %v3269 = vpack.c.bf16 %v3263, %v3260
  %s3270 = scalar_lea.vmem %s4, 52
  %v3271 = vld [vmem:[%s3270] sm:$0xf]
  %v3273 = vsel %vm702, %v3266, 0
  %v3276 = vsel %vm702, %v3267, 0
  %v3279 = vsel %vm702, %v3268, 0
  %v3282 = vsel %vm702, %v3269, 0
  %v3285 = vsel %vm715, %v3271, 0
  %3287 = vmatprep.subr.bf16.mxu0 0
  %3288 = vmatpush1.bf16.msra.mxu0 0
  %3289 = vmatprep.subr.bf16.mxu0 0
  %3290 = vmatpush1.bf16.msra.mxu0 0
  %3291 = vmatprep.subr.bf16.mxu0 0
  %3292 = vmatpush1.bf16.msra.mxu0 0
  %3293 = vmatprep.subr.bf16.mxu0 0
  %3294 = vmatpush1.bf16.msra.mxu0 0
  %3295 = vmatprep.subr.bf16.mxu0 0
  %3296 = vmatpush1.bf16.msra.mxu0 0
  %3297 = vmatprep.subr.bf16.mxu0 0
  %3298 = vmatpush1.bf16.msra.mxu0 0
  %3299 = vmatprep.subr.bf16.mxu0 0
  %3300 = vmatpush1.bf16.msra.mxu0 0
  %3301 = vmatprep.subr.bf16.mxu0 0
  %3302 = vmatpush1.bf16.msra.mxu0 %v3285
  %3303 = vmatprep.subr.bf16.mxu0 0
  %3304 = vmatpush2.bf16.msra.mxu0 0
  %3305 = vmatprep.subr.bf16.mxu0 0
  %3306 = vmatpush2.bf16.msra.mxu0 0
  %3307 = vmatprep.subr.bf16.mxu0 0
  %3308 = vmatpush2.bf16.msra.mxu0 0
  %3309 = vmatprep.subr.bf16.mxu0 0
  %3310 = vmatpush2.bf16.msra.mxu0 0
  %3311 = vmatprep.subr.bf16.mxu0 0
  %3312 = vmatpush2.bf16.msra.mxu0 0
  %3313 = vmatprep.subr.bf16.mxu0 0
  %3314 = vmatpush2.bf16.msra.mxu0 0
  %3315 = vmatprep.subr.bf16.mxu0 0
  %3316 = vmatpush2.bf16.msra.mxu0 0
  %3317 = vmatprep.subr.bf16.mxu0 0
  %3318 = vmatpush2.bf16.msra.mxu0 0
  %3319 = vmatprep.mubr.bf16.mxu0 0
  %3320 = vmatmul.mubr.bf16.gmra.mxu0 %v3273
  %v3321 = vpop.f32.mrf.mxu0
  %v3322 = vadd.f32 0.0, %v3321
  %v3323 = vpop.f32.mrf.mxu0
  %v3324 = vpop.f32.mrf.mxu0
  %v3325 = vadd.f32 0.0, %v3324
  %v3326 = vpop.f32.mrf.mxu0
  %3327 = vmatprep.mubr.bf16.mxu0 0
  %3328 = vmatmul.mubr.bf16.gmra.mxu0 %v3276
  %v3329 = vpop.f32.mrf.mxu0
  %v3330 = vadd.f32 0.0, %v3329
  %v3331 = vpop.f32.mrf.mxu0
  %v3332 = vpop.f32.mrf.mxu0
  %v3333 = vadd.f32 0.0, %v3332
  %v3334 = vpop.f32.mrf.mxu0
  %3335 = vmatprep.mubr.bf16.mxu0 0
  %3336 = vmatmul.mubr.bf16.gmra.mxu0 %v3279
  %v3337 = vpop.f32.mrf.mxu0
  %v3338 = vadd.f32 0.0, %v3337
  %v3339 = vpop.f32.mrf.mxu0
  %v3340 = vpop.f32.mrf.mxu0
  %v3341 = vadd.f32 0.0, %v3340
  %v3342 = vpop.f32.mrf.mxu0
  %3343 = vmatprep.mubr.bf16.mxu0 0
  %3344 = vmatmul.mubr.bf16.gmra.mxu0 %v3282
  %v3345 = vpop.f32.mrf.mxu0
  %v3346 = vadd.f32 0.0, %v3345
  %v3347 = vpop.f32.mrf.mxu0
  %v3348 = vpop.f32.mrf.mxu0
  %v3349 = vadd.f32 0.0, %v3348
  %v3350 = vpop.f32.mrf.mxu0
  %3351 = vdwg.mxu0
  %v3352 = vadd.f32 %v3144, %v3322
  %v3353 = vadd.f32 %v3145, %v3325
  %v3354 = vadd.f32 %v3146, %v3330
  %v3355 = vadd.f32 %v3147, %v3333
  %v3356 = vadd.f32 %v3148, %v3338
  %v3357 = vadd.f32 %v3149, %v3341
  %v3358 = vadd.f32 %v3150, %v3346
  %v3359 = vadd.f32 %v3151, %v3349
  %s3360 = scalar_lea.vmem %s3, 896
  %v3361 = vld [vmem:[%s3360] sm:$0xff]
  %v3362 = vld [vmem:[%s3360 + $0x8] sm:$0xff]
  %v3363 = vld [vmem:[%s3360 + $0x10] sm:$0xff]
  %v3364 = vld [vmem:[%s3360 + $0x18] sm:$0xff]
  %v3365 = vld [vmem:[%s3360 + $0x20] sm:$0xff]
  %v3366 = vld [vmem:[%s3360 + $0x28] sm:$0xff]
  %v3367 = vld [vmem:[%s3360 + $0x30] sm:$0xff]
  %v3368 = vld [vmem:[%s3360 + $0x38] sm:$0xff]
  %v3377 = vunpack.c.l.b16 %v3361
  %v3378 = vunpack.c.h.b16 %v3361
  %v3379 = vunpack.c.l.b16 %v3362
  %v3380 = vunpack.c.h.b16 %v3362
  %v3381 = vunpack.c.l.b16 %v3363
  %v3382 = vunpack.c.h.b16 %v3363
  %v3383 = vunpack.c.l.b16 %v3364
  %v3384 = vunpack.c.h.b16 %v3364
  %v3385 = vunpack.c.l.b16 %v3365
  %v3386 = vunpack.c.h.b16 %v3365
  %v3387 = vunpack.c.l.b16 %v3366
  %v3388 = vunpack.c.h.b16 %v3366
  %v3389 = vunpack.c.l.b16 %v3367
  %v3390 = vunpack.c.h.b16 %v3367
  %v3391 = vunpack.c.l.b16 %v3368
  %v3392 = vunpack.c.h.b16 %v3368
  %v3393 = vpack.c.b16 %v3379, %v3377
  %v3394 = vpack.c.b16 %v3380, %v3378
  %v3395 = vpack.c.b16 %v3383, %v3381
  %v3396 = vpack.c.b16 %v3384, %v3382
  %v3397 = vpack.c.b16 %v3387, %v3385
  %v3398 = vpack.c.b16 %v3388, %v3386
  %v3399 = vpack.c.b16 %v3391, %v3389
  %v3400 = vpack.c.b16 %v3392, %v3390
  %3409 = vmatprep.subr.bf16.mxu0 0
  %3410 = vmatpush1.bf16.msra.mxu0 %v455
  %3411 = vmatprep.subr.bf16.mxu0 0
  %3412 = vmatpush1.bf16.msra.mxu0 %v454
  %3413 = vmatprep.subr.bf16.mxu0 0
  %3414 = vmatpush1.bf16.msra.mxu0 %v453
  %3415 = vmatprep.subr.bf16.mxu0 0
  %3416 = vmatpush1.bf16.msra.mxu0 %v452
  %3417 = vmatprep.subr.bf16.mxu0 0
  %3418 = vmatpush1.bf16.msra.mxu0 %v451
  %3419 = vmatprep.subr.bf16.mxu0 0
  %3420 = vmatpush1.bf16.msra.mxu0 %v450
  %3421 = vmatprep.subr.bf16.mxu0 0
  %3422 = vmatpush1.bf16.msra.mxu0 %v449
  %3423 = vmatprep.subr.bf16.mxu0 0
  %3424 = vmatpush1.bf16.msra.mxu0 %v448
  %3425 = vmatprep.subr.bf16.mxu0 0
  %3426 = vmatpush2.bf16.msra.mxu0 %v463
  %3427 = vmatprep.subr.bf16.mxu0 0
  %3428 = vmatpush2.bf16.msra.mxu0 %v462
  %3429 = vmatprep.subr.bf16.mxu0 0
  %3430 = vmatpush2.bf16.msra.mxu0 %v461
  %3431 = vmatprep.subr.bf16.mxu0 0
  %3432 = vmatpush2.bf16.msra.mxu0 %v460
  %3433 = vmatprep.subr.bf16.mxu0 0
  %3434 = vmatpush2.bf16.msra.mxu0 %v459
  %3435 = vmatprep.subr.bf16.mxu0 0
  %3436 = vmatpush2.bf16.msra.mxu0 %v458
  %3437 = vmatprep.subr.bf16.mxu0 0
  %3438 = vmatpush2.bf16.msra.mxu0 %v457
  %3439 = vmatprep.subr.bf16.mxu0 0
  %3440 = vmatpush2.bf16.msra.mxu0 %v456
  %3441 = vmatprep.mubr.bf16.mxu0 %v3394
  %3442 = vmatmul.mubr.bf16.gmra.mxu0 %v3393
  %v3443 = vpop.f32.mrf.mxu0
  %v3444 = vadd.f32 0.0, %v3443
  %v3445 = vpop.f32.mrf.mxu0
  %v3446 = vpop.f32.mrf.mxu0
  %v3447 = vadd.f32 0.0, %v3446
  %v3448 = vpop.f32.mrf.mxu0
  %3449 = vmatprep.mubr.bf16.mxu0 %v3396
  %3450 = vmatmul.mubr.bf16.gmra.mxu0 %v3395
  %v3451 = vpop.f32.mrf.mxu0
  %v3452 = vadd.f32 0.0, %v3451
  %v3453 = vpop.f32.mrf.mxu0
  %v3454 = vpop.f32.mrf.mxu0
  %v3455 = vadd.f32 0.0, %v3454
  %v3456 = vpop.f32.mrf.mxu0
  %3457 = vmatprep.mubr.bf16.mxu0 %v3398
  %3458 = vmatmul.mubr.bf16.gmra.mxu0 %v3397
  %v3459 = vpop.f32.mrf.mxu0
  %v3460 = vadd.f32 0.0, %v3459
  %v3461 = vpop.f32.mrf.mxu0
  %v3462 = vpop.f32.mrf.mxu0
  %v3463 = vadd.f32 0.0, %v3462
  %v3464 = vpop.f32.mrf.mxu0
  %3465 = vmatprep.mubr.bf16.mxu0 %v3400
  %3466 = vmatmul.mubr.bf16.gmra.mxu0 %v3399
  %v3467 = vpop.f32.mrf.mxu0
  %v3468 = vadd.f32 0.0, %v3467
  %v3469 = vpop.f32.mrf.mxu0
  %v3470 = vpop.f32.mrf.mxu0
  %v3471 = vadd.f32 0.0, %v3470
  %v3472 = vpop.f32.mrf.mxu0
  %3473 = vdwg.mxu0
  %v3474 = vpack.c.bf16 %v3447, %v3444
  %v3475 = vpack.c.bf16 %v3455, %v3452
  %v3476 = vpack.c.bf16 %v3463, %v3460
  %v3477 = vpack.c.bf16 %v3471, %v3468
  %s3478 = scalar_lea.vmem %s4, 56
  %v3479 = vld [vmem:[%s3478] sm:$0xf]
  %v3481 = vsel %vm702, %v3474, 0
  %v3484 = vsel %vm702, %v3475, 0
  %v3487 = vsel %vm702, %v3476, 0
  %v3490 = vsel %vm702, %v3477, 0
  %v3493 = vsel %vm715, %v3479, 0
  %3495 = vmatprep.subr.bf16.mxu0 0
  %3496 = vmatpush1.bf16.msra.mxu0 0
  %3497 = vmatprep.subr.bf16.mxu0 0
  %3498 = vmatpush1.bf16.msra.mxu0 0
  %3499 = vmatprep.subr.bf16.mxu0 0
  %3500 = vmatpush1.bf16.msra.mxu0 0
  %3501 = vmatprep.subr.bf16.mxu0 0
  %3502 = vmatpush1.bf16.msra.mxu0 0
  %3503 = vmatprep.subr.bf16.mxu0 0
  %3504 = vmatpush1.bf16.msra.mxu0 0
  %3505 = vmatprep.subr.bf16.mxu0 0
  %3506 = vmatpush1.bf16.msra.mxu0 0
  %3507 = vmatprep.subr.bf16.mxu0 0
  %3508 = vmatpush1.bf16.msra.mxu0 0
  %3509 = vmatprep.subr.bf16.mxu0 0
  %3510 = vmatpush1.bf16.msra.mxu0 %v3493
  %3511 = vmatprep.subr.bf16.mxu0 0
  %3512 = vmatpush2.bf16.msra.mxu0 0
  %3513 = vmatprep.subr.bf16.mxu0 0
  %3514 = vmatpush2.bf16.msra.mxu0 0
  %3515 = vmatprep.subr.bf16.mxu0 0
  %3516 = vmatpush2.bf16.msra.mxu0 0
  %3517 = vmatprep.subr.bf16.mxu0 0
  %3518 = vmatpush2.bf16.msra.mxu0 0
  %3519 = vmatprep.subr.bf16.mxu0 0
  %3520 = vmatpush2.bf16.msra.mxu0 0
  %3521 = vmatprep.subr.bf16.mxu0 0
  %3522 = vmatpush2.bf16.msra.mxu0 0
  %3523 = vmatprep.subr.bf16.mxu0 0
  %3524 = vmatpush2.bf16.msra.mxu0 0
  %3525 = vmatprep.subr.bf16.mxu0 0
  %3526 = vmatpush2.bf16.msra.mxu0 0
  %3527 = vmatprep.mubr.bf16.mxu0 0
  %3528 = vmatmul.mubr.bf16.gmra.mxu0 %v3481
  %v3529 = vpop.f32.mrf.mxu0
  %v3530 = vadd.f32 0.0, %v3529
  %v3531 = vpop.f32.mrf.mxu0
  %v3532 = vpop.f32.mrf.mxu0
  %v3533 = vadd.f32 0.0, %v3532
  %v3534 = vpop.f32.mrf.mxu0
  %3535 = vmatprep.mubr.bf16.mxu0 0
  %3536 = vmatmul.mubr.bf16.gmra.mxu0 %v3484
  %v3537 = vpop.f32.mrf.mxu0
  %v3538 = vadd.f32 0.0, %v3537
  %v3539 = vpop.f32.mrf.mxu0
  %v3540 = vpop.f32.mrf.mxu0
  %v3541 = vadd.f32 0.0, %v3540
  %v3542 = vpop.f32.mrf.mxu0
  %3543 = vmatprep.mubr.bf16.mxu0 0
  %3544 = vmatmul.mubr.bf16.gmra.mxu0 %v3487
  %v3545 = vpop.f32.mrf.mxu0
  %v3546 = vadd.f32 0.0, %v3545
  %v3547 = vpop.f32.mrf.mxu0
  %v3548 = vpop.f32.mrf.mxu0
  %v3549 = vadd.f32 0.0, %v3548
  %v3550 = vpop.f32.mrf.mxu0
  %3551 = vmatprep.mubr.bf16.mxu0 0
  %3552 = vmatmul.mubr.bf16.gmra.mxu0 %v3490
  %v3553 = vpop.f32.mrf.mxu0
  %v3554 = vadd.f32 0.0, %v3553
  %v3555 = vpop.f32.mrf.mxu0
  %v3556 = vpop.f32.mrf.mxu0
  %v3557 = vadd.f32 0.0, %v3556
  %v3558 = vpop.f32.mrf.mxu0
  %3559 = vdwg.mxu0
  %v3560 = vadd.f32 %v3352, %v3530
  %v3561 = vadd.f32 %v3353, %v3533
  %v3562 = vadd.f32 %v3354, %v3538
  %v3563 = vadd.f32 %v3355, %v3541
  %v3564 = vadd.f32 %v3356, %v3546
  %v3565 = vadd.f32 %v3357, %v3549
  %v3566 = vadd.f32 %v3358, %v3554
  %v3567 = vadd.f32 %v3359, %v3557
  %s3568 = scalar_lea.vmem %s3, 960
  %v3569 = vld [vmem:[%s3568] sm:$0xff]
  %v3570 = vld [vmem:[%s3568 + $0x8] sm:$0xff]
  %v3571 = vld [vmem:[%s3568 + $0x10] sm:$0xff]
  %v3572 = vld [vmem:[%s3568 + $0x18] sm:$0xff]
  %v3573 = vld [vmem:[%s3568 + $0x20] sm:$0xff]
  %v3574 = vld [vmem:[%s3568 + $0x28] sm:$0xff]
  %v3575 = vld [vmem:[%s3568 + $0x30] sm:$0xff]
  %v3576 = vld [vmem:[%s3568 + $0x38] sm:$0xff]
  %v3585 = vunpack.c.l.b16 %v3569
  %v3586 = vunpack.c.h.b16 %v3569
  %v3587 = vunpack.c.l.b16 %v3570
  %v3588 = vunpack.c.h.b16 %v3570
  %v3589 = vunpack.c.l.b16 %v3571
  %v3590 = vunpack.c.h.b16 %v3571
  %v3591 = vunpack.c.l.b16 %v3572
  %v3592 = vunpack.c.h.b16 %v3572
  %v3593 = vunpack.c.l.b16 %v3573
  %v3594 = vunpack.c.h.b16 %v3573
  %v3595 = vunpack.c.l.b16 %v3574
  %v3596 = vunpack.c.h.b16 %v3574
  %v3597 = vunpack.c.l.b16 %v3575
  %v3598 = vunpack.c.h.b16 %v3575
  %v3599 = vunpack.c.l.b16 %v3576
  %v3600 = vunpack.c.h.b16 %v3576
  %v3601 = vpack.c.b16 %v3587, %v3585
  %v3602 = vpack.c.b16 %v3588, %v3586
  %v3603 = vpack.c.b16 %v3591, %v3589
  %v3604 = vpack.c.b16 %v3592, %v3590
  %v3605 = vpack.c.b16 %v3595, %v3593
  %v3606 = vpack.c.b16 %v3596, %v3594
  %v3607 = vpack.c.b16 %v3599, %v3597
  %v3608 = vpack.c.b16 %v3600, %v3598
  %3617 = vmatprep.subr.bf16.mxu0 0
  %3618 = vmatpush1.bf16.msra.mxu0 %v455
  %3619 = vmatprep.subr.bf16.mxu0 0
  %3620 = vmatpush1.bf16.msra.mxu0 %v454
  %3621 = vmatprep.subr.bf16.mxu0 0
  %3622 = vmatpush1.bf16.msra.mxu0 %v453
  %3623 = vmatprep.subr.bf16.mxu0 0
  %3624 = vmatpush1.bf16.msra.mxu0 %v452
  %3625 = vmatprep.subr.bf16.mxu0 0
  %3626 = vmatpush1.bf16.msra.mxu0 %v451
  %3627 = vmatprep.subr.bf16.mxu0 0
  %3628 = vmatpush1.bf16.msra.mxu0 %v450
  %3629 = vmatprep.subr.bf16.mxu0 0
  %3630 = vmatpush1.bf16.msra.mxu0 %v449
  %3631 = vmatprep.subr.bf16.mxu0 0
  %3632 = vmatpush1.bf16.msra.mxu0 %v448
  %3633 = vmatprep.subr.bf16.mxu0 0
  %3634 = vmatpush2.bf16.msra.mxu0 %v463
  %3635 = vmatprep.subr.bf16.mxu0 0
  %3636 = vmatpush2.bf16.msra.mxu0 %v462
  %3637 = vmatprep.subr.bf16.mxu0 0
  %3638 = vmatpush2.bf16.msra.mxu0 %v461
  %3639 = vmatprep.subr.bf16.mxu0 0
  %3640 = vmatpush2.bf16.msra.mxu0 %v460
  %3641 = vmatprep.subr.bf16.mxu0 0
  %3642 = vmatpush2.bf16.msra.mxu0 %v459
  %3643 = vmatprep.subr.bf16.mxu0 0
  %3644 = vmatpush2.bf16.msra.mxu0 %v458
  %3645 = vmatprep.subr.bf16.mxu0 0
  %3646 = vmatpush2.bf16.msra.mxu0 %v457
  %3647 = vmatprep.subr.bf16.mxu0 0
  %3648 = vmatpush2.bf16.msra.mxu0 %v456
  %3649 = vmatprep.mubr.bf16.mxu0 %v3602
  %3650 = vmatmul.mubr.bf16.gmra.mxu0 %v3601
  %v3651 = vpop.f32.mrf.mxu0
  %v3652 = vadd.f32 0.0, %v3651
  %v3653 = vpop.f32.mrf.mxu0
  %v3654 = vpop.f32.mrf.mxu0
  %v3655 = vadd.f32 0.0, %v3654
  %v3656 = vpop.f32.mrf.mxu0
  %3657 = vmatprep.mubr.bf16.mxu0 %v3604
  %3658 = vmatmul.mubr.bf16.gmra.mxu0 %v3603
  %v3659 = vpop.f32.mrf.mxu0
  %v3660 = vadd.f32 0.0, %v3659
  %v3661 = vpop.f32.mrf.mxu0
  %v3662 = vpop.f32.mrf.mxu0
  %v3663 = vadd.f32 0.0, %v3662
  %v3664 = vpop.f32.mrf.mxu0
  %3665 = vmatprep.mubr.bf16.mxu0 %v3606
  %3666 = vmatmul.mubr.bf16.gmra.mxu0 %v3605
  %v3667 = vpop.f32.mrf.mxu0
  %v3668 = vadd.f32 0.0, %v3667
  %v3669 = vpop.f32.mrf.mxu0
  %v3670 = vpop.f32.mrf.mxu0
  %v3671 = vadd.f32 0.0, %v3670
  %v3672 = vpop.f32.mrf.mxu0
  %3673 = vmatprep.mubr.bf16.mxu0 %v3608
  %3674 = vmatmul.mubr.bf16.gmra.mxu0 %v3607
  %v3675 = vpop.f32.mrf.mxu0
  %v3676 = vadd.f32 0.0, %v3675
  %v3677 = vpop.f32.mrf.mxu0
  %v3678 = vpop.f32.mrf.mxu0
  %v3679 = vadd.f32 0.0, %v3678
  %v3680 = vpop.f32.mrf.mxu0
  %3681 = vdwg.mxu0
  %v3682 = vpack.c.bf16 %v3655, %v3652
  %v3683 = vpack.c.bf16 %v3663, %v3660
  %v3684 = vpack.c.bf16 %v3671, %v3668
  %v3685 = vpack.c.bf16 %v3679, %v3676
  %s3686 = scalar_lea.vmem %s4, 60
  %v3687 = vld [vmem:[%s3686] sm:$0xf]
  %v3689 = vsel %vm702, %v3682, 0
  %v3692 = vsel %vm702, %v3683, 0
  %v3695 = vsel %vm702, %v3684, 0
  %v3698 = vsel %vm702, %v3685, 0
  %v3701 = vsel %vm715, %v3687, 0
  %3703 = vmatprep.subr.bf16.mxu0 0
  %3704 = vmatpush1.bf16.msra.mxu0 0
  %3705 = vmatprep.subr.bf16.mxu0 0
  %3706 = vmatpush1.bf16.msra.mxu0 0
  %3707 = vmatprep.subr.bf16.mxu0 0
  %3708 = vmatpush1.bf16.msra.mxu0 0
  %3709 = vmatprep.subr.bf16.mxu0 0
  %3710 = vmatpush1.bf16.msra.mxu0 0
  %3711 = vmatprep.subr.bf16.mxu0 0
  %3712 = vmatpush1.bf16.msra.mxu0 0
  %3713 = vmatprep.subr.bf16.mxu0 0
  %3714 = vmatpush1.bf16.msra.mxu0 0
  %3715 = vmatprep.subr.bf16.mxu0 0
  %3716 = vmatpush1.bf16.msra.mxu0 0
  %3717 = vmatprep.subr.bf16.mxu0 0
  %3718 = vmatpush1.bf16.msra.mxu0 %v3701
  %3719 = vmatprep.subr.bf16.mxu0 0
  %3720 = vmatpush2.bf16.msra.mxu0 0
  %3721 = vmatprep.subr.bf16.mxu0 0
  %3722 = vmatpush2.bf16.msra.mxu0 0
  %3723 = vmatprep.subr.bf16.mxu0 0
  %3724 = vmatpush2.bf16.msra.mxu0 0
  %3725 = vmatprep.subr.bf16.mxu0 0
  %3726 = vmatpush2.bf16.msra.mxu0 0
  %3727 = vmatprep.subr.bf16.mxu0 0
  %3728 = vmatpush2.bf16.msra.mxu0 0
  %3729 = vmatprep.subr.bf16.mxu0 0
  %3730 = vmatpush2.bf16.msra.mxu0 0
  %3731 = vmatprep.subr.bf16.mxu0 0
  %3732 = vmatpush2.bf16.msra.mxu0 0
  %3733 = vmatprep.subr.bf16.mxu0 0
  %3734 = vmatpush2.bf16.msra.mxu0 0
  %3735 = vmatprep.mubr.bf16.mxu0 0
  %3736 = vmatmul.mubr.bf16.gmra.mxu0 %v3689
  %v3737 = vpop.f32.mrf.mxu0
  %v3738 = vadd.f32 0.0, %v3737
  %v3739 = vpop.f32.mrf.mxu0
  %v3740 = vpop.f32.mrf.mxu0
  %v3741 = vadd.f32 0.0, %v3740
  %v3742 = vpop.f32.mrf.mxu0
  %3743 = vmatprep.mubr.bf16.mxu0 0
  %3744 = vmatmul.mubr.bf16.gmra.mxu0 %v3692
  %v3745 = vpop.f32.mrf.mxu0
  %v3746 = vadd.f32 0.0, %v3745
  %v3747 = vpop.f32.mrf.mxu0
  %v3748 = vpop.f32.mrf.mxu0
  %v3749 = vadd.f32 0.0, %v3748
  %v3750 = vpop.f32.mrf.mxu0
  %3751 = vmatprep.mubr.bf16.mxu0 0
  %3752 = vmatmul.mubr.bf16.gmra.mxu0 %v3695
  %v3753 = vpop.f32.mrf.mxu0
  %v3754 = vadd.f32 0.0, %v3753
  %v3755 = vpop.f32.mrf.mxu0
  %v3756 = vpop.f32.mrf.mxu0
  %v3757 = vadd.f32 0.0, %v3756
  %v3758 = vpop.f32.mrf.mxu0
  %3759 = vmatprep.mubr.bf16.mxu0 0
  %3760 = vmatmul.mubr.bf16.gmra.mxu0 %v3698
  %v3761 = vpop.f32.mrf.mxu0
  %v3762 = vadd.f32 0.0, %v3761
  %v3763 = vpop.f32.mrf.mxu0
  %v3764 = vpop.f32.mrf.mxu0
  %v3765 = vadd.f32 0.0, %v3764
  %v3766 = vpop.f32.mrf.mxu0
  %3767 = vdwg.mxu0
  %v3768 = vadd.f32 %v3560, %v3738
  %v3769 = vadd.f32 %v3561, %v3741
  %v3770 = vadd.f32 %v3562, %v3746
  %v3771 = vadd.f32 %v3563, %v3749
  %v3772 = vadd.f32 %v3564, %v3754
  %v3773 = vadd.f32 %v3565, %v3757
  %v3774 = vadd.f32 %v3566, %v3762
  %v3775 = vadd.f32 %v3567, %v3765
  %v3777 = vlaneseq
  %v3778 = vshrl.u32 %v3777, 7
  %v3779 = vsub.s32 0, %v3778
  %v3780 = vrot.slane %v447, %v3779
  %v3782 = vadd.f32 %v3768, %v3780
  %v3783 = vadd.f32 %v3769, %v3780
  %v3784 = vadd.f32 %v3770, %v3780
  %v3785 = vadd.f32 %v3771, %v3780
  %v3786 = vadd.f32 %v3772, %v3780
  %v3787 = vadd.f32 %v3773, %v3780
  %v3788 = vadd.f32 %v3774, %v3780
  %v3789 = vadd.f32 %v3775, %v3780
  %v3790 = vmax.f32 %v3782, 0.0
  %v3791 = vmax.f32 %v3783, 0.0
  %v3792 = vmax.f32 %v3784, 0.0
  %v3793 = vmax.f32 %v3785, 0.0
  %v3794 = vmax.f32 %v3786, 0.0
  %v3795 = vmax.f32 %v3787, 0.0
  %v3796 = vmax.f32 %v3788, 0.0
  %v3797 = vmax.f32 %v3789, 0.0
  %v3798 = vld [vmem:[%s8] sm:$0x1]
  %v3799 = vpack.c.bf16 %v3791, %v3790
  %v3800 = vpack.c.bf16 %v3793, %v3792
  %v3801 = vpack.c.bf16 %v3795, %v3794
  %v3802 = vpack.c.bf16 %v3797, %v3796
  %v3803 = vld [vmem:[%s6] sm:$0xf]
  %v3804 = vld [vmem:[%s6 + $0x4] sm:$0xf]
  %v3805 = vld [vmem:[%s6 + $0x8] sm:$0xf]
  %v3806 = vld [vmem:[%s6 + $0xc] sm:$0xf]
  %v3807 = vld [vmem:[%s6 + $0x10] sm:$0xf]
  %v3808 = vld [vmem:[%s6 + $0x14] sm:$0xf]
  %v3809 = vld [vmem:[%s6 + $0x18] sm:$0xf]
  %v3810 = vld [vmem:[%s6 + $0x1c] sm:$0xf]
  %v3819 = vunpack.c.l.b16 %v3803
  %v3820 = vunpack.c.l.b16 %v3804
  %v3821 = vunpack.c.l.b16 %v3805
  %v3822 = vunpack.c.l.b16 %v3806
  %v3823 = vunpack.c.l.b16 %v3807
  %v3824 = vunpack.c.l.b16 %v3808
  %v3825 = vunpack.c.l.b16 %v3809
  %v3826 = vunpack.c.l.b16 %v3810
  %v3827 = vpack.c.b16 %v3820, %v3819
  %v3828 = vpack.c.b16 %v3822, %v3821
  %v3829 = vpack.c.b16 %v3824, %v3823
  %v3830 = vpack.c.b16 %v3826, %v3825
  %v3832 = vsel %vm205, %v3827, 0
  %v3835 = vsel %vm205, %v3828, 0
  %v3838 = vsel %vm205, %v3829, 0
  %v3841 = vsel %vm205, %v3830, 0
  %3843 = vmatprep.subr.bf16.mxu0 0
  %3844 = vmatpush1.bf16.msra.mxu0 0
  %3845 = vmatprep.subr.bf16.mxu0 0
  %3846 = vmatpush1.bf16.msra.mxu0 0
  %3847 = vmatprep.subr.bf16.mxu0 0
  %3848 = vmatpush1.bf16.msra.mxu0 0
  %3849 = vmatprep.subr.bf16.mxu0 0
  %3850 = vmatpush1.bf16.msra.mxu0 0
  %3851 = vmatprep.subr.bf16.mxu0 0
  %3852 = vmatpush1.bf16.msra.mxu0 %v3802
  %3853 = vmatprep.subr.bf16.mxu0 0
  %3854 = vmatpush1.bf16.msra.mxu0 %v3801
  %3855 = vmatprep.subr.bf16.mxu0 0
  %3856 = vmatpush1.bf16.msra.mxu0 %v3800
  %3857 = vmatprep.subr.bf16.mxu0 0
  %3858 = vmatpush1.bf16.msra.mxu0 %v3799
  %3859 = vmatprep.subr.bf16.mxu0 0
  %3860 = vmatpush2.bf16.msra.mxu0 0
  %3861 = vmatprep.subr.bf16.mxu0 0
  %3862 = vmatpush2.bf16.msra.mxu0 0
  %3863 = vmatprep.subr.bf16.mxu0 0
  %3864 = vmatpush2.bf16.msra.mxu0 0
  %3865 = vmatprep.subr.bf16.mxu0 0
  %3866 = vmatpush2.bf16.msra.mxu0 0
  %3867 = vmatprep.subr.bf16.mxu0 0
  %3868 = vmatpush2.bf16.msra.mxu0 0
  %3869 = vmatprep.subr.bf16.mxu0 0
  %3870 = vmatpush2.bf16.msra.mxu0 0
  %3871 = vmatprep.subr.bf16.mxu0 0
  %3872 = vmatpush2.bf16.msra.mxu0 0
  %3873 = vmatprep.subr.bf16.mxu0 0
  %3874 = vmatpush2.bf16.msra.mxu0 0
  %3875 = vmatprep.mubr.bf16.mxu0 0
  %3876 = vmatmul.mubr.bf16.gmra.mxu0 %v3832
  %v3877 = vpop.f32.mrf.mxu0
  %v3878 = vadd.f32 0.0, %v3877
  %v3879 = vpop.f32.mrf.mxu0
  %v3880 = vpop.f32.mrf.mxu0
  %v3881 = vadd.f32 0.0, %v3880
  %v3882 = vpop.f32.mrf.mxu0
  %3883 = vmatprep.mubr.bf16.mxu0 0
  %3884 = vmatmul.mubr.bf16.gmra.mxu0 %v3835
  %v3885 = vpop.f32.mrf.mxu0
  %v3886 = vadd.f32 0.0, %v3885
  %v3887 = vpop.f32.mrf.mxu0
  %v3888 = vpop.f32.mrf.mxu0
  %v3889 = vadd.f32 0.0, %v3888
  %v3890 = vpop.f32.mrf.mxu0
  %3891 = vmatprep.mubr.bf16.mxu0 0
  %3892 = vmatmul.mubr.bf16.gmra.mxu0 %v3838
  %v3893 = vpop.f32.mrf.mxu0
  %v3894 = vadd.f32 0.0, %v3893
  %v3895 = vpop.f32.mrf.mxu0
  %v3896 = vpop.f32.mrf.mxu0
  %v3897 = vadd.f32 0.0, %v3896
  %v3898 = vpop.f32.mrf.mxu0
  %3899 = vmatprep.mubr.bf16.mxu0 0
  %3900 = vmatmul.mubr.bf16.gmra.mxu0 %v3841
  %v3901 = vpop.f32.mrf.mxu0
  %v3902 = vadd.f32 0.0, %v3901
  %v3903 = vpop.f32.mrf.mxu0
  %v3904 = vpop.f32.mrf.mxu0
  %v3905 = vadd.f32 0.0, %v3904
  %v3906 = vpop.f32.mrf.mxu0
  %3907 = vdwg.mxu0
  %v3908 = vpack.c.bf16 %v3881, %v3878
  %v3909 = vpack.c.bf16 %v3889, %v3886
  %v3910 = vpack.c.bf16 %v3897, %v3894
  %v3911 = vpack.c.bf16 %v3905, %v3902
  %v3912 = vld [vmem:[%s7] sm:$0xf]
  %v3913 = vld [vmem:[%s7 + $0x4] sm:$0xf]
  %s3914 = scalar_lea.vmem %s6, 32
  %v3915 = vld [vmem:[%s3914] sm:$0xf]
  %v3916 = vld [vmem:[%s3914 + $0x4] sm:$0xf]
  %v3917 = vld [vmem:[%s3914 + $0x8] sm:$0xf]
  %v3918 = vld [vmem:[%s3914 + $0xc] sm:$0xf]
  %v3919 = vld [vmem:[%s3914 + $0x10] sm:$0xf]
  %v3920 = vld [vmem:[%s3914 + $0x14] sm:$0xf]
  %v3921 = vld [vmem:[%s3914 + $0x18] sm:$0xf]
  %v3922 = vld [vmem:[%s3914 + $0x1c] sm:$0xf]
  %v3931 = vunpack.c.l.b16 %v3915
  %v3932 = vunpack.c.l.b16 %v3916
  %v3933 = vunpack.c.l.b16 %v3917
  %v3934 = vunpack.c.l.b16 %v3918
  %v3935 = vunpack.c.l.b16 %v3919
  %v3936 = vunpack.c.l.b16 %v3920
  %v3937 = vunpack.c.l.b16 %v3921
  %v3938 = vunpack.c.l.b16 %v3922
  %v3939 = vpack.c.b16 %v3932, %v3931
  %v3940 = vpack.c.b16 %v3934, %v3933
  %v3941 = vpack.c.b16 %v3936, %v3935
  %v3942 = vpack.c.b16 %v3938, %v3937
  %v3944 = vsel %vm205, %v3939, 0
  %v3947 = vsel %vm205, %v3940, 0
  %v3950 = vsel %vm205, %v3941, 0
  %v3953 = vsel %vm205, %v3942, 0
  %3955 = vmatprep.subr.bf16.mxu0 0
  %3956 = vmatpush1.bf16.msra.mxu0 0
  %3957 = vmatprep.subr.bf16.mxu0 0
  %3958 = vmatpush1.bf16.msra.mxu0 0
  %3959 = vmatprep.subr.bf16.mxu0 0
  %3960 = vmatpush1.bf16.msra.mxu0 0
  %3961 = vmatprep.subr.bf16.mxu0 0
  %3962 = vmatpush1.bf16.msra.mxu0 0
  %3963 = vmatprep.subr.bf16.mxu0 0
  %3964 = vmatpush1.bf16.msra.mxu0 %v3802
  %3965 = vmatprep.subr.bf16.mxu0 0
  %3966 = vmatpush1.bf16.msra.mxu0 %v3801
  %3967 = vmatprep.subr.bf16.mxu0 0
  %3968 = vmatpush1.bf16.msra.mxu0 %v3800
  %3969 = vmatprep.subr.bf16.mxu0 0
  %3970 = vmatpush1.bf16.msra.mxu0 %v3799
  %3971 = vmatprep.subr.bf16.mxu0 0
  %3972 = vmatpush2.bf16.msra.mxu0 0
  %3973 = vmatprep.subr.bf16.mxu0 0
  %3974 = vmatpush2.bf16.msra.mxu0 0
  %3975 = vmatprep.subr.bf16.mxu0 0
  %3976 = vmatpush2.bf16.msra.mxu0 0
  %3977 = vmatprep.subr.bf16.mxu0 0
  %3978 = vmatpush2.bf16.msra.mxu0 0
  %3979 = vmatprep.subr.bf16.mxu0 0
  %3980 = vmatpush2.bf16.msra.mxu0 0
  %3981 = vmatprep.subr.bf16.mxu0 0
  %3982 = vmatpush2.bf16.msra.mxu0 0
  %3983 = vmatprep.subr.bf16.mxu0 0
  %3984 = vmatpush2.bf16.msra.mxu0 0
  %3985 = vmatprep.subr.bf16.mxu0 0
  %3986 = vmatpush2.bf16.msra.mxu0 0
  %3987 = vmatprep.mubr.bf16.mxu0 0
  %3988 = vmatmul.mubr.bf16.gmra.mxu0 %v3944
  %v3989 = vpop.f32.mrf.mxu0
  %v3990 = vadd.f32 0.0, %v3989
  %v3991 = vpop.f32.mrf.mxu0
  %v3992 = vpop.f32.mrf.mxu0
  %v3993 = vadd.f32 0.0, %v3992
  %v3994 = vpop.f32.mrf.mxu0
  %3995 = vmatprep.mubr.bf16.mxu0 0
  %3996 = vmatmul.mubr.bf16.gmra.mxu0 %v3947
  %v3997 = vpop.f32.mrf.mxu0
  %v3998 = vadd.f32 0.0, %v3997
  %v3999 = vpop.f32.mrf.mxu0
  %v4000 = vpop.f32.mrf.mxu0
  %v4001 = vadd.f32 0.0, %v4000
  %v4002 = vpop.f32.mrf.mxu0
  %4003 = vmatprep.mubr.bf16.mxu0 0
  %4004 = vmatmul.mubr.bf16.gmra.mxu0 %v3950
  %v4005 = vpop.f32.mrf.mxu0
  %v4006 = vadd.f32 0.0, %v4005
  %v4007 = vpop.f32.mrf.mxu0
  %v4008 = vpop.f32.mrf.mxu0
  %v4009 = vadd.f32 0.0, %v4008
  %v4010 = vpop.f32.mrf.mxu0
  %4011 = vmatprep.mubr.bf16.mxu0 0
  %4012 = vmatmul.mubr.bf16.gmra.mxu0 %v3953
  %v4013 = vpop.f32.mrf.mxu0
  %v4014 = vadd.f32 0.0, %v4013
  %v4015 = vpop.f32.mrf.mxu0
  %v4016 = vpop.f32.mrf.mxu0
  %v4017 = vadd.f32 0.0, %v4016
  %v4018 = vpop.f32.mrf.mxu0
  %4019 = vdwg.mxu0
  %v4020 = vpack.c.bf16 %v3993, %v3990
  %v4021 = vpack.c.bf16 %v4001, %v3998
  %v4022 = vpack.c.bf16 %v4009, %v4006
  %v4023 = vpack.c.bf16 %v4017, %v4014
  %s4024 = scalar_lea.vmem %s7, 8
  %v4025 = vld [vmem:[%s4024] sm:$0xf]
  %v4026 = vld [vmem:[%s4024 + $0x4] sm:$0xf]
  %v4029 = vunpack.c.l.b16 %v4025
  %v4030 = vunpack.c.l.b16 %v4026
  %v4031 = vpack.c.b16 %v4030, %v4029
  %vm4033 = vcmask 130048
  %v4035 = vsel %vm4033, %v4020, 0
  %v4038 = vsel %vm4033, %v4021, 0
  %v4041 = vsel %vm4033, %v4022, 0
  %v4044 = vsel %vm4033, %v4023, 0
  %4046 = vmatprep.subr.bf16.mxu0 0
  %4047 = vmatpush1.bf16.msra.mxu0 0
  %4048 = vmatprep.subr.bf16.mxu0 0
  %4049 = vmatpush1.bf16.msra.mxu0 0
  %4050 = vmatprep.subr.bf16.mxu0 0
  %4051 = vmatpush1.bf16.msra.mxu0 0
  %4052 = vmatprep.subr.bf16.mxu0 0
  %4053 = vmatpush1.bf16.msra.mxu0 0
  %4054 = vmatprep.subr.bf16.mxu0 0
  %4055 = vmatpush1.bf16.msra.mxu0 0
  %4056 = vmatprep.subr.bf16.mxu0 0
  %4057 = vmatpush1.bf16.msra.mxu0 0
  %4058 = vmatprep.subr.bf16.mxu0 0
  %4059 = vmatpush1.bf16.msra.mxu0 0
  %4060 = vmatprep.subr.bf16.mxu0 0
  %4061 = vmatpush1.bf16.msra.mxu0 %v4031
  %4062 = vmatprep.subr.bf16.mxu0 0
  %4063 = vmatpush2.bf16.msra.mxu0 0
  %4064 = vmatprep.subr.bf16.mxu0 0
  %4065 = vmatpush2.bf16.msra.mxu0 0
  %4066 = vmatprep.subr.bf16.mxu0 0
  %4067 = vmatpush2.bf16.msra.mxu0 0
  %4068 = vmatprep.subr.bf16.mxu0 0
  %4069 = vmatpush2.bf16.msra.mxu0 0
  %4070 = vmatprep.subr.bf16.mxu0 0
  %4071 = vmatpush2.bf16.msra.mxu0 0
  %4072 = vmatprep.subr.bf16.mxu0 0
  %4073 = vmatpush2.bf16.msra.mxu0 0
  %4074 = vmatprep.subr.bf16.mxu0 0
  %4075 = vmatpush2.bf16.msra.mxu0 0
  %4076 = vmatprep.subr.bf16.mxu0 0
  %4077 = vmatpush2.bf16.msra.mxu0 0
  %4078 = vmatprep.mubr.bf16.mxu0 0
  %4079 = vmatmul.mubr.bf16.gmra.mxu0 %v4035
  %v4080 = vpop.f32.mrf.mxu0
  %v4081 = vadd.f32 0.0, %v4080
  %v4082 = vpop.f32.mrf.mxu0
  %v4083 = vpop.f32.mrf.mxu0
  %v4084 = vadd.f32 0.0, %v4083
  %v4085 = vpop.f32.mrf.mxu0
  %4086 = vmatprep.mubr.bf16.mxu0 0
  %4087 = vmatmul.mubr.bf16.gmra.mxu0 %v4038
  %v4088 = vpop.f32.mrf.mxu0
  %v4089 = vadd.f32 0.0, %v4088
  %v4090 = vpop.f32.mrf.mxu0
  %v4091 = vpop.f32.mrf.mxu0
  %v4092 = vadd.f32 0.0, %v4091
  %v4093 = vpop.f32.mrf.mxu0
  %4094 = vmatprep.mubr.bf16.mxu0 0
  %4095 = vmatmul.mubr.bf16.gmra.mxu0 %v4041
  %v4096 = vpop.f32.mrf.mxu0
  %v4097 = vadd.f32 0.0, %v4096
  %v4098 = vpop.f32.mrf.mxu0
  %v4099 = vpop.f32.mrf.mxu0
  %v4100 = vadd.f32 0.0, %v4099
  %v4101 = vpop.f32.mrf.mxu0
  %4102 = vmatprep.mubr.bf16.mxu0 0
  %4103 = vmatmul.mubr.bf16.gmra.mxu0 %v4044
  %v4104 = vpop.f32.mrf.mxu0
  %v4105 = vadd.f32 0.0, %v4104
  %v4106 = vpop.f32.mrf.mxu0
  %v4107 = vpop.f32.mrf.mxu0
  %v4108 = vadd.f32 0.0, %v4107
  %v4109 = vpop.f32.mrf.mxu0
  %4110 = vdwg.mxu0
  %v4113 = vunpack.c.l.b16 %v3912
  %v4114 = vunpack.c.l.b16 %v3913
  %v4115 = vpack.c.b16 %v4114, %v4113
  %v4118 = vsel %vm4033, %v3908, 0
  %v4121 = vsel %vm4033, %v3909, 0
  %v4124 = vsel %vm4033, %v3910, 0
  %v4127 = vsel %vm4033, %v3911, 0
  %4129 = vmatprep.subr.bf16.mxu0 0
  %4130 = vmatpush1.bf16.msra.mxu0 0
  %4131 = vmatprep.subr.bf16.mxu0 0
  %4132 = vmatpush1.bf16.msra.mxu0 0
  %4133 = vmatprep.subr.bf16.mxu0 0
  %4134 = vmatpush1.bf16.msra.mxu0 0
  %4135 = vmatprep.subr.bf16.mxu0 0
  %4136 = vmatpush1.bf16.msra.mxu0 0
  %4137 = vmatprep.subr.bf16.mxu0 0
  %4138 = vmatpush1.bf16.msra.mxu0 0
  %4139 = vmatprep.subr.bf16.mxu0 0
  %4140 = vmatpush1.bf16.msra.mxu0 0
  %4141 = vmatprep.subr.bf16.mxu0 0
  %4142 = vmatpush1.bf16.msra.mxu0 0
  %4143 = vmatprep.subr.bf16.mxu0 0
  %4144 = vmatpush1.bf16.msra.mxu0 %v4115
  %4145 = vmatprep.subr.bf16.mxu0 0
  %4146 = vmatpush2.bf16.msra.mxu0 0
  %4147 = vmatprep.subr.bf16.mxu0 0
  %4148 = vmatpush2.bf16.msra.mxu0 0
  %4149 = vmatprep.subr.bf16.mxu0 0
  %4150 = vmatpush2.bf16.msra.mxu0 0
  %4151 = vmatprep.subr.bf16.mxu0 0
  %4152 = vmatpush2.bf16.msra.mxu0 0
  %4153 = vmatprep.subr.bf16.mxu0 0
  %4154 = vmatpush2.bf16.msra.mxu0 0
  %4155 = vmatprep.subr.bf16.mxu0 0
  %4156 = vmatpush2.bf16.msra.mxu0 0
  %4157 = vmatprep.subr.bf16.mxu0 0
  %4158 = vmatpush2.bf16.msra.mxu0 0
  %4159 = vmatprep.subr.bf16.mxu0 0
  %4160 = vmatpush2.bf16.msra.mxu0 0
  %4161 = vmatprep.mubr.bf16.mxu0 0
  %4162 = vmatmul.mubr.bf16.gmra.mxu0 %v4118
  %v4163 = vpop.f32.mrf.mxu0
  %v4164 = vadd.f32 %v4081, %v4163
  %v4165 = vpop.f32.mrf.mxu0
  %v4166 = vpop.f32.mrf.mxu0
  %v4167 = vadd.f32 %v4084, %v4166
  %v4168 = vpop.f32.mrf.mxu0
  %4169 = vmatprep.mubr.bf16.mxu0 0
  %4170 = vmatmul.mubr.bf16.gmra.mxu0 %v4121
  %v4171 = vpop.f32.mrf.mxu0
  %v4172 = vadd.f32 %v4089, %v4171
  %v4173 = vpop.f32.mrf.mxu0
  %v4174 = vpop.f32.mrf.mxu0
  %v4175 = vadd.f32 %v4092, %v4174
  %v4176 = vpop.f32.mrf.mxu0
  %4177 = vmatprep.mubr.bf16.mxu0 0
  %4178 = vmatmul.mubr.bf16.gmra.mxu0 %v4124
  %v4179 = vpop.f32.mrf.mxu0
  %v4180 = vadd.f32 %v4097, %v4179
  %v4181 = vpop.f32.mrf.mxu0
  %v4182 = vpop.f32.mrf.mxu0
  %v4183 = vadd.f32 %v4100, %v4182
  %v4184 = vpop.f32.mrf.mxu0
  %4185 = vmatprep.mubr.bf16.mxu0 0
  %4186 = vmatmul.mubr.bf16.gmra.mxu0 %v4127
  %v4187 = vpop.f32.mrf.mxu0
  %v4188 = vadd.f32 %v4105, %v4187
  %v4189 = vpop.f32.mrf.mxu0
  %v4190 = vpop.f32.mrf.mxu0
  %v4191 = vadd.f32 %v4108, %v4190
  %v4192 = vpop.f32.mrf.mxu0
  %4193 = vdwg.mxu0
  %s4194 = scalar_lea.vmem %s6, 64
  %v4195 = vld [vmem:[%s4194] sm:$0xf]
  %v4196 = vld [vmem:[%s4194 + $0x4] sm:$0xf]
  %v4197 = vld [vmem:[%s4194 + $0x8] sm:$0xf]
  %v4198 = vld [vmem:[%s4194 + $0xc] sm:$0xf]
  %v4199 = vld [vmem:[%s4194 + $0x10] sm:$0xf]
  %v4200 = vld [vmem:[%s4194 + $0x14] sm:$0xf]
  %v4201 = vld [vmem:[%s4194 + $0x18] sm:$0xf]
  %v4202 = vld [vmem:[%s4194 + $0x1c] sm:$0xf]
  %v4211 = vunpack.c.l.b16 %v4195
  %v4212 = vunpack.c.l.b16 %v4196
  %v4213 = vunpack.c.l.b16 %v4197
  %v4214 = vunpack.c.l.b16 %v4198
  %v4215 = vunpack.c.l.b16 %v4199
  %v4216 = vunpack.c.l.b16 %v4200
  %v4217 = vunpack.c.l.b16 %v4201
  %v4218 = vunpack.c.l.b16 %v4202
  %v4219 = vpack.c.b16 %v4212, %v4211
  %v4220 = vpack.c.b16 %v4214, %v4213
  %v4221 = vpack.c.b16 %v4216, %v4215
  %v4222 = vpack.c.b16 %v4218, %v4217
  %v4224 = vsel %vm205, %v4219, 0
  %v4227 = vsel %vm205, %v4220, 0
  %v4230 = vsel %vm205, %v4221, 0
  %v4233 = vsel %vm205, %v4222, 0
  %4235 = vmatprep.subr.bf16.mxu0 0
  %4236 = vmatpush1.bf16.msra.mxu0 0
  %4237 = vmatprep.subr.bf16.mxu0 0
  %4238 = vmatpush1.bf16.msra.mxu0 0
  %4239 = vmatprep.subr.bf16.mxu0 0
  %4240 = vmatpush1.bf16.msra.mxu0 0
  %4241 = vmatprep.subr.bf16.mxu0 0
  %4242 = vmatpush1.bf16.msra.mxu0 0
  %4243 = vmatprep.subr.bf16.mxu0 0
  %4244 = vmatpush1.bf16.msra.mxu0 %v3802
  %4245 = vmatprep.subr.bf16.mxu0 0
  %4246 = vmatpush1.bf16.msra.mxu0 %v3801
  %4247 = vmatprep.subr.bf16.mxu0 0
  %4248 = vmatpush1.bf16.msra.mxu0 %v3800
  %4249 = vmatprep.subr.bf16.mxu0 0
  %4250 = vmatpush1.bf16.msra.mxu0 %v3799
  %4251 = vmatprep.subr.bf16.mxu0 0
  %4252 = vmatpush2.bf16.msra.mxu0 0
  %4253 = vmatprep.subr.bf16.mxu0 0
  %4254 = vmatpush2.bf16.msra.mxu0 0
  %4255 = vmatprep.subr.bf16.mxu0 0
  %4256 = vmatpush2.bf16.msra.mxu0 0
  %4257 = vmatprep.subr.bf16.mxu0 0
  %4258 = vmatpush2.bf16.msra.mxu0 0
  %4259 = vmatprep.subr.bf16.mxu0 0
  %4260 = vmatpush2.bf16.msra.mxu0 0
  %4261 = vmatprep.subr.bf16.mxu0 0
  %4262 = vmatpush2.bf16.msra.mxu0 0
  %4263 = vmatprep.subr.bf16.mxu0 0
  %4264 = vmatpush2.bf16.msra.mxu0 0
  %4265 = vmatprep.subr.bf16.mxu0 0
  %4266 = vmatpush2.bf16.msra.mxu0 0
  %4267 = vmatprep.mubr.bf16.mxu0 0
  %4268 = vmatmul.mubr.bf16.gmra.mxu0 %v4224
  %v4269 = vpop.f32.mrf.mxu0
  %v4270 = vadd.f32 0.0, %v4269
  %v4271 = vpop.f32.mrf.mxu0
  %v4272 = vpop.f32.mrf.mxu0
  %v4273 = vadd.f32 0.0, %v4272
  %v4274 = vpop.f32.mrf.mxu0
  %4275 = vmatprep.mubr.bf16.mxu0 0
  %4276 = vmatmul.mubr.bf16.gmra.mxu0 %v4227
  %v4277 = vpop.f32.mrf.mxu0
  %v4278 = vadd.f32 0.0, %v4277
  %v4279 = vpop.f32.mrf.mxu0
  %v4280 = vpop.f32.mrf.mxu0
  %v4281 = vadd.f32 0.0, %v4280
  %v4282 = vpop.f32.mrf.mxu0
  %4283 = vmatprep.mubr.bf16.mxu0 0
  %4284 = vmatmul.mubr.bf16.gmra.mxu0 %v4230
  %v4285 = vpop.f32.mrf.mxu0
  %v4286 = vadd.f32 0.0, %v4285
  %v4287 = vpop.f32.mrf.mxu0
  %v4288 = vpop.f32.mrf.mxu0
  %v4289 = vadd.f32 0.0, %v4288
  %v4290 = vpop.f32.mrf.mxu0
  %4291 = vmatprep.mubr.bf16.mxu0 0
  %4292 = vmatmul.mubr.bf16.gmra.mxu0 %v4233
  %v4293 = vpop.f32.mrf.mxu0
  %v4294 = vadd.f32 0.0, %v4293
  %v4295 = vpop.f32.mrf.mxu0
  %v4296 = vpop.f32.mrf.mxu0
  %v4297 = vadd.f32 0.0, %v4296
  %v4298 = vpop.f32.mrf.mxu0
  %4299 = vdwg.mxu0
  %v4300 = vpack.c.bf16 %v4273, %v4270
  %v4301 = vpack.c.bf16 %v4281, %v4278
  %v4302 = vpack.c.bf16 %v4289, %v4286
  %v4303 = vpack.c.bf16 %v4297, %v4294
  %s4304 = scalar_lea.vmem %s7, 16
  %v4305 = vld [vmem:[%s4304] sm:$0xf]
  %v4306 = vld [vmem:[%s4304 + $0x4] sm:$0xf]
  %v4309 = vunpack.c.l.b16 %v4305
  %v4310 = vunpack.c.l.b16 %v4306
  %v4311 = vpack.c.b16 %v4310, %v4309
  %v4314 = vsel %vm4033, %v4300, 0
  %v4317 = vsel %vm4033, %v4301, 0
  %v4320 = vsel %vm4033, %v4302, 0
  %v4323 = vsel %vm4033, %v4303, 0
  %4325 = vmatprep.subr.bf16.mxu0 0
  %4326 = vmatpush1.bf16.msra.mxu0 0
  %4327 = vmatprep.subr.bf16.mxu0 0
  %4328 = vmatpush1.bf16.msra.mxu0 0
  %4329 = vmatprep.subr.bf16.mxu0 0
  %4330 = vmatpush1.bf16.msra.mxu0 0
  %4331 = vmatprep.subr.bf16.mxu0 0
  %4332 = vmatpush1.bf16.msra.mxu0 0
  %4333 = vmatprep.subr.bf16.mxu0 0
  %4334 = vmatpush1.bf16.msra.mxu0 0
  %4335 = vmatprep.subr.bf16.mxu0 0
  %4336 = vmatpush1.bf16.msra.mxu0 0
  %4337 = vmatprep.subr.bf16.mxu0 0
  %4338 = vmatpush1.bf16.msra.mxu0 0
  %4339 = vmatprep.subr.bf16.mxu0 0
  %4340 = vmatpush1.bf16.msra.mxu0 %v4311
  %4341 = vmatprep.subr.bf16.mxu0 0
  %4342 = vmatpush2.bf16.msra.mxu0 0
  %4343 = vmatprep.subr.bf16.mxu0 0
  %4344 = vmatpush2.bf16.msra.mxu0 0
  %4345 = vmatprep.subr.bf16.mxu0 0
  %4346 = vmatpush2.bf16.msra.mxu0 0
  %4347 = vmatprep.subr.bf16.mxu0 0
  %4348 = vmatpush2.bf16.msra.mxu0 0
  %4349 = vmatprep.subr.bf16.mxu0 0
  %4350 = vmatpush2.bf16.msra.mxu0 0
  %4351 = vmatprep.subr.bf16.mxu0 0
  %4352 = vmatpush2.bf16.msra.mxu0 0
  %4353 = vmatprep.subr.bf16.mxu0 0
  %4354 = vmatpush2.bf16.msra.mxu0 0
  %4355 = vmatprep.subr.bf16.mxu0 0
  %4356 = vmatpush2.bf16.msra.mxu0 0
  %4357 = vmatprep.mubr.bf16.mxu0 0
  %4358 = vmatmul.mubr.bf16.gmra.mxu0 %v4314
  %v4359 = vpop.f32.mrf.mxu0
  %v4360 = vadd.f32 0.0, %v4359
  %v4361 = vpop.f32.mrf.mxu0
  %v4362 = vpop.f32.mrf.mxu0
  %v4363 = vadd.f32 0.0, %v4362
  %v4364 = vpop.f32.mrf.mxu0
  %4365 = vmatprep.mubr.bf16.mxu0 0
  %4366 = vmatmul.mubr.bf16.gmra.mxu0 %v4317
  %v4367 = vpop.f32.mrf.mxu0
  %v4368 = vadd.f32 0.0, %v4367
  %v4369 = vpop.f32.mrf.mxu0
  %v4370 = vpop.f32.mrf.mxu0
  %v4371 = vadd.f32 0.0, %v4370
  %v4372 = vpop.f32.mrf.mxu0
  %4373 = vmatprep.mubr.bf16.mxu0 0
  %4374 = vmatmul.mubr.bf16.gmra.mxu0 %v4320
  %v4375 = vpop.f32.mrf.mxu0
  %v4376 = vadd.f32 0.0, %v4375
  %v4377 = vpop.f32.mrf.mxu0
  %v4378 = vpop.f32.mrf.mxu0
  %v4379 = vadd.f32 0.0, %v4378
  %v4380 = vpop.f32.mrf.mxu0
  %4381 = vmatprep.mubr.bf16.mxu0 0
  %4382 = vmatmul.mubr.bf16.gmra.mxu0 %v4323
  %v4383 = vpop.f32.mrf.mxu0
  %v4384 = vadd.f32 0.0, %v4383
  %v4385 = vpop.f32.mrf.mxu0
  %v4386 = vpop.f32.mrf.mxu0
  %v4387 = vadd.f32 0.0, %v4386
  %v4388 = vpop.f32.mrf.mxu0
  %4389 = vdwg.mxu0
  %v4390 = vadd.f32 %v4164, %v4360
  %v4391 = vadd.f32 %v4167, %v4363
  %v4392 = vadd.f32 %v4172, %v4368
  %v4393 = vadd.f32 %v4175, %v4371
  %v4394 = vadd.f32 %v4180, %v4376
  %v4395 = vadd.f32 %v4183, %v4379
  %v4396 = vadd.f32 %v4188, %v4384
  %v4397 = vadd.f32 %v4191, %v4387
  %s4398 = scalar_lea.vmem %s6, 96
  %v4399 = vld [vmem:[%s4398] sm:$0xf]
  %v4400 = vld [vmem:[%s4398 + $0x4] sm:$0xf]
  %v4401 = vld [vmem:[%s4398 + $0x8] sm:$0xf]
  %v4402 = vld [vmem:[%s4398 + $0xc] sm:$0xf]
  %v4403 = vld [vmem:[%s4398 + $0x10] sm:$0xf]
  %v4404 = vld [vmem:[%s4398 + $0x14] sm:$0xf]
  %v4405 = vld [vmem:[%s4398 + $0x18] sm:$0xf]
  %v4406 = vld [vmem:[%s4398 + $0x1c] sm:$0xf]
  %v4415 = vunpack.c.l.b16 %v4399
  %v4416 = vunpack.c.l.b16 %v4400
  %v4417 = vunpack.c.l.b16 %v4401
  %v4418 = vunpack.c.l.b16 %v4402
  %v4419 = vunpack.c.l.b16 %v4403
  %v4420 = vunpack.c.l.b16 %v4404
  %v4421 = vunpack.c.l.b16 %v4405
  %v4422 = vunpack.c.l.b16 %v4406
  %v4423 = vpack.c.b16 %v4416, %v4415
  %v4424 = vpack.c.b16 %v4418, %v4417
  %v4425 = vpack.c.b16 %v4420, %v4419
  %v4426 = vpack.c.b16 %v4422, %v4421
  %v4428 = vsel %vm205, %v4423, 0
  %v4431 = vsel %vm205, %v4424, 0
  %v4434 = vsel %vm205, %v4425, 0
  %v4437 = vsel %vm205, %v4426, 0
  %4439 = vmatprep.subr.bf16.mxu0 0
  %4440 = vmatpush1.bf16.msra.mxu0 0
  %4441 = vmatprep.subr.bf16.mxu0 0
  %4442 = vmatpush1.bf16.msra.mxu0 0
  %4443 = vmatprep.subr.bf16.mxu0 0
  %4444 = vmatpush1.bf16.msra.mxu0 0
  %4445 = vmatprep.subr.bf16.mxu0 0
  %4446 = vmatpush1.bf16.msra.mxu0 0
  %4447 = vmatprep.subr.bf16.mxu0 0
  %4448 = vmatpush1.bf16.msra.mxu0 %v3802
  %4449 = vmatprep.subr.bf16.mxu0 0
  %4450 = vmatpush1.bf16.msra.mxu0 %v3801
  %4451 = vmatprep.subr.bf16.mxu0 0
  %4452 = vmatpush1.bf16.msra.mxu0 %v3800
  %4453 = vmatprep.subr.bf16.mxu0 0
  %4454 = vmatpush1.bf16.msra.mxu0 %v3799
  %4455 = vmatprep.subr.bf16.mxu0 0
  %4456 = vmatpush2.bf16.msra.mxu0 0
  %4457 = vmatprep.subr.bf16.mxu0 0
  %4458 = vmatpush2.bf16.msra.mxu0 0
  %4459 = vmatprep.subr.bf16.mxu0 0
  %4460 = vmatpush2.bf16.msra.mxu0 0
  %4461 = vmatprep.subr.bf16.mxu0 0
  %4462 = vmatpush2.bf16.msra.mxu0 0
  %4463 = vmatprep.subr.bf16.mxu0 0
  %4464 = vmatpush2.bf16.msra.mxu0 0
  %4465 = vmatprep.subr.bf16.mxu0 0
  %4466 = vmatpush2.bf16.msra.mxu0 0
  %4467 = vmatprep.subr.bf16.mxu0 0
  %4468 = vmatpush2.bf16.msra.mxu0 0
  %4469 = vmatprep.subr.bf16.mxu0 0
  %4470 = vmatpush2.bf16.msra.mxu0 0
  %4471 = vmatprep.mubr.bf16.mxu0 0
  %4472 = vmatmul.mubr.bf16.gmra.mxu0 %v4428
  %v4473 = vpop.f32.mrf.mxu0
  %v4474 = vadd.f32 0.0, %v4473
  %v4475 = vpop.f32.mrf.mxu0
  %v4476 = vpop.f32.mrf.mxu0
  %v4477 = vadd.f32 0.0, %v4476
  %v4478 = vpop.f32.mrf.mxu0
  %4479 = vmatprep.mubr.bf16.mxu0 0
  %4480 = vmatmul.mubr.bf16.gmra.mxu0 %v4431
  %v4481 = vpop.f32.mrf.mxu0
  %v4482 = vadd.f32 0.0, %v4481
  %v4483 = vpop.f32.mrf.mxu0
  %v4484 = vpop.f32.mrf.mxu0
  %v4485 = vadd.f32 0.0, %v4484
  %v4486 = vpop.f32.mrf.mxu0
  %4487 = vmatprep.mubr.bf16.mxu0 0
  %4488 = vmatmul.mubr.bf16.gmra.mxu0 %v4434
  %v4489 = vpop.f32.mrf.mxu0
  %v4490 = vadd.f32 0.0, %v4489
  %v4491 = vpop.f32.mrf.mxu0
  %v4492 = vpop.f32.mrf.mxu0
  %v4493 = vadd.f32 0.0, %v4492
  %v4494 = vpop.f32.mrf.mxu0
  %4495 = vmatprep.mubr.bf16.mxu0 0
  %4496 = vmatmul.mubr.bf16.gmra.mxu0 %v4437
  %v4497 = vpop.f32.mrf.mxu0
  %v4498 = vadd.f32 0.0, %v4497
  %v4499 = vpop.f32.mrf.mxu0
  %v4500 = vpop.f32.mrf.mxu0
  %v4501 = vadd.f32 0.0, %v4500
  %v4502 = vpop.f32.mrf.mxu0
  %4503 = vdwg.mxu0
  %v4504 = vpack.c.bf16 %v4477, %v4474
  %v4505 = vpack.c.bf16 %v4485, %v4482
  %v4506 = vpack.c.bf16 %v4493, %v4490
  %v4507 = vpack.c.bf16 %v4501, %v4498
  %s4508 = scalar_lea.vmem %s7, 24
  %v4509 = vld [vmem:[%s4508] sm:$0xf]
  %v4510 = vld [vmem:[%s4508 + $0x4] sm:$0xf]
  %v4513 = vunpack.c.l.b16 %v4509
  %v4514 = vunpack.c.l.b16 %v4510
  %v4515 = vpack.c.b16 %v4514, %v4513
  %v4518 = vsel %vm4033, %v4504, 0
  %v4521 = vsel %vm4033, %v4505, 0
  %v4524 = vsel %vm4033, %v4506, 0
  %v4527 = vsel %vm4033, %v4507, 0
  %4529 = vmatprep.subr.bf16.mxu0 0
  %4530 = vmatpush1.bf16.msra.mxu0 0
  %4531 = vmatprep.subr.bf16.mxu0 0
  %4532 = vmatpush1.bf16.msra.mxu0 0
  %4533 = vmatprep.subr.bf16.mxu0 0
  %4534 = vmatpush1.bf16.msra.mxu0 0
  %4535 = vmatprep.subr.bf16.mxu0 0
  %4536 = vmatpush1.bf16.msra.mxu0 0
  %4537 = vmatprep.subr.bf16.mxu0 0
  %4538 = vmatpush1.bf16.msra.mxu0 0
  %4539 = vmatprep.subr.bf16.mxu0 0
  %4540 = vmatpush1.bf16.msra.mxu0 0
  %4541 = vmatprep.subr.bf16.mxu0 0
  %4542 = vmatpush1.bf16.msra.mxu0 0
  %4543 = vmatprep.subr.bf16.mxu0 0
  %4544 = vmatpush1.bf16.msra.mxu0 %v4515
  %4545 = vmatprep.subr.bf16.mxu0 0
  %4546 = vmatpush2.bf16.msra.mxu0 0
  %4547 = vmatprep.subr.bf16.mxu0 0
  %4548 = vmatpush2.bf16.msra.mxu0 0
  %4549 = vmatprep.subr.bf16.mxu0 0
  %4550 = vmatpush2.bf16.msra.mxu0 0
  %4551 = vmatprep.subr.bf16.mxu0 0
  %4552 = vmatpush2.bf16.msra.mxu0 0
  %4553 = vmatprep.subr.bf16.mxu0 0
  %4554 = vmatpush2.bf16.msra.mxu0 0
  %4555 = vmatprep.subr.bf16.mxu0 0
  %4556 = vmatpush2.bf16.msra.mxu0 0
  %4557 = vmatprep.subr.bf16.mxu0 0
  %4558 = vmatpush2.bf16.msra.mxu0 0
  %4559 = vmatprep.subr.bf16.mxu0 0
  %4560 = vmatpush2.bf16.msra.mxu0 0
  %4561 = vmatprep.mubr.bf16.mxu0 0
  %4562 = vmatmul.mubr.bf16.gmra.mxu0 %v4518
  %v4563 = vpop.f32.mrf.mxu0
  %v4564 = vadd.f32 0.0, %v4563
  %v4565 = vpop.f32.mrf.mxu0
  %v4566 = vpop.f32.mrf.mxu0
  %v4567 = vadd.f32 0.0, %v4566
  %v4568 = vpop.f32.mrf.mxu0
  %4569 = vmatprep.mubr.bf16.mxu0 0
  %4570 = vmatmul.mubr.bf16.gmra.mxu0 %v4521
  %v4571 = vpop.f32.mrf.mxu0
  %v4572 = vadd.f32 0.0, %v4571
  %v4573 = vpop.f32.mrf.mxu0
  %v4574 = vpop.f32.mrf.mxu0
  %v4575 = vadd.f32 0.0, %v4574
  %v4576 = vpop.f32.mrf.mxu0
  %4577 = vmatprep.mubr.bf16.mxu0 0
  %4578 = vmatmul.mubr.bf16.gmra.mxu0 %v4524
  %v4579 = vpop.f32.mrf.mxu0
  %v4580 = vadd.f32 0.0, %v4579
  %v4581 = vpop.f32.mrf.mxu0
  %v4582 = vpop.f32.mrf.mxu0
  %v4583 = vadd.f32 0.0, %v4582
  %v4584 = vpop.f32.mrf.mxu0
  %4585 = vmatprep.mubr.bf16.mxu0 0
  %4586 = vmatmul.mubr.bf16.gmra.mxu0 %v4527
  %v4587 = vpop.f32.mrf.mxu0
  %v4588 = vadd.f32 0.0, %v4587
  %v4589 = vpop.f32.mrf.mxu0
  %v4590 = vpop.f32.mrf.mxu0
  %v4591 = vadd.f32 0.0, %v4590
  %v4592 = vpop.f32.mrf.mxu0
  %4593 = vdwg.mxu0
  %v4594 = vadd.f32 %v4390, %v4564
  %v4595 = vadd.f32 %v4391, %v4567
  %v4596 = vadd.f32 %v4392, %v4572
  %v4597 = vadd.f32 %v4393, %v4575
  %v4598 = vadd.f32 %v4394, %v4580
  %v4599 = vadd.f32 %v4395, %v4583
  %v4600 = vadd.f32 %v4396, %v4588
  %v4601 = vadd.f32 %v4397, %v4591
  %s4602 = scalar_lea.vmem %s6, 128
  %v4603 = vld [vmem:[%s4602] sm:$0xf]
  %v4604 = vld [vmem:[%s4602 + $0x4] sm:$0xf]
  %v4605 = vld [vmem:[%s4602 + $0x8] sm:$0xf]
  %v4606 = vld [vmem:[%s4602 + $0xc] sm:$0xf]
  %v4607 = vld [vmem:[%s4602 + $0x10] sm:$0xf]
  %v4608 = vld [vmem:[%s4602 + $0x14] sm:$0xf]
  %v4609 = vld [vmem:[%s4602 + $0x18] sm:$0xf]
  %v4610 = vld [vmem:[%s4602 + $0x1c] sm:$0xf]
  %v4619 = vunpack.c.l.b16 %v4603
  %v4620 = vunpack.c.l.b16 %v4604
  %v4621 = vunpack.c.l.b16 %v4605
  %v4622 = vunpack.c.l.b16 %v4606
  %v4623 = vunpack.c.l.b16 %v4607
  %v4624 = vunpack.c.l.b16 %v4608
  %v4625 = vunpack.c.l.b16 %v4609
  %v4626 = vunpack.c.l.b16 %v4610
  %v4627 = vpack.c.b16 %v4620, %v4619
  %v4628 = vpack.c.b16 %v4622, %v4621
  %v4629 = vpack.c.b16 %v4624, %v4623
  %v4630 = vpack.c.b16 %v4626, %v4625
  %v4632 = vsel %vm205, %v4627, 0
  %v4635 = vsel %vm205, %v4628, 0
  %v4638 = vsel %vm205, %v4629, 0
  %v4641 = vsel %vm205, %v4630, 0
  %4643 = vmatprep.subr.bf16.mxu0 0
  %4644 = vmatpush1.bf16.msra.mxu0 0
  %4645 = vmatprep.subr.bf16.mxu0 0
  %4646 = vmatpush1.bf16.msra.mxu0 0
  %4647 = vmatprep.subr.bf16.mxu0 0
  %4648 = vmatpush1.bf16.msra.mxu0 0
  %4649 = vmatprep.subr.bf16.mxu0 0
  %4650 = vmatpush1.bf16.msra.mxu0 0
  %4651 = vmatprep.subr.bf16.mxu0 0
  %4652 = vmatpush1.bf16.msra.mxu0 %v3802
  %4653 = vmatprep.subr.bf16.mxu0 0
  %4654 = vmatpush1.bf16.msra.mxu0 %v3801
  %4655 = vmatprep.subr.bf16.mxu0 0
  %4656 = vmatpush1.bf16.msra.mxu0 %v3800
  %4657 = vmatprep.subr.bf16.mxu0 0
  %4658 = vmatpush1.bf16.msra.mxu0 %v3799
  %4659 = vmatprep.subr.bf16.mxu0 0
  %4660 = vmatpush2.bf16.msra.mxu0 0
  %4661 = vmatprep.subr.bf16.mxu0 0
  %4662 = vmatpush2.bf16.msra.mxu0 0
  %4663 = vmatprep.subr.bf16.mxu0 0
  %4664 = vmatpush2.bf16.msra.mxu0 0
  %4665 = vmatprep.subr.bf16.mxu0 0
  %4666 = vmatpush2.bf16.msra.mxu0 0
  %4667 = vmatprep.subr.bf16.mxu0 0
  %4668 = vmatpush2.bf16.msra.mxu0 0
  %4669 = vmatprep.subr.bf16.mxu0 0
  %4670 = vmatpush2.bf16.msra.mxu0 0
  %4671 = vmatprep.subr.bf16.mxu0 0
  %4672 = vmatpush2.bf16.msra.mxu0 0
  %4673 = vmatprep.subr.bf16.mxu0 0
  %4674 = vmatpush2.bf16.msra.mxu0 0
  %4675 = vmatprep.mubr.bf16.mxu0 0
  %4676 = vmatmul.mubr.bf16.gmra.mxu0 %v4632
  %v4677 = vpop.f32.mrf.mxu0
  %v4678 = vadd.f32 0.0, %v4677
  %v4679 = vpop.f32.mrf.mxu0
  %v4680 = vpop.f32.mrf.mxu0
  %v4681 = vadd.f32 0.0, %v4680
  %v4682 = vpop.f32.mrf.mxu0
  %4683 = vmatprep.mubr.bf16.mxu0 0
  %4684 = vmatmul.mubr.bf16.gmra.mxu0 %v4635
  %v4685 = vpop.f32.mrf.mxu0
  %v4686 = vadd.f32 0.0, %v4685
  %v4687 = vpop.f32.mrf.mxu0
  %v4688 = vpop.f32.mrf.mxu0
  %v4689 = vadd.f32 0.0, %v4688
  %v4690 = vpop.f32.mrf.mxu0
  %4691 = vmatprep.mubr.bf16.mxu0 0
  %4692 = vmatmul.mubr.bf16.gmra.mxu0 %v4638
  %v4693 = vpop.f32.mrf.mxu0
  %v4694 = vadd.f32 0.0, %v4693
  %v4695 = vpop.f32.mrf.mxu0
  %v4696 = vpop.f32.mrf.mxu0
  %v4697 = vadd.f32 0.0, %v4696
  %v4698 = vpop.f32.mrf.mxu0
  %4699 = vmatprep.mubr.bf16.mxu0 0
  %4700 = vmatmul.mubr.bf16.gmra.mxu0 %v4641
  %v4701 = vpop.f32.mrf.mxu0
  %v4702 = vadd.f32 0.0, %v4701
  %v4703 = vpop.f32.mrf.mxu0
  %v4704 = vpop.f32.mrf.mxu0
  %v4705 = vadd.f32 0.0, %v4704
  %v4706 = vpop.f32.mrf.mxu0
  %4707 = vdwg.mxu0
  %v4708 = vpack.c.bf16 %v4681, %v4678
  %v4709 = vpack.c.bf16 %v4689, %v4686
  %v4710 = vpack.c.bf16 %v4697, %v4694
  %v4711 = vpack.c.bf16 %v4705, %v4702
  %s4712 = scalar_lea.vmem %s7, 32
  %v4713 = vld [vmem:[%s4712] sm:$0xf]
  %v4714 = vld [vmem:[%s4712 + $0x4] sm:$0xf]
  %v4717 = vunpack.c.l.b16 %v4713
  %v4718 = vunpack.c.l.b16 %v4714
  %v4719 = vpack.c.b16 %v4718, %v4717
  %v4722 = vsel %vm4033, %v4708, 0
  %v4725 = vsel %vm4033, %v4709, 0
  %v4728 = vsel %vm4033, %v4710, 0
  %v4731 = vsel %vm4033, %v4711, 0
  %4733 = vmatprep.subr.bf16.mxu0 0
  %4734 = vmatpush1.bf16.msra.mxu0 0
  %4735 = vmatprep.subr.bf16.mxu0 0
  %4736 = vmatpush1.bf16.msra.mxu0 0
  %4737 = vmatprep.subr.bf16.mxu0 0
  %4738 = vmatpush1.bf16.msra.mxu0 0
  %4739 = vmatprep.subr.bf16.mxu0 0
  %4740 = vmatpush1.bf16.msra.mxu0 0
  %4741 = vmatprep.subr.bf16.mxu0 0
  %4742 = vmatpush1.bf16.msra.mxu0 0
  %4743 = vmatprep.subr.bf16.mxu0 0
  %4744 = vmatpush1.bf16.msra.mxu0 0
  %4745 = vmatprep.subr.bf16.mxu0 0
  %4746 = vmatpush1.bf16.msra.mxu0 0
  %4747 = vmatprep.subr.bf16.mxu0 0
  %4748 = vmatpush1.bf16.msra.mxu0 %v4719
  %4749 = vmatprep.subr.bf16.mxu0 0
  %4750 = vmatpush2.bf16.msra.mxu0 0
  %4751 = vmatprep.subr.bf16.mxu0 0
  %4752 = vmatpush2.bf16.msra.mxu0 0
  %4753 = vmatprep.subr.bf16.mxu0 0
  %4754 = vmatpush2.bf16.msra.mxu0 0
  %4755 = vmatprep.subr.bf16.mxu0 0
  %4756 = vmatpush2.bf16.msra.mxu0 0
  %4757 = vmatprep.subr.bf16.mxu0 0
  %4758 = vmatpush2.bf16.msra.mxu0 0
  %4759 = vmatprep.subr.bf16.mxu0 0
  %4760 = vmatpush2.bf16.msra.mxu0 0
  %4761 = vmatprep.subr.bf16.mxu0 0
  %4762 = vmatpush2.bf16.msra.mxu0 0
  %4763 = vmatprep.subr.bf16.mxu0 0
  %4764 = vmatpush2.bf16.msra.mxu0 0
  %4765 = vmatprep.mubr.bf16.mxu0 0
  %4766 = vmatmul.mubr.bf16.gmra.mxu0 %v4722
  %v4767 = vpop.f32.mrf.mxu0
  %v4768 = vadd.f32 0.0, %v4767
  %v4769 = vpop.f32.mrf.mxu0
  %v4770 = vpop.f32.mrf.mxu0
  %v4771 = vadd.f32 0.0, %v4770
  %v4772 = vpop.f32.mrf.mxu0
  %4773 = vmatprep.mubr.bf16.mxu0 0
  %4774 = vmatmul.mubr.bf16.gmra.mxu0 %v4725
  %v4775 = vpop.f32.mrf.mxu0
  %v4776 = vadd.f32 0.0, %v4775
  %v4777 = vpop.f32.mrf.mxu0
  %v4778 = vpop.f32.mrf.mxu0
  %v4779 = vadd.f32 0.0, %v4778
  %v4780 = vpop.f32.mrf.mxu0
  %4781 = vmatprep.mubr.bf16.mxu0 0
  %4782 = vmatmul.mubr.bf16.gmra.mxu0 %v4728
  %v4783 = vpop.f32.mrf.mxu0
  %v4784 = vadd.f32 0.0, %v4783
  %v4785 = vpop.f32.mrf.mxu0
  %v4786 = vpop.f32.mrf.mxu0
  %v4787 = vadd.f32 0.0, %v4786
  %v4788 = vpop.f32.mrf.mxu0
  %4789 = vmatprep.mubr.bf16.mxu0 0
  %4790 = vmatmul.mubr.bf16.gmra.mxu0 %v4731
  %v4791 = vpop.f32.mrf.mxu0
  %v4792 = vadd.f32 0.0, %v4791
  %v4793 = vpop.f32.mrf.mxu0
  %v4794 = vpop.f32.mrf.mxu0
  %v4795 = vadd.f32 0.0, %v4794
  %v4796 = vpop.f32.mrf.mxu0
  %4797 = vdwg.mxu0
  %v4798 = vadd.f32 %v4594, %v4768
  %v4799 = vadd.f32 %v4595, %v4771
  %v4800 = vadd.f32 %v4596, %v4776
  %v4801 = vadd.f32 %v4597, %v4779
  %v4802 = vadd.f32 %v4598, %v4784
  %v4803 = vadd.f32 %v4599, %v4787
  %v4804 = vadd.f32 %v4600, %v4792
  %v4805 = vadd.f32 %v4601, %v4795
  %s4806 = scalar_lea.vmem %s6, 160
  %v4807 = vld [vmem:[%s4806] sm:$0xf]
  %v4808 = vld [vmem:[%s4806 + $0x4] sm:$0xf]
  %v4809 = vld [vmem:[%s4806 + $0x8] sm:$0xf]
  %v4810 = vld [vmem:[%s4806 + $0xc] sm:$0xf]
  %v4811 = vld [vmem:[%s4806 + $0x10] sm:$0xf]
  %v4812 = vld [vmem:[%s4806 + $0x14] sm:$0xf]
  %v4813 = vld [vmem:[%s4806 + $0x18] sm:$0xf]
  %v4814 = vld [vmem:[%s4806 + $0x1c] sm:$0xf]
  %v4823 = vunpack.c.l.b16 %v4807
  %v4824 = vunpack.c.l.b16 %v4808
  %v4825 = vunpack.c.l.b16 %v4809
  %v4826 = vunpack.c.l.b16 %v4810
  %v4827 = vunpack.c.l.b16 %v4811
  %v4828 = vunpack.c.l.b16 %v4812
  %v4829 = vunpack.c.l.b16 %v4813
  %v4830 = vunpack.c.l.b16 %v4814
  %v4831 = vpack.c.b16 %v4824, %v4823
  %v4832 = vpack.c.b16 %v4826, %v4825
  %v4833 = vpack.c.b16 %v4828, %v4827
  %v4834 = vpack.c.b16 %v4830, %v4829
  %v4836 = vsel %vm205, %v4831, 0
  %v4839 = vsel %vm205, %v4832, 0
  %v4842 = vsel %vm205, %v4833, 0
  %v4845 = vsel %vm205, %v4834, 0
  %4847 = vmatprep.subr.bf16.mxu0 0
  %4848 = vmatpush1.bf16.msra.mxu0 0
  %4849 = vmatprep.subr.bf16.mxu0 0
  %4850 = vmatpush1.bf16.msra.mxu0 0
  %4851 = vmatprep.subr.bf16.mxu0 0
  %4852 = vmatpush1.bf16.msra.mxu0 0
  %4853 = vmatprep.subr.bf16.mxu0 0
  %4854 = vmatpush1.bf16.msra.mxu0 0
  %4855 = vmatprep.subr.bf16.mxu0 0
  %4856 = vmatpush1.bf16.msra.mxu0 %v3802
  %4857 = vmatprep.subr.bf16.mxu0 0
  %4858 = vmatpush1.bf16.msra.mxu0 %v3801
  %4859 = vmatprep.subr.bf16.mxu0 0
  %4860 = vmatpush1.bf16.msra.mxu0 %v3800
  %4861 = vmatprep.subr.bf16.mxu0 0
  %4862 = vmatpush1.bf16.msra.mxu0 %v3799
  %4863 = vmatprep.subr.bf16.mxu0 0
  %4864 = vmatpush2.bf16.msra.mxu0 0
  %4865 = vmatprep.subr.bf16.mxu0 0
  %4866 = vmatpush2.bf16.msra.mxu0 0
  %4867 = vmatprep.subr.bf16.mxu0 0
  %4868 = vmatpush2.bf16.msra.mxu0 0
  %4869 = vmatprep.subr.bf16.mxu0 0
  %4870 = vmatpush2.bf16.msra.mxu0 0
  %4871 = vmatprep.subr.bf16.mxu0 0
  %4872 = vmatpush2.bf16.msra.mxu0 0
  %4873 = vmatprep.subr.bf16.mxu0 0
  %4874 = vmatpush2.bf16.msra.mxu0 0
  %4875 = vmatprep.subr.bf16.mxu0 0
  %4876 = vmatpush2.bf16.msra.mxu0 0
  %4877 = vmatprep.subr.bf16.mxu0 0
  %4878 = vmatpush2.bf16.msra.mxu0 0
  %4879 = vmatprep.mubr.bf16.mxu0 0
  %4880 = vmatmul.mubr.bf16.gmra.mxu0 %v4836
  %v4881 = vpop.f32.mrf.mxu0
  %v4882 = vadd.f32 0.0, %v4881
  %v4883 = vpop.f32.mrf.mxu0
  %v4884 = vpop.f32.mrf.mxu0
  %v4885 = vadd.f32 0.0, %v4884
  %v4886 = vpop.f32.mrf.mxu0
  %4887 = vmatprep.mubr.bf16.mxu0 0
  %4888 = vmatmul.mubr.bf16.gmra.mxu0 %v4839
  %v4889 = vpop.f32.mrf.mxu0
  %v4890 = vadd.f32 0.0, %v4889
  %v4891 = vpop.f32.mrf.mxu0
  %v4892 = vpop.f32.mrf.mxu0
  %v4893 = vadd.f32 0.0, %v4892
  %v4894 = vpop.f32.mrf.mxu0
  %4895 = vmatprep.mubr.bf16.mxu0 0
  %4896 = vmatmul.mubr.bf16.gmra.mxu0 %v4842
  %v4897 = vpop.f32.mrf.mxu0
  %v4898 = vadd.f32 0.0, %v4897
  %v4899 = vpop.f32.mrf.mxu0
  %v4900 = vpop.f32.mrf.mxu0
  %v4901 = vadd.f32 0.0, %v4900
  %v4902 = vpop.f32.mrf.mxu0
  %4903 = vmatprep.mubr.bf16.mxu0 0
  %4904 = vmatmul.mubr.bf16.gmra.mxu0 %v4845
  %v4905 = vpop.f32.mrf.mxu0
  %v4906 = vadd.f32 0.0, %v4905
  %v4907 = vpop.f32.mrf.mxu0
  %v4908 = vpop.f32.mrf.mxu0
  %v4909 = vadd.f32 0.0, %v4908
  %v4910 = vpop.f32.mrf.mxu0
  %4911 = vdwg.mxu0
  %v4912 = vpack.c.bf16 %v4885, %v4882
  %v4913 = vpack.c.bf16 %v4893, %v4890
  %v4914 = vpack.c.bf16 %v4901, %v4898
  %v4915 = vpack.c.bf16 %v4909, %v4906
  %s4916 = scalar_lea.vmem %s7, 40
  %v4917 = vld [vmem:[%s4916] sm:$0xf]
  %v4918 = vld [vmem:[%s4916 + $0x4] sm:$0xf]
  %v4921 = vunpack.c.l.b16 %v4917
  %v4922 = vunpack.c.l.b16 %v4918
  %v4923 = vpack.c.b16 %v4922, %v4921
  %v4926 = vsel %vm4033, %v4912, 0
  %v4929 = vsel %vm4033, %v4913, 0
  %v4932 = vsel %vm4033, %v4914, 0
  %v4935 = vsel %vm4033, %v4915, 0
  %4937 = vmatprep.subr.bf16.mxu0 0
  %4938 = vmatpush1.bf16.msra.mxu0 0
  %4939 = vmatprep.subr.bf16.mxu0 0
  %4940 = vmatpush1.bf16.msra.mxu0 0
  %4941 = vmatprep.subr.bf16.mxu0 0
  %4942 = vmatpush1.bf16.msra.mxu0 0
  %4943 = vmatprep.subr.bf16.mxu0 0
  %4944 = vmatpush1.bf16.msra.mxu0 0
  %4945 = vmatprep.subr.bf16.mxu0 0
  %4946 = vmatpush1.bf16.msra.mxu0 0
  %4947 = vmatprep.subr.bf16.mxu0 0
  %4948 = vmatpush1.bf16.msra.mxu0 0
  %4949 = vmatprep.subr.bf16.mxu0 0
  %4950 = vmatpush1.bf16.msra.mxu0 0
  %4951 = vmatprep.subr.bf16.mxu0 0
  %4952 = vmatpush1.bf16.msra.mxu0 %v4923
  %4953 = vmatprep.subr.bf16.mxu0 0
  %4954 = vmatpush2.bf16.msra.mxu0 0
  %4955 = vmatprep.subr.bf16.mxu0 0
  %4956 = vmatpush2.bf16.msra.mxu0 0
  %4957 = vmatprep.subr.bf16.mxu0 0
  %4958 = vmatpush2.bf16.msra.mxu0 0
  %4959 = vmatprep.subr.bf16.mxu0 0
  %4960 = vmatpush2.bf16.msra.mxu0 0
  %4961 = vmatprep.subr.bf16.mxu0 0
  %4962 = vmatpush2.bf16.msra.mxu0 0
  %4963 = vmatprep.subr.bf16.mxu0 0
  %4964 = vmatpush2.bf16.msra.mxu0 0
  %4965 = vmatprep.subr.bf16.mxu0 0
  %4966 = vmatpush2.bf16.msra.mxu0 0
  %4967 = vmatprep.subr.bf16.mxu0 0
  %4968 = vmatpush2.bf16.msra.mxu0 0
  %4969 = vmatprep.mubr.bf16.mxu0 0
  %4970 = vmatmul.mubr.bf16.gmra.mxu0 %v4926
  %v4971 = vpop.f32.mrf.mxu0
  %v4972 = vadd.f32 0.0, %v4971
  %v4973 = vpop.f32.mrf.mxu0
  %v4974 = vpop.f32.mrf.mxu0
  %v4975 = vadd.f32 0.0, %v4974
  %v4976 = vpop.f32.mrf.mxu0
  %4977 = vmatprep.mubr.bf16.mxu0 0
  %4978 = vmatmul.mubr.bf16.gmra.mxu0 %v4929
  %v4979 = vpop.f32.mrf.mxu0
  %v4980 = vadd.f32 0.0, %v4979
  %v4981 = vpop.f32.mrf.mxu0
  %v4982 = vpop.f32.mrf.mxu0
  %v4983 = vadd.f32 0.0, %v4982
  %v4984 = vpop.f32.mrf.mxu0
  %4985 = vmatprep.mubr.bf16.mxu0 0
  %4986 = vmatmul.mubr.bf16.gmra.mxu0 %v4932
  %v4987 = vpop.f32.mrf.mxu0
  %v4988 = vadd.f32 0.0, %v4987
  %v4989 = vpop.f32.mrf.mxu0
  %v4990 = vpop.f32.mrf.mxu0
  %v4991 = vadd.f32 0.0, %v4990
  %v4992 = vpop.f32.mrf.mxu0
  %4993 = vmatprep.mubr.bf16.mxu0 0
  %4994 = vmatmul.mubr.bf16.gmra.mxu0 %v4935
  %v4995 = vpop.f32.mrf.mxu0
  %v4996 = vadd.f32 0.0, %v4995
  %v4997 = vpop.f32.mrf.mxu0
  %v4998 = vpop.f32.mrf.mxu0
  %v4999 = vadd.f32 0.0, %v4998
  %v5000 = vpop.f32.mrf.mxu0
  %5001 = vdwg.mxu0
  %v5002 = vadd.f32 %v4798, %v4972
  %v5003 = vadd.f32 %v4799, %v4975
  %v5004 = vadd.f32 %v4800, %v4980
  %v5005 = vadd.f32 %v4801, %v4983
  %v5006 = vadd.f32 %v4802, %v4988
  %v5007 = vadd.f32 %v4803, %v4991
  %v5008 = vadd.f32 %v4804, %v4996
  %v5009 = vadd.f32 %v4805, %v4999
  %s5010 = scalar_lea.vmem %s6, 192
  %v5011 = vld [vmem:[%s5010] sm:$0xf]
  %v5012 = vld [vmem:[%s5010 + $0x4] sm:$0xf]
  %v5013 = vld [vmem:[%s5010 + $0x8] sm:$0xf]
  %v5014 = vld [vmem:[%s5010 + $0xc] sm:$0xf]
  %v5015 = vld [vmem:[%s5010 + $0x10] sm:$0xf]
  %v5016 = vld [vmem:[%s5010 + $0x14] sm:$0xf]
  %v5017 = vld [vmem:[%s5010 + $0x18] sm:$0xf]
  %v5018 = vld [vmem:[%s5010 + $0x1c] sm:$0xf]
  %v5027 = vunpack.c.l.b16 %v5011
  %v5028 = vunpack.c.l.b16 %v5012
  %v5029 = vunpack.c.l.b16 %v5013
  %v5030 = vunpack.c.l.b16 %v5014
  %v5031 = vunpack.c.l.b16 %v5015
  %v5032 = vunpack.c.l.b16 %v5016
  %v5033 = vunpack.c.l.b16 %v5017
  %v5034 = vunpack.c.l.b16 %v5018
  %v5035 = vpack.c.b16 %v5028, %v5027
  %v5036 = vpack.c.b16 %v5030, %v5029
  %v5037 = vpack.c.b16 %v5032, %v5031
  %v5038 = vpack.c.b16 %v5034, %v5033
  %v5040 = vsel %vm205, %v5035, 0
  %v5043 = vsel %vm205, %v5036, 0
  %v5046 = vsel %vm205, %v5037, 0
  %v5049 = vsel %vm205, %v5038, 0
  %5051 = vmatprep.subr.bf16.mxu0 0
  %5052 = vmatpush1.bf16.msra.mxu0 0
  %5053 = vmatprep.subr.bf16.mxu0 0
  %5054 = vmatpush1.bf16.msra.mxu0 0
  %5055 = vmatprep.subr.bf16.mxu0 0
  %5056 = vmatpush1.bf16.msra.mxu0 0
  %5057 = vmatprep.subr.bf16.mxu0 0
  %5058 = vmatpush1.bf16.msra.mxu0 0
  %5059 = vmatprep.subr.bf16.mxu0 0
  %5060 = vmatpush1.bf16.msra.mxu0 %v3802
  %5061 = vmatprep.subr.bf16.mxu0 0
  %5062 = vmatpush1.bf16.msra.mxu0 %v3801
  %5063 = vmatprep.subr.bf16.mxu0 0
  %5064 = vmatpush1.bf16.msra.mxu0 %v3800
  %5065 = vmatprep.subr.bf16.mxu0 0
  %5066 = vmatpush1.bf16.msra.mxu0 %v3799
  %5067 = vmatprep.subr.bf16.mxu0 0
  %5068 = vmatpush2.bf16.msra.mxu0 0
  %5069 = vmatprep.subr.bf16.mxu0 0
  %5070 = vmatpush2.bf16.msra.mxu0 0
  %5071 = vmatprep.subr.bf16.mxu0 0
  %5072 = vmatpush2.bf16.msra.mxu0 0
  %5073 = vmatprep.subr.bf16.mxu0 0
  %5074 = vmatpush2.bf16.msra.mxu0 0
  %5075 = vmatprep.subr.bf16.mxu0 0
  %5076 = vmatpush2.bf16.msra.mxu0 0
  %5077 = vmatprep.subr.bf16.mxu0 0
  %5078 = vmatpush2.bf16.msra.mxu0 0
  %5079 = vmatprep.subr.bf16.mxu0 0
  %5080 = vmatpush2.bf16.msra.mxu0 0
  %5081 = vmatprep.subr.bf16.mxu0 0
  %5082 = vmatpush2.bf16.msra.mxu0 0
  %5083 = vmatprep.mubr.bf16.mxu0 0
  %5084 = vmatmul.mubr.bf16.gmra.mxu0 %v5040
  %v5085 = vpop.f32.mrf.mxu0
  %v5086 = vadd.f32 0.0, %v5085
  %v5087 = vpop.f32.mrf.mxu0
  %v5088 = vpop.f32.mrf.mxu0
  %v5089 = vadd.f32 0.0, %v5088
  %v5090 = vpop.f32.mrf.mxu0
  %5091 = vmatprep.mubr.bf16.mxu0 0
  %5092 = vmatmul.mubr.bf16.gmra.mxu0 %v5043
  %v5093 = vpop.f32.mrf.mxu0
  %v5094 = vadd.f32 0.0, %v5093
  %v5095 = vpop.f32.mrf.mxu0
  %v5096 = vpop.f32.mrf.mxu0
  %v5097 = vadd.f32 0.0, %v5096
  %v5098 = vpop.f32.mrf.mxu0
  %5099 = vmatprep.mubr.bf16.mxu0 0
  %5100 = vmatmul.mubr.bf16.gmra.mxu0 %v5046
  %v5101 = vpop.f32.mrf.mxu0
  %v5102 = vadd.f32 0.0, %v5101
  %v5103 = vpop.f32.mrf.mxu0
  %v5104 = vpop.f32.mrf.mxu0
  %v5105 = vadd.f32 0.0, %v5104
  %v5106 = vpop.f32.mrf.mxu0
  %5107 = vmatprep.mubr.bf16.mxu0 0
  %5108 = vmatmul.mubr.bf16.gmra.mxu0 %v5049
  %v5109 = vpop.f32.mrf.mxu0
  %v5110 = vadd.f32 0.0, %v5109
  %v5111 = vpop.f32.mrf.mxu0
  %v5112 = vpop.f32.mrf.mxu0
  %v5113 = vadd.f32 0.0, %v5112
  %v5114 = vpop.f32.mrf.mxu0
  %5115 = vdwg.mxu0
  %v5116 = vpack.c.bf16 %v5089, %v5086
  %v5117 = vpack.c.bf16 %v5097, %v5094
  %v5118 = vpack.c.bf16 %v5105, %v5102
  %v5119 = vpack.c.bf16 %v5113, %v5110
  %s5120 = scalar_lea.vmem %s7, 48
  %v5121 = vld [vmem:[%s5120] sm:$0xf]
  %v5122 = vld [vmem:[%s5120 + $0x4] sm:$0xf]
  %v5125 = vunpack.c.l.b16 %v5121
  %v5126 = vunpack.c.l.b16 %v5122
  %v5127 = vpack.c.b16 %v5126, %v5125
  %v5130 = vsel %vm4033, %v5116, 0
  %v5133 = vsel %vm4033, %v5117, 0
  %v5136 = vsel %vm4033, %v5118, 0
  %v5139 = vsel %vm4033, %v5119, 0
  %5141 = vmatprep.subr.bf16.mxu0 0
  %5142 = vmatpush1.bf16.msra.mxu0 0
  %5143 = vmatprep.subr.bf16.mxu0 0
  %5144 = vmatpush1.bf16.msra.mxu0 0
  %5145 = vmatprep.subr.bf16.mxu0 0
  %5146 = vmatpush1.bf16.msra.mxu0 0
  %5147 = vmatprep.subr.bf16.mxu0 0
  %5148 = vmatpush1.bf16.msra.mxu0 0
  %5149 = vmatprep.subr.bf16.mxu0 0
  %5150 = vmatpush1.bf16.msra.mxu0 0
  %5151 = vmatprep.subr.bf16.mxu0 0
  %5152 = vmatpush1.bf16.msra.mxu0 0
  %5153 = vmatprep.subr.bf16.mxu0 0
  %5154 = vmatpush1.bf16.msra.mxu0 0
  %5155 = vmatprep.subr.bf16.mxu0 0
  %5156 = vmatpush1.bf16.msra.mxu0 %v5127
  %5157 = vmatprep.subr.bf16.mxu0 0
  %5158 = vmatpush2.bf16.msra.mxu0 0
  %5159 = vmatprep.subr.bf16.mxu0 0
  %5160 = vmatpush2.bf16.msra.mxu0 0
  %5161 = vmatprep.subr.bf16.mxu0 0
  %5162 = vmatpush2.bf16.msra.mxu0 0
  %5163 = vmatprep.subr.bf16.mxu0 0
  %5164 = vmatpush2.bf16.msra.mxu0 0
  %5165 = vmatprep.subr.bf16.mxu0 0
  %5166 = vmatpush2.bf16.msra.mxu0 0
  %5167 = vmatprep.subr.bf16.mxu0 0
  %5168 = vmatpush2.bf16.msra.mxu0 0
  %5169 = vmatprep.subr.bf16.mxu0 0
  %5170 = vmatpush2.bf16.msra.mxu0 0
  %5171 = vmatprep.subr.bf16.mxu0 0
  %5172 = vmatpush2.bf16.msra.mxu0 0
  %5173 = vmatprep.mubr.bf16.mxu0 0
  %5174 = vmatmul.mubr.bf16.gmra.mxu0 %v5130
  %v5175 = vpop.f32.mrf.mxu0
  %v5176 = vadd.f32 0.0, %v5175
  %v5177 = vpop.f32.mrf.mxu0
  %v5178 = vpop.f32.mrf.mxu0
  %v5179 = vadd.f32 0.0, %v5178
  %v5180 = vpop.f32.mrf.mxu0
  %5181 = vmatprep.mubr.bf16.mxu0 0
  %5182 = vmatmul.mubr.bf16.gmra.mxu0 %v5133
  %v5183 = vpop.f32.mrf.mxu0
  %v5184 = vadd.f32 0.0, %v5183
  %v5185 = vpop.f32.mrf.mxu0
  %v5186 = vpop.f32.mrf.mxu0
  %v5187 = vadd.f32 0.0, %v5186
  %v5188 = vpop.f32.mrf.mxu0
  %5189 = vmatprep.mubr.bf16.mxu0 0
  %5190 = vmatmul.mubr.bf16.gmra.mxu0 %v5136
  %v5191 = vpop.f32.mrf.mxu0
  %v5192 = vadd.f32 0.0, %v5191
  %v5193 = vpop.f32.mrf.mxu0
  %v5194 = vpop.f32.mrf.mxu0
  %v5195 = vadd.f32 0.0, %v5194
  %v5196 = vpop.f32.mrf.mxu0
  %5197 = vmatprep.mubr.bf16.mxu0 0
  %5198 = vmatmul.mubr.bf16.gmra.mxu0 %v5139
  %v5199 = vpop.f32.mrf.mxu0
  %v5200 = vadd.f32 0.0, %v5199
  %v5201 = vpop.f32.mrf.mxu0
  %v5202 = vpop.f32.mrf.mxu0
  %v5203 = vadd.f32 0.0, %v5202
  %v5204 = vpop.f32.mrf.mxu0
  %5205 = vdwg.mxu0
  %v5206 = vadd.f32 %v5002, %v5176
  %v5207 = vadd.f32 %v5003, %v5179
  %v5208 = vadd.f32 %v5004, %v5184
  %v5209 = vadd.f32 %v5005, %v5187
  %v5210 = vadd.f32 %v5006, %v5192
  %v5211 = vadd.f32 %v5007, %v5195
  %v5212 = vadd.f32 %v5008, %v5200
  %v5213 = vadd.f32 %v5009, %v5203
  %s5214 = scalar_lea.vmem %s6, 224
  %v5215 = vld [vmem:[%s5214] sm:$0xf]
  %v5216 = vld [vmem:[%s5214 + $0x4] sm:$0xf]
  %v5217 = vld [vmem:[%s5214 + $0x8] sm:$0xf]
  %v5218 = vld [vmem:[%s5214 + $0xc] sm:$0xf]
  %v5219 = vld [vmem:[%s5214 + $0x10] sm:$0xf]
  %v5220 = vld [vmem:[%s5214 + $0x14] sm:$0xf]
  %v5221 = vld [vmem:[%s5214 + $0x18] sm:$0xf]
  %v5222 = vld [vmem:[%s5214 + $0x1c] sm:$0xf]
  %v5231 = vunpack.c.l.b16 %v5215
  %v5232 = vunpack.c.l.b16 %v5216
  %v5233 = vunpack.c.l.b16 %v5217
  %v5234 = vunpack.c.l.b16 %v5218
  %v5235 = vunpack.c.l.b16 %v5219
  %v5236 = vunpack.c.l.b16 %v5220
  %v5237 = vunpack.c.l.b16 %v5221
  %v5238 = vunpack.c.l.b16 %v5222
  %v5239 = vpack.c.b16 %v5232, %v5231
  %v5240 = vpack.c.b16 %v5234, %v5233
  %v5241 = vpack.c.b16 %v5236, %v5235
  %v5242 = vpack.c.b16 %v5238, %v5237
  %v5244 = vsel %vm205, %v5239, 0
  %v5247 = vsel %vm205, %v5240, 0
  %v5250 = vsel %vm205, %v5241, 0
  %v5253 = vsel %vm205, %v5242, 0
  %5255 = vmatprep.subr.bf16.mxu0 0
  %5256 = vmatpush1.bf16.msra.mxu0 0
  %5257 = vmatprep.subr.bf16.mxu0 0
  %5258 = vmatpush1.bf16.msra.mxu0 0
  %5259 = vmatprep.subr.bf16.mxu0 0
  %5260 = vmatpush1.bf16.msra.mxu0 0
  %5261 = vmatprep.subr.bf16.mxu0 0
  %5262 = vmatpush1.bf16.msra.mxu0 0
  %5263 = vmatprep.subr.bf16.mxu0 0
  %5264 = vmatpush1.bf16.msra.mxu0 %v3802
  %5265 = vmatprep.subr.bf16.mxu0 0
  %5266 = vmatpush1.bf16.msra.mxu0 %v3801
  %5267 = vmatprep.subr.bf16.mxu0 0
  %5268 = vmatpush1.bf16.msra.mxu0 %v3800
  %5269 = vmatprep.subr.bf16.mxu0 0
  %5270 = vmatpush1.bf16.msra.mxu0 %v3799
  %5271 = vmatprep.subr.bf16.mxu0 0
  %5272 = vmatpush2.bf16.msra.mxu0 0
  %5273 = vmatprep.subr.bf16.mxu0 0
  %5274 = vmatpush2.bf16.msra.mxu0 0
  %5275 = vmatprep.subr.bf16.mxu0 0
  %5276 = vmatpush2.bf16.msra.mxu0 0
  %5277 = vmatprep.subr.bf16.mxu0 0
  %5278 = vmatpush2.bf16.msra.mxu0 0
  %5279 = vmatprep.subr.bf16.mxu0 0
  %5280 = vmatpush2.bf16.msra.mxu0 0
  %5281 = vmatprep.subr.bf16.mxu0 0
  %5282 = vmatpush2.bf16.msra.mxu0 0
  %5283 = vmatprep.subr.bf16.mxu0 0
  %5284 = vmatpush2.bf16.msra.mxu0 0
  %5285 = vmatprep.subr.bf16.mxu0 0
  %5286 = vmatpush2.bf16.msra.mxu0 0
  %5287 = vmatprep.mubr.bf16.mxu0 0
  %5288 = vmatmul.mubr.bf16.gmra.mxu0 %v5244
  %v5289 = vpop.f32.mrf.mxu0
  %v5290 = vadd.f32 0.0, %v5289
  %v5291 = vpop.f32.mrf.mxu0
  %v5292 = vpop.f32.mrf.mxu0
  %v5293 = vadd.f32 0.0, %v5292
  %v5294 = vpop.f32.mrf.mxu0
  %5295 = vmatprep.mubr.bf16.mxu0 0
  %5296 = vmatmul.mubr.bf16.gmra.mxu0 %v5247
  %v5297 = vpop.f32.mrf.mxu0
  %v5298 = vadd.f32 0.0, %v5297
  %v5299 = vpop.f32.mrf.mxu0
  %v5300 = vpop.f32.mrf.mxu0
  %v5301 = vadd.f32 0.0, %v5300
  %v5302 = vpop.f32.mrf.mxu0
  %5303 = vmatprep.mubr.bf16.mxu0 0
  %5304 = vmatmul.mubr.bf16.gmra.mxu0 %v5250
  %v5305 = vpop.f32.mrf.mxu0
  %v5306 = vadd.f32 0.0, %v5305
  %v5307 = vpop.f32.mrf.mxu0
  %v5308 = vpop.f32.mrf.mxu0
  %v5309 = vadd.f32 0.0, %v5308
  %v5310 = vpop.f32.mrf.mxu0
  %5311 = vmatprep.mubr.bf16.mxu0 0
  %5312 = vmatmul.mubr.bf16.gmra.mxu0 %v5253
  %v5313 = vpop.f32.mrf.mxu0
  %v5314 = vadd.f32 0.0, %v5313
  %v5315 = vpop.f32.mrf.mxu0
  %v5316 = vpop.f32.mrf.mxu0
  %v5317 = vadd.f32 0.0, %v5316
  %v5318 = vpop.f32.mrf.mxu0
  %5319 = vdwg.mxu0
  %v5320 = vpack.c.bf16 %v5293, %v5290
  %v5321 = vpack.c.bf16 %v5301, %v5298
  %v5322 = vpack.c.bf16 %v5309, %v5306
  %v5323 = vpack.c.bf16 %v5317, %v5314
  %s5324 = scalar_lea.vmem %s7, 56
  %v5325 = vld [vmem:[%s5324] sm:$0xf]
  %v5326 = vld [vmem:[%s5324 + $0x4] sm:$0xf]
  %v5329 = vunpack.c.l.b16 %v5325
  %v5330 = vunpack.c.l.b16 %v5326
  %v5331 = vpack.c.b16 %v5330, %v5329
  %v5334 = vsel %vm4033, %v5320, 0
  %v5337 = vsel %vm4033, %v5321, 0
  %v5340 = vsel %vm4033, %v5322, 0
  %v5343 = vsel %vm4033, %v5323, 0
  %5345 = vmatprep.subr.bf16.mxu0 0
  %5346 = vmatpush1.bf16.msra.mxu0 0
  %5347 = vmatprep.subr.bf16.mxu0 0
  %5348 = vmatpush1.bf16.msra.mxu0 0
  %5349 = vmatprep.subr.bf16.mxu0 0
  %5350 = vmatpush1.bf16.msra.mxu0 0
  %5351 = vmatprep.subr.bf16.mxu0 0
  %5352 = vmatpush1.bf16.msra.mxu0 0
  %5353 = vmatprep.subr.bf16.mxu0 0
  %5354 = vmatpush1.bf16.msra.mxu0 0
  %5355 = vmatprep.subr.bf16.mxu0 0
  %5356 = vmatpush1.bf16.msra.mxu0 0
  %5357 = vmatprep.subr.bf16.mxu0 0
  %5358 = vmatpush1.bf16.msra.mxu0 0
  %5359 = vmatprep.subr.bf16.mxu0 0
  %5360 = vmatpush1.bf16.msra.mxu0 %v5331
  %5361 = vmatprep.subr.bf16.mxu0 0
  %5362 = vmatpush2.bf16.msra.mxu0 0
  %5363 = vmatprep.subr.bf16.mxu0 0
  %5364 = vmatpush2.bf16.msra.mxu0 0
  %5365 = vmatprep.subr.bf16.mxu0 0
  %5366 = vmatpush2.bf16.msra.mxu0 0
  %5367 = vmatprep.subr.bf16.mxu0 0
  %5368 = vmatpush2.bf16.msra.mxu0 0
  %5369 = vmatprep.subr.bf16.mxu0 0
  %5370 = vmatpush2.bf16.msra.mxu0 0
  %5371 = vmatprep.subr.bf16.mxu0 0
  %5372 = vmatpush2.bf16.msra.mxu0 0
  %5373 = vmatprep.subr.bf16.mxu0 0
  %5374 = vmatpush2.bf16.msra.mxu0 0
  %5375 = vmatprep.subr.bf16.mxu0 0
  %5376 = vmatpush2.bf16.msra.mxu0 0
  %5377 = vmatprep.mubr.bf16.mxu0 0
  %5378 = vmatmul.mubr.bf16.gmra.mxu0 %v5334
  %v5379 = vpop.f32.mrf.mxu0
  %v5380 = vadd.f32 0.0, %v5379
  %v5381 = vpop.f32.mrf.mxu0
  %v5382 = vpop.f32.mrf.mxu0
  %v5383 = vadd.f32 0.0, %v5382
  %v5384 = vpop.f32.mrf.mxu0
  %5385 = vmatprep.mubr.bf16.mxu0 0
  %5386 = vmatmul.mubr.bf16.gmra.mxu0 %v5337
  %v5387 = vpop.f32.mrf.mxu0
  %v5388 = vadd.f32 0.0, %v5387
  %v5389 = vpop.f32.mrf.mxu0
  %v5390 = vpop.f32.mrf.mxu0
  %v5391 = vadd.f32 0.0, %v5390
  %v5392 = vpop.f32.mrf.mxu0
  %5393 = vmatprep.mubr.bf16.mxu0 0
  %5394 = vmatmul.mubr.bf16.gmra.mxu0 %v5340
  %v5395 = vpop.f32.mrf.mxu0
  %v5396 = vadd.f32 0.0, %v5395
  %v5397 = vpop.f32.mrf.mxu0
  %v5398 = vpop.f32.mrf.mxu0
  %v5399 = vadd.f32 0.0, %v5398
  %v5400 = vpop.f32.mrf.mxu0
  %5401 = vmatprep.mubr.bf16.mxu0 0
  %5402 = vmatmul.mubr.bf16.gmra.mxu0 %v5343
  %v5403 = vpop.f32.mrf.mxu0
  %v5404 = vadd.f32 0.0, %v5403
  %v5405 = vpop.f32.mrf.mxu0
  %v5406 = vpop.f32.mrf.mxu0
  %v5407 = vadd.f32 0.0, %v5406
  %v5408 = vpop.f32.mrf.mxu0
  %5409 = vdwg.mxu0
  %v5410 = vadd.f32 %v5206, %v5380
  %v5411 = vadd.f32 %v5207, %v5383
  %v5412 = vadd.f32 %v5208, %v5388
  %v5413 = vadd.f32 %v5209, %v5391
  %v5414 = vadd.f32 %v5210, %v5396
  %v5415 = vadd.f32 %v5211, %v5399
  %v5416 = vadd.f32 %v5212, %v5404
  %v5417 = vadd.f32 %v5213, %v5407
  %s5418 = scalar_lea.vmem %s6, 256
  %v5419 = vld [vmem:[%s5418] sm:$0xf]
  %v5420 = vld [vmem:[%s5418 + $0x4] sm:$0xf]
  %v5421 = vld [vmem:[%s5418 + $0x8] sm:$0xf]
  %v5422 = vld [vmem:[%s5418 + $0xc] sm:$0xf]
  %v5423 = vld [vmem:[%s5418 + $0x10] sm:$0xf]
  %v5424 = vld [vmem:[%s5418 + $0x14] sm:$0xf]
  %v5425 = vld [vmem:[%s5418 + $0x18] sm:$0xf]
  %v5426 = vld [vmem:[%s5418 + $0x1c] sm:$0xf]
  %v5435 = vunpack.c.l.b16 %v5419
  %v5436 = vunpack.c.l.b16 %v5420
  %v5437 = vunpack.c.l.b16 %v5421
  %v5438 = vunpack.c.l.b16 %v5422
  %v5439 = vunpack.c.l.b16 %v5423
  %v5440 = vunpack.c.l.b16 %v5424
  %v5441 = vunpack.c.l.b16 %v5425
  %v5442 = vunpack.c.l.b16 %v5426
  %v5443 = vpack.c.b16 %v5436, %v5435
  %v5444 = vpack.c.b16 %v5438, %v5437
  %v5445 = vpack.c.b16 %v5440, %v5439
  %v5446 = vpack.c.b16 %v5442, %v5441
  %v5448 = vsel %vm205, %v5443, 0
  %v5451 = vsel %vm205, %v5444, 0
  %v5454 = vsel %vm205, %v5445, 0
  %v5457 = vsel %vm205, %v5446, 0
  %5459 = vmatprep.subr.bf16.mxu0 0
  %5460 = vmatpush1.bf16.msra.mxu0 0
  %5461 = vmatprep.subr.bf16.mxu0 0
  %5462 = vmatpush1.bf16.msra.mxu0 0
  %5463 = vmatprep.subr.bf16.mxu0 0
  %5464 = vmatpush1.bf16.msra.mxu0 0
  %5465 = vmatprep.subr.bf16.mxu0 0
  %5466 = vmatpush1.bf16.msra.mxu0 0
  %5467 = vmatprep.subr.bf16.mxu0 0
  %5468 = vmatpush1.bf16.msra.mxu0 %v3802
  %5469 = vmatprep.subr.bf16.mxu0 0
  %5470 = vmatpush1.bf16.msra.mxu0 %v3801
  %5471 = vmatprep.subr.bf16.mxu0 0
  %5472 = vmatpush1.bf16.msra.mxu0 %v3800
  %5473 = vmatprep.subr.bf16.mxu0 0
  %5474 = vmatpush1.bf16.msra.mxu0 %v3799
  %5475 = vmatprep.subr.bf16.mxu0 0
  %5476 = vmatpush2.bf16.msra.mxu0 0
  %5477 = vmatprep.subr.bf16.mxu0 0
  %5478 = vmatpush2.bf16.msra.mxu0 0
  %5479 = vmatprep.subr.bf16.mxu0 0
  %5480 = vmatpush2.bf16.msra.mxu0 0
  %5481 = vmatprep.subr.bf16.mxu0 0
  %5482 = vmatpush2.bf16.msra.mxu0 0
  %5483 = vmatprep.subr.bf16.mxu0 0
  %5484 = vmatpush2.bf16.msra.mxu0 0
  %5485 = vmatprep.subr.bf16.mxu0 0
  %5486 = vmatpush2.bf16.msra.mxu0 0
  %5487 = vmatprep.subr.bf16.mxu0 0
  %5488 = vmatpush2.bf16.msra.mxu0 0
  %5489 = vmatprep.subr.bf16.mxu0 0
  %5490 = vmatpush2.bf16.msra.mxu0 0
  %5491 = vmatprep.mubr.bf16.mxu0 0
  %5492 = vmatmul.mubr.bf16.gmra.mxu0 %v5448
  %v5493 = vpop.f32.mrf.mxu0
  %v5494 = vadd.f32 0.0, %v5493
  %v5495 = vpop.f32.mrf.mxu0
  %v5496 = vpop.f32.mrf.mxu0
  %v5497 = vadd.f32 0.0, %v5496
  %v5498 = vpop.f32.mrf.mxu0
  %5499 = vmatprep.mubr.bf16.mxu0 0
  %5500 = vmatmul.mubr.bf16.gmra.mxu0 %v5451
  %v5501 = vpop.f32.mrf.mxu0
  %v5502 = vadd.f32 0.0, %v5501
  %v5503 = vpop.f32.mrf.mxu0
  %v5504 = vpop.f32.mrf.mxu0
  %v5505 = vadd.f32 0.0, %v5504
  %v5506 = vpop.f32.mrf.mxu0
  %5507 = vmatprep.mubr.bf16.mxu0 0
  %5508 = vmatmul.mubr.bf16.gmra.mxu0 %v5454
  %v5509 = vpop.f32.mrf.mxu0
  %v5510 = vadd.f32 0.0, %v5509
  %v5511 = vpop.f32.mrf.mxu0
  %v5512 = vpop.f32.mrf.mxu0
  %v5513 = vadd.f32 0.0, %v5512
  %v5514 = vpop.f32.mrf.mxu0
  %5515 = vmatprep.mubr.bf16.mxu0 0
  %5516 = vmatmul.mubr.bf16.gmra.mxu0 %v5457
  %v5517 = vpop.f32.mrf.mxu0
  %v5518 = vadd.f32 0.0, %v5517
  %v5519 = vpop.f32.mrf.mxu0
  %v5520 = vpop.f32.mrf.mxu0
  %v5521 = vadd.f32 0.0, %v5520
  %v5522 = vpop.f32.mrf.mxu0
  %5523 = vdwg.mxu0
  %v5524 = vpack.c.bf16 %v5497, %v5494
  %v5525 = vpack.c.bf16 %v5505, %v5502
  %v5526 = vpack.c.bf16 %v5513, %v5510
  %v5527 = vpack.c.bf16 %v5521, %v5518
  %s5528 = scalar_lea.vmem %s7, 64
  %v5529 = vld [vmem:[%s5528] sm:$0xf]
  %v5530 = vld [vmem:[%s5528 + $0x4] sm:$0xf]
  %v5533 = vunpack.c.l.b16 %v5529
  %v5534 = vunpack.c.l.b16 %v5530
  %v5535 = vpack.c.b16 %v5534, %v5533
  %v5538 = vsel %vm4033, %v5524, 0
  %v5541 = vsel %vm4033, %v5525, 0
  %v5544 = vsel %vm4033, %v5526, 0
  %v5547 = vsel %vm4033, %v5527, 0
  %5549 = vmatprep.subr.bf16.mxu0 0
  %5550 = vmatpush1.bf16.msra.mxu0 0
  %5551 = vmatprep.subr.bf16.mxu0 0
  %5552 = vmatpush1.bf16.msra.mxu0 0
  %5553 = vmatprep.subr.bf16.mxu0 0
  %5554 = vmatpush1.bf16.msra.mxu0 0
  %5555 = vmatprep.subr.bf16.mxu0 0
  %5556 = vmatpush1.bf16.msra.mxu0 0
  %5557 = vmatprep.subr.bf16.mxu0 0
  %5558 = vmatpush1.bf16.msra.mxu0 0
  %5559 = vmatprep.subr.bf16.mxu0 0
  %5560 = vmatpush1.bf16.msra.mxu0 0
  %5561 = vmatprep.subr.bf16.mxu0 0
  %5562 = vmatpush1.bf16.msra.mxu0 0
  %5563 = vmatprep.subr.bf16.mxu0 0
  %5564 = vmatpush1.bf16.msra.mxu0 %v5535
  %5565 = vmatprep.subr.bf16.mxu0 0
  %5566 = vmatpush2.bf16.msra.mxu0 0
  %5567 = vmatprep.subr.bf16.mxu0 0
  %5568 = vmatpush2.bf16.msra.mxu0 0
  %5569 = vmatprep.subr.bf16.mxu0 0
  %5570 = vmatpush2.bf16.msra.mxu0 0
  %5571 = vmatprep.subr.bf16.mxu0 0
  %5572 = vmatpush2.bf16.msra.mxu0 0
  %5573 = vmatprep.subr.bf16.mxu0 0
  %5574 = vmatpush2.bf16.msra.mxu0 0
  %5575 = vmatprep.subr.bf16.mxu0 0
  %5576 = vmatpush2.bf16.msra.mxu0 0
  %5577 = vmatprep.subr.bf16.mxu0 0
  %5578 = vmatpush2.bf16.msra.mxu0 0
  %5579 = vmatprep.subr.bf16.mxu0 0
  %5580 = vmatpush2.bf16.msra.mxu0 0
  %5581 = vmatprep.mubr.bf16.mxu0 0
  %5582 = vmatmul.mubr.bf16.gmra.mxu0 %v5538
  %v5583 = vpop.f32.mrf.mxu0
  %v5584 = vadd.f32 0.0, %v5583
  %v5585 = vpop.f32.mrf.mxu0
  %v5586 = vpop.f32.mrf.mxu0
  %v5587 = vadd.f32 0.0, %v5586
  %v5588 = vpop.f32.mrf.mxu0
  %5589 = vmatprep.mubr.bf16.mxu0 0
  %5590 = vmatmul.mubr.bf16.gmra.mxu0 %v5541
  %v5591 = vpop.f32.mrf.mxu0
  %v5592 = vadd.f32 0.0, %v5591
  %v5593 = vpop.f32.mrf.mxu0
  %v5594 = vpop.f32.mrf.mxu0
  %v5595 = vadd.f32 0.0, %v5594
  %v5596 = vpop.f32.mrf.mxu0
  %5597 = vmatprep.mubr.bf16.mxu0 0
  %5598 = vmatmul.mubr.bf16.gmra.mxu0 %v5544
  %v5599 = vpop.f32.mrf.mxu0
  %v5600 = vadd.f32 0.0, %v5599
  %v5601 = vpop.f32.mrf.mxu0
  %v5602 = vpop.f32.mrf.mxu0
  %v5603 = vadd.f32 0.0, %v5602
  %v5604 = vpop.f32.mrf.mxu0
  %5605 = vmatprep.mubr.bf16.mxu0 0
  %5606 = vmatmul.mubr.bf16.gmra.mxu0 %v5547
  %v5607 = vpop.f32.mrf.mxu0
  %v5608 = vadd.f32 0.0, %v5607
  %v5609 = vpop.f32.mrf.mxu0
  %v5610 = vpop.f32.mrf.mxu0
  %v5611 = vadd.f32 0.0, %v5610
  %v5612 = vpop.f32.mrf.mxu0
  %5613 = vdwg.mxu0
  %v5614 = vadd.f32 %v5410, %v5584
  %v5615 = vadd.f32 %v5411, %v5587
  %v5616 = vadd.f32 %v5412, %v5592
  %v5617 = vadd.f32 %v5413, %v5595
  %v5618 = vadd.f32 %v5414, %v5600
  %v5619 = vadd.f32 %v5415, %v5603
  %v5620 = vadd.f32 %v5416, %v5608
  %v5621 = vadd.f32 %v5417, %v5611
  %v5623 = vlaneseq
  %v5624 = vshrl.u32 %v5623, 7
  %v5625 = vsub.s32 0, %v5624
  %v5626 = vrot.slane %v3798, %v5625
  %v5628 = vadd.f32 %v5614, %v5626
  %v5629 = vadd.f32 %v5615, %v5626
  %v5630 = vadd.f32 %v5616, %v5626
  %v5631 = vadd.f32 %v5617, %v5626
  %v5632 = vadd.f32 %v5618, %v5626
  %v5633 = vadd.f32 %v5619, %v5626
  %v5634 = vadd.f32 %v5620, %v5626
  %v5635 = vadd.f32 %v5621, %v5626
  %v5636 = vmax.f32 %v5628, 0.0
  %v5637 = vmax.f32 %v5629, 0.0
  %v5638 = vmax.f32 %v5630, 0.0
  %v5639 = vmax.f32 %v5631, 0.0
  %v5640 = vmax.f32 %v5632, 0.0
  %v5641 = vmax.f32 %v5633, 0.0
  %v5642 = vmax.f32 %v5634, 0.0
  %v5643 = vmax.f32 %v5635, 0.0
  %v5644 = vpack.c.bf16 %v5637, %v5636
  %v5645 = vpack.c.bf16 %v5639, %v5638
  %v5646 = vpack.c.bf16 %v5641, %v5640
  %v5647 = vpack.c.bf16 %v5643, %v5642
  %5648 = vmatprep.subr.bf16.mxu0 0
  %5649 = vmatpush1.bf16.msra.mxu0 0
  %5650 = vmatprep.subr.bf16.mxu0 0
  %5651 = vmatpush1.bf16.msra.mxu0 0
  %5652 = vmatprep.subr.bf16.mxu0 0
  %5653 = vmatpush1.bf16.msra.mxu0 0
  %5654 = vmatprep.subr.bf16.mxu0 0
  %5655 = vmatpush1.bf16.msra.mxu0 0
  %5656 = vmatprep.subr.bf16.mxu0 0
  %5657 = vmatpush1.bf16.msra.mxu0 %v5647
  %5658 = vmatprep.subr.bf16.mxu0 0
  %5659 = vmatpush1.bf16.msra.mxu0 %v5646
  %5660 = vmatprep.subr.bf16.mxu0 0
  %5661 = vmatpush1.bf16.msra.mxu0 %v5645
  %5662 = vmatprep.subr.bf16.mxu0 0
  %5663 = vmatpush1.bf16.msra.mxu0 %v5644
  %5664 = vmatprep.subr.bf16.mxu0 0
  %5665 = vmatpush2.bf16.msra.mxu0 0
  %5666 = vmatprep.subr.bf16.mxu0 0
  %5667 = vmatpush2.bf16.msra.mxu0 0
  %5668 = vmatprep.subr.bf16.mxu0 0
  %5669 = vmatpush2.bf16.msra.mxu0 0
  %5670 = vmatprep.subr.bf16.mxu0 0
  %5671 = vmatpush2.bf16.msra.mxu0 0
  %5672 = vmatprep.subr.bf16.mxu0 0
  %5673 = vmatpush2.bf16.msra.mxu0 0
  %5674 = vmatprep.subr.bf16.mxu0 0
  %5675 = vmatpush2.bf16.msra.mxu0 0
  %5676 = vmatprep.subr.bf16.mxu0 0
  %5677 = vmatpush2.bf16.msra.mxu0 0
  %5678 = vmatprep.subr.bf16.mxu0 0
  %5679 = vmatpush2.bf16.msra.mxu0 0
  %5680 = vmatprep.mubr.bf16.mxu0 0
  %5681 = vmatmul.mubr.bf16.gmra.mxu0 %v3832
  %v5682 = vpop.f32.mrf.mxu0
  %v5683 = vadd.f32 0.0, %v5682
  %v5684 = vpop.f32.mrf.mxu0
  %v5685 = vpop.f32.mrf.mxu0
  %v5686 = vadd.f32 0.0, %v5685
  %v5687 = vpop.f32.mrf.mxu0
  %5688 = vmatprep.mubr.bf16.mxu0 0
  %5689 = vmatmul.mubr.bf16.gmra.mxu0 %v3835
  %v5690 = vpop.f32.mrf.mxu0
  %v5691 = vadd.f32 0.0, %v5690
  %v5692 = vpop.f32.mrf.mxu0
  %v5693 = vpop.f32.mrf.mxu0
  %v5694 = vadd.f32 0.0, %v5693
  %v5695 = vpop.f32.mrf.mxu0
  %5696 = vmatprep.mubr.bf16.mxu0 0
  %5697 = vmatmul.mubr.bf16.gmra.mxu0 %v3838
  %v5698 = vpop.f32.mrf.mxu0
  %v5699 = vadd.f32 0.0, %v5698
  %v5700 = vpop.f32.mrf.mxu0
  %v5701 = vpop.f32.mrf.mxu0
  %v5702 = vadd.f32 0.0, %v5701
  %v5703 = vpop.f32.mrf.mxu0
  %5704 = vmatprep.mubr.bf16.mxu0 0
  %5705 = vmatmul.mubr.bf16.gmra.mxu0 %v3841
  %v5706 = vpop.f32.mrf.mxu0
  %v5707 = vadd.f32 0.0, %v5706
  %v5708 = vpop.f32.mrf.mxu0
  %v5709 = vpop.f32.mrf.mxu0
  %v5710 = vadd.f32 0.0, %v5709
  %v5711 = vpop.f32.mrf.mxu0
  %5712 = vdwg.mxu0
  %v5713 = vpack.c.bf16 %v5686, %v5683
  %v5714 = vpack.c.bf16 %v5694, %v5691
  %v5715 = vpack.c.bf16 %v5702, %v5699
  %v5716 = vpack.c.bf16 %v5710, %v5707
  %v5717 = vld [vmem:[%s9] sm:$0xf]
  %v5718 = vld [vmem:[%s9 + $0x4] sm:$0xf]
  %5719 = vmatprep.subr.bf16.mxu0 0
  %5720 = vmatpush1.bf16.msra.mxu0 0
  %5721 = vmatprep.subr.bf16.mxu0 0
  %5722 = vmatpush1.bf16.msra.mxu0 0
  %5723 = vmatprep.subr.bf16.mxu0 0
  %5724 = vmatpush1.bf16.msra.mxu0 0
  %5725 = vmatprep.subr.bf16.mxu0 0
  %5726 = vmatpush1.bf16.msra.mxu0 0
  %5727 = vmatprep.subr.bf16.mxu0 0
  %5728 = vmatpush1.bf16.msra.mxu0 %v5647
  %5729 = vmatprep.subr.bf16.mxu0 0
  %5730 = vmatpush1.bf16.msra.mxu0 %v5646
  %5731 = vmatprep.subr.bf16.mxu0 0
  %5732 = vmatpush1.bf16.msra.mxu0 %v5645
  %5733 = vmatprep.subr.bf16.mxu0 0
  %5734 = vmatpush1.bf16.msra.mxu0 %v5644
  %5735 = vmatprep.subr.bf16.mxu0 0
  %5736 = vmatpush2.bf16.msra.mxu0 0
  %5737 = vmatprep.subr.bf16.mxu0 0
  %5738 = vmatpush2.bf16.msra.mxu0 0
  %5739 = vmatprep.subr.bf16.mxu0 0
  %5740 = vmatpush2.bf16.msra.mxu0 0
  %5741 = vmatprep.subr.bf16.mxu0 0
  %5742 = vmatpush2.bf16.msra.mxu0 0
  %5743 = vmatprep.subr.bf16.mxu0 0
  %5744 = vmatpush2.bf16.msra.mxu0 0
  %5745 = vmatprep.subr.bf16.mxu0 0
  %5746 = vmatpush2.bf16.msra.mxu0 0
  %5747 = vmatprep.subr.bf16.mxu0 0
  %5748 = vmatpush2.bf16.msra.mxu0 0
  %5749 = vmatprep.subr.bf16.mxu0 0
  %5750 = vmatpush2.bf16.msra.mxu0 0
  %5751 = vmatprep.mubr.bf16.mxu0 0
  %5752 = vmatmul.mubr.bf16.gmra.mxu0 %v3944
  %v5753 = vpop.f32.mrf.mxu0
  %v5754 = vadd.f32 0.0, %v5753
  %v5755 = vpop.f32.mrf.mxu0
  %v5756 = vpop.f32.mrf.mxu0
  %v5757 = vadd.f32 0.0, %v5756
  %v5758 = vpop.f32.mrf.mxu0
  %5759 = vmatprep.mubr.bf16.mxu0 0
  %5760 = vmatmul.mubr.bf16.gmra.mxu0 %v3947
  %v5761 = vpop.f32.mrf.mxu0
  %v5762 = vadd.f32 0.0, %v5761
  %v5763 = vpop.f32.mrf.mxu0
  %v5764 = vpop.f32.mrf.mxu0
  %v5765 = vadd.f32 0.0, %v5764
  %v5766 = vpop.f32.mrf.mxu0
  %5767 = vmatprep.mubr.bf16.mxu0 0
  %5768 = vmatmul.mubr.bf16.gmra.mxu0 %v3950
  %v5769 = vpop.f32.mrf.mxu0
  %v5770 = vadd.f32 0.0, %v5769
  %v5771 = vpop.f32.mrf.mxu0
  %v5772 = vpop.f32.mrf.mxu0
  %v5773 = vadd.f32 0.0, %v5772
  %v5774 = vpop.f32.mrf.mxu0
  %5775 = vmatprep.mubr.bf16.mxu0 0
  %5776 = vmatmul.mubr.bf16.gmra.mxu0 %v3953
  %v5777 = vpop.f32.mrf.mxu0
  %v5778 = vadd.f32 0.0, %v5777
  %v5779 = vpop.f32.mrf.mxu0
  %v5780 = vpop.f32.mrf.mxu0
  %v5781 = vadd.f32 0.0, %v5780
  %v5782 = vpop.f32.mrf.mxu0
  %5783 = vdwg.mxu0
  %v5784 = vpack.c.bf16 %v5757, %v5754
  %v5785 = vpack.c.bf16 %v5765, %v5762
  %v5786 = vpack.c.bf16 %v5773, %v5770
  %v5787 = vpack.c.bf16 %v5781, %v5778
  %s5788 = scalar_lea.vmem %s9, 8
  %v5789 = vld [vmem:[%s5788] sm:$0xf]
  %v5790 = vld [vmem:[%s5788 + $0x4] sm:$0xf]
  %v5793 = vunpack.c.l.b16 %v5789
  %v5794 = vunpack.c.l.b16 %v5790
  %v5795 = vpack.c.b16 %v5794, %v5793
  %v5798 = vsel %vm4033, %v5784, 0
  %v5801 = vsel %vm4033, %v5785, 0
  %v5804 = vsel %vm4033, %v5786, 0
  %v5807 = vsel %vm4033, %v5787, 0
  %5809 = vmatprep.subr.bf16.mxu0 0
  %5810 = vmatpush1.bf16.msra.mxu0 0
  %5811 = vmatprep.subr.bf16.mxu0 0
  %5812 = vmatpush1.bf16.msra.mxu0 0
  %5813 = vmatprep.subr.bf16.mxu0 0
  %5814 = vmatpush1.bf16.msra.mxu0 0
  %5815 = vmatprep.subr.bf16.mxu0 0
  %5816 = vmatpush1.bf16.msra.mxu0 0
  %5817 = vmatprep.subr.bf16.mxu0 0
  %5818 = vmatpush1.bf16.msra.mxu0 0
  %5819 = vmatprep.subr.bf16.mxu0 0
  %5820 = vmatpush1.bf16.msra.mxu0 0
  %5821 = vmatprep.subr.bf16.mxu0 0
  %5822 = vmatpush1.bf16.msra.mxu0 0
  %5823 = vmatprep.subr.bf16.mxu0 0
  %5824 = vmatpush1.bf16.msra.mxu0 %v5795
  %5825 = vmatprep.subr.bf16.mxu0 0
  %5826 = vmatpush2.bf16.msra.mxu0 0
  %5827 = vmatprep.subr.bf16.mxu0 0
  %5828 = vmatpush2.bf16.msra.mxu0 0
  %5829 = vmatprep.subr.bf16.mxu0 0
  %5830 = vmatpush2.bf16.msra.mxu0 0
  %5831 = vmatprep.subr.bf16.mxu0 0
  %5832 = vmatpush2.bf16.msra.mxu0 0
  %5833 = vmatprep.subr.bf16.mxu0 0
  %5834 = vmatpush2.bf16.msra.mxu0 0
  %5835 = vmatprep.subr.bf16.mxu0 0
  %5836 = vmatpush2.bf16.msra.mxu0 0
  %5837 = vmatprep.subr.bf16.mxu0 0
  %5838 = vmatpush2.bf16.msra.mxu0 0
  %5839 = vmatprep.subr.bf16.mxu0 0
  %5840 = vmatpush2.bf16.msra.mxu0 0
  %5841 = vmatprep.mubr.bf16.mxu0 0
  %5842 = vmatmul.mubr.bf16.gmra.mxu0 %v5798
  %v5843 = vpop.f32.mrf.mxu0
  %v5844 = vadd.f32 0.0, %v5843
  %v5845 = vpop.f32.mrf.mxu0
  %v5846 = vpop.f32.mrf.mxu0
  %v5847 = vadd.f32 0.0, %v5846
  %v5848 = vpop.f32.mrf.mxu0
  %5849 = vmatprep.mubr.bf16.mxu0 0
  %5850 = vmatmul.mubr.bf16.gmra.mxu0 %v5801
  %v5851 = vpop.f32.mrf.mxu0
  %v5852 = vadd.f32 0.0, %v5851
  %v5853 = vpop.f32.mrf.mxu0
  %v5854 = vpop.f32.mrf.mxu0
  %v5855 = vadd.f32 0.0, %v5854
  %v5856 = vpop.f32.mrf.mxu0
  %5857 = vmatprep.mubr.bf16.mxu0 0
  %5858 = vmatmul.mubr.bf16.gmra.mxu0 %v5804
  %v5859 = vpop.f32.mrf.mxu0
  %v5860 = vadd.f32 0.0, %v5859
  %v5861 = vpop.f32.mrf.mxu0
  %v5862 = vpop.f32.mrf.mxu0
  %v5863 = vadd.f32 0.0, %v5862
  %v5864 = vpop.f32.mrf.mxu0
  %5865 = vmatprep.mubr.bf16.mxu0 0
  %5866 = vmatmul.mubr.bf16.gmra.mxu0 %v5807
  %v5867 = vpop.f32.mrf.mxu0
  %v5868 = vadd.f32 0.0, %v5867
  %v5869 = vpop.f32.mrf.mxu0
  %v5870 = vpop.f32.mrf.mxu0
  %v5871 = vadd.f32 0.0, %v5870
  %v5872 = vpop.f32.mrf.mxu0
  %5873 = vdwg.mxu0
  %v5876 = vunpack.c.l.b16 %v5717
  %v5877 = vunpack.c.l.b16 %v5718
  %v5878 = vpack.c.b16 %v5877, %v5876
  %v5881 = vsel %vm4033, %v5713, 0
  %v5884 = vsel %vm4033, %v5714, 0
  %v5887 = vsel %vm4033, %v5715, 0
  %v5890 = vsel %vm4033, %v5716, 0
  %5892 = vmatprep.subr.bf16.mxu0 0
  %5893 = vmatpush1.bf16.msra.mxu0 0
  %5894 = vmatprep.subr.bf16.mxu0 0
  %5895 = vmatpush1.bf16.msra.mxu0 0
  %5896 = vmatprep.subr.bf16.mxu0 0
  %5897 = vmatpush1.bf16.msra.mxu0 0
  %5898 = vmatprep.subr.bf16.mxu0 0
  %5899 = vmatpush1.bf16.msra.mxu0 0
  %5900 = vmatprep.subr.bf16.mxu0 0
  %5901 = vmatpush1.bf16.msra.mxu0 0
  %5902 = vmatprep.subr.bf16.mxu0 0
  %5903 = vmatpush1.bf16.msra.mxu0 0
  %5904 = vmatprep.subr.bf16.mxu0 0
  %5905 = vmatpush1.bf16.msra.mxu0 0
  %5906 = vmatprep.subr.bf16.mxu0 0
  %5907 = vmatpush1.bf16.msra.mxu0 %v5878
  %5908 = vmatprep.subr.bf16.mxu0 0
  %5909 = vmatpush2.bf16.msra.mxu0 0
  %5910 = vmatprep.subr.bf16.mxu0 0
  %5911 = vmatpush2.bf16.msra.mxu0 0
  %5912 = vmatprep.subr.bf16.mxu0 0
  %5913 = vmatpush2.bf16.msra.mxu0 0
  %5914 = vmatprep.subr.bf16.mxu0 0
  %5915 = vmatpush2.bf16.msra.mxu0 0
  %5916 = vmatprep.subr.bf16.mxu0 0
  %5917 = vmatpush2.bf16.msra.mxu0 0
  %5918 = vmatprep.subr.bf16.mxu0 0
  %5919 = vmatpush2.bf16.msra.mxu0 0
  %5920 = vmatprep.subr.bf16.mxu0 0
  %5921 = vmatpush2.bf16.msra.mxu0 0
  %5922 = vmatprep.subr.bf16.mxu0 0
  %5923 = vmatpush2.bf16.msra.mxu0 0
  %5924 = vmatprep.mubr.bf16.mxu0 0
  %5925 = vmatmul.mubr.bf16.gmra.mxu0 %v5881
  %v5926 = vpop.f32.mrf.mxu0
  %v5927 = vadd.f32 %v5844, %v5926
  %v5928 = vpop.f32.mrf.mxu0
  %v5929 = vpop.f32.mrf.mxu0
  %v5930 = vadd.f32 %v5847, %v5929
  %v5931 = vpop.f32.mrf.mxu0
  %5932 = vmatprep.mubr.bf16.mxu0 0
  %5933 = vmatmul.mubr.bf16.gmra.mxu0 %v5884
  %v5934 = vpop.f32.mrf.mxu0
  %v5935 = vadd.f32 %v5852, %v5934
  %v5936 = vpop.f32.mrf.mxu0
  %v5937 = vpop.f32.mrf.mxu0
  %v5938 = vadd.f32 %v5855, %v5937
  %v5939 = vpop.f32.mrf.mxu0
  %5940 = vmatprep.mubr.bf16.mxu0 0
  %5941 = vmatmul.mubr.bf16.gmra.mxu0 %v5887
  %v5942 = vpop.f32.mrf.mxu0
  %v5943 = vadd.f32 %v5860, %v5942
  %v5944 = vpop.f32.mrf.mxu0
  %v5945 = vpop.f32.mrf.mxu0
  %v5946 = vadd.f32 %v5863, %v5945
  %v5947 = vpop.f32.mrf.mxu0
  %5948 = vmatprep.mubr.bf16.mxu0 0
  %5949 = vmatmul.mubr.bf16.gmra.mxu0 %v5890
  %v5950 = vpop.f32.mrf.mxu0
  %v5951 = vadd.f32 %v5868, %v5950
  %v5952 = vpop.f32.mrf.mxu0
  %v5953 = vpop.f32.mrf.mxu0
  %v5954 = vadd.f32 %v5871, %v5953
  %v5955 = vpop.f32.mrf.mxu0
  %5956 = vdwg.mxu0
  %5957 = vmatprep.subr.bf16.mxu0 0
  %5958 = vmatpush1.bf16.msra.mxu0 0
  %5959 = vmatprep.subr.bf16.mxu0 0
  %5960 = vmatpush1.bf16.msra.mxu0 0
  %5961 = vmatprep.subr.bf16.mxu0 0
  %5962 = vmatpush1.bf16.msra.mxu0 0
  %5963 = vmatprep.subr.bf16.mxu0 0
  %5964 = vmatpush1.bf16.msra.mxu0 0
  %5965 = vmatprep.subr.bf16.mxu0 0
  %5966 = vmatpush1.bf16.msra.mxu0 %v5647
  %5967 = vmatprep.subr.bf16.mxu0 0
  %5968 = vmatpush1.bf16.msra.mxu0 %v5646
  %5969 = vmatprep.subr.bf16.mxu0 0
  %5970 = vmatpush1.bf16.msra.mxu0 %v5645
  %5971 = vmatprep.subr.bf16.mxu0 0
  %5972 = vmatpush1.bf16.msra.mxu0 %v5644
  %5973 = vmatprep.subr.bf16.mxu0 0
  %5974 = vmatpush2.bf16.msra.mxu0 0
  %5975 = vmatprep.subr.bf16.mxu0 0
  %5976 = vmatpush2.bf16.msra.mxu0 0
  %5977 = vmatprep.subr.bf16.mxu0 0
  %5978 = vmatpush2.bf16.msra.mxu0 0
  %5979 = vmatprep.subr.bf16.mxu0 0
  %5980 = vmatpush2.bf16.msra.mxu0 0
  %5981 = vmatprep.subr.bf16.mxu0 0
  %5982 = vmatpush2.bf16.msra.mxu0 0
  %5983 = vmatprep.subr.bf16.mxu0 0
  %5984 = vmatpush2.bf16.msra.mxu0 0
  %5985 = vmatprep.subr.bf16.mxu0 0
  %5986 = vmatpush2.bf16.msra.mxu0 0
  %5987 = vmatprep.subr.bf16.mxu0 0
  %5988 = vmatpush2.bf16.msra.mxu0 0
  %5989 = vmatprep.mubr.bf16.mxu0 0
  %5990 = vmatmul.mubr.bf16.gmra.mxu0 %v4224
  %v5991 = vpop.f32.mrf.mxu0
  %v5992 = vadd.f32 0.0, %v5991
  %v5993 = vpop.f32.mrf.mxu0
  %v5994 = vpop.f32.mrf.mxu0
  %v5995 = vadd.f32 0.0, %v5994
  %v5996 = vpop.f32.mrf.mxu0
  %5997 = vmatprep.mubr.bf16.mxu0 0
  %5998 = vmatmul.mubr.bf16.gmra.mxu0 %v4227
  %v5999 = vpop.f32.mrf.mxu0
  %v6000 = vadd.f32 0.0, %v5999
  %v6001 = vpop.f32.mrf.mxu0
  %v6002 = vpop.f32.mrf.mxu0
  %v6003 = vadd.f32 0.0, %v6002
  %v6004 = vpop.f32.mrf.mxu0
  %6005 = vmatprep.mubr.bf16.mxu0 0
  %6006 = vmatmul.mubr.bf16.gmra.mxu0 %v4230
  %v6007 = vpop.f32.mrf.mxu0
  %v6008 = vadd.f32 0.0, %v6007
  %v6009 = vpop.f32.mrf.mxu0
  %v6010 = vpop.f32.mrf.mxu0
  %v6011 = vadd.f32 0.0, %v6010
  %v6012 = vpop.f32.mrf.mxu0
  %6013 = vmatprep.mubr.bf16.mxu0 0
  %6014 = vmatmul.mubr.bf16.gmra.mxu0 %v4233
  %v6015 = vpop.f32.mrf.mxu0
  %v6016 = vadd.f32 0.0, %v6015
  %v6017 = vpop.f32.mrf.mxu0
  %v6018 = vpop.f32.mrf.mxu0
  %v6019 = vadd.f32 0.0, %v6018
  %v6020 = vpop.f32.mrf.mxu0
  %6021 = vdwg.mxu0
  %v6022 = vpack.c.bf16 %v5995, %v5992
  %v6023 = vpack.c.bf16 %v6003, %v6000
  %v6024 = vpack.c.bf16 %v6011, %v6008
  %v6025 = vpack.c.bf16 %v6019, %v6016
  %s6026 = scalar_lea.vmem %s9, 16
  %v6027 = vld [vmem:[%s6026] sm:$0xf]
  %v6028 = vld [vmem:[%s6026 + $0x4] sm:$0xf]
  %v6031 = vunpack.c.l.b16 %v6027
  %v6032 = vunpack.c.l.b16 %v6028
  %v6033 = vpack.c.b16 %v6032, %v6031
  %v6036 = vsel %vm4033, %v6022, 0
  %v6039 = vsel %vm4033, %v6023, 0
  %v6042 = vsel %vm4033, %v6024, 0
  %v6045 = vsel %vm4033, %v6025, 0
  %6047 = vmatprep.subr.bf16.mxu0 0
  %6048 = vmatpush1.bf16.msra.mxu0 0
  %6049 = vmatprep.subr.bf16.mxu0 0
  %6050 = vmatpush1.bf16.msra.mxu0 0
  %6051 = vmatprep.subr.bf16.mxu0 0
  %6052 = vmatpush1.bf16.msra.mxu0 0
  %6053 = vmatprep.subr.bf16.mxu0 0
  %6054 = vmatpush1.bf16.msra.mxu0 0
  %6055 = vmatprep.subr.bf16.mxu0 0
  %6056 = vmatpush1.bf16.msra.mxu0 0
  %6057 = vmatprep.subr.bf16.mxu0 0
  %6058 = vmatpush1.bf16.msra.mxu0 0
  %6059 = vmatprep.subr.bf16.mxu0 0
  %6060 = vmatpush1.bf16.msra.mxu0 0
  %6061 = vmatprep.subr.bf16.mxu0 0
  %6062 = vmatpush1.bf16.msra.mxu0 %v6033
  %6063 = vmatprep.subr.bf16.mxu0 0
  %6064 = vmatpush2.bf16.msra.mxu0 0
  %6065 = vmatprep.subr.bf16.mxu0 0
  %6066 = vmatpush2.bf16.msra.mxu0 0
  %6067 = vmatprep.subr.bf16.mxu0 0
  %6068 = vmatpush2.bf16.msra.mxu0 0
  %6069 = vmatprep.subr.bf16.mxu0 0
  %6070 = vmatpush2.bf16.msra.mxu0 0
  %6071 = vmatprep.subr.bf16.mxu0 0
  %6072 = vmatpush2.bf16.msra.mxu0 0
  %6073 = vmatprep.subr.bf16.mxu0 0
  %6074 = vmatpush2.bf16.msra.mxu0 0
  %6075 = vmatprep.subr.bf16.mxu0 0
  %6076 = vmatpush2.bf16.msra.mxu0 0
  %6077 = vmatprep.subr.bf16.mxu0 0
  %6078 = vmatpush2.bf16.msra.mxu0 0
  %6079 = vmatprep.mubr.bf16.mxu0 0
  %6080 = vmatmul.mubr.bf16.gmra.mxu0 %v6036
  %v6081 = vpop.f32.mrf.mxu0
  %v6082 = vadd.f32 0.0, %v6081
  %v6083 = vpop.f32.mrf.mxu0
  %v6084 = vpop.f32.mrf.mxu0
  %v6085 = vadd.f32 0.0, %v6084
  %v6086 = vpop.f32.mrf.mxu0
  %6087 = vmatprep.mubr.bf16.mxu0 0
  %6088 = vmatmul.mubr.bf16.gmra.mxu0 %v6039
  %v6089 = vpop.f32.mrf.mxu0
  %v6090 = vadd.f32 0.0, %v6089
  %v6091 = vpop.f32.mrf.mxu0
  %v6092 = vpop.f32.mrf.mxu0
  %v6093 = vadd.f32 0.0, %v6092
  %v6094 = vpop.f32.mrf.mxu0
  %6095 = vmatprep.mubr.bf16.mxu0 0
  %6096 = vmatmul.mubr.bf16.gmra.mxu0 %v6042
  %v6097 = vpop.f32.mrf.mxu0
  %v6098 = vadd.f32 0.0, %v6097
  %v6099 = vpop.f32.mrf.mxu0
  %v6100 = vpop.f32.mrf.mxu0
  %v6101 = vadd.f32 0.0, %v6100
  %v6102 = vpop.f32.mrf.mxu0
  %6103 = vmatprep.mubr.bf16.mxu0 0
  %6104 = vmatmul.mubr.bf16.gmra.mxu0 %v6045
  %v6105 = vpop.f32.mrf.mxu0
  %v6106 = vadd.f32 0.0, %v6105
  %v6107 = vpop.f32.mrf.mxu0
  %v6108 = vpop.f32.mrf.mxu0
  %v6109 = vadd.f32 0.0, %v6108
  %v6110 = vpop.f32.mrf.mxu0
  %6111 = vdwg.mxu0
  %v6112 = vadd.f32 %v5927, %v6082
  %v6113 = vadd.f32 %v5930, %v6085
  %v6114 = vadd.f32 %v5935, %v6090
  %v6115 = vadd.f32 %v5938, %v6093
  %v6116 = vadd.f32 %v5943, %v6098
  %v6117 = vadd.f32 %v5946, %v6101
  %v6118 = vadd.f32 %v5951, %v6106
  %v6119 = vadd.f32 %v5954, %v6109
  %6120 = vmatprep.subr.bf16.mxu0 0
  %6121 = vmatpush1.bf16.msra.mxu0 0
  %6122 = vmatprep.subr.bf16.mxu0 0
  %6123 = vmatpush1.bf16.msra.mxu0 0
  %6124 = vmatprep.subr.bf16.mxu0 0
  %6125 = vmatpush1.bf16.msra.mxu0 0
  %6126 = vmatprep.subr.bf16.mxu0 0
  %6127 = vmatpush1.bf16.msra.mxu0 0
  %6128 = vmatprep.subr.bf16.mxu0 0
  %6129 = vmatpush1.bf16.msra.mxu0 %v5647
  %6130 = vmatprep.subr.bf16.mxu0 0
  %6131 = vmatpush1.bf16.msra.mxu0 %v5646
  %6132 = vmatprep.subr.bf16.mxu0 0
  %6133 = vmatpush1.bf16.msra.mxu0 %v5645
  %6134 = vmatprep.subr.bf16.mxu0 0
  %6135 = vmatpush1.bf16.msra.mxu0 %v5644
  %6136 = vmatprep.subr.bf16.mxu0 0
  %6137 = vmatpush2.bf16.msra.mxu0 0
  %6138 = vmatprep.subr.bf16.mxu0 0
  %6139 = vmatpush2.bf16.msra.mxu0 0
  %6140 = vmatprep.subr.bf16.mxu0 0
  %6141 = vmatpush2.bf16.msra.mxu0 0
  %6142 = vmatprep.subr.bf16.mxu0 0
  %6143 = vmatpush2.bf16.msra.mxu0 0
  %6144 = vmatprep.subr.bf16.mxu0 0
  %6145 = vmatpush2.bf16.msra.mxu0 0
  %6146 = vmatprep.subr.bf16.mxu0 0
  %6147 = vmatpush2.bf16.msra.mxu0 0
  %6148 = vmatprep.subr.bf16.mxu0 0
  %6149 = vmatpush2.bf16.msra.mxu0 0
  %6150 = vmatprep.subr.bf16.mxu0 0
  %6151 = vmatpush2.bf16.msra.mxu0 0
  %6152 = vmatprep.mubr.bf16.mxu0 0
  %6153 = vmatmul.mubr.bf16.gmra.mxu0 %v4428
  %v6154 = vpop.f32.mrf.mxu0
  %v6155 = vadd.f32 0.0, %v6154
  %v6156 = vpop.f32.mrf.mxu0
  %v6157 = vpop.f32.mrf.mxu0
  %v6158 = vadd.f32 0.0, %v6157
  %v6159 = vpop.f32.mrf.mxu0
  %6160 = vmatprep.mubr.bf16.mxu0 0
  %6161 = vmatmul.mubr.bf16.gmra.mxu0 %v4431
  %v6162 = vpop.f32.mrf.mxu0
  %v6163 = vadd.f32 0.0, %v6162
  %v6164 = vpop.f32.mrf.mxu0
  %v6165 = vpop.f32.mrf.mxu0
  %v6166 = vadd.f32 0.0, %v6165
  %v6167 = vpop.f32.mrf.mxu0
  %6168 = vmatprep.mubr.bf16.mxu0 0
  %6169 = vmatmul.mubr.bf16.gmra.mxu0 %v4434
  %v6170 = vpop.f32.mrf.mxu0
  %v6171 = vadd.f32 0.0, %v6170
  %v6172 = vpop.f32.mrf.mxu0
  %v6173 = vpop.f32.mrf.mxu0
  %v6174 = vadd.f32 0.0, %v6173
  %v6175 = vpop.f32.mrf.mxu0
  %6176 = vmatprep.mubr.bf16.mxu0 0
  %6177 = vmatmul.mubr.bf16.gmra.mxu0 %v4437
  %v6178 = vpop.f32.mrf.mxu0
  %v6179 = vadd.f32 0.0, %v6178
  %v6180 = vpop.f32.mrf.mxu0
  %v6181 = vpop.f32.mrf.mxu0
  %v6182 = vadd.f32 0.0, %v6181
  %v6183 = vpop.f32.mrf.mxu0
  %6184 = vdwg.mxu0
  %v6185 = vpack.c.bf16 %v6158, %v6155
  %v6186 = vpack.c.bf16 %v6166, %v6163
  %v6187 = vpack.c.bf16 %v6174, %v6171
  %v6188 = vpack.c.bf16 %v6182, %v6179
  %s6189 = scalar_lea.vmem %s9, 24
  %v6190 = vld [vmem:[%s6189] sm:$0xf]
  %v6191 = vld [vmem:[%s6189 + $0x4] sm:$0xf]
  %v6194 = vunpack.c.l.b16 %v6190
  %v6195 = vunpack.c.l.b16 %v6191
  %v6196 = vpack.c.b16 %v6195, %v6194
  %v6199 = vsel %vm4033, %v6185, 0
  %v6202 = vsel %vm4033, %v6186, 0
  %v6205 = vsel %vm4033, %v6187, 0
  %v6208 = vsel %vm4033, %v6188, 0
  %6210 = vmatprep.subr.bf16.mxu0 0
  %6211 = vmatpush1.bf16.msra.mxu0 0
  %6212 = vmatprep.subr.bf16.mxu0 0
  %6213 = vmatpush1.bf16.msra.mxu0 0
  %6214 = vmatprep.subr.bf16.mxu0 0
  %6215 = vmatpush1.bf16.msra.mxu0 0
  %6216 = vmatprep.subr.bf16.mxu0 0
  %6217 = vmatpush1.bf16.msra.mxu0 0
  %6218 = vmatprep.subr.bf16.mxu0 0
  %6219 = vmatpush1.bf16.msra.mxu0 0
  %6220 = vmatprep.subr.bf16.mxu0 0
  %6221 = vmatpush1.bf16.msra.mxu0 0
  %6222 = vmatprep.subr.bf16.mxu0 0
  %6223 = vmatpush1.bf16.msra.mxu0 0
  %6224 = vmatprep.subr.bf16.mxu0 0
  %6225 = vmatpush1.bf16.msra.mxu0 %v6196
  %6226 = vmatprep.subr.bf16.mxu0 0
  %6227 = vmatpush2.bf16.msra.mxu0 0
  %6228 = vmatprep.subr.bf16.mxu0 0
  %6229 = vmatpush2.bf16.msra.mxu0 0
  %6230 = vmatprep.subr.bf16.mxu0 0
  %6231 = vmatpush2.bf16.msra.mxu0 0
  %6232 = vmatprep.subr.bf16.mxu0 0
  %6233 = vmatpush2.bf16.msra.mxu0 0
  %6234 = vmatprep.subr.bf16.mxu0 0
  %6235 = vmatpush2.bf16.msra.mxu0 0
  %6236 = vmatprep.subr.bf16.mxu0 0
  %6237 = vmatpush2.bf16.msra.mxu0 0
  %6238 = vmatprep.subr.bf16.mxu0 0
  %6239 = vmatpush2.bf16.msra.mxu0 0
  %6240 = vmatprep.subr.bf16.mxu0 0
  %6241 = vmatpush2.bf16.msra.mxu0 0
  %6242 = vmatprep.mubr.bf16.mxu0 0
  %6243 = vmatmul.mubr.bf16.gmra.mxu0 %v6199
  %v6244 = vpop.f32.mrf.mxu0
  %v6245 = vadd.f32 0.0, %v6244
  %v6246 = vpop.f32.mrf.mxu0
  %v6247 = vpop.f32.mrf.mxu0
  %v6248 = vadd.f32 0.0, %v6247
  %v6249 = vpop.f32.mrf.mxu0
  %6250 = vmatprep.mubr.bf16.mxu0 0
  %6251 = vmatmul.mubr.bf16.gmra.mxu0 %v6202
  %v6252 = vpop.f32.mrf.mxu0
  %v6253 = vadd.f32 0.0, %v6252
  %v6254 = vpop.f32.mrf.mxu0
  %v6255 = vpop.f32.mrf.mxu0
  %v6256 = vadd.f32 0.0, %v6255
  %v6257 = vpop.f32.mrf.mxu0
  %6258 = vmatprep.mubr.bf16.mxu0 0
  %6259 = vmatmul.mubr.bf16.gmra.mxu0 %v6205
  %v6260 = vpop.f32.mrf.mxu0
  %v6261 = vadd.f32 0.0, %v6260
  %v6262 = vpop.f32.mrf.mxu0
  %v6263 = vpop.f32.mrf.mxu0
  %v6264 = vadd.f32 0.0, %v6263
  %v6265 = vpop.f32.mrf.mxu0
  %6266 = vmatprep.mubr.bf16.mxu0 0
  %6267 = vmatmul.mubr.bf16.gmra.mxu0 %v6208
  %v6268 = vpop.f32.mrf.mxu0
  %v6269 = vadd.f32 0.0, %v6268
  %v6270 = vpop.f32.mrf.mxu0
  %v6271 = vpop.f32.mrf.mxu0
  %v6272 = vadd.f32 0.0, %v6271
  %v6273 = vpop.f32.mrf.mxu0
  %6274 = vdwg.mxu0
  %v6275 = vadd.f32 %v6112, %v6245
  %v6276 = vadd.f32 %v6113, %v6248
  %v6277 = vadd.f32 %v6114, %v6253
  %v6278 = vadd.f32 %v6115, %v6256
  %v6279 = vadd.f32 %v6116, %v6261
  %v6280 = vadd.f32 %v6117, %v6264
  %v6281 = vadd.f32 %v6118, %v6269
  %v6282 = vadd.f32 %v6119, %v6272
  %6283 = vmatprep.subr.bf16.mxu0 0
  %6284 = vmatpush1.bf16.msra.mxu0 0
  %6285 = vmatprep.subr.bf16.mxu0 0
  %6286 = vmatpush1.bf16.msra.mxu0 0
  %6287 = vmatprep.subr.bf16.mxu0 0
  %6288 = vmatpush1.bf16.msra.mxu0 0
  %6289 = vmatprep.subr.bf16.mxu0 0
  %6290 = vmatpush1.bf16.msra.mxu0 0
  %6291 = vmatprep.subr.bf16.mxu0 0
  %6292 = vmatpush1.bf16.msra.mxu0 %v5647
  %6293 = vmatprep.subr.bf16.mxu0 0
  %6294 = vmatpush1.bf16.msra.mxu0 %v5646
  %6295 = vmatprep.subr.bf16.mxu0 0
  %6296 = vmatpush1.bf16.msra.mxu0 %v5645
  %6297 = vmatprep.subr.bf16.mxu0 0
  %6298 = vmatpush1.bf16.msra.mxu0 %v5644
  %6299 = vmatprep.subr.bf16.mxu0 0
  %6300 = vmatpush2.bf16.msra.mxu0 0
  %6301 = vmatprep.subr.bf16.mxu0 0
  %6302 = vmatpush2.bf16.msra.mxu0 0
  %6303 = vmatprep.subr.bf16.mxu0 0
  %6304 = vmatpush2.bf16.msra.mxu0 0
  %6305 = vmatprep.subr.bf16.mxu0 0
  %6306 = vmatpush2.bf16.msra.mxu0 0
  %6307 = vmatprep.subr.bf16.mxu0 0
  %6308 = vmatpush2.bf16.msra.mxu0 0
  %6309 = vmatprep.subr.bf16.mxu0 0
  %6310 = vmatpush2.bf16.msra.mxu0 0
  %6311 = vmatprep.subr.bf16.mxu0 0
  %6312 = vmatpush2.bf16.msra.mxu0 0
  %6313 = vmatprep.subr.bf16.mxu0 0
  %6314 = vmatpush2.bf16.msra.mxu0 0
  %6315 = vmatprep.mubr.bf16.mxu0 0
  %6316 = vmatmul.mubr.bf16.gmra.mxu0 %v4632
  %v6317 = vpop.f32.mrf.mxu0
  %v6318 = vadd.f32 0.0, %v6317
  %v6319 = vpop.f32.mrf.mxu0
  %v6320 = vpop.f32.mrf.mxu0
  %v6321 = vadd.f32 0.0, %v6320
  %v6322 = vpop.f32.mrf.mxu0
  %6323 = vmatprep.mubr.bf16.mxu0 0
  %6324 = vmatmul.mubr.bf16.gmra.mxu0 %v4635
  %v6325 = vpop.f32.mrf.mxu0
  %v6326 = vadd.f32 0.0, %v6325
  %v6327 = vpop.f32.mrf.mxu0
  %v6328 = vpop.f32.mrf.mxu0
  %v6329 = vadd.f32 0.0, %v6328
  %v6330 = vpop.f32.mrf.mxu0
  %6331 = vmatprep.mubr.bf16.mxu0 0
  %6332 = vmatmul.mubr.bf16.gmra.mxu0 %v4638
  %v6333 = vpop.f32.mrf.mxu0
  %v6334 = vadd.f32 0.0, %v6333
  %v6335 = vpop.f32.mrf.mxu0
  %v6336 = vpop.f32.mrf.mxu0
  %v6337 = vadd.f32 0.0, %v6336
  %v6338 = vpop.f32.mrf.mxu0
  %6339 = vmatprep.mubr.bf16.mxu0 0
  %6340 = vmatmul.mubr.bf16.gmra.mxu0 %v4641
  %v6341 = vpop.f32.mrf.mxu0
  %v6342 = vadd.f32 0.0, %v6341
  %v6343 = vpop.f32.mrf.mxu0
  %v6344 = vpop.f32.mrf.mxu0
  %v6345 = vadd.f32 0.0, %v6344
  %v6346 = vpop.f32.mrf.mxu0
  %6347 = vdwg.mxu0
  %v6348 = vpack.c.bf16 %v6321, %v6318
  %v6349 = vpack.c.bf16 %v6329, %v6326
  %v6350 = vpack.c.bf16 %v6337, %v6334
  %v6351 = vpack.c.bf16 %v6345, %v6342
  %s6352 = scalar_lea.vmem %s9, 32
  %v6353 = vld [vmem:[%s6352] sm:$0xf]
  %v6354 = vld [vmem:[%s6352 + $0x4] sm:$0xf]
  %v6357 = vunpack.c.l.b16 %v6353
  %v6358 = vunpack.c.l.b16 %v6354
  %v6359 = vpack.c.b16 %v6358, %v6357
  %v6362 = vsel %vm4033, %v6348, 0
  %v6365 = vsel %vm4033, %v6349, 0
  %v6368 = vsel %vm4033, %v6350, 0
  %v6371 = vsel %vm4033, %v6351, 0
  %6373 = vmatprep.subr.bf16.mxu0 0
  %6374 = vmatpush1.bf16.msra.mxu0 0
  %6375 = vmatprep.subr.bf16.mxu0 0
  %6376 = vmatpush1.bf16.msra.mxu0 0
  %6377 = vmatprep.subr.bf16.mxu0 0
  %6378 = vmatpush1.bf16.msra.mxu0 0
  %6379 = vmatprep.subr.bf16.mxu0 0
  %6380 = vmatpush1.bf16.msra.mxu0 0
  %6381 = vmatprep.subr.bf16.mxu0 0
  %6382 = vmatpush1.bf16.msra.mxu0 0
  %6383 = vmatprep.subr.bf16.mxu0 0
  %6384 = vmatpush1.bf16.msra.mxu0 0
  %6385 = vmatprep.subr.bf16.mxu0 0
  %6386 = vmatpush1.bf16.msra.mxu0 0
  %6387 = vmatprep.subr.bf16.mxu0 0
  %6388 = vmatpush1.bf16.msra.mxu0 %v6359
  %6389 = vmatprep.subr.bf16.mxu0 0
  %6390 = vmatpush2.bf16.msra.mxu0 0
  %6391 = vmatprep.subr.bf16.mxu0 0
  %6392 = vmatpush2.bf16.msra.mxu0 0
  %6393 = vmatprep.subr.bf16.mxu0 0
  %6394 = vmatpush2.bf16.msra.mxu0 0
  %6395 = vmatprep.subr.bf16.mxu0 0
  %6396 = vmatpush2.bf16.msra.mxu0 0
  %6397 = vmatprep.subr.bf16.mxu0 0
  %6398 = vmatpush2.bf16.msra.mxu0 0
  %6399 = vmatprep.subr.bf16.mxu0 0
  %6400 = vmatpush2.bf16.msra.mxu0 0
  %6401 = vmatprep.subr.bf16.mxu0 0
  %6402 = vmatpush2.bf16.msra.mxu0 0
  %6403 = vmatprep.subr.bf16.mxu0 0
  %6404 = vmatpush2.bf16.msra.mxu0 0
  %6405 = vmatprep.mubr.bf16.mxu0 0
  %6406 = vmatmul.mubr.bf16.gmra.mxu0 %v6362
  %v6407 = vpop.f32.mrf.mxu0
  %v6408 = vadd.f32 0.0, %v6407
  %v6409 = vpop.f32.mrf.mxu0
  %v6410 = vpop.f32.mrf.mxu0
  %v6411 = vadd.f32 0.0, %v6410
  %v6412 = vpop.f32.mrf.mxu0
  %6413 = vmatprep.mubr.bf16.mxu0 0
  %6414 = vmatmul.mubr.bf16.gmra.mxu0 %v6365
  %v6415 = vpop.f32.mrf.mxu0
  %v6416 = vadd.f32 0.0, %v6415
  %v6417 = vpop.f32.mrf.mxu0
  %v6418 = vpop.f32.mrf.mxu0
  %v6419 = vadd.f32 0.0, %v6418
  %v6420 = vpop.f32.mrf.mxu0
  %6421 = vmatprep.mubr.bf16.mxu0 0
  %6422 = vmatmul.mubr.bf16.gmra.mxu0 %v6368
  %v6423 = vpop.f32.mrf.mxu0
  %v6424 = vadd.f32 0.0, %v6423
  %v6425 = vpop.f32.mrf.mxu0
  %v6426 = vpop.f32.mrf.mxu0
  %v6427 = vadd.f32 0.0, %v6426
  %v6428 = vpop.f32.mrf.mxu0
  %6429 = vmatprep.mubr.bf16.mxu0 0
  %6430 = vmatmul.mubr.bf16.gmra.mxu0 %v6371
  %v6431 = vpop.f32.mrf.mxu0
  %v6432 = vadd.f32 0.0, %v6431
  %v6433 = vpop.f32.mrf.mxu0
  %v6434 = vpop.f32.mrf.mxu0
  %v6435 = vadd.f32 0.0, %v6434
  %v6436 = vpop.f32.mrf.mxu0
  %6437 = vdwg.mxu0
  %v6438 = vadd.f32 %v6275, %v6408
  %v6439 = vadd.f32 %v6276, %v6411
  %v6440 = vadd.f32 %v6277, %v6416
  %v6441 = vadd.f32 %v6278, %v6419
  %v6442 = vadd.f32 %v6279, %v6424
  %v6443 = vadd.f32 %v6280, %v6427
  %v6444 = vadd.f32 %v6281, %v6432
  %v6445 = vadd.f32 %v6282, %v6435
  %6446 = vmatprep.subr.bf16.mxu0 0
  %6447 = vmatpush1.bf16.msra.mxu0 0
  %6448 = vmatprep.subr.bf16.mxu0 0
  %6449 = vmatpush1.bf16.msra.mxu0 0
  %6450 = vmatprep.subr.bf16.mxu0 0
  %6451 = vmatpush1.bf16.msra.mxu0 0
  %6452 = vmatprep.subr.bf16.mxu0 0
  %6453 = vmatpush1.bf16.msra.mxu0 0
  %6454 = vmatprep.subr.bf16.mxu0 0
  %6455 = vmatpush1.bf16.msra.mxu0 %v5647
  %6456 = vmatprep.subr.bf16.mxu0 0
  %6457 = vmatpush1.bf16.msra.mxu0 %v5646
  %6458 = vmatprep.subr.bf16.mxu0 0
  %6459 = vmatpush1.bf16.msra.mxu0 %v5645
  %6460 = vmatprep.subr.bf16.mxu0 0
  %6461 = vmatpush1.bf16.msra.mxu0 %v5644
  %6462 = vmatprep.subr.bf16.mxu0 0
  %6463 = vmatpush2.bf16.msra.mxu0 0
  %6464 = vmatprep.subr.bf16.mxu0 0
  %6465 = vmatpush2.bf16.msra.mxu0 0
  %6466 = vmatprep.subr.bf16.mxu0 0
  %6467 = vmatpush2.bf16.msra.mxu0 0
  %6468 = vmatprep.subr.bf16.mxu0 0
  %6469 = vmatpush2.bf16.msra.mxu0 0
  %6470 = vmatprep.subr.bf16.mxu0 0
  %6471 = vmatpush2.bf16.msra.mxu0 0
  %6472 = vmatprep.subr.bf16.mxu0 0
  %6473 = vmatpush2.bf16.msra.mxu0 0
  %6474 = vmatprep.subr.bf16.mxu0 0
  %6475 = vmatpush2.bf16.msra.mxu0 0
  %6476 = vmatprep.subr.bf16.mxu0 0
  %6477 = vmatpush2.bf16.msra.mxu0 0
  %6478 = vmatprep.mubr.bf16.mxu0 0
  %6479 = vmatmul.mubr.bf16.gmra.mxu0 %v4836
  %v6480 = vpop.f32.mrf.mxu0
  %v6481 = vadd.f32 0.0, %v6480
  %v6482 = vpop.f32.mrf.mxu0
  %v6483 = vpop.f32.mrf.mxu0
  %v6484 = vadd.f32 0.0, %v6483
  %v6485 = vpop.f32.mrf.mxu0
  %6486 = vmatprep.mubr.bf16.mxu0 0
  %6487 = vmatmul.mubr.bf16.gmra.mxu0 %v4839
  %v6488 = vpop.f32.mrf.mxu0
  %v6489 = vadd.f32 0.0, %v6488
  %v6490 = vpop.f32.mrf.mxu0
  %v6491 = vpop.f32.mrf.mxu0
  %v6492 = vadd.f32 0.0, %v6491
  %v6493 = vpop.f32.mrf.mxu0
  %6494 = vmatprep.mubr.bf16.mxu0 0
  %6495 = vmatmul.mubr.bf16.gmra.mxu0 %v4842
  %v6496 = vpop.f32.mrf.mxu0
  %v6497 = vadd.f32 0.0, %v6496
  %v6498 = vpop.f32.mrf.mxu0
  %v6499 = vpop.f32.mrf.mxu0
  %v6500 = vadd.f32 0.0, %v6499
  %v6501 = vpop.f32.mrf.mxu0
  %6502 = vmatprep.mubr.bf16.mxu0 0
  %6503 = vmatmul.mubr.bf16.gmra.mxu0 %v4845
  %v6504 = vpop.f32.mrf.mxu0
  %v6505 = vadd.f32 0.0, %v6504
  %v6506 = vpop.f32.mrf.mxu0
  %v6507 = vpop.f32.mrf.mxu0
  %v6508 = vadd.f32 0.0, %v6507
  %v6509 = vpop.f32.mrf.mxu0
  %6510 = vdwg.mxu0
  %v6511 = vpack.c.bf16 %v6484, %v6481
  %v6512 = vpack.c.bf16 %v6492, %v6489
  %v6513 = vpack.c.bf16 %v6500, %v6497
  %v6514 = vpack.c.bf16 %v6508, %v6505
  %s6515 = scalar_lea.vmem %s9, 40
  %v6516 = vld [vmem:[%s6515] sm:$0xf]
  %v6517 = vld [vmem:[%s6515 + $0x4] sm:$0xf]
  %v6520 = vunpack.c.l.b16 %v6516
  %v6521 = vunpack.c.l.b16 %v6517
  %v6522 = vpack.c.b16 %v6521, %v6520
  %v6525 = vsel %vm4033, %v6511, 0
  %v6528 = vsel %vm4033, %v6512, 0
  %v6531 = vsel %vm4033, %v6513, 0
  %v6534 = vsel %vm4033, %v6514, 0
  %6536 = vmatprep.subr.bf16.mxu0 0
  %6537 = vmatpush1.bf16.msra.mxu0 0
  %6538 = vmatprep.subr.bf16.mxu0 0
  %6539 = vmatpush1.bf16.msra.mxu0 0
  %6540 = vmatprep.subr.bf16.mxu0 0
  %6541 = vmatpush1.bf16.msra.mxu0 0
  %6542 = vmatprep.subr.bf16.mxu0 0
  %6543 = vmatpush1.bf16.msra.mxu0 0
  %6544 = vmatprep.subr.bf16.mxu0 0
  %6545 = vmatpush1.bf16.msra.mxu0 0
  %6546 = vmatprep.subr.bf16.mxu0 0
  %6547 = vmatpush1.bf16.msra.mxu0 0
  %6548 = vmatprep.subr.bf16.mxu0 0
  %6549 = vmatpush1.bf16.msra.mxu0 0
  %6550 = vmatprep.subr.bf16.mxu0 0
  %6551 = vmatpush1.bf16.msra.mxu0 %v6522
  %6552 = vmatprep.subr.bf16.mxu0 0
  %6553 = vmatpush2.bf16.msra.mxu0 0
  %6554 = vmatprep.subr.bf16.mxu0 0
  %6555 = vmatpush2.bf16.msra.mxu0 0
  %6556 = vmatprep.subr.bf16.mxu0 0
  %6557 = vmatpush2.bf16.msra.mxu0 0
  %6558 = vmatprep.subr.bf16.mxu0 0
  %6559 = vmatpush2.bf16.msra.mxu0 0
  %6560 = vmatprep.subr.bf16.mxu0 0
  %6561 = vmatpush2.bf16.msra.mxu0 0
  %6562 = vmatprep.subr.bf16.mxu0 0
  %6563 = vmatpush2.bf16.msra.mxu0 0
  %6564 = vmatprep.subr.bf16.mxu0 0
  %6565 = vmatpush2.bf16.msra.mxu0 0
  %6566 = vmatprep.subr.bf16.mxu0 0
  %6567 = vmatpush2.bf16.msra.mxu0 0
  %6568 = vmatprep.mubr.bf16.mxu0 0
  %6569 = vmatmul.mubr.bf16.gmra.mxu0 %v6525
  %v6570 = vpop.f32.mrf.mxu0
  %v6571 = vadd.f32 0.0, %v6570
  %v6572 = vpop.f32.mrf.mxu0
  %v6573 = vpop.f32.mrf.mxu0
  %v6574 = vadd.f32 0.0, %v6573
  %v6575 = vpop.f32.mrf.mxu0
  %6576 = vmatprep.mubr.bf16.mxu0 0
  %6577 = vmatmul.mubr.bf16.gmra.mxu0 %v6528
  %v6578 = vpop.f32.mrf.mxu0
  %v6579 = vadd.f32 0.0, %v6578
  %v6580 = vpop.f32.mrf.mxu0
  %v6581 = vpop.f32.mrf.mxu0
  %v6582 = vadd.f32 0.0, %v6581
  %v6583 = vpop.f32.mrf.mxu0
  %6584 = vmatprep.mubr.bf16.mxu0 0
  %6585 = vmatmul.mubr.bf16.gmra.mxu0 %v6531
  %v6586 = vpop.f32.mrf.mxu0
  %v6587 = vadd.f32 0.0, %v6586
  %v6588 = vpop.f32.mrf.mxu0
  %v6589 = vpop.f32.mrf.mxu0
  %v6590 = vadd.f32 0.0, %v6589
  %v6591 = vpop.f32.mrf.mxu0
  %6592 = vmatprep.mubr.bf16.mxu0 0
  %6593 = vmatmul.mubr.bf16.gmra.mxu0 %v6534
  %v6594 = vpop.f32.mrf.mxu0
  %v6595 = vadd.f32 0.0, %v6594
  %v6596 = vpop.f32.mrf.mxu0
  %v6597 = vpop.f32.mrf.mxu0
  %v6598 = vadd.f32 0.0, %v6597
  %v6599 = vpop.f32.mrf.mxu0
  %6600 = vdwg.mxu0
  %v6601 = vadd.f32 %v6438, %v6571
  %v6602 = vadd.f32 %v6439, %v6574
  %v6603 = vadd.f32 %v6440, %v6579
  %v6604 = vadd.f32 %v6441, %v6582
  %v6605 = vadd.f32 %v6442, %v6587
  %v6606 = vadd.f32 %v6443, %v6590
  %v6607 = vadd.f32 %v6444, %v6595
  %v6608 = vadd.f32 %v6445, %v6598
  %6609 = vmatprep.subr.bf16.mxu0 0
  %6610 = vmatpush1.bf16.msra.mxu0 0
  %6611 = vmatprep.subr.bf16.mxu0 0
  %6612 = vmatpush1.bf16.msra.mxu0 0
  %6613 = vmatprep.subr.bf16.mxu0 0
  %6614 = vmatpush1.bf16.msra.mxu0 0
  %6615 = vmatprep.subr.bf16.mxu0 0
  %6616 = vmatpush1.bf16.msra.mxu0 0
  %6617 = vmatprep.subr.bf16.mxu0 0
  %6618 = vmatpush1.bf16.msra.mxu0 %v5647
  %6619 = vmatprep.subr.bf16.mxu0 0
  %6620 = vmatpush1.bf16.msra.mxu0 %v5646
  %6621 = vmatprep.subr.bf16.mxu0 0
  %6622 = vmatpush1.bf16.msra.mxu0 %v5645
  %6623 = vmatprep.subr.bf16.mxu0 0
  %6624 = vmatpush1.bf16.msra.mxu0 %v5644
  %6625 = vmatprep.subr.bf16.mxu0 0
  %6626 = vmatpush2.bf16.msra.mxu0 0
  %6627 = vmatprep.subr.bf16.mxu0 0
  %6628 = vmatpush2.bf16.msra.mxu0 0
  %6629 = vmatprep.subr.bf16.mxu0 0
  %6630 = vmatpush2.bf16.msra.mxu0 0
  %6631 = vmatprep.subr.bf16.mxu0 0
  %6632 = vmatpush2.bf16.msra.mxu0 0
  %6633 = vmatprep.subr.bf16.mxu0 0
  %6634 = vmatpush2.bf16.msra.mxu0 0
  %6635 = vmatprep.subr.bf16.mxu0 0
  %6636 = vmatpush2.bf16.msra.mxu0 0
  %6637 = vmatprep.subr.bf16.mxu0 0
  %6638 = vmatpush2.bf16.msra.mxu0 0
  %6639 = vmatprep.subr.bf16.mxu0 0
  %6640 = vmatpush2.bf16.msra.mxu0 0
  %6641 = vmatprep.mubr.bf16.mxu0 0
  %6642 = vmatmul.mubr.bf16.gmra.mxu0 %v5040
  %v6643 = vpop.f32.mrf.mxu0
  %v6644 = vadd.f32 0.0, %v6643
  %v6645 = vpop.f32.mrf.mxu0
  %v6646 = vpop.f32.mrf.mxu0
  %v6647 = vadd.f32 0.0, %v6646
  %v6648 = vpop.f32.mrf.mxu0
  %6649 = vmatprep.mubr.bf16.mxu0 0
  %6650 = vmatmul.mubr.bf16.gmra.mxu0 %v5043
  %v6651 = vpop.f32.mrf.mxu0
  %v6652 = vadd.f32 0.0, %v6651
  %v6653 = vpop.f32.mrf.mxu0
  %v6654 = vpop.f32.mrf.mxu0
  %v6655 = vadd.f32 0.0, %v6654
  %v6656 = vpop.f32.mrf.mxu0
  %6657 = vmatprep.mubr.bf16.mxu0 0
  %6658 = vmatmul.mubr.bf16.gmra.mxu0 %v5046
  %v6659 = vpop.f32.mrf.mxu0
  %v6660 = vadd.f32 0.0, %v6659
  %v6661 = vpop.f32.mrf.mxu0
  %v6662 = vpop.f32.mrf.mxu0
  %v6663 = vadd.f32 0.0, %v6662
  %v6664 = vpop.f32.mrf.mxu0
  %6665 = vmatprep.mubr.bf16.mxu0 0
  %6666 = vmatmul.mubr.bf16.gmra.mxu0 %v5049
  %v6667 = vpop.f32.mrf.mxu0
  %v6668 = vadd.f32 0.0, %v6667
  %v6669 = vpop.f32.mrf.mxu0
  %v6670 = vpop.f32.mrf.mxu0
  %v6671 = vadd.f32 0.0, %v6670
  %v6672 = vpop.f32.mrf.mxu0
  %6673 = vdwg.mxu0
  %v6674 = vpack.c.bf16 %v6647, %v6644
  %v6675 = vpack.c.bf16 %v6655, %v6652
  %v6676 = vpack.c.bf16 %v6663, %v6660
  %v6677 = vpack.c.bf16 %v6671, %v6668
  %s6678 = scalar_lea.vmem %s9, 48
  %v6679 = vld [vmem:[%s6678] sm:$0xf]
  %v6680 = vld [vmem:[%s6678 + $0x4] sm:$0xf]
  %v6683 = vunpack.c.l.b16 %v6679
  %v6684 = vunpack.c.l.b16 %v6680
  %v6685 = vpack.c.b16 %v6684, %v6683
  %v6688 = vsel %vm4033, %v6674, 0
  %v6691 = vsel %vm4033, %v6675, 0
  %v6694 = vsel %vm4033, %v6676, 0
  %v6697 = vsel %vm4033, %v6677, 0
  %6699 = vmatprep.subr.bf16.mxu0 0
  %6700 = vmatpush1.bf16.msra.mxu0 0
  %6701 = vmatprep.subr.bf16.mxu0 0
  %6702 = vmatpush1.bf16.msra.mxu0 0
  %6703 = vmatprep.subr.bf16.mxu0 0
  %6704 = vmatpush1.bf16.msra.mxu0 0
  %6705 = vmatprep.subr.bf16.mxu0 0
  %6706 = vmatpush1.bf16.msra.mxu0 0
  %6707 = vmatprep.subr.bf16.mxu0 0
  %6708 = vmatpush1.bf16.msra.mxu0 0
  %6709 = vmatprep.subr.bf16.mxu0 0
  %6710 = vmatpush1.bf16.msra.mxu0 0
  %6711 = vmatprep.subr.bf16.mxu0 0
  %6712 = vmatpush1.bf16.msra.mxu0 0
  %6713 = vmatprep.subr.bf16.mxu0 0
  %6714 = vmatpush1.bf16.msra.mxu0 %v6685
  %6715 = vmatprep.subr.bf16.mxu0 0
  %6716 = vmatpush2.bf16.msra.mxu0 0
  %6717 = vmatprep.subr.bf16.mxu0 0
  %6718 = vmatpush2.bf16.msra.mxu0 0
  %6719 = vmatprep.subr.bf16.mxu0 0
  %6720 = vmatpush2.bf16.msra.mxu0 0
  %6721 = vmatprep.subr.bf16.mxu0 0
  %6722 = vmatpush2.bf16.msra.mxu0 0
  %6723 = vmatprep.subr.bf16.mxu0 0
  %6724 = vmatpush2.bf16.msra.mxu0 0
  %6725 = vmatprep.subr.bf16.mxu0 0
  %6726 = vmatpush2.bf16.msra.mxu0 0
  %6727 = vmatprep.subr.bf16.mxu0 0
  %6728 = vmatpush2.bf16.msra.mxu0 0
  %6729 = vmatprep.subr.bf16.mxu0 0
  %6730 = vmatpush2.bf16.msra.mxu0 0
  %6731 = vmatprep.mubr.bf16.mxu0 0
  %6732 = vmatmul.mubr.bf16.gmra.mxu0 %v6688
  %v6733 = vpop.f32.mrf.mxu0
  %v6734 = vadd.f32 0.0, %v6733
  %v6735 = vpop.f32.mrf.mxu0
  %v6736 = vpop.f32.mrf.mxu0
  %v6737 = vadd.f32 0.0, %v6736
  %v6738 = vpop.f32.mrf.mxu0
  %6739 = vmatprep.mubr.bf16.mxu0 0
  %6740 = vmatmul.mubr.bf16.gmra.mxu0 %v6691
  %v6741 = vpop.f32.mrf.mxu0
  %v6742 = vadd.f32 0.0, %v6741
  %v6743 = vpop.f32.mrf.mxu0
  %v6744 = vpop.f32.mrf.mxu0
  %v6745 = vadd.f32 0.0, %v6744
  %v6746 = vpop.f32.mrf.mxu0
  %6747 = vmatprep.mubr.bf16.mxu0 0
  %6748 = vmatmul.mubr.bf16.gmra.mxu0 %v6694
  %v6749 = vpop.f32.mrf.mxu0
  %v6750 = vadd.f32 0.0, %v6749
  %v6751 = vpop.f32.mrf.mxu0
  %v6752 = vpop.f32.mrf.mxu0
  %v6753 = vadd.f32 0.0, %v6752
  %v6754 = vpop.f32.mrf.mxu0
  %6755 = vmatprep.mubr.bf16.mxu0 0
  %6756 = vmatmul.mubr.bf16.gmra.mxu0 %v6697
  %v6757 = vpop.f32.mrf.mxu0
  %v6758 = vadd.f32 0.0, %v6757
  %v6759 = vpop.f32.mrf.mxu0
  %v6760 = vpop.f32.mrf.mxu0
  %v6761 = vadd.f32 0.0, %v6760
  %v6762 = vpop.f32.mrf.mxu0
  %6763 = vdwg.mxu0
  %v6764 = vadd.f32 %v6601, %v6734
  %v6765 = vadd.f32 %v6602, %v6737
  %v6766 = vadd.f32 %v6603, %v6742
  %v6767 = vadd.f32 %v6604, %v6745
  %v6768 = vadd.f32 %v6605, %v6750
  %v6769 = vadd.f32 %v6606, %v6753
  %v6770 = vadd.f32 %v6607, %v6758
  %v6771 = vadd.f32 %v6608, %v6761
  %6772 = vmatprep.subr.bf16.mxu0 0
  %6773 = vmatpush1.bf16.msra.mxu0 0
  %6774 = vmatprep.subr.bf16.mxu0 0
  %6775 = vmatpush1.bf16.msra.mxu0 0
  %6776 = vmatprep.subr.bf16.mxu0 0
  %6777 = vmatpush1.bf16.msra.mxu0 0
  %6778 = vmatprep.subr.bf16.mxu0 0
  %6779 = vmatpush1.bf16.msra.mxu0 0
  %6780 = vmatprep.subr.bf16.mxu0 0
  %6781 = vmatpush1.bf16.msra.mxu0 %v5647
  %6782 = vmatprep.subr.bf16.mxu0 0
  %6783 = vmatpush1.bf16.msra.mxu0 %v5646
  %6784 = vmatprep.subr.bf16.mxu0 0
  %6785 = vmatpush1.bf16.msra.mxu0 %v5645
  %6786 = vmatprep.subr.bf16.mxu0 0
  %6787 = vmatpush1.bf16.msra.mxu0 %v5644
  %6788 = vmatprep.subr.bf16.mxu0 0
  %6789 = vmatpush2.bf16.msra.mxu0 0
  %6790 = vmatprep.subr.bf16.mxu0 0
  %6791 = vmatpush2.bf16.msra.mxu0 0
  %6792 = vmatprep.subr.bf16.mxu0 0
  %6793 = vmatpush2.bf16.msra.mxu0 0
  %6794 = vmatprep.subr.bf16.mxu0 0
  %6795 = vmatpush2.bf16.msra.mxu0 0
  %6796 = vmatprep.subr.bf16.mxu0 0
  %6797 = vmatpush2.bf16.msra.mxu0 0
  %6798 = vmatprep.subr.bf16.mxu0 0
  %6799 = vmatpush2.bf16.msra.mxu0 0
  %6800 = vmatprep.subr.bf16.mxu0 0
  %6801 = vmatpush2.bf16.msra.mxu0 0
  %6802 = vmatprep.subr.bf16.mxu0 0
  %6803 = vmatpush2.bf16.msra.mxu0 0
  %6804 = vmatprep.mubr.bf16.mxu0 0
  %6805 = vmatmul.mubr.bf16.gmra.mxu0 %v5244
  %v6806 = vpop.f32.mrf.mxu0
  %v6807 = vadd.f32 0.0, %v6806
  %v6808 = vpop.f32.mrf.mxu0
  %v6809 = vpop.f32.mrf.mxu0
  %v6810 = vadd.f32 0.0, %v6809
  %v6811 = vpop.f32.mrf.mxu0
  %6812 = vmatprep.mubr.bf16.mxu0 0
  %6813 = vmatmul.mubr.bf16.gmra.mxu0 %v5247
  %v6814 = vpop.f32.mrf.mxu0
  %v6815 = vadd.f32 0.0, %v6814
  %v6816 = vpop.f32.mrf.mxu0
  %v6817 = vpop.f32.mrf.mxu0
  %v6818 = vadd.f32 0.0, %v6817
  %v6819 = vpop.f32.mrf.mxu0
  %6820 = vmatprep.mubr.bf16.mxu0 0
  %6821 = vmatmul.mubr.bf16.gmra.mxu0 %v5250
  %v6822 = vpop.f32.mrf.mxu0
  %v6823 = vadd.f32 0.0, %v6822
  %v6824 = vpop.f32.mrf.mxu0
  %v6825 = vpop.f32.mrf.mxu0
  %v6826 = vadd.f32 0.0, %v6825
  %v6827 = vpop.f32.mrf.mxu0
  %6828 = vmatprep.mubr.bf16.mxu0 0
  %6829 = vmatmul.mubr.bf16.gmra.mxu0 %v5253
  %v6830 = vpop.f32.mrf.mxu0
  %v6831 = vadd.f32 0.0, %v6830
  %v6832 = vpop.f32.mrf.mxu0
  %v6833 = vpop.f32.mrf.mxu0
  %v6834 = vadd.f32 0.0, %v6833
  %v6835 = vpop.f32.mrf.mxu0
  %6836 = vdwg.mxu0
  %v6837 = vpack.c.bf16 %v6810, %v6807
  %v6838 = vpack.c.bf16 %v6818, %v6815
  %v6839 = vpack.c.bf16 %v6826, %v6823
  %v6840 = vpack.c.bf16 %v6834, %v6831
  %s6841 = scalar_lea.vmem %s9, 56
  %v6842 = vld [vmem:[%s6841] sm:$0xf]
  %v6843 = vld [vmem:[%s6841 + $0x4] sm:$0xf]
  %v6846 = vunpack.c.l.b16 %v6842
  %v6847 = vunpack.c.l.b16 %v6843
  %v6848 = vpack.c.b16 %v6847, %v6846
  %v6851 = vsel %vm4033, %v6837, 0
  %v6854 = vsel %vm4033, %v6838, 0
  %v6857 = vsel %vm4033, %v6839, 0
  %v6860 = vsel %vm4033, %v6840, 0
  %6862 = vmatprep.subr.bf16.mxu0 0
  %6863 = vmatpush1.bf16.msra.mxu0 0
  %6864 = vmatprep.subr.bf16.mxu0 0
  %6865 = vmatpush1.bf16.msra.mxu0 0
  %6866 = vmatprep.subr.bf16.mxu0 0
  %6867 = vmatpush1.bf16.msra.mxu0 0
  %6868 = vmatprep.subr.bf16.mxu0 0
  %6869 = vmatpush1.bf16.msra.mxu0 0
  %6870 = vmatprep.subr.bf16.mxu0 0
  %6871 = vmatpush1.bf16.msra.mxu0 0
  %6872 = vmatprep.subr.bf16.mxu0 0
  %6873 = vmatpush1.bf16.msra.mxu0 0
  %6874 = vmatprep.subr.bf16.mxu0 0
  %6875 = vmatpush1.bf16.msra.mxu0 0
  %6876 = vmatprep.subr.bf16.mxu0 0
  %6877 = vmatpush1.bf16.msra.mxu0 %v6848
  %6878 = vmatprep.subr.bf16.mxu0 0
  %6879 = vmatpush2.bf16.msra.mxu0 0
  %6880 = vmatprep.subr.bf16.mxu0 0
  %6881 = vmatpush2.bf16.msra.mxu0 0
  %6882 = vmatprep.subr.bf16.mxu0 0
  %6883 = vmatpush2.bf16.msra.mxu0 0
  %6884 = vmatprep.subr.bf16.mxu0 0
  %6885 = vmatpush2.bf16.msra.mxu0 0
  %6886 = vmatprep.subr.bf16.mxu0 0
  %6887 = vmatpush2.bf16.msra.mxu0 0
  %6888 = vmatprep.subr.bf16.mxu0 0
  %6889 = vmatpush2.bf16.msra.mxu0 0
  %6890 = vmatprep.subr.bf16.mxu0 0
  %6891 = vmatpush2.bf16.msra.mxu0 0
  %6892 = vmatprep.subr.bf16.mxu0 0
  %6893 = vmatpush2.bf16.msra.mxu0 0
  %6894 = vmatprep.mubr.bf16.mxu0 0
  %6895 = vmatmul.mubr.bf16.gmra.mxu0 %v6851
  %v6896 = vpop.f32.mrf.mxu0
  %v6897 = vadd.f32 0.0, %v6896
  %v6898 = vpop.f32.mrf.mxu0
  %v6899 = vpop.f32.mrf.mxu0
  %v6900 = vadd.f32 0.0, %v6899
  %v6901 = vpop.f32.mrf.mxu0
  %6902 = vmatprep.mubr.bf16.mxu0 0
  %6903 = vmatmul.mubr.bf16.gmra.mxu0 %v6854
  %v6904 = vpop.f32.mrf.mxu0
  %v6905 = vadd.f32 0.0, %v6904
  %v6906 = vpop.f32.mrf.mxu0
  %v6907 = vpop.f32.mrf.mxu0
  %v6908 = vadd.f32 0.0, %v6907
  %v6909 = vpop.f32.mrf.mxu0
  %6910 = vmatprep.mubr.bf16.mxu0 0
  %6911 = vmatmul.mubr.bf16.gmra.mxu0 %v6857
  %v6912 = vpop.f32.mrf.mxu0
  %v6913 = vadd.f32 0.0, %v6912
  %v6914 = vpop.f32.mrf.mxu0
  %v6915 = vpop.f32.mrf.mxu0
  %v6916 = vadd.f32 0.0, %v6915
  %v6917 = vpop.f32.mrf.mxu0
  %6918 = vmatprep.mubr.bf16.mxu0 0
  %6919 = vmatmul.mubr.bf16.gmra.mxu0 %v6860
  %v6920 = vpop.f32.mrf.mxu0
  %v6921 = vadd.f32 0.0, %v6920
  %v6922 = vpop.f32.mrf.mxu0
  %v6923 = vpop.f32.mrf.mxu0
  %v6924 = vadd.f32 0.0, %v6923
  %v6925 = vpop.f32.mrf.mxu0
  %6926 = vdwg.mxu0
  %v6927 = vadd.f32 %v6764, %v6897
  %v6928 = vadd.f32 %v6765, %v6900
  %v6929 = vadd.f32 %v6766, %v6905
  %v6930 = vadd.f32 %v6767, %v6908
  %v6931 = vadd.f32 %v6768, %v6913
  %v6932 = vadd.f32 %v6769, %v6916
  %v6933 = vadd.f32 %v6770, %v6921
  %v6934 = vadd.f32 %v6771, %v6924
  %6935 = vmatprep.subr.bf16.mxu0 0
  %6936 = vmatpush1.bf16.msra.mxu0 0
  %6937 = vmatprep.subr.bf16.mxu0 0
  %6938 = vmatpush1.bf16.msra.mxu0 0
  %6939 = vmatprep.subr.bf16.mxu0 0
  %6940 = vmatpush1.bf16.msra.mxu0 0
  %6941 = vmatprep.subr.bf16.mxu0 0
  %6942 = vmatpush1.bf16.msra.mxu0 0
  %6943 = vmatprep.subr.bf16.mxu0 0
  %6944 = vmatpush1.bf16.msra.mxu0 %v5647
  %6945 = vmatprep.subr.bf16.mxu0 0
  %6946 = vmatpush1.bf16.msra.mxu0 %v5646
  %6947 = vmatprep.subr.bf16.mxu0 0
  %6948 = vmatpush1.bf16.msra.mxu0 %v5645
  %6949 = vmatprep.subr.bf16.mxu0 0
  %6950 = vmatpush1.bf16.msra.mxu0 %v5644
  %6951 = vmatprep.subr.bf16.mxu0 0
  %6952 = vmatpush2.bf16.msra.mxu0 0
  %6953 = vmatprep.subr.bf16.mxu0 0
  %6954 = vmatpush2.bf16.msra.mxu0 0
  %6955 = vmatprep.subr.bf16.mxu0 0
  %6956 = vmatpush2.bf16.msra.mxu0 0
  %6957 = vmatprep.subr.bf16.mxu0 0
  %6958 = vmatpush2.bf16.msra.mxu0 0
  %6959 = vmatprep.subr.bf16.mxu0 0
  %6960 = vmatpush2.bf16.msra.mxu0 0
  %6961 = vmatprep.subr.bf16.mxu0 0
  %6962 = vmatpush2.bf16.msra.mxu0 0
  %6963 = vmatprep.subr.bf16.mxu0 0
  %6964 = vmatpush2.bf16.msra.mxu0 0
  %6965 = vmatprep.subr.bf16.mxu0 0
  %6966 = vmatpush2.bf16.msra.mxu0 0
  %6967 = vmatprep.mubr.bf16.mxu0 0
  %6968 = vmatmul.mubr.bf16.gmra.mxu0 %v5448
  %v6969 = vpop.f32.mrf.mxu0
  %v6970 = vadd.f32 0.0, %v6969
  %v6971 = vpop.f32.mrf.mxu0
  %v6972 = vpop.f32.mrf.mxu0
  %v6973 = vadd.f32 0.0, %v6972
  %v6974 = vpop.f32.mrf.mxu0
  %6975 = vmatprep.mubr.bf16.mxu0 0
  %6976 = vmatmul.mubr.bf16.gmra.mxu0 %v5451
  %v6977 = vpop.f32.mrf.mxu0
  %v6978 = vadd.f32 0.0, %v6977
  %v6979 = vpop.f32.mrf.mxu0
  %v6980 = vpop.f32.mrf.mxu0
  %v6981 = vadd.f32 0.0, %v6980
  %v6982 = vpop.f32.mrf.mxu0
  %6983 = vmatprep.mubr.bf16.mxu0 0
  %6984 = vmatmul.mubr.bf16.gmra.mxu0 %v5454
  %v6985 = vpop.f32.mrf.mxu0
  %v6986 = vadd.f32 0.0, %v6985
  %v6987 = vpop.f32.mrf.mxu0
  %v6988 = vpop.f32.mrf.mxu0
  %v6989 = vadd.f32 0.0, %v6988
  %v6990 = vpop.f32.mrf.mxu0
  %6991 = vmatprep.mubr.bf16.mxu0 0
  %6992 = vmatmul.mubr.bf16.gmra.mxu0 %v5457
  %v6993 = vpop.f32.mrf.mxu0
  %v6994 = vadd.f32 0.0, %v6993
  %v6995 = vpop.f32.mrf.mxu0
  %v6996 = vpop.f32.mrf.mxu0
  %v6997 = vadd.f32 0.0, %v6996
  %v6998 = vpop.f32.mrf.mxu0
  %6999 = vdwg.mxu0
  %v7000 = vpack.c.bf16 %v6973, %v6970
  %v7001 = vpack.c.bf16 %v6981, %v6978
  %v7002 = vpack.c.bf16 %v6989, %v6986
  %v7003 = vpack.c.bf16 %v6997, %v6994
  %s7004 = scalar_lea.vmem %s9, 64
  %v7005 = vld [vmem:[%s7004] sm:$0xf]
  %v7006 = vld [vmem:[%s7004 + $0x4] sm:$0xf]
  %v7009 = vunpack.c.l.b16 %v7005
  %v7010 = vunpack.c.l.b16 %v7006
  %v7011 = vpack.c.b16 %v7010, %v7009
  %v7014 = vsel %vm4033, %v7000, 0
  %v7017 = vsel %vm4033, %v7001, 0
  %v7020 = vsel %vm4033, %v7002, 0
  %v7023 = vsel %vm4033, %v7003, 0
  %7025 = vmatprep.subr.bf16.mxu0 0
  %7026 = vmatpush1.bf16.msra.mxu0 0
  %7027 = vmatprep.subr.bf16.mxu0 0
  %7028 = vmatpush1.bf16.msra.mxu0 0
  %7029 = vmatprep.subr.bf16.mxu0 0
  %7030 = vmatpush1.bf16.msra.mxu0 0
  %7031 = vmatprep.subr.bf16.mxu0 0
  %7032 = vmatpush1.bf16.msra.mxu0 0
  %7033 = vmatprep.subr.bf16.mxu0 0
  %7034 = vmatpush1.bf16.msra.mxu0 0
  %7035 = vmatprep.subr.bf16.mxu0 0
  %7036 = vmatpush1.bf16.msra.mxu0 0
  %7037 = vmatprep.subr.bf16.mxu0 0
  %7038 = vmatpush1.bf16.msra.mxu0 0
  %7039 = vmatprep.subr.bf16.mxu0 0
  %7040 = vmatpush1.bf16.msra.mxu0 %v7011
  %7041 = vmatprep.subr.bf16.mxu0 0
  %7042 = vmatpush2.bf16.msra.mxu0 0
  %7043 = vmatprep.subr.bf16.mxu0 0
  %7044 = vmatpush2.bf16.msra.mxu0 0
  %7045 = vmatprep.subr.bf16.mxu0 0
  %7046 = vmatpush2.bf16.msra.mxu0 0
  %7047 = vmatprep.subr.bf16.mxu0 0
  %7048 = vmatpush2.bf16.msra.mxu0 0
  %7049 = vmatprep.subr.bf16.mxu0 0
  %7050 = vmatpush2.bf16.msra.mxu0 0
  %7051 = vmatprep.subr.bf16.mxu0 0
  %7052 = vmatpush2.bf16.msra.mxu0 0
  %7053 = vmatprep.subr.bf16.mxu0 0
  %7054 = vmatpush2.bf16.msra.mxu0 0
  %7055 = vmatprep.subr.bf16.mxu0 0
  %7056 = vmatpush2.bf16.msra.mxu0 0
  %7057 = vmatprep.mubr.bf16.mxu0 0
  %7058 = vmatmul.mubr.bf16.gmra.mxu0 %v7014
  %v7059 = vpop.f32.mrf.mxu0
  %v7060 = vadd.f32 0.0, %v7059
  %v7061 = vpop.f32.mrf.mxu0
  %v7062 = vpop.f32.mrf.mxu0
  %v7063 = vadd.f32 0.0, %v7062
  %v7064 = vpop.f32.mrf.mxu0
  %7065 = vmatprep.mubr.bf16.mxu0 0
  %7066 = vmatmul.mubr.bf16.gmra.mxu0 %v7017
  %v7067 = vpop.f32.mrf.mxu0
  %v7068 = vadd.f32 0.0, %v7067
  %v7069 = vpop.f32.mrf.mxu0
  %v7070 = vpop.f32.mrf.mxu0
  %v7071 = vadd.f32 0.0, %v7070
  %v7072 = vpop.f32.mrf.mxu0
  %7073 = vmatprep.mubr.bf16.mxu0 0
  %7074 = vmatmul.mubr.bf16.gmra.mxu0 %v7020
  %v7075 = vpop.f32.mrf.mxu0
  %v7076 = vadd.f32 0.0, %v7075
  %v7077 = vpop.f32.mrf.mxu0
  %v7078 = vpop.f32.mrf.mxu0
  %v7079 = vadd.f32 0.0, %v7078
  %v7080 = vpop.f32.mrf.mxu0
  %7081 = vmatprep.mubr.bf16.mxu0 0
  %7082 = vmatmul.mubr.bf16.gmra.mxu0 %v7023
  %v7083 = vpop.f32.mrf.mxu0
  %v7084 = vadd.f32 0.0, %v7083
  %v7085 = vpop.f32.mrf.mxu0
  %v7086 = vpop.f32.mrf.mxu0
  %v7087 = vadd.f32 0.0, %v7086
  %v7088 = vpop.f32.mrf.mxu0
  %7089 = vdwg.mxu0
  %v7090 = vadd.f32 %v6927, %v7060
  %v7091 = vadd.f32 %v6928, %v7063
  %v7092 = vadd.f32 %v6929, %v7068
  %v7093 = vadd.f32 %v6930, %v7071
  %v7094 = vadd.f32 %v6931, %v7076
  %v7095 = vadd.f32 %v6932, %v7079
  %v7096 = vadd.f32 %v6933, %v7084
  %v7097 = vadd.f32 %v6934, %v7087
  %v7098 = vmax.f32 %v7090, 0.0
  %v7099 = vmax.f32 %v7091, 0.0
  %v7100 = vmax.f32 %v7092, 0.0
  %v7101 = vmax.f32 %v7093, 0.0
  %v7102 = vmax.f32 %v7094, 0.0
  %v7103 = vmax.f32 %v7095, 0.0
  %v7104 = vmax.f32 %v7096, 0.0
  %v7105 = vmax.f32 %v7097, 0.0
  %v7106 = vpack.c.bf16 %v7099, %v7098
  %v7107 = vpack.c.bf16 %v7101, %v7100
  %v7108 = vpack.c.bf16 %v7103, %v7102
  %v7109 = vpack.c.bf16 %v7105, %v7104
  %v7110 = vld [vmem:[%s10] sm:$0xf]
  %v7112 = vsel %vm702, %v7106, 0
  %v7115 = vsel %vm702, %v7107, 0
  %v7118 = vsel %vm702, %v7108, 0
  %v7121 = vsel %vm702, %v7109, 0
  %v7124 = vsel %vm715, %v7110, 0
  %7126 = vmatprep.subr.bf16.mxu0 0
  %7127 = vmatpush1.bf16.msra.mxu0 0
  %7128 = vmatprep.subr.bf16.mxu0 0
  %7129 = vmatpush1.bf16.msra.mxu0 0
  %7130 = vmatprep.subr.bf16.mxu0 0
  %7131 = vmatpush1.bf16.msra.mxu0 0
  %7132 = vmatprep.subr.bf16.mxu0 0
  %7133 = vmatpush1.bf16.msra.mxu0 0
  %7134 = vmatprep.subr.bf16.mxu0 0
  %7135 = vmatpush1.bf16.msra.mxu0 0
  %7136 = vmatprep.subr.bf16.mxu0 0
  %7137 = vmatpush1.bf16.msra.mxu0 0
  %7138 = vmatprep.subr.bf16.mxu0 0
  %7139 = vmatpush1.bf16.msra.mxu0 0
  %7140 = vmatprep.subr.bf16.mxu0 0
  %7141 = vmatpush1.bf16.msra.mxu0 %v7124
  %7142 = vmatprep.subr.bf16.mxu0 0
  %7143 = vmatpush2.bf16.msra.mxu0 0
  %7144 = vmatprep.subr.bf16.mxu0 0
  %7145 = vmatpush2.bf16.msra.mxu0 0
  %7146 = vmatprep.subr.bf16.mxu0 0
  %7147 = vmatpush2.bf16.msra.mxu0 0
  %7148 = vmatprep.subr.bf16.mxu0 0
  %7149 = vmatpush2.bf16.msra.mxu0 0
  %7150 = vmatprep.subr.bf16.mxu0 0
  %7151 = vmatpush2.bf16.msra.mxu0 0
  %7152 = vmatprep.subr.bf16.mxu0 0
  %7153 = vmatpush2.bf16.msra.mxu0 0
  %7154 = vmatprep.subr.bf16.mxu0 0
  %7155 = vmatpush2.bf16.msra.mxu0 0
  %7156 = vmatprep.subr.bf16.mxu0 0
  %7157 = vmatpush2.bf16.msra.mxu0 0
  %7158 = vmatprep.mubr.bf16.mxu0 0
  %7159 = vmatmul.mubr.bf16.gmra.mxu0 %v7112
  %v7160 = vpop.f32.mrf.mxu0
  %v7161 = vadd.f32 0.0, %v7160
  %v7162 = vpop.f32.mrf.mxu0
  %v7163 = vpop.f32.mrf.mxu0
  %v7164 = vadd.f32 0.0, %v7163
  %v7165 = vpop.f32.mrf.mxu0
  %7166 = vmatprep.mubr.bf16.mxu0 0
  %7167 = vmatmul.mubr.bf16.gmra.mxu0 %v7115
  %v7168 = vpop.f32.mrf.mxu0
  %v7169 = vadd.f32 0.0, %v7168
  %v7170 = vpop.f32.mrf.mxu0
  %v7171 = vpop.f32.mrf.mxu0
  %v7172 = vadd.f32 0.0, %v7171
  %v7173 = vpop.f32.mrf.mxu0
  %7174 = vmatprep.mubr.bf16.mxu0 0
  %7175 = vmatmul.mubr.bf16.gmra.mxu0 %v7118
  %v7176 = vpop.f32.mrf.mxu0
  %v7177 = vadd.f32 0.0, %v7176
  %v7178 = vpop.f32.mrf.mxu0
  %v7179 = vpop.f32.mrf.mxu0
  %v7180 = vadd.f32 0.0, %v7179
  %v7181 = vpop.f32.mrf.mxu0
  %7182 = vmatprep.mubr.bf16.mxu0 0
  %7183 = vmatmul.mubr.bf16.gmra.mxu0 %v7121
  %v7184 = vpop.f32.mrf.mxu0
  %v7185 = vadd.f32 0.0, %v7184
  %v7186 = vpop.f32.mrf.mxu0
  %v7187 = vpop.f32.mrf.mxu0
  %v7188 = vadd.f32 0.0, %v7187
  %v7189 = vpop.f32.mrf.mxu0
  %7190 = vdwg.mxu0
  %v7191 = vadd.f32 %v5628, %v7161
  %v7192 = vadd.f32 %v5629, %v7164
  %v7193 = vadd.f32 %v5630, %v7169
  %v7194 = vadd.f32 %v5631, %v7172
  %v7195 = vadd.f32 %v5632, %v7177
  %v7196 = vadd.f32 %v5633, %v7180
  %v7197 = vadd.f32 %v5634, %v7185
  %v7198 = vadd.f32 %v5635, %v7188
  %v7199 = vmax.f32 %v7191, 0.0
  %v7200 = vmax.f32 %v7192, 0.0
  %v7201 = vmax.f32 %v7193, 0.0
  %v7202 = vmax.f32 %v7194, 0.0
  %v7203 = vmax.f32 %v7195, 0.0
  %v7204 = vmax.f32 %v7196, 0.0
  %v7205 = vmax.f32 %v7197, 0.0
  %v7206 = vmax.f32 %v7198, 0.0
  %v7207 = vpack.c.bf16 %v7200, %v7199
  %v7208 = vpack.c.bf16 %v7202, %v7201
  %v7209 = vpack.c.bf16 %v7204, %v7203
  %v7210 = vpack.c.bf16 %v7206, %v7205
  %7211 = vmatprep.subr.bf16.mxu0 0
  %7212 = vmatpush1.bf16.msra.mxu0 0
  %7213 = vmatprep.subr.bf16.mxu0 0
  %7214 = vmatpush1.bf16.msra.mxu0 0
  %7215 = vmatprep.subr.bf16.mxu0 0
  %7216 = vmatpush1.bf16.msra.mxu0 0
  %7217 = vmatprep.subr.bf16.mxu0 0
  %7218 = vmatpush1.bf16.msra.mxu0 0
  %7219 = vmatprep.subr.bf16.mxu0 0
  %7220 = vmatpush1.bf16.msra.mxu0 %v7210
  %7221 = vmatprep.subr.bf16.mxu0 0
  %7222 = vmatpush1.bf16.msra.mxu0 %v7209
  %7223 = vmatprep.subr.bf16.mxu0 0
  %7224 = vmatpush1.bf16.msra.mxu0 %v7208
  %7225 = vmatprep.subr.bf16.mxu0 0
  %7226 = vmatpush1.bf16.msra.mxu0 %v7207
  %7227 = vmatprep.subr.bf16.mxu0 0
  %7228 = vmatpush2.bf16.msra.mxu0 0
  %7229 = vmatprep.subr.bf16.mxu0 0
  %7230 = vmatpush2.bf16.msra.mxu0 0
  %7231 = vmatprep.subr.bf16.mxu0 0
  %7232 = vmatpush2.bf16.msra.mxu0 0
  %7233 = vmatprep.subr.bf16.mxu0 0
  %7234 = vmatpush2.bf16.msra.mxu0 0
  %7235 = vmatprep.subr.bf16.mxu0 0
  %7236 = vmatpush2.bf16.msra.mxu0 0
  %7237 = vmatprep.subr.bf16.mxu0 0
  %7238 = vmatpush2.bf16.msra.mxu0 0
  %7239 = vmatprep.subr.bf16.mxu0 0
  %7240 = vmatpush2.bf16.msra.mxu0 0
  %7241 = vmatprep.subr.bf16.mxu0 0
  %7242 = vmatpush2.bf16.msra.mxu0 0
  %7243 = vmatprep.mubr.bf16.mxu0 0
  %7244 = vmatmul.mubr.bf16.gmra.mxu0 %v3832
  %v7245 = vpop.f32.mrf.mxu0
  %v7246 = vadd.f32 0.0, %v7245
  %v7247 = vpop.f32.mrf.mxu0
  %v7248 = vpop.f32.mrf.mxu0
  %v7249 = vadd.f32 0.0, %v7248
  %v7250 = vpop.f32.mrf.mxu0
  %7251 = vmatprep.mubr.bf16.mxu0 0
  %7252 = vmatmul.mubr.bf16.gmra.mxu0 %v3835
  %v7253 = vpop.f32.mrf.mxu0
  %v7254 = vadd.f32 0.0, %v7253
  %v7255 = vpop.f32.mrf.mxu0
  %v7256 = vpop.f32.mrf.mxu0
  %v7257 = vadd.f32 0.0, %v7256
  %v7258 = vpop.f32.mrf.mxu0
  %7259 = vmatprep.mubr.bf16.mxu0 0
  %7260 = vmatmul.mubr.bf16.gmra.mxu0 %v3838
  %v7261 = vpop.f32.mrf.mxu0
  %v7262 = vadd.f32 0.0, %v7261
  %v7263 = vpop.f32.mrf.mxu0
  %v7264 = vpop.f32.mrf.mxu0
  %v7265 = vadd.f32 0.0, %v7264
  %v7266 = vpop.f32.mrf.mxu0
  %7267 = vmatprep.mubr.bf16.mxu0 0
  %7268 = vmatmul.mubr.bf16.gmra.mxu0 %v3841
  %v7269 = vpop.f32.mrf.mxu0
  %v7270 = vadd.f32 0.0, %v7269
  %v7271 = vpop.f32.mrf.mxu0
  %v7272 = vpop.f32.mrf.mxu0
  %v7273 = vadd.f32 0.0, %v7272
  %v7274 = vpop.f32.mrf.mxu0
  %7275 = vdwg.mxu0
  %v7276 = vpack.c.bf16 %v7249, %v7246
  %v7277 = vpack.c.bf16 %v7257, %v7254
  %v7278 = vpack.c.bf16 %v7265, %v7262
  %v7279 = vpack.c.bf16 %v7273, %v7270
  %s7280 = scalar_lea.vmem %s9, 72
  %v7281 = vld [vmem:[%s7280] sm:$0xf]
  %v7282 = vld [vmem:[%s7280 + $0x4] sm:$0xf]
  %7283 = vmatprep.subr.bf16.mxu0 0
  %7284 = vmatpush1.bf16.msra.mxu0 0
  %7285 = vmatprep.subr.bf16.mxu0 0
  %7286 = vmatpush1.bf16.msra.mxu0 0
  %7287 = vmatprep.subr.bf16.mxu0 0
  %7288 = vmatpush1.bf16.msra.mxu0 0
  %7289 = vmatprep.subr.bf16.mxu0 0
  %7290 = vmatpush1.bf16.msra.mxu0 0
  %7291 = vmatprep.subr.bf16.mxu0 0
  %7292 = vmatpush1.bf16.msra.mxu0 %v7210
  %7293 = vmatprep.subr.bf16.mxu0 0
  %7294 = vmatpush1.bf16.msra.mxu0 %v7209
  %7295 = vmatprep.subr.bf16.mxu0 0
  %7296 = vmatpush1.bf16.msra.mxu0 %v7208
  %7297 = vmatprep.subr.bf16.mxu0 0
  %7298 = vmatpush1.bf16.msra.mxu0 %v7207
  %7299 = vmatprep.subr.bf16.mxu0 0
  %7300 = vmatpush2.bf16.msra.mxu0 0
  %7301 = vmatprep.subr.bf16.mxu0 0
  %7302 = vmatpush2.bf16.msra.mxu0 0
  %7303 = vmatprep.subr.bf16.mxu0 0
  %7304 = vmatpush2.bf16.msra.mxu0 0
  %7305 = vmatprep.subr.bf16.mxu0 0
  %7306 = vmatpush2.bf16.msra.mxu0 0
  %7307 = vmatprep.subr.bf16.mxu0 0
  %7308 = vmatpush2.bf16.msra.mxu0 0
  %7309 = vmatprep.subr.bf16.mxu0 0
  %7310 = vmatpush2.bf16.msra.mxu0 0
  %7311 = vmatprep.subr.bf16.mxu0 0
  %7312 = vmatpush2.bf16.msra.mxu0 0
  %7313 = vmatprep.subr.bf16.mxu0 0
  %7314 = vmatpush2.bf16.msra.mxu0 0
  %7315 = vmatprep.mubr.bf16.mxu0 0
  %7316 = vmatmul.mubr.bf16.gmra.mxu0 %v3944
  %v7317 = vpop.f32.mrf.mxu0
  %v7318 = vadd.f32 0.0, %v7317
  %v7319 = vpop.f32.mrf.mxu0
  %v7320 = vpop.f32.mrf.mxu0
  %v7321 = vadd.f32 0.0, %v7320
  %v7322 = vpop.f32.mrf.mxu0
  %7323 = vmatprep.mubr.bf16.mxu0 0
  %7324 = vmatmul.mubr.bf16.gmra.mxu0 %v3947
  %v7325 = vpop.f32.mrf.mxu0
  %v7326 = vadd.f32 0.0, %v7325
  %v7327 = vpop.f32.mrf.mxu0
  %v7328 = vpop.f32.mrf.mxu0
  %v7329 = vadd.f32 0.0, %v7328
  %v7330 = vpop.f32.mrf.mxu0
  %7331 = vmatprep.mubr.bf16.mxu0 0
  %7332 = vmatmul.mubr.bf16.gmra.mxu0 %v3950
  %v7333 = vpop.f32.mrf.mxu0
  %v7334 = vadd.f32 0.0, %v7333
  %v7335 = vpop.f32.mrf.mxu0
  %v7336 = vpop.f32.mrf.mxu0
  %v7337 = vadd.f32 0.0, %v7336
  %v7338 = vpop.f32.mrf.mxu0
  %7339 = vmatprep.mubr.bf16.mxu0 0
  %7340 = vmatmul.mubr.bf16.gmra.mxu0 %v3953
  %v7341 = vpop.f32.mrf.mxu0
  %v7342 = vadd.f32 0.0, %v7341
  %v7343 = vpop.f32.mrf.mxu0
  %v7344 = vpop.f32.mrf.mxu0
  %v7345 = vadd.f32 0.0, %v7344
  %v7346 = vpop.f32.mrf.mxu0
  %7347 = vdwg.mxu0
  %v7348 = vpack.c.bf16 %v7321, %v7318
  %v7349 = vpack.c.bf16 %v7329, %v7326
  %v7350 = vpack.c.bf16 %v7337, %v7334
  %v7351 = vpack.c.bf16 %v7345, %v7342
  %s7352 = scalar_lea.vmem %s9, 80
  %v7353 = vld [vmem:[%s7352] sm:$0xf]
  %v7354 = vld [vmem:[%s7352 + $0x4] sm:$0xf]
  %v7357 = vunpack.c.l.b16 %v7353
  %v7358 = vunpack.c.l.b16 %v7354
  %v7359 = vpack.c.b16 %v7358, %v7357
  %v7362 = vsel %vm4033, %v7348, 0
  %v7365 = vsel %vm4033, %v7349, 0
  %v7368 = vsel %vm4033, %v7350, 0
  %v7371 = vsel %vm4033, %v7351, 0
  %7373 = vmatprep.subr.bf16.mxu0 0
  %7374 = vmatpush1.bf16.msra.mxu0 0
  %7375 = vmatprep.subr.bf16.mxu0 0
  %7376 = vmatpush1.bf16.msra.mxu0 0
  %7377 = vmatprep.subr.bf16.mxu0 0
  %7378 = vmatpush1.bf16.msra.mxu0 0
  %7379 = vmatprep.subr.bf16.mxu0 0
  %7380 = vmatpush1.bf16.msra.mxu0 0
  %7381 = vmatprep.subr.bf16.mxu0 0
  %7382 = vmatpush1.bf16.msra.mxu0 0
  %7383 = vmatprep.subr.bf16.mxu0 0
  %7384 = vmatpush1.bf16.msra.mxu0 0
  %7385 = vmatprep.subr.bf16.mxu0 0
  %7386 = vmatpush1.bf16.msra.mxu0 0
  %7387 = vmatprep.subr.bf16.mxu0 0
  %7388 = vmatpush1.bf16.msra.mxu0 %v7359
  %7389 = vmatprep.subr.bf16.mxu0 0
  %7390 = vmatpush2.bf16.msra.mxu0 0
  %7391 = vmatprep.subr.bf16.mxu0 0
  %7392 = vmatpush2.bf16.msra.mxu0 0
  %7393 = vmatprep.subr.bf16.mxu0 0
  %7394 = vmatpush2.bf16.msra.mxu0 0
  %7395 = vmatprep.subr.bf16.mxu0 0
  %7396 = vmatpush2.bf16.msra.mxu0 0
  %7397 = vmatprep.subr.bf16.mxu0 0
  %7398 = vmatpush2.bf16.msra.mxu0 0
  %7399 = vmatprep.subr.bf16.mxu0 0
  %7400 = vmatpush2.bf16.msra.mxu0 0
  %7401 = vmatprep.subr.bf16.mxu0 0
  %7402 = vmatpush2.bf16.msra.mxu0 0
  %7403 = vmatprep.subr.bf16.mxu0 0
  %7404 = vmatpush2.bf16.msra.mxu0 0
  %7405 = vmatprep.mubr.bf16.mxu0 0
  %7406 = vmatmul.mubr.bf16.gmra.mxu0 %v7362
  %v7407 = vpop.f32.mrf.mxu0
  %v7408 = vadd.f32 0.0, %v7407
  %v7409 = vpop.f32.mrf.mxu0
  %v7410 = vpop.f32.mrf.mxu0
  %v7411 = vadd.f32 0.0, %v7410
  %v7412 = vpop.f32.mrf.mxu0
  %7413 = vmatprep.mubr.bf16.mxu0 0
  %7414 = vmatmul.mubr.bf16.gmra.mxu0 %v7365
  %v7415 = vpop.f32.mrf.mxu0
  %v7416 = vadd.f32 0.0, %v7415
  %v7417 = vpop.f32.mrf.mxu0
  %v7418 = vpop.f32.mrf.mxu0
  %v7419 = vadd.f32 0.0, %v7418
  %v7420 = vpop.f32.mrf.mxu0
  %7421 = vmatprep.mubr.bf16.mxu0 0
  %7422 = vmatmul.mubr.bf16.gmra.mxu0 %v7368
  %v7423 = vpop.f32.mrf.mxu0
  %v7424 = vadd.f32 0.0, %v7423
  %v7425 = vpop.f32.mrf.mxu0
  %v7426 = vpop.f32.mrf.mxu0
  %v7427 = vadd.f32 0.0, %v7426
  %v7428 = vpop.f32.mrf.mxu0
  %7429 = vmatprep.mubr.bf16.mxu0 0
  %7430 = vmatmul.mubr.bf16.gmra.mxu0 %v7371
  %v7431 = vpop.f32.mrf.mxu0
  %v7432 = vadd.f32 0.0, %v7431
  %v7433 = vpop.f32.mrf.mxu0
  %v7434 = vpop.f32.mrf.mxu0
  %v7435 = vadd.f32 0.0, %v7434
  %v7436 = vpop.f32.mrf.mxu0
  %7437 = vdwg.mxu0
  %v7440 = vunpack.c.l.b16 %v7281
  %v7441 = vunpack.c.l.b16 %v7282
  %v7442 = vpack.c.b16 %v7441, %v7440
  %v7445 = vsel %vm4033, %v7276, 0
  %v7448 = vsel %vm4033, %v7277, 0
  %v7451 = vsel %vm4033, %v7278, 0
  %v7454 = vsel %vm4033, %v7279, 0
  %7456 = vmatprep.subr.bf16.mxu0 0
  %7457 = vmatpush1.bf16.msra.mxu0 0
  %7458 = vmatprep.subr.bf16.mxu0 0
  %7459 = vmatpush1.bf16.msra.mxu0 0
  %7460 = vmatprep.subr.bf16.mxu0 0
  %7461 = vmatpush1.bf16.msra.mxu0 0
  %7462 = vmatprep.subr.bf16.mxu0 0
  %7463 = vmatpush1.bf16.msra.mxu0 0
  %7464 = vmatprep.subr.bf16.mxu0 0
  %7465 = vmatpush1.bf16.msra.mxu0 0
  %7466 = vmatprep.subr.bf16.mxu0 0
  %7467 = vmatpush1.bf16.msra.mxu0 0
  %7468 = vmatprep.subr.bf16.mxu0 0
  %7469 = vmatpush1.bf16.msra.mxu0 0
  %7470 = vmatprep.subr.bf16.mxu0 0
  %7471 = vmatpush1.bf16.msra.mxu0 %v7442
  %7472 = vmatprep.subr.bf16.mxu0 0
  %7473 = vmatpush2.bf16.msra.mxu0 0
  %7474 = vmatprep.subr.bf16.mxu0 0
  %7475 = vmatpush2.bf16.msra.mxu0 0
  %7476 = vmatprep.subr.bf16.mxu0 0
  %7477 = vmatpush2.bf16.msra.mxu0 0
  %7478 = vmatprep.subr.bf16.mxu0 0
  %7479 = vmatpush2.bf16.msra.mxu0 0
  %7480 = vmatprep.subr.bf16.mxu0 0
  %7481 = vmatpush2.bf16.msra.mxu0 0
  %7482 = vmatprep.subr.bf16.mxu0 0
  %7483 = vmatpush2.bf16.msra.mxu0 0
  %7484 = vmatprep.subr.bf16.mxu0 0
  %7485 = vmatpush2.bf16.msra.mxu0 0
  %7486 = vmatprep.subr.bf16.mxu0 0
  %7487 = vmatpush2.bf16.msra.mxu0 0
  %7488 = vmatprep.mubr.bf16.mxu0 0
  %7489 = vmatmul.mubr.bf16.gmra.mxu0 %v7445
  %v7490 = vpop.f32.mrf.mxu0
  %v7491 = vadd.f32 %v7408, %v7490
  %v7492 = vpop.f32.mrf.mxu0
  %v7493 = vpop.f32.mrf.mxu0
  %v7494 = vadd.f32 %v7411, %v7493
  %v7495 = vpop.f32.mrf.mxu0
  %7496 = vmatprep.mubr.bf16.mxu0 0
  %7497 = vmatmul.mubr.bf16.gmra.mxu0 %v7448
  %v7498 = vpop.f32.mrf.mxu0
  %v7499 = vadd.f32 %v7416, %v7498
  %v7500 = vpop.f32.mrf.mxu0
  %v7501 = vpop.f32.mrf.mxu0
  %v7502 = vadd.f32 %v7419, %v7501
  %v7503 = vpop.f32.mrf.mxu0
  %7504 = vmatprep.mubr.bf16.mxu0 0
  %7505 = vmatmul.mubr.bf16.gmra.mxu0 %v7451
  %v7506 = vpop.f32.mrf.mxu0
  %v7507 = vadd.f32 %v7424, %v7506
  %v7508 = vpop.f32.mrf.mxu0
  %v7509 = vpop.f32.mrf.mxu0
  %v7510 = vadd.f32 %v7427, %v7509
  %v7511 = vpop.f32.mrf.mxu0
  %7512 = vmatprep.mubr.bf16.mxu0 0
  %7513 = vmatmul.mubr.bf16.gmra.mxu0 %v7454
  %v7514 = vpop.f32.mrf.mxu0
  %v7515 = vadd.f32 %v7432, %v7514
  %v7516 = vpop.f32.mrf.mxu0
  %v7517 = vpop.f32.mrf.mxu0
  %v7518 = vadd.f32 %v7435, %v7517
  %v7519 = vpop.f32.mrf.mxu0
  %7520 = vdwg.mxu0
  %7521 = vmatprep.subr.bf16.mxu0 0
  %7522 = vmatpush1.bf16.msra.mxu0 0
  %7523 = vmatprep.subr.bf16.mxu0 0
  %7524 = vmatpush1.bf16.msra.mxu0 0
  %7525 = vmatprep.subr.bf16.mxu0 0
  %7526 = vmatpush1.bf16.msra.mxu0 0
  %7527 = vmatprep.subr.bf16.mxu0 0
  %7528 = vmatpush1.bf16.msra.mxu0 0
  %7529 = vmatprep.subr.bf16.mxu0 0
  %7530 = vmatpush1.bf16.msra.mxu0 %v7210
  %7531 = vmatprep.subr.bf16.mxu0 0
  %7532 = vmatpush1.bf16.msra.mxu0 %v7209
  %7533 = vmatprep.subr.bf16.mxu0 0
  %7534 = vmatpush1.bf16.msra.mxu0 %v7208
  %7535 = vmatprep.subr.bf16.mxu0 0
  %7536 = vmatpush1.bf16.msra.mxu0 %v7207
  %7537 = vmatprep.subr.bf16.mxu0 0
  %7538 = vmatpush2.bf16.msra.mxu0 0
  %7539 = vmatprep.subr.bf16.mxu0 0
  %7540 = vmatpush2.bf16.msra.mxu0 0
  %7541 = vmatprep.subr.bf16.mxu0 0
  %7542 = vmatpush2.bf16.msra.mxu0 0
  %7543 = vmatprep.subr.bf16.mxu0 0
  %7544 = vmatpush2.bf16.msra.mxu0 0
  %7545 = vmatprep.subr.bf16.mxu0 0
  %7546 = vmatpush2.bf16.msra.mxu0 0
  %7547 = vmatprep.subr.bf16.mxu0 0
  %7548 = vmatpush2.bf16.msra.mxu0 0
  %7549 = vmatprep.subr.bf16.mxu0 0
  %7550 = vmatpush2.bf16.msra.mxu0 0
  %7551 = vmatprep.subr.bf16.mxu0 0
  %7552 = vmatpush2.bf16.msra.mxu0 0
  %7553 = vmatprep.mubr.bf16.mxu0 0
  %7554 = vmatmul.mubr.bf16.gmra.mxu0 %v4224
  %v7555 = vpop.f32.mrf.mxu0
  %v7556 = vadd.f32 0.0, %v7555
  %v7557 = vpop.f32.mrf.mxu0
  %v7558 = vpop.f32.mrf.mxu0
  %v7559 = vadd.f32 0.0, %v7558
  %v7560 = vpop.f32.mrf.mxu0
  %7561 = vmatprep.mubr.bf16.mxu0 0
  %7562 = vmatmul.mubr.bf16.gmra.mxu0 %v4227
  %v7563 = vpop.f32.mrf.mxu0
  %v7564 = vadd.f32 0.0, %v7563
  %v7565 = vpop.f32.mrf.mxu0
  %v7566 = vpop.f32.mrf.mxu0
  %v7567 = vadd.f32 0.0, %v7566
  %v7568 = vpop.f32.mrf.mxu0
  %7569 = vmatprep.mubr.bf16.mxu0 0
  %7570 = vmatmul.mubr.bf16.gmra.mxu0 %v4230
  %v7571 = vpop.f32.mrf.mxu0
  %v7572 = vadd.f32 0.0, %v7571
  %v7573 = vpop.f32.mrf.mxu0
  %v7574 = vpop.f32.mrf.mxu0
  %v7575 = vadd.f32 0.0, %v7574
  %v7576 = vpop.f32.mrf.mxu0
  %7577 = vmatprep.mubr.bf16.mxu0 0
  %7578 = vmatmul.mubr.bf16.gmra.mxu0 %v4233
  %v7579 = vpop.f32.mrf.mxu0
  %v7580 = vadd.f32 0.0, %v7579
  %v7581 = vpop.f32.mrf.mxu0
  %v7582 = vpop.f32.mrf.mxu0
  %v7583 = vadd.f32 0.0, %v7582
  %v7584 = vpop.f32.mrf.mxu0
  %7585 = vdwg.mxu0
  %v7586 = vpack.c.bf16 %v7559, %v7556
  %v7587 = vpack.c.bf16 %v7567, %v7564
  %v7588 = vpack.c.bf16 %v7575, %v7572
  %v7589 = vpack.c.bf16 %v7583, %v7580
  %s7590 = scalar_lea.vmem %s9, 88
  %v7591 = vld [vmem:[%s7590] sm:$0xf]
  %v7592 = vld [vmem:[%s7590 + $0x4] sm:$0xf]
  %v7595 = vunpack.c.l.b16 %v7591
  %v7596 = vunpack.c.l.b16 %v7592
  %v7597 = vpack.c.b16 %v7596, %v7595
  %v7600 = vsel %vm4033, %v7586, 0
  %v7603 = vsel %vm4033, %v7587, 0
  %v7606 = vsel %vm4033, %v7588, 0
  %v7609 = vsel %vm4033, %v7589, 0
  %7611 = vmatprep.subr.bf16.mxu0 0
  %7612 = vmatpush1.bf16.msra.mxu0 0
  %7613 = vmatprep.subr.bf16.mxu0 0
  %7614 = vmatpush1.bf16.msra.mxu0 0
  %7615 = vmatprep.subr.bf16.mxu0 0
  %7616 = vmatpush1.bf16.msra.mxu0 0
  %7617 = vmatprep.subr.bf16.mxu0 0
  %7618 = vmatpush1.bf16.msra.mxu0 0
  %7619 = vmatprep.subr.bf16.mxu0 0
  %7620 = vmatpush1.bf16.msra.mxu0 0
  %7621 = vmatprep.subr.bf16.mxu0 0
  %7622 = vmatpush1.bf16.msra.mxu0 0
  %7623 = vmatprep.subr.bf16.mxu0 0
  %7624 = vmatpush1.bf16.msra.mxu0 0
  %7625 = vmatprep.subr.bf16.mxu0 0
  %7626 = vmatpush1.bf16.msra.mxu0 %v7597
  %7627 = vmatprep.subr.bf16.mxu0 0
  %7628 = vmatpush2.bf16.msra.mxu0 0
  %7629 = vmatprep.subr.bf16.mxu0 0
  %7630 = vmatpush2.bf16.msra.mxu0 0
  %7631 = vmatprep.subr.bf16.mxu0 0
  %7632 = vmatpush2.bf16.msra.mxu0 0
  %7633 = vmatprep.subr.bf16.mxu0 0
  %7634 = vmatpush2.bf16.msra.mxu0 0
  %7635 = vmatprep.subr.bf16.mxu0 0
  %7636 = vmatpush2.bf16.msra.mxu0 0
  %7637 = vmatprep.subr.bf16.mxu0 0
  %7638 = vmatpush2.bf16.msra.mxu0 0
  %7639 = vmatprep.subr.bf16.mxu0 0
  %7640 = vmatpush2.bf16.msra.mxu0 0
  %7641 = vmatprep.subr.bf16.mxu0 0
  %7642 = vmatpush2.bf16.msra.mxu0 0
  %7643 = vmatprep.mubr.bf16.mxu0 0
  %7644 = vmatmul.mubr.bf16.gmra.mxu0 %v7600
  %v7645 = vpop.f32.mrf.mxu0
  %v7646 = vadd.f32 0.0, %v7645
  %v7647 = vpop.f32.mrf.mxu0
  %v7648 = vpop.f32.mrf.mxu0
  %v7649 = vadd.f32 0.0, %v7648
  %v7650 = vpop.f32.mrf.mxu0
  %7651 = vmatprep.mubr.bf16.mxu0 0
  %7652 = vmatmul.mubr.bf16.gmra.mxu0 %v7603
  %v7653 = vpop.f32.mrf.mxu0
  %v7654 = vadd.f32 0.0, %v7653
  %v7655 = vpop.f32.mrf.mxu0
  %v7656 = vpop.f32.mrf.mxu0
  %v7657 = vadd.f32 0.0, %v7656
  %v7658 = vpop.f32.mrf.mxu0
  %7659 = vmatprep.mubr.bf16.mxu0 0
  %7660 = vmatmul.mubr.bf16.gmra.mxu0 %v7606
  %v7661 = vpop.f32.mrf.mxu0
  %v7662 = vadd.f32 0.0, %v7661
  %v7663 = vpop.f32.mrf.mxu0
  %v7664 = vpop.f32.mrf.mxu0
  %v7665 = vadd.f32 0.0, %v7664
  %v7666 = vpop.f32.mrf.mxu0
  %7667 = vmatprep.mubr.bf16.mxu0 0
  %7668 = vmatmul.mubr.bf16.gmra.mxu0 %v7609
  %v7669 = vpop.f32.mrf.mxu0
  %v7670 = vadd.f32 0.0, %v7669
  %v7671 = vpop.f32.mrf.mxu0
  %v7672 = vpop.f32.mrf.mxu0
  %v7673 = vadd.f32 0.0, %v7672
  %v7674 = vpop.f32.mrf.mxu0
  %7675 = vdwg.mxu0
  %v7676 = vadd.f32 %v7491, %v7646
  %v7677 = vadd.f32 %v7494, %v7649
  %v7678 = vadd.f32 %v7499, %v7654
  %v7679 = vadd.f32 %v7502, %v7657
  %v7680 = vadd.f32 %v7507, %v7662
  %v7681 = vadd.f32 %v7510, %v7665
  %v7682 = vadd.f32 %v7515, %v7670
  %v7683 = vadd.f32 %v7518, %v7673
  %7684 = vmatprep.subr.bf16.mxu0 0
  %7685 = vmatpush1.bf16.msra.mxu0 0
  %7686 = vmatprep.subr.bf16.mxu0 0
  %7687 = vmatpush1.bf16.msra.mxu0 0
  %7688 = vmatprep.subr.bf16.mxu0 0
  %7689 = vmatpush1.bf16.msra.mxu0 0
  %7690 = vmatprep.subr.bf16.mxu0 0
  %7691 = vmatpush1.bf16.msra.mxu0 0
  %7692 = vmatprep.subr.bf16.mxu0 0
  %7693 = vmatpush1.bf16.msra.mxu0 %v7210
  %7694 = vmatprep.subr.bf16.mxu0 0
  %7695 = vmatpush1.bf16.msra.mxu0 %v7209
  %7696 = vmatprep.subr.bf16.mxu0 0
  %7697 = vmatpush1.bf16.msra.mxu0 %v7208
  %7698 = vmatprep.subr.bf16.mxu0 0
  %7699 = vmatpush1.bf16.msra.mxu0 %v7207
  %7700 = vmatprep.subr.bf16.mxu0 0
  %7701 = vmatpush2.bf16.msra.mxu0 0
  %7702 = vmatprep.subr.bf16.mxu0 0
  %7703 = vmatpush2.bf16.msra.mxu0 0
  %7704 = vmatprep.subr.bf16.mxu0 0
  %7705 = vmatpush2.bf16.msra.mxu0 0
  %7706 = vmatprep.subr.bf16.mxu0 0
  %7707 = vmatpush2.bf16.msra.mxu0 0
  %7708 = vmatprep.subr.bf16.mxu0 0
  %7709 = vmatpush2.bf16.msra.mxu0 0
  %7710 = vmatprep.subr.bf16.mxu0 0
  %7711 = vmatpush2.bf16.msra.mxu0 0
  %7712 = vmatprep.subr.bf16.mxu0 0
  %7713 = vmatpush2.bf16.msra.mxu0 0
  %7714 = vmatprep.subr.bf16.mxu0 0
  %7715 = vmatpush2.bf16.msra.mxu0 0
  %7716 = vmatprep.mubr.bf16.mxu0 0
  %7717 = vmatmul.mubr.bf16.gmra.mxu0 %v4428
  %v7718 = vpop.f32.mrf.mxu0
  %v7719 = vadd.f32 0.0, %v7718
  %v7720 = vpop.f32.mrf.mxu0
  %v7721 = vpop.f32.mrf.mxu0
  %v7722 = vadd.f32 0.0, %v7721
  %v7723 = vpop.f32.mrf.mxu0
  %7724 = vmatprep.mubr.bf16.mxu0 0
  %7725 = vmatmul.mubr.bf16.gmra.mxu0 %v4431
  %v7726 = vpop.f32.mrf.mxu0
  %v7727 = vadd.f32 0.0, %v7726
  %v7728 = vpop.f32.mrf.mxu0
  %v7729 = vpop.f32.mrf.mxu0
  %v7730 = vadd.f32 0.0, %v7729
  %v7731 = vpop.f32.mrf.mxu0
  %7732 = vmatprep.mubr.bf16.mxu0 0
  %7733 = vmatmul.mubr.bf16.gmra.mxu0 %v4434
  %v7734 = vpop.f32.mrf.mxu0
  %v7735 = vadd.f32 0.0, %v7734
  %v7736 = vpop.f32.mrf.mxu0
  %v7737 = vpop.f32.mrf.mxu0
  %v7738 = vadd.f32 0.0, %v7737
  %v7739 = vpop.f32.mrf.mxu0
  %7740 = vmatprep.mubr.bf16.mxu0 0
  %7741 = vmatmul.mubr.bf16.gmra.mxu0 %v4437
  %v7742 = vpop.f32.mrf.mxu0
  %v7743 = vadd.f32 0.0, %v7742
  %v7744 = vpop.f32.mrf.mxu0
  %v7745 = vpop.f32.mrf.mxu0
  %v7746 = vadd.f32 0.0, %v7745
  %v7747 = vpop.f32.mrf.mxu0
  %7748 = vdwg.mxu0
  %v7749 = vpack.c.bf16 %v7722, %v7719
  %v7750 = vpack.c.bf16 %v7730, %v7727
  %v7751 = vpack.c.bf16 %v7738, %v7735
  %v7752 = vpack.c.bf16 %v7746, %v7743
  %s7753 = scalar_lea.vmem %s9, 96
  %v7754 = vld [vmem:[%s7753] sm:$0xf]
  %v7755 = vld [vmem:[%s7753 + $0x4] sm:$0xf]
  %v7758 = vunpack.c.l.b16 %v7754
  %v7759 = vunpack.c.l.b16 %v7755
  %v7760 = vpack.c.b16 %v7759, %v7758
  %v7763 = vsel %vm4033, %v7749, 0
  %v7766 = vsel %vm4033, %v7750, 0
  %v7769 = vsel %vm4033, %v7751, 0
  %v7772 = vsel %vm4033, %v7752, 0
  %7774 = vmatprep.subr.bf16.mxu0 0
  %7775 = vmatpush1.bf16.msra.mxu0 0
  %7776 = vmatprep.subr.bf16.mxu0 0
  %7777 = vmatpush1.bf16.msra.mxu0 0
  %7778 = vmatprep.subr.bf16.mxu0 0
  %7779 = vmatpush1.bf16.msra.mxu0 0
  %7780 = vmatprep.subr.bf16.mxu0 0
  %7781 = vmatpush1.bf16.msra.mxu0 0
  %7782 = vmatprep.subr.bf16.mxu0 0
  %7783 = vmatpush1.bf16.msra.mxu0 0
  %7784 = vmatprep.subr.bf16.mxu0 0
  %7785 = vmatpush1.bf16.msra.mxu0 0
  %7786 = vmatprep.subr.bf16.mxu0 0
  %7787 = vmatpush1.bf16.msra.mxu0 0
  %7788 = vmatprep.subr.bf16.mxu0 0
  %7789 = vmatpush1.bf16.msra.mxu0 %v7760
  %7790 = vmatprep.subr.bf16.mxu0 0
  %7791 = vmatpush2.bf16.msra.mxu0 0
  %7792 = vmatprep.subr.bf16.mxu0 0
  %7793 = vmatpush2.bf16.msra.mxu0 0
  %7794 = vmatprep.subr.bf16.mxu0 0
  %7795 = vmatpush2.bf16.msra.mxu0 0
  %7796 = vmatprep.subr.bf16.mxu0 0
  %7797 = vmatpush2.bf16.msra.mxu0 0
  %7798 = vmatprep.subr.bf16.mxu0 0
  %7799 = vmatpush2.bf16.msra.mxu0 0
  %7800 = vmatprep.subr.bf16.mxu0 0
  %7801 = vmatpush2.bf16.msra.mxu0 0
  %7802 = vmatprep.subr.bf16.mxu0 0
  %7803 = vmatpush2.bf16.msra.mxu0 0
  %7804 = vmatprep.subr.bf16.mxu0 0
  %7805 = vmatpush2.bf16.msra.mxu0 0
  %7806 = vmatprep.mubr.bf16.mxu0 0
  %7807 = vmatmul.mubr.bf16.gmra.mxu0 %v7763
  %v7808 = vpop.f32.mrf.mxu0
  %v7809 = vadd.f32 0.0, %v7808
  %v7810 = vpop.f32.mrf.mxu0
  %v7811 = vpop.f32.mrf.mxu0
  %v7812 = vadd.f32 0.0, %v7811
  %v7813 = vpop.f32.mrf.mxu0
  %7814 = vmatprep.mubr.bf16.mxu0 0
  %7815 = vmatmul.mubr.bf16.gmra.mxu0 %v7766
  %v7816 = vpop.f32.mrf.mxu0
  %v7817 = vadd.f32 0.0, %v7816
  %v7818 = vpop.f32.mrf.mxu0
  %v7819 = vpop.f32.mrf.mxu0
  %v7820 = vadd.f32 0.0, %v7819
  %v7821 = vpop.f32.mrf.mxu0
  %7822 = vmatprep.mubr.bf16.mxu0 0
  %7823 = vmatmul.mubr.bf16.gmra.mxu0 %v7769
  %v7824 = vpop.f32.mrf.mxu0
  %v7825 = vadd.f32 0.0, %v7824
  %v7826 = vpop.f32.mrf.mxu0
  %v7827 = vpop.f32.mrf.mxu0
  %v7828 = vadd.f32 0.0, %v7827
  %v7829 = vpop.f32.mrf.mxu0
  %7830 = vmatprep.mubr.bf16.mxu0 0
  %7831 = vmatmul.mubr.bf16.gmra.mxu0 %v7772
  %v7832 = vpop.f32.mrf.mxu0
  %v7833 = vadd.f32 0.0, %v7832
  %v7834 = vpop.f32.mrf.mxu0
  %v7835 = vpop.f32.mrf.mxu0
  %v7836 = vadd.f32 0.0, %v7835
  %v7837 = vpop.f32.mrf.mxu0
  %7838 = vdwg.mxu0
  %v7839 = vadd.f32 %v7676, %v7809
  %v7840 = vadd.f32 %v7677, %v7812
  %v7841 = vadd.f32 %v7678, %v7817
  %v7842 = vadd.f32 %v7679, %v7820
  %v7843 = vadd.f32 %v7680, %v7825
  %v7844 = vadd.f32 %v7681, %v7828
  %v7845 = vadd.f32 %v7682, %v7833
  %v7846 = vadd.f32 %v7683, %v7836
  %7847 = vmatprep.subr.bf16.mxu0 0
  %7848 = vmatpush1.bf16.msra.mxu0 0
  %7849 = vmatprep.subr.bf16.mxu0 0
  %7850 = vmatpush1.bf16.msra.mxu0 0
  %7851 = vmatprep.subr.bf16.mxu0 0
  %7852 = vmatpush1.bf16.msra.mxu0 0
  %7853 = vmatprep.subr.bf16.mxu0 0
  %7854 = vmatpush1.bf16.msra.mxu0 0
  %7855 = vmatprep.subr.bf16.mxu0 0
  %7856 = vmatpush1.bf16.msra.mxu0 %v7210
  %7857 = vmatprep.subr.bf16.mxu0 0
  %7858 = vmatpush1.bf16.msra.mxu0 %v7209
  %7859 = vmatprep.subr.bf16.mxu0 0
  %7860 = vmatpush1.bf16.msra.mxu0 %v7208
  %7861 = vmatprep.subr.bf16.mxu0 0
  %7862 = vmatpush1.bf16.msra.mxu0 %v7207
  %7863 = vmatprep.subr.bf16.mxu0 0
  %7864 = vmatpush2.bf16.msra.mxu0 0
  %7865 = vmatprep.subr.bf16.mxu0 0
  %7866 = vmatpush2.bf16.msra.mxu0 0
  %7867 = vmatprep.subr.bf16.mxu0 0
  %7868 = vmatpush2.bf16.msra.mxu0 0
  %7869 = vmatprep.subr.bf16.mxu0 0
  %7870 = vmatpush2.bf16.msra.mxu0 0
  %7871 = vmatprep.subr.bf16.mxu0 0
  %7872 = vmatpush2.bf16.msra.mxu0 0
  %7873 = vmatprep.subr.bf16.mxu0 0
  %7874 = vmatpush2.bf16.msra.mxu0 0
  %7875 = vmatprep.subr.bf16.mxu0 0
  %7876 = vmatpush2.bf16.msra.mxu0 0
  %7877 = vmatprep.subr.bf16.mxu0 0
  %7878 = vmatpush2.bf16.msra.mxu0 0
  %7879 = vmatprep.mubr.bf16.mxu0 0
  %7880 = vmatmul.mubr.bf16.gmra.mxu0 %v4632
  %v7881 = vpop.f32.mrf.mxu0
  %v7882 = vadd.f32 0.0, %v7881
  %v7883 = vpop.f32.mrf.mxu0
  %v7884 = vpop.f32.mrf.mxu0
  %v7885 = vadd.f32 0.0, %v7884
  %v7886 = vpop.f32.mrf.mxu0
  %7887 = vmatprep.mubr.bf16.mxu0 0
  %7888 = vmatmul.mubr.bf16.gmra.mxu0 %v4635
  %v7889 = vpop.f32.mrf.mxu0
  %v7890 = vadd.f32 0.0, %v7889
  %v7891 = vpop.f32.mrf.mxu0
  %v7892 = vpop.f32.mrf.mxu0
  %v7893 = vadd.f32 0.0, %v7892
  %v7894 = vpop.f32.mrf.mxu0
  %7895 = vmatprep.mubr.bf16.mxu0 0
  %7896 = vmatmul.mubr.bf16.gmra.mxu0 %v4638
  %v7897 = vpop.f32.mrf.mxu0
  %v7898 = vadd.f32 0.0, %v7897
  %v7899 = vpop.f32.mrf.mxu0
  %v7900 = vpop.f32.mrf.mxu0
  %v7901 = vadd.f32 0.0, %v7900
  %v7902 = vpop.f32.mrf.mxu0
  %7903 = vmatprep.mubr.bf16.mxu0 0
  %7904 = vmatmul.mubr.bf16.gmra.mxu0 %v4641
  %v7905 = vpop.f32.mrf.mxu0
  %v7906 = vadd.f32 0.0, %v7905
  %v7907 = vpop.f32.mrf.mxu0
  %v7908 = vpop.f32.mrf.mxu0
  %v7909 = vadd.f32 0.0, %v7908
  %v7910 = vpop.f32.mrf.mxu0
  %7911 = vdwg.mxu0
  %v7912 = vpack.c.bf16 %v7885, %v7882
  %v7913 = vpack.c.bf16 %v7893, %v7890
  %v7914 = vpack.c.bf16 %v7901, %v7898
  %v7915 = vpack.c.bf16 %v7909, %v7906
  %s7916 = scalar_lea.vmem %s9, 104
  %v7917 = vld [vmem:[%s7916] sm:$0xf]
  %v7918 = vld [vmem:[%s7916 + $0x4] sm:$0xf]
  %v7921 = vunpack.c.l.b16 %v7917
  %v7922 = vunpack.c.l.b16 %v7918
  %v7923 = vpack.c.b16 %v7922, %v7921
  %v7926 = vsel %vm4033, %v7912, 0
  %v7929 = vsel %vm4033, %v7913, 0
  %v7932 = vsel %vm4033, %v7914, 0
  %v7935 = vsel %vm4033, %v7915, 0
  %7937 = vmatprep.subr.bf16.mxu0 0
  %7938 = vmatpush1.bf16.msra.mxu0 0
  %7939 = vmatprep.subr.bf16.mxu0 0
  %7940 = vmatpush1.bf16.msra.mxu0 0
  %7941 = vmatprep.subr.bf16.mxu0 0
  %7942 = vmatpush1.bf16.msra.mxu0 0
  %7943 = vmatprep.subr.bf16.mxu0 0
  %7944 = vmatpush1.bf16.msra.mxu0 0
  %7945 = vmatprep.subr.bf16.mxu0 0
  %7946 = vmatpush1.bf16.msra.mxu0 0
  %7947 = vmatprep.subr.bf16.mxu0 0
  %7948 = vmatpush1.bf16.msra.mxu0 0
  %7949 = vmatprep.subr.bf16.mxu0 0
  %7950 = vmatpush1.bf16.msra.mxu0 0
  %7951 = vmatprep.subr.bf16.mxu0 0
  %7952 = vmatpush1.bf16.msra.mxu0 %v7923
  %7953 = vmatprep.subr.bf16.mxu0 0
  %7954 = vmatpush2.bf16.msra.mxu0 0
  %7955 = vmatprep.subr.bf16.mxu0 0
  %7956 = vmatpush2.bf16.msra.mxu0 0
  %7957 = vmatprep.subr.bf16.mxu0 0
  %7958 = vmatpush2.bf16.msra.mxu0 0
  %7959 = vmatprep.subr.bf16.mxu0 0
  %7960 = vmatpush2.bf16.msra.mxu0 0
  %7961 = vmatprep.subr.bf16.mxu0 0
  %7962 = vmatpush2.bf16.msra.mxu0 0
  %7963 = vmatprep.subr.bf16.mxu0 0
  %7964 = vmatpush2.bf16.msra.mxu0 0
  %7965 = vmatprep.subr.bf16.mxu0 0
  %7966 = vmatpush2.bf16.msra.mxu0 0
  %7967 = vmatprep.subr.bf16.mxu0 0
  %7968 = vmatpush2.bf16.msra.mxu0 0
  %7969 = vmatprep.mubr.bf16.mxu0 0
  %7970 = vmatmul.mubr.bf16.gmra.mxu0 %v7926
  %v7971 = vpop.f32.mrf.mxu0
  %v7972 = vadd.f32 0.0, %v7971
  %v7973 = vpop.f32.mrf.mxu0
  %v7974 = vpop.f32.mrf.mxu0
  %v7975 = vadd.f32 0.0, %v7974
  %v7976 = vpop.f32.mrf.mxu0
  %7977 = vmatprep.mubr.bf16.mxu0 0
  %7978 = vmatmul.mubr.bf16.gmra.mxu0 %v7929
  %v7979 = vpop.f32.mrf.mxu0
  %v7980 = vadd.f32 0.0, %v7979
  %v7981 = vpop.f32.mrf.mxu0
  %v7982 = vpop.f32.mrf.mxu0
  %v7983 = vadd.f32 0.0, %v7982
  %v7984 = vpop.f32.mrf.mxu0
  %7985 = vmatprep.mubr.bf16.mxu0 0
  %7986 = vmatmul.mubr.bf16.gmra.mxu0 %v7932
  %v7987 = vpop.f32.mrf.mxu0
  %v7988 = vadd.f32 0.0, %v7987
  %v7989 = vpop.f32.mrf.mxu0
  %v7990 = vpop.f32.mrf.mxu0
  %v7991 = vadd.f32 0.0, %v7990
  %v7992 = vpop.f32.mrf.mxu0
  %7993 = vmatprep.mubr.bf16.mxu0 0
  %7994 = vmatmul.mubr.bf16.gmra.mxu0 %v7935
  %v7995 = vpop.f32.mrf.mxu0
  %v7996 = vadd.f32 0.0, %v7995
  %v7997 = vpop.f32.mrf.mxu0
  %v7998 = vpop.f32.mrf.mxu0
  %v7999 = vadd.f32 0.0, %v7998
  %v8000 = vpop.f32.mrf.mxu0
  %8001 = vdwg.mxu0
  %v8002 = vadd.f32 %v7839, %v7972
  %v8003 = vadd.f32 %v7840, %v7975
  %v8004 = vadd.f32 %v7841, %v7980
  %v8005 = vadd.f32 %v7842, %v7983
  %v8006 = vadd.f32 %v7843, %v7988
  %v8007 = vadd.f32 %v7844, %v7991
  %v8008 = vadd.f32 %v7845, %v7996
  %v8009 = vadd.f32 %v7846, %v7999
  %8010 = vmatprep.subr.bf16.mxu0 0
  %8011 = vmatpush1.bf16.msra.mxu0 0
  %8012 = vmatprep.subr.bf16.mxu0 0
  %8013 = vmatpush1.bf16.msra.mxu0 0
  %8014 = vmatprep.subr.bf16.mxu0 0
  %8015 = vmatpush1.bf16.msra.mxu0 0
  %8016 = vmatprep.subr.bf16.mxu0 0
  %8017 = vmatpush1.bf16.msra.mxu0 0
  %8018 = vmatprep.subr.bf16.mxu0 0
  %8019 = vmatpush1.bf16.msra.mxu0 %v7210
  %8020 = vmatprep.subr.bf16.mxu0 0
  %8021 = vmatpush1.bf16.msra.mxu0 %v7209
  %8022 = vmatprep.subr.bf16.mxu0 0
  %8023 = vmatpush1.bf16.msra.mxu0 %v7208
  %8024 = vmatprep.subr.bf16.mxu0 0
  %8025 = vmatpush1.bf16.msra.mxu0 %v7207
  %8026 = vmatprep.subr.bf16.mxu0 0
  %8027 = vmatpush2.bf16.msra.mxu0 0
  %8028 = vmatprep.subr.bf16.mxu0 0
  %8029 = vmatpush2.bf16.msra.mxu0 0
  %8030 = vmatprep.subr.bf16.mxu0 0
  %8031 = vmatpush2.bf16.msra.mxu0 0
  %8032 = vmatprep.subr.bf16.mxu0 0
  %8033 = vmatpush2.bf16.msra.mxu0 0
  %8034 = vmatprep.subr.bf16.mxu0 0
  %8035 = vmatpush2.bf16.msra.mxu0 0
  %8036 = vmatprep.subr.bf16.mxu0 0
  %8037 = vmatpush2.bf16.msra.mxu0 0
  %8038 = vmatprep.subr.bf16.mxu0 0
  %8039 = vmatpush2.bf16.msra.mxu0 0
  %8040 = vmatprep.subr.bf16.mxu0 0
  %8041 = vmatpush2.bf16.msra.mxu0 0
  %8042 = vmatprep.mubr.bf16.mxu0 0
  %8043 = vmatmul.mubr.bf16.gmra.mxu0 %v4836
  %v8044 = vpop.f32.mrf.mxu0
  %v8045 = vadd.f32 0.0, %v8044
  %v8046 = vpop.f32.mrf.mxu0
  %v8047 = vpop.f32.mrf.mxu0
  %v8048 = vadd.f32 0.0, %v8047
  %v8049 = vpop.f32.mrf.mxu0
  %8050 = vmatprep.mubr.bf16.mxu0 0
  %8051 = vmatmul.mubr.bf16.gmra.mxu0 %v4839
  %v8052 = vpop.f32.mrf.mxu0
  %v8053 = vadd.f32 0.0, %v8052
  %v8054 = vpop.f32.mrf.mxu0
  %v8055 = vpop.f32.mrf.mxu0
  %v8056 = vadd.f32 0.0, %v8055
  %v8057 = vpop.f32.mrf.mxu0
  %8058 = vmatprep.mubr.bf16.mxu0 0
  %8059 = vmatmul.mubr.bf16.gmra.mxu0 %v4842
  %v8060 = vpop.f32.mrf.mxu0
  %v8061 = vadd.f32 0.0, %v8060
  %v8062 = vpop.f32.mrf.mxu0
  %v8063 = vpop.f32.mrf.mxu0
  %v8064 = vadd.f32 0.0, %v8063
  %v8065 = vpop.f32.mrf.mxu0
  %8066 = vmatprep.mubr.bf16.mxu0 0
  %8067 = vmatmul.mubr.bf16.gmra.mxu0 %v4845
  %v8068 = vpop.f32.mrf.mxu0
  %v8069 = vadd.f32 0.0, %v8068
  %v8070 = vpop.f32.mrf.mxu0
  %v8071 = vpop.f32.mrf.mxu0
  %v8072 = vadd.f32 0.0, %v8071
  %v8073 = vpop.f32.mrf.mxu0
  %8074 = vdwg.mxu0
  %v8075 = vpack.c.bf16 %v8048, %v8045
  %v8076 = vpack.c.bf16 %v8056, %v8053
  %v8077 = vpack.c.bf16 %v8064, %v8061
  %v8078 = vpack.c.bf16 %v8072, %v8069
  %s8079 = scalar_lea.vmem %s9, 112
  %v8080 = vld [vmem:[%s8079] sm:$0xf]
  %v8081 = vld [vmem:[%s8079 + $0x4] sm:$0xf]
  %v8084 = vunpack.c.l.b16 %v8080
  %v8085 = vunpack.c.l.b16 %v8081
  %v8086 = vpack.c.b16 %v8085, %v8084
  %v8089 = vsel %vm4033, %v8075, 0
  %v8092 = vsel %vm4033, %v8076, 0
  %v8095 = vsel %vm4033, %v8077, 0
  %v8098 = vsel %vm4033, %v8078, 0
  %8100 = vmatprep.subr.bf16.mxu0 0
  %8101 = vmatpush1.bf16.msra.mxu0 0
  %8102 = vmatprep.subr.bf16.mxu0 0
  %8103 = vmatpush1.bf16.msra.mxu0 0
  %8104 = vmatprep.subr.bf16.mxu0 0
  %8105 = vmatpush1.bf16.msra.mxu0 0
  %8106 = vmatprep.subr.bf16.mxu0 0
  %8107 = vmatpush1.bf16.msra.mxu0 0
  %8108 = vmatprep.subr.bf16.mxu0 0
  %8109 = vmatpush1.bf16.msra.mxu0 0
  %8110 = vmatprep.subr.bf16.mxu0 0
  %8111 = vmatpush1.bf16.msra.mxu0 0
  %8112 = vmatprep.subr.bf16.mxu0 0
  %8113 = vmatpush1.bf16.msra.mxu0 0
  %8114 = vmatprep.subr.bf16.mxu0 0
  %8115 = vmatpush1.bf16.msra.mxu0 %v8086
  %8116 = vmatprep.subr.bf16.mxu0 0
  %8117 = vmatpush2.bf16.msra.mxu0 0
  %8118 = vmatprep.subr.bf16.mxu0 0
  %8119 = vmatpush2.bf16.msra.mxu0 0
  %8120 = vmatprep.subr.bf16.mxu0 0
  %8121 = vmatpush2.bf16.msra.mxu0 0
  %8122 = vmatprep.subr.bf16.mxu0 0
  %8123 = vmatpush2.bf16.msra.mxu0 0
  %8124 = vmatprep.subr.bf16.mxu0 0
  %8125 = vmatpush2.bf16.msra.mxu0 0
  %8126 = vmatprep.subr.bf16.mxu0 0
  %8127 = vmatpush2.bf16.msra.mxu0 0
  %8128 = vmatprep.subr.bf16.mxu0 0
  %8129 = vmatpush2.bf16.msra.mxu0 0
  %8130 = vmatprep.subr.bf16.mxu0 0
  %8131 = vmatpush2.bf16.msra.mxu0 0
  %8132 = vmatprep.mubr.bf16.mxu0 0
  %8133 = vmatmul.mubr.bf16.gmra.mxu0 %v8089
  %v8134 = vpop.f32.mrf.mxu0
  %v8135 = vadd.f32 0.0, %v8134
  %v8136 = vpop.f32.mrf.mxu0
  %v8137 = vpop.f32.mrf.mxu0
  %v8138 = vadd.f32 0.0, %v8137
  %v8139 = vpop.f32.mrf.mxu0
  %8140 = vmatprep.mubr.bf16.mxu0 0
  %8141 = vmatmul.mubr.bf16.gmra.mxu0 %v8092
  %v8142 = vpop.f32.mrf.mxu0
  %v8143 = vadd.f32 0.0, %v8142
  %v8144 = vpop.f32.mrf.mxu0
  %v8145 = vpop.f32.mrf.mxu0
  %v8146 = vadd.f32 0.0, %v8145
  %v8147 = vpop.f32.mrf.mxu0
  %8148 = vmatprep.mubr.bf16.mxu0 0
  %8149 = vmatmul.mubr.bf16.gmra.mxu0 %v8095
  %v8150 = vpop.f32.mrf.mxu0
  %v8151 = vadd.f32 0.0, %v8150
  %v8152 = vpop.f32.mrf.mxu0
  %v8153 = vpop.f32.mrf.mxu0
  %v8154 = vadd.f32 0.0, %v8153
  %v8155 = vpop.f32.mrf.mxu0
  %8156 = vmatprep.mubr.bf16.mxu0 0
  %8157 = vmatmul.mubr.bf16.gmra.mxu0 %v8098
  %v8158 = vpop.f32.mrf.mxu0
  %v8159 = vadd.f32 0.0, %v8158
  %v8160 = vpop.f32.mrf.mxu0
  %v8161 = vpop.f32.mrf.mxu0
  %v8162 = vadd.f32 0.0, %v8161
  %v8163 = vpop.f32.mrf.mxu0
  %8164 = vdwg.mxu0
  %v8165 = vadd.f32 %v8002, %v8135
  %v8166 = vadd.f32 %v8003, %v8138
  %v8167 = vadd.f32 %v8004, %v8143
  %v8168 = vadd.f32 %v8005, %v8146
  %v8169 = vadd.f32 %v8006, %v8151
  %v8170 = vadd.f32 %v8007, %v8154
  %v8171 = vadd.f32 %v8008, %v8159
  %v8172 = vadd.f32 %v8009, %v8162
  %8173 = vmatprep.subr.bf16.mxu0 0
  %8174 = vmatpush1.bf16.msra.mxu0 0
  %8175 = vmatprep.subr.bf16.mxu0 0
  %8176 = vmatpush1.bf16.msra.mxu0 0
  %8177 = vmatprep.subr.bf16.mxu0 0
  %8178 = vmatpush1.bf16.msra.mxu0 0
  %8179 = vmatprep.subr.bf16.mxu0 0
  %8180 = vmatpush1.bf16.msra.mxu0 0
  %8181 = vmatprep.subr.bf16.mxu0 0
  %8182 = vmatpush1.bf16.msra.mxu0 %v7210
  %8183 = vmatprep.subr.bf16.mxu0 0
  %8184 = vmatpush1.bf16.msra.mxu0 %v7209
  %8185 = vmatprep.subr.bf16.mxu0 0
  %8186 = vmatpush1.bf16.msra.mxu0 %v7208
  %8187 = vmatprep.subr.bf16.mxu0 0
  %8188 = vmatpush1.bf16.msra.mxu0 %v7207
  %8189 = vmatprep.subr.bf16.mxu0 0
  %8190 = vmatpush2.bf16.msra.mxu0 0
  %8191 = vmatprep.subr.bf16.mxu0 0
  %8192 = vmatpush2.bf16.msra.mxu0 0
  %8193 = vmatprep.subr.bf16.mxu0 0
  %8194 = vmatpush2.bf16.msra.mxu0 0
  %8195 = vmatprep.subr.bf16.mxu0 0
  %8196 = vmatpush2.bf16.msra.mxu0 0
  %8197 = vmatprep.subr.bf16.mxu0 0
  %8198 = vmatpush2.bf16.msra.mxu0 0
  %8199 = vmatprep.subr.bf16.mxu0 0
  %8200 = vmatpush2.bf16.msra.mxu0 0
  %8201 = vmatprep.subr.bf16.mxu0 0
  %8202 = vmatpush2.bf16.msra.mxu0 0
  %8203 = vmatprep.subr.bf16.mxu0 0
  %8204 = vmatpush2.bf16.msra.mxu0 0
  %8205 = vmatprep.mubr.bf16.mxu0 0
  %8206 = vmatmul.mubr.bf16.gmra.mxu0 %v5040
  %v8207 = vpop.f32.mrf.mxu0
  %v8208 = vadd.f32 0.0, %v8207
  %v8209 = vpop.f32.mrf.mxu0
  %v8210 = vpop.f32.mrf.mxu0
  %v8211 = vadd.f32 0.0, %v8210
  %v8212 = vpop.f32.mrf.mxu0
  %8213 = vmatprep.mubr.bf16.mxu0 0
  %8214 = vmatmul.mubr.bf16.gmra.mxu0 %v5043
  %v8215 = vpop.f32.mrf.mxu0
  %v8216 = vadd.f32 0.0, %v8215
  %v8217 = vpop.f32.mrf.mxu0
  %v8218 = vpop.f32.mrf.mxu0
  %v8219 = vadd.f32 0.0, %v8218
  %v8220 = vpop.f32.mrf.mxu0
  %8221 = vmatprep.mubr.bf16.mxu0 0
  %8222 = vmatmul.mubr.bf16.gmra.mxu0 %v5046
  %v8223 = vpop.f32.mrf.mxu0
  %v8224 = vadd.f32 0.0, %v8223
  %v8225 = vpop.f32.mrf.mxu0
  %v8226 = vpop.f32.mrf.mxu0
  %v8227 = vadd.f32 0.0, %v8226
  %v8228 = vpop.f32.mrf.mxu0
  %8229 = vmatprep.mubr.bf16.mxu0 0
  %8230 = vmatmul.mubr.bf16.gmra.mxu0 %v5049
  %v8231 = vpop.f32.mrf.mxu0
  %v8232 = vadd.f32 0.0, %v8231
  %v8233 = vpop.f32.mrf.mxu0
  %v8234 = vpop.f32.mrf.mxu0
  %v8235 = vadd.f32 0.0, %v8234
  %v8236 = vpop.f32.mrf.mxu0
  %8237 = vdwg.mxu0
  %v8238 = vpack.c.bf16 %v8211, %v8208
  %v8239 = vpack.c.bf16 %v8219, %v8216
  %v8240 = vpack.c.bf16 %v8227, %v8224
  %v8241 = vpack.c.bf16 %v8235, %v8232
  %s8242 = scalar_lea.vmem %s9, 120
  %v8243 = vld [vmem:[%s8242] sm:$0xf]
  %v8244 = vld [vmem:[%s8242 + $0x4] sm:$0xf]
  %v8247 = vunpack.c.l.b16 %v8243
  %v8248 = vunpack.c.l.b16 %v8244
  %v8249 = vpack.c.b16 %v8248, %v8247
  %v8252 = vsel %vm4033, %v8238, 0
  %v8255 = vsel %vm4033, %v8239, 0
  %v8258 = vsel %vm4033, %v8240, 0
  %v8261 = vsel %vm4033, %v8241, 0
  %8263 = vmatprep.subr.bf16.mxu0 0
  %8264 = vmatpush1.bf16.msra.mxu0 0
  %8265 = vmatprep.subr.bf16.mxu0 0
  %8266 = vmatpush1.bf16.msra.mxu0 0
  %8267 = vmatprep.subr.bf16.mxu0 0
  %8268 = vmatpush1.bf16.msra.mxu0 0
  %8269 = vmatprep.subr.bf16.mxu0 0
  %8270 = vmatpush1.bf16.msra.mxu0 0
  %8271 = vmatprep.subr.bf16.mxu0 0
  %8272 = vmatpush1.bf16.msra.mxu0 0
  %8273 = vmatprep.subr.bf16.mxu0 0
  %8274 = vmatpush1.bf16.msra.mxu0 0
  %8275 = vmatprep.subr.bf16.mxu0 0
  %8276 = vmatpush1.bf16.msra.mxu0 0
  %8277 = vmatprep.subr.bf16.mxu0 0
  %8278 = vmatpush1.bf16.msra.mxu0 %v8249
  %8279 = vmatprep.subr.bf16.mxu0 0
  %8280 = vmatpush2.bf16.msra.mxu0 0
  %8281 = vmatprep.subr.bf16.mxu0 0
  %8282 = vmatpush2.bf16.msra.mxu0 0
  %8283 = vmatprep.subr.bf16.mxu0 0
  %8284 = vmatpush2.bf16.msra.mxu0 0
  %8285 = vmatprep.subr.bf16.mxu0 0
  %8286 = vmatpush2.bf16.msra.mxu0 0
  %8287 = vmatprep.subr.bf16.mxu0 0
  %8288 = vmatpush2.bf16.msra.mxu0 0
  %8289 = vmatprep.subr.bf16.mxu0 0
  %8290 = vmatpush2.bf16.msra.mxu0 0
  %8291 = vmatprep.subr.bf16.mxu0 0
  %8292 = vmatpush2.bf16.msra.mxu0 0
  %8293 = vmatprep.subr.bf16.mxu0 0
  %8294 = vmatpush2.bf16.msra.mxu0 0
  %8295 = vmatprep.mubr.bf16.mxu0 0
  %8296 = vmatmul.mubr.bf16.gmra.mxu0 %v8252
  %v8297 = vpop.f32.mrf.mxu0
  %v8298 = vadd.f32 0.0, %v8297
  %v8299 = vpop.f32.mrf.mxu0
  %v8300 = vpop.f32.mrf.mxu0
  %v8301 = vadd.f32 0.0, %v8300
  %v8302 = vpop.f32.mrf.mxu0
  %8303 = vmatprep.mubr.bf16.mxu0 0
  %8304 = vmatmul.mubr.bf16.gmra.mxu0 %v8255
  %v8305 = vpop.f32.mrf.mxu0
  %v8306 = vadd.f32 0.0, %v8305
  %v8307 = vpop.f32.mrf.mxu0
  %v8308 = vpop.f32.mrf.mxu0
  %v8309 = vadd.f32 0.0, %v8308
  %v8310 = vpop.f32.mrf.mxu0
  %8311 = vmatprep.mubr.bf16.mxu0 0
  %8312 = vmatmul.mubr.bf16.gmra.mxu0 %v8258
  %v8313 = vpop.f32.mrf.mxu0
  %v8314 = vadd.f32 0.0, %v8313
  %v8315 = vpop.f32.mrf.mxu0
  %v8316 = vpop.f32.mrf.mxu0
  %v8317 = vadd.f32 0.0, %v8316
  %v8318 = vpop.f32.mrf.mxu0
  %8319 = vmatprep.mubr.bf16.mxu0 0
  %8320 = vmatmul.mubr.bf16.gmra.mxu0 %v8261
  %v8321 = vpop.f32.mrf.mxu0
  %v8322 = vadd.f32 0.0, %v8321
  %v8323 = vpop.f32.mrf.mxu0
  %v8324 = vpop.f32.mrf.mxu0
  %v8325 = vadd.f32 0.0, %v8324
  %v8326 = vpop.f32.mrf.mxu0
  %8327 = vdwg.mxu0
  %v8328 = vadd.f32 %v8165, %v8298
  %v8329 = vadd.f32 %v8166, %v8301
  %v8330 = vadd.f32 %v8167, %v8306
  %v8331 = vadd.f32 %v8168, %v8309
  %v8332 = vadd.f32 %v8169, %v8314
  %v8333 = vadd.f32 %v8170, %v8317
  %v8334 = vadd.f32 %v8171, %v8322
  %v8335 = vadd.f32 %v8172, %v8325
  %8336 = vmatprep.subr.bf16.mxu0 0
  %8337 = vmatpush1.bf16.msra.mxu0 0
  %8338 = vmatprep.subr.bf16.mxu0 0
  %8339 = vmatpush1.bf16.msra.mxu0 0
  %8340 = vmatprep.subr.bf16.mxu0 0
  %8341 = vmatpush1.bf16.msra.mxu0 0
  %8342 = vmatprep.subr.bf16.mxu0 0
  %8343 = vmatpush1.bf16.msra.mxu0 0
  %8344 = vmatprep.subr.bf16.mxu0 0
  %8345 = vmatpush1.bf16.msra.mxu0 %v7210
  %8346 = vmatprep.subr.bf16.mxu0 0
  %8347 = vmatpush1.bf16.msra.mxu0 %v7209
  %8348 = vmatprep.subr.bf16.mxu0 0
  %8349 = vmatpush1.bf16.msra.mxu0 %v7208
  %8350 = vmatprep.subr.bf16.mxu0 0
  %8351 = vmatpush1.bf16.msra.mxu0 %v7207
  %8352 = vmatprep.subr.bf16.mxu0 0
  %8353 = vmatpush2.bf16.msra.mxu0 0
  %8354 = vmatprep.subr.bf16.mxu0 0
  %8355 = vmatpush2.bf16.msra.mxu0 0
  %8356 = vmatprep.subr.bf16.mxu0 0
  %8357 = vmatpush2.bf16.msra.mxu0 0
  %8358 = vmatprep.subr.bf16.mxu0 0
  %8359 = vmatpush2.bf16.msra.mxu0 0
  %8360 = vmatprep.subr.bf16.mxu0 0
  %8361 = vmatpush2.bf16.msra.mxu0 0
  %8362 = vmatprep.subr.bf16.mxu0 0
  %8363 = vmatpush2.bf16.msra.mxu0 0
  %8364 = vmatprep.subr.bf16.mxu0 0
  %8365 = vmatpush2.bf16.msra.mxu0 0
  %8366 = vmatprep.subr.bf16.mxu0 0
  %8367 = vmatpush2.bf16.msra.mxu0 0
  %8368 = vmatprep.mubr.bf16.mxu0 0
  %8369 = vmatmul.mubr.bf16.gmra.mxu0 %v5244
  %v8370 = vpop.f32.mrf.mxu0
  %v8371 = vadd.f32 0.0, %v8370
  %v8372 = vpop.f32.mrf.mxu0
  %v8373 = vpop.f32.mrf.mxu0
  %v8374 = vadd.f32 0.0, %v8373
  %v8375 = vpop.f32.mrf.mxu0
  %8376 = vmatprep.mubr.bf16.mxu0 0
  %8377 = vmatmul.mubr.bf16.gmra.mxu0 %v5247
  %v8378 = vpop.f32.mrf.mxu0
  %v8379 = vadd.f32 0.0, %v8378
  %v8380 = vpop.f32.mrf.mxu0
  %v8381 = vpop.f32.mrf.mxu0
  %v8382 = vadd.f32 0.0, %v8381
  %v8383 = vpop.f32.mrf.mxu0
  %8384 = vmatprep.mubr.bf16.mxu0 0
  %8385 = vmatmul.mubr.bf16.gmra.mxu0 %v5250
  %v8386 = vpop.f32.mrf.mxu0
  %v8387 = vadd.f32 0.0, %v8386
  %v8388 = vpop.f32.mrf.mxu0
  %v8389 = vpop.f32.mrf.mxu0
  %v8390 = vadd.f32 0.0, %v8389
  %v8391 = vpop.f32.mrf.mxu0
  %8392 = vmatprep.mubr.bf16.mxu0 0
  %8393 = vmatmul.mubr.bf16.gmra.mxu0 %v5253
  %v8394 = vpop.f32.mrf.mxu0
  %v8395 = vadd.f32 0.0, %v8394
  %v8396 = vpop.f32.mrf.mxu0
  %v8397 = vpop.f32.mrf.mxu0
  %v8398 = vadd.f32 0.0, %v8397
  %v8399 = vpop.f32.mrf.mxu0
  %8400 = vdwg.mxu0
  %v8401 = vpack.c.bf16 %v8374, %v8371
  %v8402 = vpack.c.bf16 %v8382, %v8379
  %v8403 = vpack.c.bf16 %v8390, %v8387
  %v8404 = vpack.c.bf16 %v8398, %v8395
  %s8405 = scalar_lea.vmem %s9, 128
  %v8406 = vld [vmem:[%s8405] sm:$0xf]
  %v8407 = vld [vmem:[%s8405 + $0x4] sm:$0xf]
  %v8410 = vunpack.c.l.b16 %v8406
  %v8411 = vunpack.c.l.b16 %v8407
  %v8412 = vpack.c.b16 %v8411, %v8410
  %v8415 = vsel %vm4033, %v8401, 0
  %v8418 = vsel %vm4033, %v8402, 0
  %v8421 = vsel %vm4033, %v8403, 0
  %v8424 = vsel %vm4033, %v8404, 0
  %8426 = vmatprep.subr.bf16.mxu0 0
  %8427 = vmatpush1.bf16.msra.mxu0 0
  %8428 = vmatprep.subr.bf16.mxu0 0
  %8429 = vmatpush1.bf16.msra.mxu0 0
  %8430 = vmatprep.subr.bf16.mxu0 0
  %8431 = vmatpush1.bf16.msra.mxu0 0
  %8432 = vmatprep.subr.bf16.mxu0 0
  %8433 = vmatpush1.bf16.msra.mxu0 0
  %8434 = vmatprep.subr.bf16.mxu0 0
  %8435 = vmatpush1.bf16.msra.mxu0 0
  %8436 = vmatprep.subr.bf16.mxu0 0
  %8437 = vmatpush1.bf16.msra.mxu0 0
  %8438 = vmatprep.subr.bf16.mxu0 0
  %8439 = vmatpush1.bf16.msra.mxu0 0
  %8440 = vmatprep.subr.bf16.mxu0 0
  %8441 = vmatpush1.bf16.msra.mxu0 %v8412
  %8442 = vmatprep.subr.bf16.mxu0 0
  %8443 = vmatpush2.bf16.msra.mxu0 0
  %8444 = vmatprep.subr.bf16.mxu0 0
  %8445 = vmatpush2.bf16.msra.mxu0 0
  %8446 = vmatprep.subr.bf16.mxu0 0
  %8447 = vmatpush2.bf16.msra.mxu0 0
  %8448 = vmatprep.subr.bf16.mxu0 0
  %8449 = vmatpush2.bf16.msra.mxu0 0
  %8450 = vmatprep.subr.bf16.mxu0 0
  %8451 = vmatpush2.bf16.msra.mxu0 0
  %8452 = vmatprep.subr.bf16.mxu0 0
  %8453 = vmatpush2.bf16.msra.mxu0 0
  %8454 = vmatprep.subr.bf16.mxu0 0
  %8455 = vmatpush2.bf16.msra.mxu0 0
  %8456 = vmatprep.subr.bf16.mxu0 0
  %8457 = vmatpush2.bf16.msra.mxu0 0
  %8458 = vmatprep.mubr.bf16.mxu0 0
  %8459 = vmatmul.mubr.bf16.gmra.mxu0 %v8415
  %v8460 = vpop.f32.mrf.mxu0
  %v8461 = vadd.f32 0.0, %v8460
  %v8462 = vpop.f32.mrf.mxu0
  %v8463 = vpop.f32.mrf.mxu0
  %v8464 = vadd.f32 0.0, %v8463
  %v8465 = vpop.f32.mrf.mxu0
  %8466 = vmatprep.mubr.bf16.mxu0 0
  %8467 = vmatmul.mubr.bf16.gmra.mxu0 %v8418
  %v8468 = vpop.f32.mrf.mxu0
  %v8469 = vadd.f32 0.0, %v8468
  %v8470 = vpop.f32.mrf.mxu0
  %v8471 = vpop.f32.mrf.mxu0
  %v8472 = vadd.f32 0.0, %v8471
  %v8473 = vpop.f32.mrf.mxu0
  %8474 = vmatprep.mubr.bf16.mxu0 0
  %8475 = vmatmul.mubr.bf16.gmra.mxu0 %v8421
  %v8476 = vpop.f32.mrf.mxu0
  %v8477 = vadd.f32 0.0, %v8476
  %v8478 = vpop.f32.mrf.mxu0
  %v8479 = vpop.f32.mrf.mxu0
  %v8480 = vadd.f32 0.0, %v8479
  %v8481 = vpop.f32.mrf.mxu0
  %8482 = vmatprep.mubr.bf16.mxu0 0
  %8483 = vmatmul.mubr.bf16.gmra.mxu0 %v8424
  %v8484 = vpop.f32.mrf.mxu0
  %v8485 = vadd.f32 0.0, %v8484
  %v8486 = vpop.f32.mrf.mxu0
  %v8487 = vpop.f32.mrf.mxu0
  %v8488 = vadd.f32 0.0, %v8487
  %v8489 = vpop.f32.mrf.mxu0
  %8490 = vdwg.mxu0
  %v8491 = vadd.f32 %v8328, %v8461
  %v8492 = vadd.f32 %v8329, %v8464
  %v8493 = vadd.f32 %v8330, %v8469
  %v8494 = vadd.f32 %v8331, %v8472
  %v8495 = vadd.f32 %v8332, %v8477
  %v8496 = vadd.f32 %v8333, %v8480
  %v8497 = vadd.f32 %v8334, %v8485
  %v8498 = vadd.f32 %v8335, %v8488
  %8499 = vmatprep.subr.bf16.mxu0 0
  %8500 = vmatpush1.bf16.msra.mxu0 0
  %8501 = vmatprep.subr.bf16.mxu0 0
  %8502 = vmatpush1.bf16.msra.mxu0 0
  %8503 = vmatprep.subr.bf16.mxu0 0
  %8504 = vmatpush1.bf16.msra.mxu0 0
  %8505 = vmatprep.subr.bf16.mxu0 0
  %8506 = vmatpush1.bf16.msra.mxu0 0
  %8507 = vmatprep.subr.bf16.mxu0 0
  %8508 = vmatpush1.bf16.msra.mxu0 %v7210
  %8509 = vmatprep.subr.bf16.mxu0 0
  %8510 = vmatpush1.bf16.msra.mxu0 %v7209
  %8511 = vmatprep.subr.bf16.mxu0 0
  %8512 = vmatpush1.bf16.msra.mxu0 %v7208
  %8513 = vmatprep.subr.bf16.mxu0 0
  %8514 = vmatpush1.bf16.msra.mxu0 %v7207
  %8515 = vmatprep.subr.bf16.mxu0 0
  %8516 = vmatpush2.bf16.msra.mxu0 0
  %8517 = vmatprep.subr.bf16.mxu0 0
  %8518 = vmatpush2.bf16.msra.mxu0 0
  %8519 = vmatprep.subr.bf16.mxu0 0
  %8520 = vmatpush2.bf16.msra.mxu0 0
  %8521 = vmatprep.subr.bf16.mxu0 0
  %8522 = vmatpush2.bf16.msra.mxu0 0
  %8523 = vmatprep.subr.bf16.mxu0 0
  %8524 = vmatpush2.bf16.msra.mxu0 0
  %8525 = vmatprep.subr.bf16.mxu0 0
  %8526 = vmatpush2.bf16.msra.mxu0 0
  %8527 = vmatprep.subr.bf16.mxu0 0
  %8528 = vmatpush2.bf16.msra.mxu0 0
  %8529 = vmatprep.subr.bf16.mxu0 0
  %8530 = vmatpush2.bf16.msra.mxu0 0
  %8531 = vmatprep.mubr.bf16.mxu0 0
  %8532 = vmatmul.mubr.bf16.gmra.mxu0 %v5448
  %v8533 = vpop.f32.mrf.mxu0
  %v8534 = vadd.f32 0.0, %v8533
  %v8535 = vpop.f32.mrf.mxu0
  %v8536 = vpop.f32.mrf.mxu0
  %v8537 = vadd.f32 0.0, %v8536
  %v8538 = vpop.f32.mrf.mxu0
  %8539 = vmatprep.mubr.bf16.mxu0 0
  %8540 = vmatmul.mubr.bf16.gmra.mxu0 %v5451
  %v8541 = vpop.f32.mrf.mxu0
  %v8542 = vadd.f32 0.0, %v8541
  %v8543 = vpop.f32.mrf.mxu0
  %v8544 = vpop.f32.mrf.mxu0
  %v8545 = vadd.f32 0.0, %v8544
  %v8546 = vpop.f32.mrf.mxu0
  %8547 = vmatprep.mubr.bf16.mxu0 0
  %8548 = vmatmul.mubr.bf16.gmra.mxu0 %v5454
  %v8549 = vpop.f32.mrf.mxu0
  %v8550 = vadd.f32 0.0, %v8549
  %v8551 = vpop.f32.mrf.mxu0
  %v8552 = vpop.f32.mrf.mxu0
  %v8553 = vadd.f32 0.0, %v8552
  %v8554 = vpop.f32.mrf.mxu0
  %8555 = vmatprep.mubr.bf16.mxu0 0
  %8556 = vmatmul.mubr.bf16.gmra.mxu0 %v5457
  %v8557 = vpop.f32.mrf.mxu0
  %v8558 = vadd.f32 0.0, %v8557
  %v8559 = vpop.f32.mrf.mxu0
  %v8560 = vpop.f32.mrf.mxu0
  %v8561 = vadd.f32 0.0, %v8560
  %v8562 = vpop.f32.mrf.mxu0
  %8563 = vdwg.mxu0
  %v8564 = vpack.c.bf16 %v8537, %v8534
  %v8565 = vpack.c.bf16 %v8545, %v8542
  %v8566 = vpack.c.bf16 %v8553, %v8550
  %v8567 = vpack.c.bf16 %v8561, %v8558
  %s8568 = scalar_lea.vmem %s9, 136
  %v8569 = vld [vmem:[%s8568] sm:$0xf]
  %v8570 = vld [vmem:[%s8568 + $0x4] sm:$0xf]
  %v8573 = vunpack.c.l.b16 %v8569
  %v8574 = vunpack.c.l.b16 %v8570
  %v8575 = vpack.c.b16 %v8574, %v8573
  %v8578 = vsel %vm4033, %v8564, 0
  %v8581 = vsel %vm4033, %v8565, 0
  %v8584 = vsel %vm4033, %v8566, 0
  %v8587 = vsel %vm4033, %v8567, 0
  %8589 = vmatprep.subr.bf16.mxu0 0
  %8590 = vmatpush1.bf16.msra.mxu0 0
  %8591 = vmatprep.subr.bf16.mxu0 0
  %8592 = vmatpush1.bf16.msra.mxu0 0
  %8593 = vmatprep.subr.bf16.mxu0 0
  %8594 = vmatpush1.bf16.msra.mxu0 0
  %8595 = vmatprep.subr.bf16.mxu0 0
  %8596 = vmatpush1.bf16.msra.mxu0 0
  %8597 = vmatprep.subr.bf16.mxu0 0
  %8598 = vmatpush1.bf16.msra.mxu0 0
  %8599 = vmatprep.subr.bf16.mxu0 0
  %8600 = vmatpush1.bf16.msra.mxu0 0
  %8601 = vmatprep.subr.bf16.mxu0 0
  %8602 = vmatpush1.bf16.msra.mxu0 0
  %8603 = vmatprep.subr.bf16.mxu0 0
  %8604 = vmatpush1.bf16.msra.mxu0 %v8575
  %8605 = vmatprep.subr.bf16.mxu0 0
  %8606 = vmatpush2.bf16.msra.mxu0 0
  %8607 = vmatprep.subr.bf16.mxu0 0
  %8608 = vmatpush2.bf16.msra.mxu0 0
  %8609 = vmatprep.subr.bf16.mxu0 0
  %8610 = vmatpush2.bf16.msra.mxu0 0
  %8611 = vmatprep.subr.bf16.mxu0 0
  %8612 = vmatpush2.bf16.msra.mxu0 0
  %8613 = vmatprep.subr.bf16.mxu0 0
  %8614 = vmatpush2.bf16.msra.mxu0 0
  %8615 = vmatprep.subr.bf16.mxu0 0
  %8616 = vmatpush2.bf16.msra.mxu0 0
  %8617 = vmatprep.subr.bf16.mxu0 0
  %8618 = vmatpush2.bf16.msra.mxu0 0
  %8619 = vmatprep.subr.bf16.mxu0 0
  %8620 = vmatpush2.bf16.msra.mxu0 0
  %8621 = vmatprep.mubr.bf16.mxu0 0
  %8622 = vmatmul.mubr.bf16.gmra.mxu0 %v8578
  %v8623 = vpop.f32.mrf.mxu0
  %v8624 = vadd.f32 0.0, %v8623
  %v8625 = vpop.f32.mrf.mxu0
  %v8626 = vpop.f32.mrf.mxu0
  %v8627 = vadd.f32 0.0, %v8626
  %v8628 = vpop.f32.mrf.mxu0
  %8629 = vmatprep.mubr.bf16.mxu0 0
  %8630 = vmatmul.mubr.bf16.gmra.mxu0 %v8581
  %v8631 = vpop.f32.mrf.mxu0
  %v8632 = vadd.f32 0.0, %v8631
  %v8633 = vpop.f32.mrf.mxu0
  %v8634 = vpop.f32.mrf.mxu0
  %v8635 = vadd.f32 0.0, %v8634
  %v8636 = vpop.f32.mrf.mxu0
  %8637 = vmatprep.mubr.bf16.mxu0 0
  %8638 = vmatmul.mubr.bf16.gmra.mxu0 %v8584
  %v8639 = vpop.f32.mrf.mxu0
  %v8640 = vadd.f32 0.0, %v8639
  %v8641 = vpop.f32.mrf.mxu0
  %v8642 = vpop.f32.mrf.mxu0
  %v8643 = vadd.f32 0.0, %v8642
  %v8644 = vpop.f32.mrf.mxu0
  %8645 = vmatprep.mubr.bf16.mxu0 0
  %8646 = vmatmul.mubr.bf16.gmra.mxu0 %v8587
  %v8647 = vpop.f32.mrf.mxu0
  %v8648 = vadd.f32 0.0, %v8647
  %v8649 = vpop.f32.mrf.mxu0
  %v8650 = vpop.f32.mrf.mxu0
  %v8651 = vadd.f32 0.0, %v8650
  %v8652 = vpop.f32.mrf.mxu0
  %8653 = vdwg.mxu0
  %v8654 = vadd.f32 %v8491, %v8624
  %v8655 = vadd.f32 %v8492, %v8627
  %v8656 = vadd.f32 %v8493, %v8632
  %v8657 = vadd.f32 %v8494, %v8635
  %v8658 = vadd.f32 %v8495, %v8640
  %v8659 = vadd.f32 %v8496, %v8643
  %v8660 = vadd.f32 %v8497, %v8648
  %v8661 = vadd.f32 %v8498, %v8651
  %v8662 = vmax.f32 %v8654, 0.0
  %v8663 = vmax.f32 %v8655, 0.0
  %v8664 = vmax.f32 %v8656, 0.0
  %v8665 = vmax.f32 %v8657, 0.0
  %v8666 = vmax.f32 %v8658, 0.0
  %v8667 = vmax.f32 %v8659, 0.0
  %v8668 = vmax.f32 %v8660, 0.0
  %v8669 = vmax.f32 %v8661, 0.0
  %v8670 = vpack.c.bf16 %v8663, %v8662
  %v8671 = vpack.c.bf16 %v8665, %v8664
  %v8672 = vpack.c.bf16 %v8667, %v8666
  %v8673 = vpack.c.bf16 %v8669, %v8668
  %s8674 = scalar_lea.vmem %s10, 4
  %v8675 = vld [vmem:[%s8674] sm:$0xf]
  %v8677 = vsel %vm702, %v8670, 0
  %v8680 = vsel %vm702, %v8671, 0
  %v8683 = vsel %vm702, %v8672, 0
  %v8686 = vsel %vm702, %v8673, 0
  %v8689 = vsel %vm715, %v8675, 0
  %8691 = vmatprep.subr.bf16.mxu0 0
  %8692 = vmatpush1.bf16.msra.mxu0 0
  %8693 = vmatprep.subr.bf16.mxu0 0
  %8694 = vmatpush1.bf16.msra.mxu0 0
  %8695 = vmatprep.subr.bf16.mxu0 0
  %8696 = vmatpush1.bf16.msra.mxu0 0
  %8697 = vmatprep.subr.bf16.mxu0 0
  %8698 = vmatpush1.bf16.msra.mxu0 0
  %8699 = vmatprep.subr.bf16.mxu0 0
  %8700 = vmatpush1.bf16.msra.mxu0 0
  %8701 = vmatprep.subr.bf16.mxu0 0
  %8702 = vmatpush1.bf16.msra.mxu0 0
  %8703 = vmatprep.subr.bf16.mxu0 0
  %8704 = vmatpush1.bf16.msra.mxu0 0
  %8705 = vmatprep.subr.bf16.mxu0 0
  %8706 = vmatpush1.bf16.msra.mxu0 %v8689
  %8707 = vmatprep.subr.bf16.mxu0 0
  %8708 = vmatpush2.bf16.msra.mxu0 0
  %8709 = vmatprep.subr.bf16.mxu0 0
  %8710 = vmatpush2.bf16.msra.mxu0 0
  %8711 = vmatprep.subr.bf16.mxu0 0
  %8712 = vmatpush2.bf16.msra.mxu0 0
  %8713 = vmatprep.subr.bf16.mxu0 0
  %8714 = vmatpush2.bf16.msra.mxu0 0
  %8715 = vmatprep.subr.bf16.mxu0 0
  %8716 = vmatpush2.bf16.msra.mxu0 0
  %8717 = vmatprep.subr.bf16.mxu0 0
  %8718 = vmatpush2.bf16.msra.mxu0 0
  %8719 = vmatprep.subr.bf16.mxu0 0
  %8720 = vmatpush2.bf16.msra.mxu0 0
  %8721 = vmatprep.subr.bf16.mxu0 0
  %8722 = vmatpush2.bf16.msra.mxu0 0
  %8723 = vmatprep.mubr.bf16.mxu0 0
  %8724 = vmatmul.mubr.bf16.gmra.mxu0 %v8677
  %v8725 = vpop.f32.mrf.mxu0
  %v8726 = vadd.f32 0.0, %v8725
  %v8727 = vpop.f32.mrf.mxu0
  %v8728 = vpop.f32.mrf.mxu0
  %v8729 = vadd.f32 0.0, %v8728
  %v8730 = vpop.f32.mrf.mxu0
  %8731 = vmatprep.mubr.bf16.mxu0 0
  %8732 = vmatmul.mubr.bf16.gmra.mxu0 %v8680
  %v8733 = vpop.f32.mrf.mxu0
  %v8734 = vadd.f32 0.0, %v8733
  %v8735 = vpop.f32.mrf.mxu0
  %v8736 = vpop.f32.mrf.mxu0
  %v8737 = vadd.f32 0.0, %v8736
  %v8738 = vpop.f32.mrf.mxu0
  %8739 = vmatprep.mubr.bf16.mxu0 0
  %8740 = vmatmul.mubr.bf16.gmra.mxu0 %v8683
  %v8741 = vpop.f32.mrf.mxu0
  %v8742 = vadd.f32 0.0, %v8741
  %v8743 = vpop.f32.mrf.mxu0
  %v8744 = vpop.f32.mrf.mxu0
  %v8745 = vadd.f32 0.0, %v8744
  %v8746 = vpop.f32.mrf.mxu0
  %8747 = vmatprep.mubr.bf16.mxu0 0
  %8748 = vmatmul.mubr.bf16.gmra.mxu0 %v8686
  %v8749 = vpop.f32.mrf.mxu0
  %v8750 = vadd.f32 0.0, %v8749
  %v8751 = vpop.f32.mrf.mxu0
  %v8752 = vpop.f32.mrf.mxu0
  %v8753 = vadd.f32 0.0, %v8752
  %v8754 = vpop.f32.mrf.mxu0
  %8755 = vdwg.mxu0
  %v8756 = vadd.f32 %v7191, %v8726
  %v8757 = vadd.f32 %v7192, %v8729
  %v8758 = vadd.f32 %v7193, %v8734
  %v8759 = vadd.f32 %v7194, %v8737
  %v8760 = vadd.f32 %v7195, %v8742
  %v8761 = vadd.f32 %v7196, %v8745
  %v8762 = vadd.f32 %v7197, %v8750
  %v8763 = vadd.f32 %v7198, %v8753
  %v8764 = vmax.f32 %v8756, 0.0
  %v8765 = vmax.f32 %v8757, 0.0
  %v8766 = vmax.f32 %v8758, 0.0
  %v8767 = vmax.f32 %v8759, 0.0
  %v8768 = vmax.f32 %v8760, 0.0
  %v8769 = vmax.f32 %v8761, 0.0
  %v8770 = vmax.f32 %v8762, 0.0
  %v8771 = vmax.f32 %v8763, 0.0
  %v8772 = vpack.c.bf16 %v8765, %v8764
  %v8773 = vpack.c.bf16 %v8767, %v8766
  %v8774 = vpack.c.bf16 %v8769, %v8768
  %v8775 = vpack.c.bf16 %v8771, %v8770
  %v8776 = vld [vmem:[%s11] sm:$0x3]
  %v8778 = vsel %vm205, %v8776, 0
  %8780 = vmatprep.subr.bf16.mxu0 0
  %8781 = vmatpush1.bf16.msra.mxu0 0
  %8782 = vmatprep.subr.bf16.mxu0 0
  %8783 = vmatpush1.bf16.msra.mxu0 0
  %8784 = vmatprep.subr.bf16.mxu0 0
  %8785 = vmatpush1.bf16.msra.mxu0 0
  %8786 = vmatprep.subr.bf16.mxu0 0
  %8787 = vmatpush1.bf16.msra.mxu0 0
  %8788 = vmatprep.subr.bf16.mxu0 0
  %8789 = vmatpush1.bf16.msra.mxu0 %v8775
  %8790 = vmatprep.subr.bf16.mxu0 0
  %8791 = vmatpush1.bf16.msra.mxu0 %v8774
  %8792 = vmatprep.subr.bf16.mxu0 0
  %8793 = vmatpush1.bf16.msra.mxu0 %v8773
  %8794 = vmatprep.subr.bf16.mxu0 0
  %8795 = vmatpush1.bf16.msra.mxu0 %v8772
  %8796 = vmatprep.subr.bf16.mxu0 0
  %8797 = vmatpush2.bf16.msra.mxu0 0
  %8798 = vmatprep.subr.bf16.mxu0 0
  %8799 = vmatpush2.bf16.msra.mxu0 0
  %8800 = vmatprep.subr.bf16.mxu0 0
  %8801 = vmatpush2.bf16.msra.mxu0 0
  %8802 = vmatprep.subr.bf16.mxu0 0
  %8803 = vmatpush2.bf16.msra.mxu0 0
  %8804 = vmatprep.subr.bf16.mxu0 0
  %8805 = vmatpush2.bf16.msra.mxu0 0
  %8806 = vmatprep.subr.bf16.mxu0 0
  %8807 = vmatpush2.bf16.msra.mxu0 0
  %8808 = vmatprep.subr.bf16.mxu0 0
  %8809 = vmatpush2.bf16.msra.mxu0 0
  %8810 = vmatprep.subr.bf16.mxu0 0
  %8811 = vmatpush2.bf16.msra.mxu0 0
  %8812 = vmatprep.mubr.bf16.mxu0 0
  %8813 = vmatmul.mubr.bf16.gmra.mxu0 %v8778
  %v8814 = vpop.f32.mrf.mxu0
  %v8815 = vadd.f32 0.0, %v8814
  %v8816 = vpop.f32.mrf.mxu0
  %v8817 = vpop.f32.mrf.mxu0
  %v8818 = vpop.f32.mrf.mxu0
  %8819 = vdwg.mxu0
  %v8820 = vpack.c.bf16 %v8815, %v8815
  %v8821 = vld [vmem:[%s12] sm:$0xf]
  %v8822 = vld [vmem:[%s12 + $0x4] sm:$0xf]
  %s8823 = scalar_lea.vmem %s11, 2
  %v8824 = vld [vmem:[%s8823] sm:$0x3]
  %v8826 = vsel %vm205, %v8824, 0
  %8828 = vmatprep.subr.bf16.mxu0 0
  %8829 = vmatpush1.bf16.msra.mxu0 0
  %8830 = vmatprep.subr.bf16.mxu0 0
  %8831 = vmatpush1.bf16.msra.mxu0 0
  %8832 = vmatprep.subr.bf16.mxu0 0
  %8833 = vmatpush1.bf16.msra.mxu0 0
  %8834 = vmatprep.subr.bf16.mxu0 0
  %8835 = vmatpush1.bf16.msra.mxu0 0
  %8836 = vmatprep.subr.bf16.mxu0 0
  %8837 = vmatpush1.bf16.msra.mxu0 %v8775
  %8838 = vmatprep.subr.bf16.mxu0 0
  %8839 = vmatpush1.bf16.msra.mxu0 %v8774
  %8840 = vmatprep.subr.bf16.mxu0 0
  %8841 = vmatpush1.bf16.msra.mxu0 %v8773
  %8842 = vmatprep.subr.bf16.mxu0 0
  %8843 = vmatpush1.bf16.msra.mxu0 %v8772
  %8844 = vmatprep.subr.bf16.mxu0 0
  %8845 = vmatpush2.bf16.msra.mxu0 0
  %8846 = vmatprep.subr.bf16.mxu0 0
  %8847 = vmatpush2.bf16.msra.mxu0 0
  %8848 = vmatprep.subr.bf16.mxu0 0
  %8849 = vmatpush2.bf16.msra.mxu0 0
  %8850 = vmatprep.subr.bf16.mxu0 0
  %8851 = vmatpush2.bf16.msra.mxu0 0
  %8852 = vmatprep.subr.bf16.mxu0 0
  %8853 = vmatpush2.bf16.msra.mxu0 0
  %8854 = vmatprep.subr.bf16.mxu0 0
  %8855 = vmatpush2.bf16.msra.mxu0 0
  %8856 = vmatprep.subr.bf16.mxu0 0
  %8857 = vmatpush2.bf16.msra.mxu0 0
  %8858 = vmatprep.subr.bf16.mxu0 0
  %8859 = vmatpush2.bf16.msra.mxu0 0
  %8860 = vmatprep.mubr.bf16.mxu0 0
  %8861 = vmatmul.mubr.bf16.gmra.mxu0 %v8826
  %v8862 = vpop.f32.mrf.mxu0
  %v8863 = vadd.f32 0.0, %v8862
  %v8864 = vpop.f32.mrf.mxu0
  %v8865 = vpop.f32.mrf.mxu0
  %v8866 = vpop.f32.mrf.mxu0
  %8867 = vdwg.mxu0
  %v8868 = vpack.c.bf16 %v8863, %v8863
  %s8869 = scalar_lea.vmem %s12, 8
  %v8870 = vld [vmem:[%s8869] sm:$0xf]
  %v8871 = vld [vmem:[%s8869 + $0x4] sm:$0xf]
  %v8874 = vunpack.c.l.b16 %v8870
  %v8875 = vunpack.c.l.b16 %v8871
  %v8876 = vpack.c.b16 %v8875, %v8874
  %v8879 = vsel %vm4033, %v8868, 0
  %8881 = vmatprep.subr.bf16.mxu0 0
  %8882 = vmatpush1.bf16.msra.mxu0 0
  %8883 = vmatprep.subr.bf16.mxu0 0
  %8884 = vmatpush1.bf16.msra.mxu0 0
  %8885 = vmatprep.subr.bf16.mxu0 0
  %8886 = vmatpush1.bf16.msra.mxu0 0
  %8887 = vmatprep.subr.bf16.mxu0 0
  %8888 = vmatpush1.bf16.msra.mxu0 0
  %8889 = vmatprep.subr.bf16.mxu0 0
  %8890 = vmatpush1.bf16.msra.mxu0 0
  %8891 = vmatprep.subr.bf16.mxu0 0
  %8892 = vmatpush1.bf16.msra.mxu0 0
  %8893 = vmatprep.subr.bf16.mxu0 0
  %8894 = vmatpush1.bf16.msra.mxu0 0
  %8895 = vmatprep.subr.bf16.mxu0 0
  %8896 = vmatpush1.bf16.msra.mxu0 %v8876
  %8897 = vmatprep.subr.bf16.mxu0 0
  %8898 = vmatpush2.bf16.msra.mxu0 0
  %8899 = vmatprep.subr.bf16.mxu0 0
  %8900 = vmatpush2.bf16.msra.mxu0 0
  %8901 = vmatprep.subr.bf16.mxu0 0
  %8902 = vmatpush2.bf16.msra.mxu0 0
  %8903 = vmatprep.subr.bf16.mxu0 0
  %8904 = vmatpush2.bf16.msra.mxu0 0
  %8905 = vmatprep.subr.bf16.mxu0 0
  %8906 = vmatpush2.bf16.msra.mxu0 0
  %8907 = vmatprep.subr.bf16.mxu0 0
  %8908 = vmatpush2.bf16.msra.mxu0 0
  %8909 = vmatprep.subr.bf16.mxu0 0
  %8910 = vmatpush2.bf16.msra.mxu0 0
  %8911 = vmatprep.subr.bf16.mxu0 0
  %8912 = vmatpush2.bf16.msra.mxu0 0
  %8913 = vmatprep.mubr.bf16.mxu0 0
  %8914 = vmatmul.mubr.bf16.gmra.mxu0 %v8879
  %v8915 = vpop.f32.mrf.mxu0
  %v8916 = vadd.f32 0.0, %v8915
  %v8917 = vpop.f32.mrf.mxu0
  %v8918 = vpop.f32.mrf.mxu0
  %v8919 = vpop.f32.mrf.mxu0
  %8920 = vdwg.mxu0
  %v8923 = vunpack.c.l.b16 %v8821
  %v8924 = vunpack.c.l.b16 %v8822
  %v8925 = vpack.c.b16 %v8924, %v8923
  %v8928 = vsel %vm4033, %v8820, 0
  %8930 = vmatprep.subr.bf16.mxu0 0
  %8931 = vmatpush1.bf16.msra.mxu0 0
  %8932 = vmatprep.subr.bf16.mxu0 0
  %8933 = vmatpush1.bf16.msra.mxu0 0
  %8934 = vmatprep.subr.bf16.mxu0 0
  %8935 = vmatpush1.bf16.msra.mxu0 0
  %8936 = vmatprep.subr.bf16.mxu0 0
  %8937 = vmatpush1.bf16.msra.mxu0 0
  %8938 = vmatprep.subr.bf16.mxu0 0
  %8939 = vmatpush1.bf16.msra.mxu0 0
  %8940 = vmatprep.subr.bf16.mxu0 0
  %8941 = vmatpush1.bf16.msra.mxu0 0
  %8942 = vmatprep.subr.bf16.mxu0 0
  %8943 = vmatpush1.bf16.msra.mxu0 0
  %8944 = vmatprep.subr.bf16.mxu0 0
  %8945 = vmatpush1.bf16.msra.mxu0 %v8925
  %8946 = vmatprep.subr.bf16.mxu0 0
  %8947 = vmatpush2.bf16.msra.mxu0 0
  %8948 = vmatprep.subr.bf16.mxu0 0
  %8949 = vmatpush2.bf16.msra.mxu0 0
  %8950 = vmatprep.subr.bf16.mxu0 0
  %8951 = vmatpush2.bf16.msra.mxu0 0
  %8952 = vmatprep.subr.bf16.mxu0 0
  %8953 = vmatpush2.bf16.msra.mxu0 0
  %8954 = vmatprep.subr.bf16.mxu0 0
  %8955 = vmatpush2.bf16.msra.mxu0 0
  %8956 = vmatprep.subr.bf16.mxu0 0
  %8957 = vmatpush2.bf16.msra.mxu0 0
  %8958 = vmatprep.subr.bf16.mxu0 0
  %8959 = vmatpush2.bf16.msra.mxu0 0
  %8960 = vmatprep.subr.bf16.mxu0 0
  %8961 = vmatpush2.bf16.msra.mxu0 0
  %8962 = vmatprep.mubr.bf16.mxu0 0
  %8963 = vmatmul.mubr.bf16.gmra.mxu0 %v8928
  %v8964 = vpop.f32.mrf.mxu0
  %v8965 = vadd.f32 %v8916, %v8964
  %v8966 = vpop.f32.mrf.mxu0
  %v8967 = vpop.f32.mrf.mxu0
  %v8968 = vpop.f32.mrf.mxu0
  %8969 = vdwg.mxu0
  %s8970 = scalar_lea.vmem %s11, 4
  %v8971 = vld [vmem:[%s8970] sm:$0x3]
  %v8973 = vsel %vm205, %v8971, 0
  %8975 = vmatprep.subr.bf16.mxu0 0
  %8976 = vmatpush1.bf16.msra.mxu0 0
  %8977 = vmatprep.subr.bf16.mxu0 0
  %8978 = vmatpush1.bf16.msra.mxu0 0
  %8979 = vmatprep.subr.bf16.mxu0 0
  %8980 = vmatpush1.bf16.msra.mxu0 0
  %8981 = vmatprep.subr.bf16.mxu0 0
  %8982 = vmatpush1.bf16.msra.mxu0 0
  %8983 = vmatprep.subr.bf16.mxu0 0
  %8984 = vmatpush1.bf16.msra.mxu0 %v8775
  %8985 = vmatprep.subr.bf16.mxu0 0
  %8986 = vmatpush1.bf16.msra.mxu0 %v8774
  %8987 = vmatprep.subr.bf16.mxu0 0
  %8988 = vmatpush1.bf16.msra.mxu0 %v8773
  %8989 = vmatprep.subr.bf16.mxu0 0
  %8990 = vmatpush1.bf16.msra.mxu0 %v8772
  %8991 = vmatprep.subr.bf16.mxu0 0
  %8992 = vmatpush2.bf16.msra.mxu0 0
  %8993 = vmatprep.subr.bf16.mxu0 0
  %8994 = vmatpush2.bf16.msra.mxu0 0
  %8995 = vmatprep.subr.bf16.mxu0 0
  %8996 = vmatpush2.bf16.msra.mxu0 0
  %8997 = vmatprep.subr.bf16.mxu0 0
  %8998 = vmatpush2.bf16.msra.mxu0 0
  %8999 = vmatprep.subr.bf16.mxu0 0
  %9000 = vmatpush2.bf16.msra.mxu0 0
  %9001 = vmatprep.subr.bf16.mxu0 0
  %9002 = vmatpush2.bf16.msra.mxu0 0
  %9003 = vmatprep.subr.bf16.mxu0 0
  %9004 = vmatpush2.bf16.msra.mxu0 0
  %9005 = vmatprep.subr.bf16.mxu0 0
  %9006 = vmatpush2.bf16.msra.mxu0 0
  %9007 = vmatprep.mubr.bf16.mxu0 0
  %9008 = vmatmul.mubr.bf16.gmra.mxu0 %v8973
  %v9009 = vpop.f32.mrf.mxu0
  %v9010 = vadd.f32 0.0, %v9009
  %v9011 = vpop.f32.mrf.mxu0
  %v9012 = vpop.f32.mrf.mxu0
  %v9013 = vpop.f32.mrf.mxu0
  %9014 = vdwg.mxu0
  %v9015 = vpack.c.bf16 %v9010, %v9010
  %s9016 = scalar_lea.vmem %s12, 16
  %v9017 = vld [vmem:[%s9016] sm:$0xf]
  %v9018 = vld [vmem:[%s9016 + $0x4] sm:$0xf]
  %v9021 = vunpack.c.l.b16 %v9017
  %v9022 = vunpack.c.l.b16 %v9018
  %v9023 = vpack.c.b16 %v9022, %v9021
  %v9026 = vsel %vm4033, %v9015, 0
  %9028 = vmatprep.subr.bf16.mxu0 0
  %9029 = vmatpush1.bf16.msra.mxu0 0
  %9030 = vmatprep.subr.bf16.mxu0 0
  %9031 = vmatpush1.bf16.msra.mxu0 0
  %9032 = vmatprep.subr.bf16.mxu0 0
  %9033 = vmatpush1.bf16.msra.mxu0 0
  %9034 = vmatprep.subr.bf16.mxu0 0
  %9035 = vmatpush1.bf16.msra.mxu0 0
  %9036 = vmatprep.subr.bf16.mxu0 0
  %9037 = vmatpush1.bf16.msra.mxu0 0
  %9038 = vmatprep.subr.bf16.mxu0 0
  %9039 = vmatpush1.bf16.msra.mxu0 0
  %9040 = vmatprep.subr.bf16.mxu0 0
  %9041 = vmatpush1.bf16.msra.mxu0 0
  %9042 = vmatprep.subr.bf16.mxu0 0
  %9043 = vmatpush1.bf16.msra.mxu0 %v9023
  %9044 = vmatprep.subr.bf16.mxu0 0
  %9045 = vmatpush2.bf16.msra.mxu0 0
  %9046 = vmatprep.subr.bf16.mxu0 0
  %9047 = vmatpush2.bf16.msra.mxu0 0
  %9048 = vmatprep.subr.bf16.mxu0 0
  %9049 = vmatpush2.bf16.msra.mxu0 0
  %9050 = vmatprep.subr.bf16.mxu0 0
  %9051 = vmatpush2.bf16.msra.mxu0 0
  %9052 = vmatprep.subr.bf16.mxu0 0
  %9053 = vmatpush2.bf16.msra.mxu0 0
  %9054 = vmatprep.subr.bf16.mxu0 0
  %9055 = vmatpush2.bf16.msra.mxu0 0
  %9056 = vmatprep.subr.bf16.mxu0 0
  %9057 = vmatpush2.bf16.msra.mxu0 0
  %9058 = vmatprep.subr.bf16.mxu0 0
  %9059 = vmatpush2.bf16.msra.mxu0 0
  %9060 = vmatprep.mubr.bf16.mxu0 0
  %9061 = vmatmul.mubr.bf16.gmra.mxu0 %v9026
  %v9062 = vpop.f32.mrf.mxu0
  %v9063 = vadd.f32 0.0, %v9062
  %v9064 = vpop.f32.mrf.mxu0
  %v9065 = vpop.f32.mrf.mxu0
  %v9066 = vpop.f32.mrf.mxu0
  %9067 = vdwg.mxu0
  %v9068 = vadd.f32 %v8965, %v9063
  %s9069 = scalar_lea.vmem %s11, 6
  %v9070 = vld [vmem:[%s9069] sm:$0x3]
  %v9072 = vsel %vm205, %v9070, 0
  %9074 = vmatprep.subr.bf16.mxu0 0
  %9075 = vmatpush1.bf16.msra.mxu0 0
  %9076 = vmatprep.subr.bf16.mxu0 0
  %9077 = vmatpush1.bf16.msra.mxu0 0
  %9078 = vmatprep.subr.bf16.mxu0 0
  %9079 = vmatpush1.bf16.msra.mxu0 0
  %9080 = vmatprep.subr.bf16.mxu0 0
  %9081 = vmatpush1.bf16.msra.mxu0 0
  %9082 = vmatprep.subr.bf16.mxu0 0
  %9083 = vmatpush1.bf16.msra.mxu0 %v8775
  %9084 = vmatprep.subr.bf16.mxu0 0
  %9085 = vmatpush1.bf16.msra.mxu0 %v8774
  %9086 = vmatprep.subr.bf16.mxu0 0
  %9087 = vmatpush1.bf16.msra.mxu0 %v8773
  %9088 = vmatprep.subr.bf16.mxu0 0
  %9089 = vmatpush1.bf16.msra.mxu0 %v8772
  %9090 = vmatprep.subr.bf16.mxu0 0
  %9091 = vmatpush2.bf16.msra.mxu0 0
  %9092 = vmatprep.subr.bf16.mxu0 0
  %9093 = vmatpush2.bf16.msra.mxu0 0
  %9094 = vmatprep.subr.bf16.mxu0 0
  %9095 = vmatpush2.bf16.msra.mxu0 0
  %9096 = vmatprep.subr.bf16.mxu0 0
  %9097 = vmatpush2.bf16.msra.mxu0 0
  %9098 = vmatprep.subr.bf16.mxu0 0
  %9099 = vmatpush2.bf16.msra.mxu0 0
  %9100 = vmatprep.subr.bf16.mxu0 0
  %9101 = vmatpush2.bf16.msra.mxu0 0
  %9102 = vmatprep.subr.bf16.mxu0 0
  %9103 = vmatpush2.bf16.msra.mxu0 0
  %9104 = vmatprep.subr.bf16.mxu0 0
  %9105 = vmatpush2.bf16.msra.mxu0 0
  %9106 = vmatprep.mubr.bf16.mxu0 0
  %9107 = vmatmul.mubr.bf16.gmra.mxu0 %v9072
  %v9108 = vpop.f32.mrf.mxu0
  %v9109 = vadd.f32 0.0, %v9108
  %v9110 = vpop.f32.mrf.mxu0
  %v9111 = vpop.f32.mrf.mxu0
  %v9112 = vpop.f32.mrf.mxu0
  %9113 = vdwg.mxu0
  %v9114 = vpack.c.bf16 %v9109, %v9109
  %s9115 = scalar_lea.vmem %s12, 24
  %v9116 = vld [vmem:[%s9115] sm:$0xf]
  %v9117 = vld [vmem:[%s9115 + $0x4] sm:$0xf]
  %v9120 = vunpack.c.l.b16 %v9116
  %v9121 = vunpack.c.l.b16 %v9117
  %v9122 = vpack.c.b16 %v9121, %v9120
  %v9125 = vsel %vm4033, %v9114, 0
  %9127 = vmatprep.subr.bf16.mxu0 0
  %9128 = vmatpush1.bf16.msra.mxu0 0
  %9129 = vmatprep.subr.bf16.mxu0 0
  %9130 = vmatpush1.bf16.msra.mxu0 0
  %9131 = vmatprep.subr.bf16.mxu0 0
  %9132 = vmatpush1.bf16.msra.mxu0 0
  %9133 = vmatprep.subr.bf16.mxu0 0
  %9134 = vmatpush1.bf16.msra.mxu0 0
  %9135 = vmatprep.subr.bf16.mxu0 0
  %9136 = vmatpush1.bf16.msra.mxu0 0
  %9137 = vmatprep.subr.bf16.mxu0 0
  %9138 = vmatpush1.bf16.msra.mxu0 0
  %9139 = vmatprep.subr.bf16.mxu0 0
  %9140 = vmatpush1.bf16.msra.mxu0 0
  %9141 = vmatprep.subr.bf16.mxu0 0
  %9142 = vmatpush1.bf16.msra.mxu0 %v9122
  %9143 = vmatprep.subr.bf16.mxu0 0
  %9144 = vmatpush2.bf16.msra.mxu0 0
  %9145 = vmatprep.subr.bf16.mxu0 0
  %9146 = vmatpush2.bf16.msra.mxu0 0
  %9147 = vmatprep.subr.bf16.mxu0 0
  %9148 = vmatpush2.bf16.msra.mxu0 0
  %9149 = vmatprep.subr.bf16.mxu0 0
  %9150 = vmatpush2.bf16.msra.mxu0 0
  %9151 = vmatprep.subr.bf16.mxu0 0
  %9152 = vmatpush2.bf16.msra.mxu0 0
  %9153 = vmatprep.subr.bf16.mxu0 0
  %9154 = vmatpush2.bf16.msra.mxu0 0
  %9155 = vmatprep.subr.bf16.mxu0 0
  %9156 = vmatpush2.bf16.msra.mxu0 0
  %9157 = vmatprep.subr.bf16.mxu0 0
  %9158 = vmatpush2.bf16.msra.mxu0 0
  %9159 = vmatprep.mubr.bf16.mxu0 0
  %9160 = vmatmul.mubr.bf16.gmra.mxu0 %v9125
  %v9161 = vpop.f32.mrf.mxu0
  %v9162 = vadd.f32 0.0, %v9161
  %v9163 = vpop.f32.mrf.mxu0
  %v9164 = vpop.f32.mrf.mxu0
  %v9165 = vpop.f32.mrf.mxu0
  %9166 = vdwg.mxu0
  %v9167 = vadd.f32 %v9068, %v9162
  %s9168 = scalar_lea.vmem %s11, 8
  %v9169 = vld [vmem:[%s9168] sm:$0x3]
  %v9171 = vsel %vm205, %v9169, 0
  %9173 = vmatprep.subr.bf16.mxu0 0
  %9174 = vmatpush1.bf16.msra.mxu0 0
  %9175 = vmatprep.subr.bf16.mxu0 0
  %9176 = vmatpush1.bf16.msra.mxu0 0
  %9177 = vmatprep.subr.bf16.mxu0 0
  %9178 = vmatpush1.bf16.msra.mxu0 0
  %9179 = vmatprep.subr.bf16.mxu0 0
  %9180 = vmatpush1.bf16.msra.mxu0 0
  %9181 = vmatprep.subr.bf16.mxu0 0
  %9182 = vmatpush1.bf16.msra.mxu0 %v8775
  %9183 = vmatprep.subr.bf16.mxu0 0
  %9184 = vmatpush1.bf16.msra.mxu0 %v8774
  %9185 = vmatprep.subr.bf16.mxu0 0
  %9186 = vmatpush1.bf16.msra.mxu0 %v8773
  %9187 = vmatprep.subr.bf16.mxu0 0
  %9188 = vmatpush1.bf16.msra.mxu0 %v8772
  %9189 = vmatprep.subr.bf16.mxu0 0
  %9190 = vmatpush2.bf16.msra.mxu0 0
  %9191 = vmatprep.subr.bf16.mxu0 0
  %9192 = vmatpush2.bf16.msra.mxu0 0
  %9193 = vmatprep.subr.bf16.mxu0 0
  %9194 = vmatpush2.bf16.msra.mxu0 0
  %9195 = vmatprep.subr.bf16.mxu0 0
  %9196 = vmatpush2.bf16.msra.mxu0 0
  %9197 = vmatprep.subr.bf16.mxu0 0
  %9198 = vmatpush2.bf16.msra.mxu0 0
  %9199 = vmatprep.subr.bf16.mxu0 0
  %9200 = vmatpush2.bf16.msra.mxu0 0
  %9201 = vmatprep.subr.bf16.mxu0 0
  %9202 = vmatpush2.bf16.msra.mxu0 0
  %9203 = vmatprep.subr.bf16.mxu0 0
  %9204 = vmatpush2.bf16.msra.mxu0 0
  %9205 = vmatprep.mubr.bf16.mxu0 0
  %9206 = vmatmul.mubr.bf16.gmra.mxu0 %v9171
  %v9207 = vpop.f32.mrf.mxu0
  %v9208 = vadd.f32 0.0, %v9207
  %v9209 = vpop.f32.mrf.mxu0
  %v9210 = vpop.f32.mrf.mxu0
  %v9211 = vpop.f32.mrf.mxu0
  %9212 = vdwg.mxu0
  %v9213 = vpack.c.bf16 %v9208, %v9208
  %s9214 = scalar_lea.vmem %s12, 32
  %v9215 = vld [vmem:[%s9214] sm:$0xf]
  %v9216 = vld [vmem:[%s9214 + $0x4] sm:$0xf]
  %v9219 = vunpack.c.l.b16 %v9215
  %v9220 = vunpack.c.l.b16 %v9216
  %v9221 = vpack.c.b16 %v9220, %v9219
  %v9224 = vsel %vm4033, %v9213, 0
  %9226 = vmatprep.subr.bf16.mxu0 0
  %9227 = vmatpush1.bf16.msra.mxu0 0
  %9228 = vmatprep.subr.bf16.mxu0 0
  %9229 = vmatpush1.bf16.msra.mxu0 0
  %9230 = vmatprep.subr.bf16.mxu0 0
  %9231 = vmatpush1.bf16.msra.mxu0 0
  %9232 = vmatprep.subr.bf16.mxu0 0
  %9233 = vmatpush1.bf16.msra.mxu0 0
  %9234 = vmatprep.subr.bf16.mxu0 0
  %9235 = vmatpush1.bf16.msra.mxu0 0
  %9236 = vmatprep.subr.bf16.mxu0 0
  %9237 = vmatpush1.bf16.msra.mxu0 0
  %9238 = vmatprep.subr.bf16.mxu0 0
  %9239 = vmatpush1.bf16.msra.mxu0 0
  %9240 = vmatprep.subr.bf16.mxu0 0
  %9241 = vmatpush1.bf16.msra.mxu0 %v9221
  %9242 = vmatprep.subr.bf16.mxu0 0
  %9243 = vmatpush2.bf16.msra.mxu0 0
  %9244 = vmatprep.subr.bf16.mxu0 0
  %9245 = vmatpush2.bf16.msra.mxu0 0
  %9246 = vmatprep.subr.bf16.mxu0 0
  %9247 = vmatpush2.bf16.msra.mxu0 0
  %9248 = vmatprep.subr.bf16.mxu0 0
  %9249 = vmatpush2.bf16.msra.mxu0 0
  %9250 = vmatprep.subr.bf16.mxu0 0
  %9251 = vmatpush2.bf16.msra.mxu0 0
  %9252 = vmatprep.subr.bf16.mxu0 0
  %9253 = vmatpush2.bf16.msra.mxu0 0
  %9254 = vmatprep.subr.bf16.mxu0 0
  %9255 = vmatpush2.bf16.msra.mxu0 0
  %9256 = vmatprep.subr.bf16.mxu0 0
  %9257 = vmatpush2.bf16.msra.mxu0 0
  %9258 = vmatprep.mubr.bf16.mxu0 0
  %9259 = vmatmul.mubr.bf16.gmra.mxu0 %v9224
  %v9260 = vpop.f32.mrf.mxu0
  %v9261 = vadd.f32 0.0, %v9260
  %v9262 = vpop.f32.mrf.mxu0
  %v9263 = vpop.f32.mrf.mxu0
  %v9264 = vpop.f32.mrf.mxu0
  %9265 = vdwg.mxu0
  %v9266 = vadd.f32 %v9167, %v9261
  %s9267 = scalar_lea.vmem %s11, 10
  %v9268 = vld [vmem:[%s9267] sm:$0x3]
  %v9270 = vsel %vm205, %v9268, 0
  %9272 = vmatprep.subr.bf16.mxu0 0
  %9273 = vmatpush1.bf16.msra.mxu0 0
  %9274 = vmatprep.subr.bf16.mxu0 0
  %9275 = vmatpush1.bf16.msra.mxu0 0
  %9276 = vmatprep.subr.bf16.mxu0 0
  %9277 = vmatpush1.bf16.msra.mxu0 0
  %9278 = vmatprep.subr.bf16.mxu0 0
  %9279 = vmatpush1.bf16.msra.mxu0 0
  %9280 = vmatprep.subr.bf16.mxu0 0
  %9281 = vmatpush1.bf16.msra.mxu0 %v8775
  %9282 = vmatprep.subr.bf16.mxu0 0
  %9283 = vmatpush1.bf16.msra.mxu0 %v8774
  %9284 = vmatprep.subr.bf16.mxu0 0
  %9285 = vmatpush1.bf16.msra.mxu0 %v8773
  %9286 = vmatprep.subr.bf16.mxu0 0
  %9287 = vmatpush1.bf16.msra.mxu0 %v8772
  %9288 = vmatprep.subr.bf16.mxu0 0
  %9289 = vmatpush2.bf16.msra.mxu0 0
  %9290 = vmatprep.subr.bf16.mxu0 0
  %9291 = vmatpush2.bf16.msra.mxu0 0
  %9292 = vmatprep.subr.bf16.mxu0 0
  %9293 = vmatpush2.bf16.msra.mxu0 0
  %9294 = vmatprep.subr.bf16.mxu0 0
  %9295 = vmatpush2.bf16.msra.mxu0 0
  %9296 = vmatprep.subr.bf16.mxu0 0
  %9297 = vmatpush2.bf16.msra.mxu0 0
  %9298 = vmatprep.subr.bf16.mxu0 0
  %9299 = vmatpush2.bf16.msra.mxu0 0
  %9300 = vmatprep.subr.bf16.mxu0 0
  %9301 = vmatpush2.bf16.msra.mxu0 0
  %9302 = vmatprep.subr.bf16.mxu0 0
  %9303 = vmatpush2.bf16.msra.mxu0 0
  %9304 = vmatprep.mubr.bf16.mxu0 0
  %9305 = vmatmul.mubr.bf16.gmra.mxu0 %v9270
  %v9306 = vpop.f32.mrf.mxu0
  %v9307 = vadd.f32 0.0, %v9306
  %v9308 = vpop.f32.mrf.mxu0
  %v9309 = vpop.f32.mrf.mxu0
  %v9310 = vpop.f32.mrf.mxu0
  %9311 = vdwg.mxu0
  %v9312 = vpack.c.bf16 %v9307, %v9307
  %s9313 = scalar_lea.vmem %s12, 40
  %v9314 = vld [vmem:[%s9313] sm:$0xf]
  %v9315 = vld [vmem:[%s9313 + $0x4] sm:$0xf]
  %v9318 = vunpack.c.l.b16 %v9314
  %v9319 = vunpack.c.l.b16 %v9315
  %v9320 = vpack.c.b16 %v9319, %v9318
  %v9323 = vsel %vm4033, %v9312, 0
  %9325 = vmatprep.subr.bf16.mxu0 0
  %9326 = vmatpush1.bf16.msra.mxu0 0
  %9327 = vmatprep.subr.bf16.mxu0 0
  %9328 = vmatpush1.bf16.msra.mxu0 0
  %9329 = vmatprep.subr.bf16.mxu0 0
  %9330 = vmatpush1.bf16.msra.mxu0 0
  %9331 = vmatprep.subr.bf16.mxu0 0
  %9332 = vmatpush1.bf16.msra.mxu0 0
  %9333 = vmatprep.subr.bf16.mxu0 0
  %9334 = vmatpush1.bf16.msra.mxu0 0
  %9335 = vmatprep.subr.bf16.mxu0 0
  %9336 = vmatpush1.bf16.msra.mxu0 0
  %9337 = vmatprep.subr.bf16.mxu0 0
  %9338 = vmatpush1.bf16.msra.mxu0 0
  %9339 = vmatprep.subr.bf16.mxu0 0
  %9340 = vmatpush1.bf16.msra.mxu0 %v9320
  %9341 = vmatprep.subr.bf16.mxu0 0
  %9342 = vmatpush2.bf16.msra.mxu0 0
  %9343 = vmatprep.subr.bf16.mxu0 0
  %9344 = vmatpush2.bf16.msra.mxu0 0
  %9345 = vmatprep.subr.bf16.mxu0 0
  %9346 = vmatpush2.bf16.msra.mxu0 0
  %9347 = vmatprep.subr.bf16.mxu0 0
  %9348 = vmatpush2.bf16.msra.mxu0 0
  %9349 = vmatprep.subr.bf16.mxu0 0
  %9350 = vmatpush2.bf16.msra.mxu0 0
  %9351 = vmatprep.subr.bf16.mxu0 0
  %9352 = vmatpush2.bf16.msra.mxu0 0
  %9353 = vmatprep.subr.bf16.mxu0 0
  %9354 = vmatpush2.bf16.msra.mxu0 0
  %9355 = vmatprep.subr.bf16.mxu0 0
  %9356 = vmatpush2.bf16.msra.mxu0 0
  %9357 = vmatprep.mubr.bf16.mxu0 0
  %9358 = vmatmul.mubr.bf16.gmra.mxu0 %v9323
  %v9359 = vpop.f32.mrf.mxu0
  %v9360 = vadd.f32 0.0, %v9359
  %v9361 = vpop.f32.mrf.mxu0
  %v9362 = vpop.f32.mrf.mxu0
  %v9363 = vpop.f32.mrf.mxu0
  %9364 = vdwg.mxu0
  %v9365 = vadd.f32 %v9266, %v9360
  %s9366 = scalar_lea.vmem %s11, 12
  %v9367 = vld [vmem:[%s9366] sm:$0x3]
  %v9369 = vsel %vm205, %v9367, 0
  %9371 = vmatprep.subr.bf16.mxu0 0
  %9372 = vmatpush1.bf16.msra.mxu0 0
  %9373 = vmatprep.subr.bf16.mxu0 0
  %9374 = vmatpush1.bf16.msra.mxu0 0
  %9375 = vmatprep.subr.bf16.mxu0 0
  %9376 = vmatpush1.bf16.msra.mxu0 0
  %9377 = vmatprep.subr.bf16.mxu0 0
  %9378 = vmatpush1.bf16.msra.mxu0 0
  %9379 = vmatprep.subr.bf16.mxu0 0
  %9380 = vmatpush1.bf16.msra.mxu0 %v8775
  %9381 = vmatprep.subr.bf16.mxu0 0
  %9382 = vmatpush1.bf16.msra.mxu0 %v8774
  %9383 = vmatprep.subr.bf16.mxu0 0
  %9384 = vmatpush1.bf16.msra.mxu0 %v8773
  %9385 = vmatprep.subr.bf16.mxu0 0
  %9386 = vmatpush1.bf16.msra.mxu0 %v8772
  %9387 = vmatprep.subr.bf16.mxu0 0
  %9388 = vmatpush2.bf16.msra.mxu0 0
  %9389 = vmatprep.subr.bf16.mxu0 0
  %9390 = vmatpush2.bf16.msra.mxu0 0
  %9391 = vmatprep.subr.bf16.mxu0 0
  %9392 = vmatpush2.bf16.msra.mxu0 0
  %9393 = vmatprep.subr.bf16.mxu0 0
  %9394 = vmatpush2.bf16.msra.mxu0 0
  %9395 = vmatprep.subr.bf16.mxu0 0
  %9396 = vmatpush2.bf16.msra.mxu0 0
  %9397 = vmatprep.subr.bf16.mxu0 0
  %9398 = vmatpush2.bf16.msra.mxu0 0
  %9399 = vmatprep.subr.bf16.mxu0 0
  %9400 = vmatpush2.bf16.msra.mxu0 0
  %9401 = vmatprep.subr.bf16.mxu0 0
  %9402 = vmatpush2.bf16.msra.mxu0 0
  %9403 = vmatprep.mubr.bf16.mxu0 0
  %9404 = vmatmul.mubr.bf16.gmra.mxu0 %v9369
  %v9405 = vpop.f32.mrf.mxu0
  %v9406 = vadd.f32 0.0, %v9405
  %v9407 = vpop.f32.mrf.mxu0
  %v9408 = vpop.f32.mrf.mxu0
  %v9409 = vpop.f32.mrf.mxu0
  %9410 = vdwg.mxu0
  %v9411 = vpack.c.bf16 %v9406, %v9406
  %s9412 = scalar_lea.vmem %s12, 48
  %v9413 = vld [vmem:[%s9412] sm:$0xf]
  %v9414 = vld [vmem:[%s9412 + $0x4] sm:$0xf]
  %v9417 = vunpack.c.l.b16 %v9413
  %v9418 = vunpack.c.l.b16 %v9414
  %v9419 = vpack.c.b16 %v9418, %v9417
  %v9422 = vsel %vm4033, %v9411, 0
  %9424 = vmatprep.subr.bf16.mxu0 0
  %9425 = vmatpush1.bf16.msra.mxu0 0
  %9426 = vmatprep.subr.bf16.mxu0 0
  %9427 = vmatpush1.bf16.msra.mxu0 0
  %9428 = vmatprep.subr.bf16.mxu0 0
  %9429 = vmatpush1.bf16.msra.mxu0 0
  %9430 = vmatprep.subr.bf16.mxu0 0
  %9431 = vmatpush1.bf16.msra.mxu0 0
  %9432 = vmatprep.subr.bf16.mxu0 0
  %9433 = vmatpush1.bf16.msra.mxu0 0
  %9434 = vmatprep.subr.bf16.mxu0 0
  %9435 = vmatpush1.bf16.msra.mxu0 0
  %9436 = vmatprep.subr.bf16.mxu0 0
  %9437 = vmatpush1.bf16.msra.mxu0 0
  %9438 = vmatprep.subr.bf16.mxu0 0
  %9439 = vmatpush1.bf16.msra.mxu0 %v9419
  %9440 = vmatprep.subr.bf16.mxu0 0
  %9441 = vmatpush2.bf16.msra.mxu0 0
  %9442 = vmatprep.subr.bf16.mxu0 0
  %9443 = vmatpush2.bf16.msra.mxu0 0
  %9444 = vmatprep.subr.bf16.mxu0 0
  %9445 = vmatpush2.bf16.msra.mxu0 0
  %9446 = vmatprep.subr.bf16.mxu0 0
  %9447 = vmatpush2.bf16.msra.mxu0 0
  %9448 = vmatprep.subr.bf16.mxu0 0
  %9449 = vmatpush2.bf16.msra.mxu0 0
  %9450 = vmatprep.subr.bf16.mxu0 0
  %9451 = vmatpush2.bf16.msra.mxu0 0
  %9452 = vmatprep.subr.bf16.mxu0 0
  %9453 = vmatpush2.bf16.msra.mxu0 0
  %9454 = vmatprep.subr.bf16.mxu0 0
  %9455 = vmatpush2.bf16.msra.mxu0 0
  %9456 = vmatprep.mubr.bf16.mxu0 0
  %9457 = vmatmul.mubr.bf16.gmra.mxu0 %v9422
  %v9458 = vpop.f32.mrf.mxu0
  %v9459 = vadd.f32 0.0, %v9458
  %v9460 = vpop.f32.mrf.mxu0
  %v9461 = vpop.f32.mrf.mxu0
  %v9462 = vpop.f32.mrf.mxu0
  %9463 = vdwg.mxu0
  %v9464 = vadd.f32 %v9365, %v9459
  %s9465 = scalar_lea.vmem %s11, 14
  %v9466 = vld [vmem:[%s9465] sm:$0x3]
  %v9468 = vsel %vm205, %v9466, 0
  %9470 = vmatprep.subr.bf16.mxu0 0
  %9471 = vmatpush1.bf16.msra.mxu0 0
  %9472 = vmatprep.subr.bf16.mxu0 0
  %9473 = vmatpush1.bf16.msra.mxu0 0
  %9474 = vmatprep.subr.bf16.mxu0 0
  %9475 = vmatpush1.bf16.msra.mxu0 0
  %9476 = vmatprep.subr.bf16.mxu0 0
  %9477 = vmatpush1.bf16.msra.mxu0 0
  %9478 = vmatprep.subr.bf16.mxu0 0
  %9479 = vmatpush1.bf16.msra.mxu0 %v8775
  %9480 = vmatprep.subr.bf16.mxu0 0
  %9481 = vmatpush1.bf16.msra.mxu0 %v8774
  %9482 = vmatprep.subr.bf16.mxu0 0
  %9483 = vmatpush1.bf16.msra.mxu0 %v8773
  %9484 = vmatprep.subr.bf16.mxu0 0
  %9485 = vmatpush1.bf16.msra.mxu0 %v8772
  %9486 = vmatprep.subr.bf16.mxu0 0
  %9487 = vmatpush2.bf16.msra.mxu0 0
  %9488 = vmatprep.subr.bf16.mxu0 0
  %9489 = vmatpush2.bf16.msra.mxu0 0
  %9490 = vmatprep.subr.bf16.mxu0 0
  %9491 = vmatpush2.bf16.msra.mxu0 0
  %9492 = vmatprep.subr.bf16.mxu0 0
  %9493 = vmatpush2.bf16.msra.mxu0 0
  %9494 = vmatprep.subr.bf16.mxu0 0
  %9495 = vmatpush2.bf16.msra.mxu0 0
  %9496 = vmatprep.subr.bf16.mxu0 0
  %9497 = vmatpush2.bf16.msra.mxu0 0
  %9498 = vmatprep.subr.bf16.mxu0 0
  %9499 = vmatpush2.bf16.msra.mxu0 0
  %9500 = vmatprep.subr.bf16.mxu0 0
  %9501 = vmatpush2.bf16.msra.mxu0 0
  %9502 = vmatprep.mubr.bf16.mxu0 0
  %9503 = vmatmul.mubr.bf16.gmra.mxu0 %v9468
  %v9504 = vpop.f32.mrf.mxu0
  %v9505 = vadd.f32 0.0, %v9504
  %v9506 = vpop.f32.mrf.mxu0
  %v9507 = vpop.f32.mrf.mxu0
  %v9508 = vpop.f32.mrf.mxu0
  %9509 = vdwg.mxu0
  %v9510 = vpack.c.bf16 %v9505, %v9505
  %s9511 = scalar_lea.vmem %s12, 56
  %v9512 = vld [vmem:[%s9511] sm:$0xf]
  %v9513 = vld [vmem:[%s9511 + $0x4] sm:$0xf]
  %v9516 = vunpack.c.l.b16 %v9512
  %v9517 = vunpack.c.l.b16 %v9513
  %v9518 = vpack.c.b16 %v9517, %v9516
  %v9521 = vsel %vm4033, %v9510, 0
  %9523 = vmatprep.subr.bf16.mxu0 0
  %9524 = vmatpush1.bf16.msra.mxu0 0
  %9525 = vmatprep.subr.bf16.mxu0 0
  %9526 = vmatpush1.bf16.msra.mxu0 0
  %9527 = vmatprep.subr.bf16.mxu0 0
  %9528 = vmatpush1.bf16.msra.mxu0 0
  %9529 = vmatprep.subr.bf16.mxu0 0
  %9530 = vmatpush1.bf16.msra.mxu0 0
  %9531 = vmatprep.subr.bf16.mxu0 0
  %9532 = vmatpush1.bf16.msra.mxu0 0
  %9533 = vmatprep.subr.bf16.mxu0 0
  %9534 = vmatpush1.bf16.msra.mxu0 0
  %9535 = vmatprep.subr.bf16.mxu0 0
  %9536 = vmatpush1.bf16.msra.mxu0 0
  %9537 = vmatprep.subr.bf16.mxu0 0
  %9538 = vmatpush1.bf16.msra.mxu0 %v9518
  %9539 = vmatprep.subr.bf16.mxu0 0
  %9540 = vmatpush2.bf16.msra.mxu0 0
  %9541 = vmatprep.subr.bf16.mxu0 0
  %9542 = vmatpush2.bf16.msra.mxu0 0
  %9543 = vmatprep.subr.bf16.mxu0 0
  %9544 = vmatpush2.bf16.msra.mxu0 0
  %9545 = vmatprep.subr.bf16.mxu0 0
  %9546 = vmatpush2.bf16.msra.mxu0 0
  %9547 = vmatprep.subr.bf16.mxu0 0
  %9548 = vmatpush2.bf16.msra.mxu0 0
  %9549 = vmatprep.subr.bf16.mxu0 0
  %9550 = vmatpush2.bf16.msra.mxu0 0
  %9551 = vmatprep.subr.bf16.mxu0 0
  %9552 = vmatpush2.bf16.msra.mxu0 0
  %9553 = vmatprep.subr.bf16.mxu0 0
  %9554 = vmatpush2.bf16.msra.mxu0 0
  %9555 = vmatprep.mubr.bf16.mxu0 0
  %9556 = vmatmul.mubr.bf16.gmra.mxu0 %v9521
  %v9557 = vpop.f32.mrf.mxu0
  %v9558 = vadd.f32 0.0, %v9557
  %v9559 = vpop.f32.mrf.mxu0
  %v9560 = vpop.f32.mrf.mxu0
  %v9561 = vpop.f32.mrf.mxu0
  %9562 = vdwg.mxu0
  %v9563 = vadd.f32 %v9464, %v9558
  %s9564 = scalar_lea.vmem %s11, 16
  %v9565 = vld [vmem:[%s9564] sm:$0x3]
  %v9567 = vsel %vm205, %v9565, 0
  %9569 = vmatprep.subr.bf16.mxu0 0
  %9570 = vmatpush1.bf16.msra.mxu0 0
  %9571 = vmatprep.subr.bf16.mxu0 0
  %9572 = vmatpush1.bf16.msra.mxu0 0
  %9573 = vmatprep.subr.bf16.mxu0 0
  %9574 = vmatpush1.bf16.msra.mxu0 0
  %9575 = vmatprep.subr.bf16.mxu0 0
  %9576 = vmatpush1.bf16.msra.mxu0 0
  %9577 = vmatprep.subr.bf16.mxu0 0
  %9578 = vmatpush1.bf16.msra.mxu0 %v8775
  %9579 = vmatprep.subr.bf16.mxu0 0
  %9580 = vmatpush1.bf16.msra.mxu0 %v8774
  %9581 = vmatprep.subr.bf16.mxu0 0
  %9582 = vmatpush1.bf16.msra.mxu0 %v8773
  %9583 = vmatprep.subr.bf16.mxu0 0
  %9584 = vmatpush1.bf16.msra.mxu0 %v8772
  %9585 = vmatprep.subr.bf16.mxu0 0
  %9586 = vmatpush2.bf16.msra.mxu0 0
  %9587 = vmatprep.subr.bf16.mxu0 0
  %9588 = vmatpush2.bf16.msra.mxu0 0
  %9589 = vmatprep.subr.bf16.mxu0 0
  %9590 = vmatpush2.bf16.msra.mxu0 0
  %9591 = vmatprep.subr.bf16.mxu0 0
  %9592 = vmatpush2.bf16.msra.mxu0 0
  %9593 = vmatprep.subr.bf16.mxu0 0
  %9594 = vmatpush2.bf16.msra.mxu0 0
  %9595 = vmatprep.subr.bf16.mxu0 0
  %9596 = vmatpush2.bf16.msra.mxu0 0
  %9597 = vmatprep.subr.bf16.mxu0 0
  %9598 = vmatpush2.bf16.msra.mxu0 0
  %9599 = vmatprep.subr.bf16.mxu0 0
  %9600 = vmatpush2.bf16.msra.mxu0 0
  %9601 = vmatprep.mubr.bf16.mxu0 0
  %9602 = vmatmul.mubr.bf16.gmra.mxu0 %v9567
  %v9603 = vpop.f32.mrf.mxu0
  %v9604 = vadd.f32 0.0, %v9603
  %v9605 = vpop.f32.mrf.mxu0
  %v9606 = vpop.f32.mrf.mxu0
  %v9607 = vpop.f32.mrf.mxu0
  %9608 = vdwg.mxu0
  %v9609 = vpack.c.bf16 %v9604, %v9604
  %s9610 = scalar_lea.vmem %s12, 64
  %v9611 = vld [vmem:[%s9610] sm:$0xf]
  %v9612 = vld [vmem:[%s9610 + $0x4] sm:$0xf]
  %v9615 = vunpack.c.l.b16 %v9611
  %v9616 = vunpack.c.l.b16 %v9612
  %v9617 = vpack.c.b16 %v9616, %v9615
  %v9620 = vsel %vm4033, %v9609, 0
  %9622 = vmatprep.subr.bf16.mxu0 0
  %9623 = vmatpush1.bf16.msra.mxu0 0
  %9624 = vmatprep.subr.bf16.mxu0 0
  %9625 = vmatpush1.bf16.msra.mxu0 0
  %9626 = vmatprep.subr.bf16.mxu0 0
  %9627 = vmatpush1.bf16.msra.mxu0 0
  %9628 = vmatprep.subr.bf16.mxu0 0
  %9629 = vmatpush1.bf16.msra.mxu0 0
  %9630 = vmatprep.subr.bf16.mxu0 0
  %9631 = vmatpush1.bf16.msra.mxu0 0
  %9632 = vmatprep.subr.bf16.mxu0 0
  %9633 = vmatpush1.bf16.msra.mxu0 0
  %9634 = vmatprep.subr.bf16.mxu0 0
  %9635 = vmatpush1.bf16.msra.mxu0 0
  %9636 = vmatprep.subr.bf16.mxu0 0
  %9637 = vmatpush1.bf16.msra.mxu0 %v9617
  %9638 = vmatprep.subr.bf16.mxu0 0
  %9639 = vmatpush2.bf16.msra.mxu0 0
  %9640 = vmatprep.subr.bf16.mxu0 0
  %9641 = vmatpush2.bf16.msra.mxu0 0
  %9642 = vmatprep.subr.bf16.mxu0 0
  %9643 = vmatpush2.bf16.msra.mxu0 0
  %9644 = vmatprep.subr.bf16.mxu0 0
  %9645 = vmatpush2.bf16.msra.mxu0 0
  %9646 = vmatprep.subr.bf16.mxu0 0
  %9647 = vmatpush2.bf16.msra.mxu0 0
  %9648 = vmatprep.subr.bf16.mxu0 0
  %9649 = vmatpush2.bf16.msra.mxu0 0
  %9650 = vmatprep.subr.bf16.mxu0 0
  %9651 = vmatpush2.bf16.msra.mxu0 0
  %9652 = vmatprep.subr.bf16.mxu0 0
  %9653 = vmatpush2.bf16.msra.mxu0 0
  %9654 = vmatprep.mubr.bf16.mxu0 0
  %9655 = vmatmul.mubr.bf16.gmra.mxu0 %v9620
  %v9656 = vpop.f32.mrf.mxu0
  %v9657 = vadd.f32 0.0, %v9656
  %v9658 = vpop.f32.mrf.mxu0
  %v9659 = vpop.f32.mrf.mxu0
  %v9660 = vpop.f32.mrf.mxu0
  %9661 = vdwg.mxu0
  %v9662 = vadd.f32 %v9563, %v9657
  %s9663 = scalar_lea.vmem %s11, 18
  %v9664 = vld [vmem:[%s9663] sm:$0x3]
  %v9666 = vsel %vm205, %v9664, 0
  %9668 = vmatprep.subr.bf16.mxu0 0
  %9669 = vmatpush1.bf16.msra.mxu0 0
  %9670 = vmatprep.subr.bf16.mxu0 0
  %9671 = vmatpush1.bf16.msra.mxu0 0
  %9672 = vmatprep.subr.bf16.mxu0 0
  %9673 = vmatpush1.bf16.msra.mxu0 0
  %9674 = vmatprep.subr.bf16.mxu0 0
  %9675 = vmatpush1.bf16.msra.mxu0 0
  %9676 = vmatprep.subr.bf16.mxu0 0
  %9677 = vmatpush1.bf16.msra.mxu0 %v8775
  %9678 = vmatprep.subr.bf16.mxu0 0
  %9679 = vmatpush1.bf16.msra.mxu0 %v8774
  %9680 = vmatprep.subr.bf16.mxu0 0
  %9681 = vmatpush1.bf16.msra.mxu0 %v8773
  %9682 = vmatprep.subr.bf16.mxu0 0
  %9683 = vmatpush1.bf16.msra.mxu0 %v8772
  %9684 = vmatprep.subr.bf16.mxu0 0
  %9685 = vmatpush2.bf16.msra.mxu0 0
  %9686 = vmatprep.subr.bf16.mxu0 0
  %9687 = vmatpush2.bf16.msra.mxu0 0
  %9688 = vmatprep.subr.bf16.mxu0 0
  %9689 = vmatpush2.bf16.msra.mxu0 0
  %9690 = vmatprep.subr.bf16.mxu0 0
  %9691 = vmatpush2.bf16.msra.mxu0 0
  %9692 = vmatprep.subr.bf16.mxu0 0
  %9693 = vmatpush2.bf16.msra.mxu0 0
  %9694 = vmatprep.subr.bf16.mxu0 0
  %9695 = vmatpush2.bf16.msra.mxu0 0
  %9696 = vmatprep.subr.bf16.mxu0 0
  %9697 = vmatpush2.bf16.msra.mxu0 0
  %9698 = vmatprep.subr.bf16.mxu0 0
  %9699 = vmatpush2.bf16.msra.mxu0 0
  %9700 = vmatprep.mubr.bf16.mxu0 0
  %9701 = vmatmul.mubr.bf16.gmra.mxu0 %v9666
  %v9702 = vpop.f32.mrf.mxu0
  %v9703 = vadd.f32 0.0, %v9702
  %v9704 = vpop.f32.mrf.mxu0
  %v9705 = vpop.f32.mrf.mxu0
  %v9706 = vpop.f32.mrf.mxu0
  %9707 = vdwg.mxu0
  %v9708 = vpack.c.bf16 %v9703, %v9703
  %s9709 = scalar_lea.vmem %s12, 72
  %v9710 = vld [vmem:[%s9709] sm:$0xf]
  %v9711 = vld [vmem:[%s9709 + $0x4] sm:$0xf]
  %v9714 = vunpack.c.l.b16 %v9710
  %v9715 = vunpack.c.l.b16 %v9711
  %v9716 = vpack.c.b16 %v9715, %v9714
  %v9719 = vsel %vm4033, %v9708, 0
  %9721 = vmatprep.subr.bf16.mxu0 0
  %9722 = vmatpush1.bf16.msra.mxu0 0
  %9723 = vmatprep.subr.bf16.mxu0 0
  %9724 = vmatpush1.bf16.msra.mxu0 0
  %9725 = vmatprep.subr.bf16.mxu0 0
  %9726 = vmatpush1.bf16.msra.mxu0 0
  %9727 = vmatprep.subr.bf16.mxu0 0
  %9728 = vmatpush1.bf16.msra.mxu0 0
  %9729 = vmatprep.subr.bf16.mxu0 0
  %9730 = vmatpush1.bf16.msra.mxu0 0
  %9731 = vmatprep.subr.bf16.mxu0 0
  %9732 = vmatpush1.bf16.msra.mxu0 0
  %9733 = vmatprep.subr.bf16.mxu0 0
  %9734 = vmatpush1.bf16.msra.mxu0 0
  %9735 = vmatprep.subr.bf16.mxu0 0
  %9736 = vmatpush1.bf16.msra.mxu0 %v9716
  %9737 = vmatprep.subr.bf16.mxu0 0
  %9738 = vmatpush2.bf16.msra.mxu0 0
  %9739 = vmatprep.subr.bf16.mxu0 0
  %9740 = vmatpush2.bf16.msra.mxu0 0
  %9741 = vmatprep.subr.bf16.mxu0 0
  %9742 = vmatpush2.bf16.msra.mxu0 0
  %9743 = vmatprep.subr.bf16.mxu0 0
  %9744 = vmatpush2.bf16.msra.mxu0 0
  %9745 = vmatprep.subr.bf16.mxu0 0
  %9746 = vmatpush2.bf16.msra.mxu0 0
  %9747 = vmatprep.subr.bf16.mxu0 0
  %9748 = vmatpush2.bf16.msra.mxu0 0
  %9749 = vmatprep.subr.bf16.mxu0 0
  %9750 = vmatpush2.bf16.msra.mxu0 0
  %9751 = vmatprep.subr.bf16.mxu0 0
  %9752 = vmatpush2.bf16.msra.mxu0 0
  %9753 = vmatprep.mubr.bf16.mxu0 0
  %9754 = vmatmul.mubr.bf16.gmra.mxu0 %v9719
  %v9755 = vpop.f32.mrf.mxu0
  %v9756 = vadd.f32 0.0, %v9755
  %v9757 = vpop.f32.mrf.mxu0
  %v9758 = vpop.f32.mrf.mxu0
  %v9759 = vpop.f32.mrf.mxu0
  %9760 = vdwg.mxu0
  %v9761 = vadd.f32 %v9662, %v9756
  %s9762 = scalar_lea.vmem %s11, 20
  %v9763 = vld [vmem:[%s9762] sm:$0x3]
  %v9765 = vsel %vm205, %v9763, 0
  %9767 = vmatprep.subr.bf16.mxu0 0
  %9768 = vmatpush1.bf16.msra.mxu0 0
  %9769 = vmatprep.subr.bf16.mxu0 0
  %9770 = vmatpush1.bf16.msra.mxu0 0
  %9771 = vmatprep.subr.bf16.mxu0 0
  %9772 = vmatpush1.bf16.msra.mxu0 0
  %9773 = vmatprep.subr.bf16.mxu0 0
  %9774 = vmatpush1.bf16.msra.mxu0 0
  %9775 = vmatprep.subr.bf16.mxu0 0
  %9776 = vmatpush1.bf16.msra.mxu0 %v8775
  %9777 = vmatprep.subr.bf16.mxu0 0
  %9778 = vmatpush1.bf16.msra.mxu0 %v8774
  %9779 = vmatprep.subr.bf16.mxu0 0
  %9780 = vmatpush1.bf16.msra.mxu0 %v8773
  %9781 = vmatprep.subr.bf16.mxu0 0
  %9782 = vmatpush1.bf16.msra.mxu0 %v8772
  %9783 = vmatprep.subr.bf16.mxu0 0
  %9784 = vmatpush2.bf16.msra.mxu0 0
  %9785 = vmatprep.subr.bf16.mxu0 0
  %9786 = vmatpush2.bf16.msra.mxu0 0
  %9787 = vmatprep.subr.bf16.mxu0 0
  %9788 = vmatpush2.bf16.msra.mxu0 0
  %9789 = vmatprep.subr.bf16.mxu0 0
  %9790 = vmatpush2.bf16.msra.mxu0 0
  %9791 = vmatprep.subr.bf16.mxu0 0
  %9792 = vmatpush2.bf16.msra.mxu0 0
  %9793 = vmatprep.subr.bf16.mxu0 0
  %9794 = vmatpush2.bf16.msra.mxu0 0
  %9795 = vmatprep.subr.bf16.mxu0 0
  %9796 = vmatpush2.bf16.msra.mxu0 0
  %9797 = vmatprep.subr.bf16.mxu0 0
  %9798 = vmatpush2.bf16.msra.mxu0 0
  %9799 = vmatprep.mubr.bf16.mxu0 0
  %9800 = vmatmul.mubr.bf16.gmra.mxu0 %v9765
  %v9801 = vpop.f32.mrf.mxu0
  %v9802 = vadd.f32 0.0, %v9801
  %v9803 = vpop.f32.mrf.mxu0
  %v9804 = vpop.f32.mrf.mxu0
  %v9805 = vpop.f32.mrf.mxu0
  %9806 = vdwg.mxu0
  %v9807 = vpack.c.bf16 %v9802, %v9802
  %s9808 = scalar_lea.vmem %s12, 80
  %v9809 = vld [vmem:[%s9808] sm:$0xf]
  %v9810 = vld [vmem:[%s9808 + $0x4] sm:$0xf]
  %v9813 = vunpack.c.l.b16 %v9809
  %v9814 = vunpack.c.l.b16 %v9810
  %v9815 = vpack.c.b16 %v9814, %v9813
  %v9818 = vsel %vm4033, %v9807, 0
  %9820 = vmatprep.subr.bf16.mxu0 0
  %9821 = vmatpush1.bf16.msra.mxu0 0
  %9822 = vmatprep.subr.bf16.mxu0 0
  %9823 = vmatpush1.bf16.msra.mxu0 0
  %9824 = vmatprep.subr.bf16.mxu0 0
  %9825 = vmatpush1.bf16.msra.mxu0 0
  %9826 = vmatprep.subr.bf16.mxu0 0
  %9827 = vmatpush1.bf16.msra.mxu0 0
  %9828 = vmatprep.subr.bf16.mxu0 0
  %9829 = vmatpush1.bf16.msra.mxu0 0
  %9830 = vmatprep.subr.bf16.mxu0 0
  %9831 = vmatpush1.bf16.msra.mxu0 0
  %9832 = vmatprep.subr.bf16.mxu0 0
  %9833 = vmatpush1.bf16.msra.mxu0 0
  %9834 = vmatprep.subr.bf16.mxu0 0
  %9835 = vmatpush1.bf16.msra.mxu0 %v9815
  %9836 = vmatprep.subr.bf16.mxu0 0
  %9837 = vmatpush2.bf16.msra.mxu0 0
  %9838 = vmatprep.subr.bf16.mxu0 0
  %9839 = vmatpush2.bf16.msra.mxu0 0
  %9840 = vmatprep.subr.bf16.mxu0 0
  %9841 = vmatpush2.bf16.msra.mxu0 0
  %9842 = vmatprep.subr.bf16.mxu0 0
  %9843 = vmatpush2.bf16.msra.mxu0 0
  %9844 = vmatprep.subr.bf16.mxu0 0
  %9845 = vmatpush2.bf16.msra.mxu0 0
  %9846 = vmatprep.subr.bf16.mxu0 0
  %9847 = vmatpush2.bf16.msra.mxu0 0
  %9848 = vmatprep.subr.bf16.mxu0 0
  %9849 = vmatpush2.bf16.msra.mxu0 0
  %9850 = vmatprep.subr.bf16.mxu0 0
  %9851 = vmatpush2.bf16.msra.mxu0 0
  %9852 = vmatprep.mubr.bf16.mxu0 0
  %9853 = vmatmul.mubr.bf16.gmra.mxu0 %v9818
  %v9854 = vpop.f32.mrf.mxu0
  %v9855 = vadd.f32 0.0, %v9854
  %v9856 = vpop.f32.mrf.mxu0
  %v9857 = vpop.f32.mrf.mxu0
  %v9858 = vpop.f32.mrf.mxu0
  %9859 = vdwg.mxu0
  %v9860 = vadd.f32 %v9761, %v9855
  %s9861 = scalar_lea.vmem %s11, 22
  %v9862 = vld [vmem:[%s9861] sm:$0x3]
  %v9864 = vsel %vm205, %v9862, 0
  %9866 = vmatprep.subr.bf16.mxu0 0
  %9867 = vmatpush1.bf16.msra.mxu0 0
  %9868 = vmatprep.subr.bf16.mxu0 0
  %9869 = vmatpush1.bf16.msra.mxu0 0
  %9870 = vmatprep.subr.bf16.mxu0 0
  %9871 = vmatpush1.bf16.msra.mxu0 0
  %9872 = vmatprep.subr.bf16.mxu0 0
  %9873 = vmatpush1.bf16.msra.mxu0 0
  %9874 = vmatprep.subr.bf16.mxu0 0
  %9875 = vmatpush1.bf16.msra.mxu0 %v8775
  %9876 = vmatprep.subr.bf16.mxu0 0
  %9877 = vmatpush1.bf16.msra.mxu0 %v8774
  %9878 = vmatprep.subr.bf16.mxu0 0
  %9879 = vmatpush1.bf16.msra.mxu0 %v8773
  %9880 = vmatprep.subr.bf16.mxu0 0
  %9881 = vmatpush1.bf16.msra.mxu0 %v8772
  %9882 = vmatprep.subr.bf16.mxu0 0
  %9883 = vmatpush2.bf16.msra.mxu0 0
  %9884 = vmatprep.subr.bf16.mxu0 0
  %9885 = vmatpush2.bf16.msra.mxu0 0
  %9886 = vmatprep.subr.bf16.mxu0 0
  %9887 = vmatpush2.bf16.msra.mxu0 0
  %9888 = vmatprep.subr.bf16.mxu0 0
  %9889 = vmatpush2.bf16.msra.mxu0 0
  %9890 = vmatprep.subr.bf16.mxu0 0
  %9891 = vmatpush2.bf16.msra.mxu0 0
  %9892 = vmatprep.subr.bf16.mxu0 0
  %9893 = vmatpush2.bf16.msra.mxu0 0
  %9894 = vmatprep.subr.bf16.mxu0 0
  %9895 = vmatpush2.bf16.msra.mxu0 0
  %9896 = vmatprep.subr.bf16.mxu0 0
  %9897 = vmatpush2.bf16.msra.mxu0 0
  %9898 = vmatprep.mubr.bf16.mxu0 0
  %9899 = vmatmul.mubr.bf16.gmra.mxu0 %v9864
  %v9900 = vpop.f32.mrf.mxu0
  %v9901 = vadd.f32 0.0, %v9900
  %v9902 = vpop.f32.mrf.mxu0
  %v9903 = vpop.f32.mrf.mxu0
  %v9904 = vpop.f32.mrf.mxu0
  %9905 = vdwg.mxu0
  %v9906 = vpack.c.bf16 %v9901, %v9901
  %s9907 = scalar_lea.vmem %s12, 88
  %v9908 = vld [vmem:[%s9907] sm:$0xf]
  %v9909 = vld [vmem:[%s9907 + $0x4] sm:$0xf]
  %v9912 = vunpack.c.l.b16 %v9908
  %v9913 = vunpack.c.l.b16 %v9909
  %v9914 = vpack.c.b16 %v9913, %v9912
  %v9917 = vsel %vm4033, %v9906, 0
  %9919 = vmatprep.subr.bf16.mxu0 0
  %9920 = vmatpush1.bf16.msra.mxu0 0
  %9921 = vmatprep.subr.bf16.mxu0 0
  %9922 = vmatpush1.bf16.msra.mxu0 0
  %9923 = vmatprep.subr.bf16.mxu0 0
  %9924 = vmatpush1.bf16.msra.mxu0 0
  %9925 = vmatprep.subr.bf16.mxu0 0
  %9926 = vmatpush1.bf16.msra.mxu0 0
  %9927 = vmatprep.subr.bf16.mxu0 0
  %9928 = vmatpush1.bf16.msra.mxu0 0
  %9929 = vmatprep.subr.bf16.mxu0 0
  %9930 = vmatpush1.bf16.msra.mxu0 0
  %9931 = vmatprep.subr.bf16.mxu0 0
  %9932 = vmatpush1.bf16.msra.mxu0 0
  %9933 = vmatprep.subr.bf16.mxu0 0
  %9934 = vmatpush1.bf16.msra.mxu0 %v9914
  %9935 = vmatprep.subr.bf16.mxu0 0
  %9936 = vmatpush2.bf16.msra.mxu0 0
  %9937 = vmatprep.subr.bf16.mxu0 0
  %9938 = vmatpush2.bf16.msra.mxu0 0
  %9939 = vmatprep.subr.bf16.mxu0 0
  %9940 = vmatpush2.bf16.msra.mxu0 0
  %9941 = vmatprep.subr.bf16.mxu0 0
  %9942 = vmatpush2.bf16.msra.mxu0 0
  %9943 = vmatprep.subr.bf16.mxu0 0
  %9944 = vmatpush2.bf16.msra.mxu0 0
  %9945 = vmatprep.subr.bf16.mxu0 0
  %9946 = vmatpush2.bf16.msra.mxu0 0
  %9947 = vmatprep.subr.bf16.mxu0 0
  %9948 = vmatpush2.bf16.msra.mxu0 0
  %9949 = vmatprep.subr.bf16.mxu0 0
  %9950 = vmatpush2.bf16.msra.mxu0 0
  %9951 = vmatprep.mubr.bf16.mxu0 0
  %9952 = vmatmul.mubr.bf16.gmra.mxu0 %v9917
  %v9953 = vpop.f32.mrf.mxu0
  %v9954 = vadd.f32 0.0, %v9953
  %v9955 = vpop.f32.mrf.mxu0
  %v9956 = vpop.f32.mrf.mxu0
  %v9957 = vpop.f32.mrf.mxu0
  %9958 = vdwg.mxu0
  %v9959 = vadd.f32 %v9860, %v9954
  %s9960 = scalar_lea.vmem %s11, 24
  %v9961 = vld [vmem:[%s9960] sm:$0x3]
  %v9963 = vsel %vm205, %v9961, 0
  %9965 = vmatprep.subr.bf16.mxu0 0
  %9966 = vmatpush1.bf16.msra.mxu0 0
  %9967 = vmatprep.subr.bf16.mxu0 0
  %9968 = vmatpush1.bf16.msra.mxu0 0
  %9969 = vmatprep.subr.bf16.mxu0 0
  %9970 = vmatpush1.bf16.msra.mxu0 0
  %9971 = vmatprep.subr.bf16.mxu0 0
  %9972 = vmatpush1.bf16.msra.mxu0 0
  %9973 = vmatprep.subr.bf16.mxu0 0
  %9974 = vmatpush1.bf16.msra.mxu0 %v8775
  %9975 = vmatprep.subr.bf16.mxu0 0
  %9976 = vmatpush1.bf16.msra.mxu0 %v8774
  %9977 = vmatprep.subr.bf16.mxu0 0
  %9978 = vmatpush1.bf16.msra.mxu0 %v8773
  %9979 = vmatprep.subr.bf16.mxu0 0
  %9980 = vmatpush1.bf16.msra.mxu0 %v8772
  %9981 = vmatprep.subr.bf16.mxu0 0
  %9982 = vmatpush2.bf16.msra.mxu0 0
  %9983 = vmatprep.subr.bf16.mxu0 0
  %9984 = vmatpush2.bf16.msra.mxu0 0
  %9985 = vmatprep.subr.bf16.mxu0 0
  %9986 = vmatpush2.bf16.msra.mxu0 0
  %9987 = vmatprep.subr.bf16.mxu0 0
  %9988 = vmatpush2.bf16.msra.mxu0 0
  %9989 = vmatprep.subr.bf16.mxu0 0
  %9990 = vmatpush2.bf16.msra.mxu0 0
  %9991 = vmatprep.subr.bf16.mxu0 0
  %9992 = vmatpush2.bf16.msra.mxu0 0
  %9993 = vmatprep.subr.bf16.mxu0 0
  %9994 = vmatpush2.bf16.msra.mxu0 0
  %9995 = vmatprep.subr.bf16.mxu0 0
  %9996 = vmatpush2.bf16.msra.mxu0 0
  %9997 = vmatprep.mubr.bf16.mxu0 0
  %9998 = vmatmul.mubr.bf16.gmra.mxu0 %v9963
  %v9999 = vpop.f32.mrf.mxu0
  %v10000 = vadd.f32 0.0, %v9999
  %v10001 = vpop.f32.mrf.mxu0
  %v10002 = vpop.f32.mrf.mxu0
  %v10003 = vpop.f32.mrf.mxu0
  %10004 = vdwg.mxu0
  %v10005 = vpack.c.bf16 %v10000, %v10000
  %s10006 = scalar_lea.vmem %s12, 96
  %v10007 = vld [vmem:[%s10006] sm:$0xf]
  %v10008 = vld [vmem:[%s10006 + $0x4] sm:$0xf]
  %v10011 = vunpack.c.l.b16 %v10007
  %v10012 = vunpack.c.l.b16 %v10008
  %v10013 = vpack.c.b16 %v10012, %v10011
  %v10016 = vsel %vm4033, %v10005, 0
  %10018 = vmatprep.subr.bf16.mxu0 0
  %10019 = vmatpush1.bf16.msra.mxu0 0
  %10020 = vmatprep.subr.bf16.mxu0 0
  %10021 = vmatpush1.bf16.msra.mxu0 0
  %10022 = vmatprep.subr.bf16.mxu0 0
  %10023 = vmatpush1.bf16.msra.mxu0 0
  %10024 = vmatprep.subr.bf16.mxu0 0
  %10025 = vmatpush1.bf16.msra.mxu0 0
  %10026 = vmatprep.subr.bf16.mxu0 0
  %10027 = vmatpush1.bf16.msra.mxu0 0
  %10028 = vmatprep.subr.bf16.mxu0 0
  %10029 = vmatpush1.bf16.msra.mxu0 0
  %10030 = vmatprep.subr.bf16.mxu0 0
  %10031 = vmatpush1.bf16.msra.mxu0 0
  %10032 = vmatprep.subr.bf16.mxu0 0
  %10033 = vmatpush1.bf16.msra.mxu0 %v10013
  %10034 = vmatprep.subr.bf16.mxu0 0
  %10035 = vmatpush2.bf16.msra.mxu0 0
  %10036 = vmatprep.subr.bf16.mxu0 0
  %10037 = vmatpush2.bf16.msra.mxu0 0
  %10038 = vmatprep.subr.bf16.mxu0 0
  %10039 = vmatpush2.bf16.msra.mxu0 0
  %10040 = vmatprep.subr.bf16.mxu0 0
  %10041 = vmatpush2.bf16.msra.mxu0 0
  %10042 = vmatprep.subr.bf16.mxu0 0
  %10043 = vmatpush2.bf16.msra.mxu0 0
  %10044 = vmatprep.subr.bf16.mxu0 0
  %10045 = vmatpush2.bf16.msra.mxu0 0
  %10046 = vmatprep.subr.bf16.mxu0 0
  %10047 = vmatpush2.bf16.msra.mxu0 0
  %10048 = vmatprep.subr.bf16.mxu0 0
  %10049 = vmatpush2.bf16.msra.mxu0 0
  %10050 = vmatprep.mubr.bf16.mxu0 0
  %10051 = vmatmul.mubr.bf16.gmra.mxu0 %v10016
  %v10052 = vpop.f32.mrf.mxu0
  %v10053 = vadd.f32 0.0, %v10052
  %v10054 = vpop.f32.mrf.mxu0
  %v10055 = vpop.f32.mrf.mxu0
  %v10056 = vpop.f32.mrf.mxu0
  %10057 = vdwg.mxu0
  %v10058 = vadd.f32 %v9959, %v10053
  %s10059 = scalar_lea.vmem %s11, 26
  %v10060 = vld [vmem:[%s10059] sm:$0x3]
  %v10062 = vsel %vm205, %v10060, 0
  %10064 = vmatprep.subr.bf16.mxu0 0
  %10065 = vmatpush1.bf16.msra.mxu0 0
  %10066 = vmatprep.subr.bf16.mxu0 0
  %10067 = vmatpush1.bf16.msra.mxu0 0
  %10068 = vmatprep.subr.bf16.mxu0 0
  %10069 = vmatpush1.bf16.msra.mxu0 0
  %10070 = vmatprep.subr.bf16.mxu0 0
  %10071 = vmatpush1.bf16.msra.mxu0 0
  %10072 = vmatprep.subr.bf16.mxu0 0
  %10073 = vmatpush1.bf16.msra.mxu0 %v8775
  %10074 = vmatprep.subr.bf16.mxu0 0
  %10075 = vmatpush1.bf16.msra.mxu0 %v8774
  %10076 = vmatprep.subr.bf16.mxu0 0
  %10077 = vmatpush1.bf16.msra.mxu0 %v8773
  %10078 = vmatprep.subr.bf16.mxu0 0
  %10079 = vmatpush1.bf16.msra.mxu0 %v8772
  %10080 = vmatprep.subr.bf16.mxu0 0
  %10081 = vmatpush2.bf16.msra.mxu0 0
  %10082 = vmatprep.subr.bf16.mxu0 0
  %10083 = vmatpush2.bf16.msra.mxu0 0
  %10084 = vmatprep.subr.bf16.mxu0 0
  %10085 = vmatpush2.bf16.msra.mxu0 0
  %10086 = vmatprep.subr.bf16.mxu0 0
  %10087 = vmatpush2.bf16.msra.mxu0 0
  %10088 = vmatprep.subr.bf16.mxu0 0
  %10089 = vmatpush2.bf16.msra.mxu0 0
  %10090 = vmatprep.subr.bf16.mxu0 0
  %10091 = vmatpush2.bf16.msra.mxu0 0
  %10092 = vmatprep.subr.bf16.mxu0 0
  %10093 = vmatpush2.bf16.msra.mxu0 0
  %10094 = vmatprep.subr.bf16.mxu0 0
  %10095 = vmatpush2.bf16.msra.mxu0 0
  %10096 = vmatprep.mubr.bf16.mxu0 0
  %10097 = vmatmul.mubr.bf16.gmra.mxu0 %v10062
  %v10098 = vpop.f32.mrf.mxu0
  %v10099 = vadd.f32 0.0, %v10098
  %v10100 = vpop.f32.mrf.mxu0
  %v10101 = vpop.f32.mrf.mxu0
  %v10102 = vpop.f32.mrf.mxu0
  %10103 = vdwg.mxu0
  %v10104 = vpack.c.bf16 %v10099, %v10099
  %s10105 = scalar_lea.vmem %s12, 104
  %v10106 = vld [vmem:[%s10105] sm:$0xf]
  %v10107 = vld [vmem:[%s10105 + $0x4] sm:$0xf]
  %v10110 = vunpack.c.l.b16 %v10106
  %v10111 = vunpack.c.l.b16 %v10107
  %v10112 = vpack.c.b16 %v10111, %v10110
  %v10115 = vsel %vm4033, %v10104, 0
  %10117 = vmatprep.subr.bf16.mxu0 0
  %10118 = vmatpush1.bf16.msra.mxu0 0
  %10119 = vmatprep.subr.bf16.mxu0 0
  %10120 = vmatpush1.bf16.msra.mxu0 0
  %10121 = vmatprep.subr.bf16.mxu0 0
  %10122 = vmatpush1.bf16.msra.mxu0 0
  %10123 = vmatprep.subr.bf16.mxu0 0
  %10124 = vmatpush1.bf16.msra.mxu0 0
  %10125 = vmatprep.subr.bf16.mxu0 0
  %10126 = vmatpush1.bf16.msra.mxu0 0
  %10127 = vmatprep.subr.bf16.mxu0 0
  %10128 = vmatpush1.bf16.msra.mxu0 0
  %10129 = vmatprep.subr.bf16.mxu0 0
  %10130 = vmatpush1.bf16.msra.mxu0 0
  %10131 = vmatprep.subr.bf16.mxu0 0
  %10132 = vmatpush1.bf16.msra.mxu0 %v10112
  %10133 = vmatprep.subr.bf16.mxu0 0
  %10134 = vmatpush2.bf16.msra.mxu0 0
  %10135 = vmatprep.subr.bf16.mxu0 0
  %10136 = vmatpush2.bf16.msra.mxu0 0
  %10137 = vmatprep.subr.bf16.mxu0 0
  %10138 = vmatpush2.bf16.msra.mxu0 0
  %10139 = vmatprep.subr.bf16.mxu0 0
  %10140 = vmatpush2.bf16.msra.mxu0 0
  %10141 = vmatprep.subr.bf16.mxu0 0
  %10142 = vmatpush2.bf16.msra.mxu0 0
  %10143 = vmatprep.subr.bf16.mxu0 0
  %10144 = vmatpush2.bf16.msra.mxu0 0
  %10145 = vmatprep.subr.bf16.mxu0 0
  %10146 = vmatpush2.bf16.msra.mxu0 0
  %10147 = vmatprep.subr.bf16.mxu0 0
  %10148 = vmatpush2.bf16.msra.mxu0 0
  %10149 = vmatprep.mubr.bf16.mxu0 0
  %10150 = vmatmul.mubr.bf16.gmra.mxu0 %v10115
  %v10151 = vpop.f32.mrf.mxu0
  %v10152 = vadd.f32 0.0, %v10151
  %v10153 = vpop.f32.mrf.mxu0
  %v10154 = vpop.f32.mrf.mxu0
  %v10155 = vpop.f32.mrf.mxu0
  %10156 = vdwg.mxu0
  %v10157 = vadd.f32 %v10058, %v10152
  %s10158 = scalar_lea.vmem %s11, 28
  %v10159 = vld [vmem:[%s10158] sm:$0x3]
  %v10161 = vsel %vm205, %v10159, 0
  %10163 = vmatprep.subr.bf16.mxu0 0
  %10164 = vmatpush1.bf16.msra.mxu0 0
  %10165 = vmatprep.subr.bf16.mxu0 0
  %10166 = vmatpush1.bf16.msra.mxu0 0
  %10167 = vmatprep.subr.bf16.mxu0 0
  %10168 = vmatpush1.bf16.msra.mxu0 0
  %10169 = vmatprep.subr.bf16.mxu0 0
  %10170 = vmatpush1.bf16.msra.mxu0 0
  %10171 = vmatprep.subr.bf16.mxu0 0
  %10172 = vmatpush1.bf16.msra.mxu0 %v8775
  %10173 = vmatprep.subr.bf16.mxu0 0
  %10174 = vmatpush1.bf16.msra.mxu0 %v8774
  %10175 = vmatprep.subr.bf16.mxu0 0
  %10176 = vmatpush1.bf16.msra.mxu0 %v8773
  %10177 = vmatprep.subr.bf16.mxu0 0
  %10178 = vmatpush1.bf16.msra.mxu0 %v8772
  %10179 = vmatprep.subr.bf16.mxu0 0
  %10180 = vmatpush2.bf16.msra.mxu0 0
  %10181 = vmatprep.subr.bf16.mxu0 0
  %10182 = vmatpush2.bf16.msra.mxu0 0
  %10183 = vmatprep.subr.bf16.mxu0 0
  %10184 = vmatpush2.bf16.msra.mxu0 0
  %10185 = vmatprep.subr.bf16.mxu0 0
  %10186 = vmatpush2.bf16.msra.mxu0 0
  %10187 = vmatprep.subr.bf16.mxu0 0
  %10188 = vmatpush2.bf16.msra.mxu0 0
  %10189 = vmatprep.subr.bf16.mxu0 0
  %10190 = vmatpush2.bf16.msra.mxu0 0
  %10191 = vmatprep.subr.bf16.mxu0 0
  %10192 = vmatpush2.bf16.msra.mxu0 0
  %10193 = vmatprep.subr.bf16.mxu0 0
  %10194 = vmatpush2.bf16.msra.mxu0 0
  %10195 = vmatprep.mubr.bf16.mxu0 0
  %10196 = vmatmul.mubr.bf16.gmra.mxu0 %v10161
  %v10197 = vpop.f32.mrf.mxu0
  %v10198 = vadd.f32 0.0, %v10197
  %v10199 = vpop.f32.mrf.mxu0
  %v10200 = vpop.f32.mrf.mxu0
  %v10201 = vpop.f32.mrf.mxu0
  %10202 = vdwg.mxu0
  %v10203 = vpack.c.bf16 %v10198, %v10198
  %s10204 = scalar_lea.vmem %s12, 112
  %v10205 = vld [vmem:[%s10204] sm:$0xf]
  %v10206 = vld [vmem:[%s10204 + $0x4] sm:$0xf]
  %v10209 = vunpack.c.l.b16 %v10205
  %v10210 = vunpack.c.l.b16 %v10206
  %v10211 = vpack.c.b16 %v10210, %v10209
  %v10214 = vsel %vm4033, %v10203, 0
  %10216 = vmatprep.subr.bf16.mxu0 0
  %10217 = vmatpush1.bf16.msra.mxu0 0
  %10218 = vmatprep.subr.bf16.mxu0 0
  %10219 = vmatpush1.bf16.msra.mxu0 0
  %10220 = vmatprep.subr.bf16.mxu0 0
  %10221 = vmatpush1.bf16.msra.mxu0 0
  %10222 = vmatprep.subr.bf16.mxu0 0
  %10223 = vmatpush1.bf16.msra.mxu0 0
  %10224 = vmatprep.subr.bf16.mxu0 0
  %10225 = vmatpush1.bf16.msra.mxu0 0
  %10226 = vmatprep.subr.bf16.mxu0 0
  %10227 = vmatpush1.bf16.msra.mxu0 0
  %10228 = vmatprep.subr.bf16.mxu0 0
  %10229 = vmatpush1.bf16.msra.mxu0 0
  %10230 = vmatprep.subr.bf16.mxu0 0
  %10231 = vmatpush1.bf16.msra.mxu0 %v10211
  %10232 = vmatprep.subr.bf16.mxu0 0
  %10233 = vmatpush2.bf16.msra.mxu0 0
  %10234 = vmatprep.subr.bf16.mxu0 0
  %10235 = vmatpush2.bf16.msra.mxu0 0
  %10236 = vmatprep.subr.bf16.mxu0 0
  %10237 = vmatpush2.bf16.msra.mxu0 0
  %10238 = vmatprep.subr.bf16.mxu0 0
  %10239 = vmatpush2.bf16.msra.mxu0 0
  %10240 = vmatprep.subr.bf16.mxu0 0
  %10241 = vmatpush2.bf16.msra.mxu0 0
  %10242 = vmatprep.subr.bf16.mxu0 0
  %10243 = vmatpush2.bf16.msra.mxu0 0
  %10244 = vmatprep.subr.bf16.mxu0 0
  %10245 = vmatpush2.bf16.msra.mxu0 0
  %10246 = vmatprep.subr.bf16.mxu0 0
  %10247 = vmatpush2.bf16.msra.mxu0 0
  %10248 = vmatprep.mubr.bf16.mxu0 0
  %10249 = vmatmul.mubr.bf16.gmra.mxu0 %v10214
  %v10250 = vpop.f32.mrf.mxu0
  %v10251 = vadd.f32 0.0, %v10250
  %v10252 = vpop.f32.mrf.mxu0
  %v10253 = vpop.f32.mrf.mxu0
  %v10254 = vpop.f32.mrf.mxu0
  %10255 = vdwg.mxu0
  %v10256 = vadd.f32 %v10157, %v10251
  %s10257 = scalar_lea.vmem %s11, 30
  %v10258 = vld [vmem:[%s10257] sm:$0x3]
  %v10260 = vsel %vm205, %v10258, 0
  %10262 = vmatprep.subr.bf16.mxu0 0
  %10263 = vmatpush1.bf16.msra.mxu0 0
  %10264 = vmatprep.subr.bf16.mxu0 0
  %10265 = vmatpush1.bf16.msra.mxu0 0
  %10266 = vmatprep.subr.bf16.mxu0 0
  %10267 = vmatpush1.bf16.msra.mxu0 0
  %10268 = vmatprep.subr.bf16.mxu0 0
  %10269 = vmatpush1.bf16.msra.mxu0 0
  %10270 = vmatprep.subr.bf16.mxu0 0
  %10271 = vmatpush1.bf16.msra.mxu0 %v8775
  %10272 = vmatprep.subr.bf16.mxu0 0
  %10273 = vmatpush1.bf16.msra.mxu0 %v8774
  %10274 = vmatprep.subr.bf16.mxu0 0
  %10275 = vmatpush1.bf16.msra.mxu0 %v8773
  %10276 = vmatprep.subr.bf16.mxu0 0
  %10277 = vmatpush1.bf16.msra.mxu0 %v8772
  %10278 = vmatprep.subr.bf16.mxu0 0
  %10279 = vmatpush2.bf16.msra.mxu0 0
  %10280 = vmatprep.subr.bf16.mxu0 0
  %10281 = vmatpush2.bf16.msra.mxu0 0
  %10282 = vmatprep.subr.bf16.mxu0 0
  %10283 = vmatpush2.bf16.msra.mxu0 0
  %10284 = vmatprep.subr.bf16.mxu0 0
  %10285 = vmatpush2.bf16.msra.mxu0 0
  %10286 = vmatprep.subr.bf16.mxu0 0
  %10287 = vmatpush2.bf16.msra.mxu0 0
  %10288 = vmatprep.subr.bf16.mxu0 0
  %10289 = vmatpush2.bf16.msra.mxu0 0
  %10290 = vmatprep.subr.bf16.mxu0 0
  %10291 = vmatpush2.bf16.msra.mxu0 0
  %10292 = vmatprep.subr.bf16.mxu0 0
  %10293 = vmatpush2.bf16.msra.mxu0 0
  %10294 = vmatprep.mubr.bf16.mxu0 0
  %10295 = vmatmul.mubr.bf16.gmra.mxu0 %v10260
  %v10296 = vpop.f32.mrf.mxu0
  %v10297 = vadd.f32 0.0, %v10296
  %v10298 = vpop.f32.mrf.mxu0
  %v10299 = vpop.f32.mrf.mxu0
  %v10300 = vpop.f32.mrf.mxu0
  %10301 = vdwg.mxu0
  %v10302 = vpack.c.bf16 %v10297, %v10297
  %s10303 = scalar_lea.vmem %s12, 120
  %v10304 = vld [vmem:[%s10303] sm:$0xf]
  %v10305 = vld [vmem:[%s10303 + $0x4] sm:$0xf]
  %v10308 = vunpack.c.l.b16 %v10304
  %v10309 = vunpack.c.l.b16 %v10305
  %v10310 = vpack.c.b16 %v10309, %v10308
  %v10313 = vsel %vm4033, %v10302, 0
  %10315 = vmatprep.subr.bf16.mxu0 0
  %10316 = vmatpush1.bf16.msra.mxu0 0
  %10317 = vmatprep.subr.bf16.mxu0 0
  %10318 = vmatpush1.bf16.msra.mxu0 0
  %10319 = vmatprep.subr.bf16.mxu0 0
  %10320 = vmatpush1.bf16.msra.mxu0 0
  %10321 = vmatprep.subr.bf16.mxu0 0
  %10322 = vmatpush1.bf16.msra.mxu0 0
  %10323 = vmatprep.subr.bf16.mxu0 0
  %10324 = vmatpush1.bf16.msra.mxu0 0
  %10325 = vmatprep.subr.bf16.mxu0 0
  %10326 = vmatpush1.bf16.msra.mxu0 0
  %10327 = vmatprep.subr.bf16.mxu0 0
  %10328 = vmatpush1.bf16.msra.mxu0 0
  %10329 = vmatprep.subr.bf16.mxu0 0
  %10330 = vmatpush1.bf16.msra.mxu0 %v10310
  %10331 = vmatprep.subr.bf16.mxu0 0
  %10332 = vmatpush2.bf16.msra.mxu0 0
  %10333 = vmatprep.subr.bf16.mxu0 0
  %10334 = vmatpush2.bf16.msra.mxu0 0
  %10335 = vmatprep.subr.bf16.mxu0 0
  %10336 = vmatpush2.bf16.msra.mxu0 0
  %10337 = vmatprep.subr.bf16.mxu0 0
  %10338 = vmatpush2.bf16.msra.mxu0 0
  %10339 = vmatprep.subr.bf16.mxu0 0
  %10340 = vmatpush2.bf16.msra.mxu0 0
  %10341 = vmatprep.subr.bf16.mxu0 0
  %10342 = vmatpush2.bf16.msra.mxu0 0
  %10343 = vmatprep.subr.bf16.mxu0 0
  %10344 = vmatpush2.bf16.msra.mxu0 0
  %10345 = vmatprep.subr.bf16.mxu0 0
  %10346 = vmatpush2.bf16.msra.mxu0 0
  %10347 = vmatprep.mubr.bf16.mxu0 0
  %10348 = vmatmul.mubr.bf16.gmra.mxu0 %v10313
  %v10349 = vpop.f32.mrf.mxu0
  %v10350 = vadd.f32 0.0, %v10349
  %v10351 = vpop.f32.mrf.mxu0
  %v10352 = vpop.f32.mrf.mxu0
  %v10353 = vpop.f32.mrf.mxu0
  %10354 = vdwg.mxu0
  %v10355 = vadd.f32 %v10256, %v10350
  %v10356 = vld [vmem:[%s13] sm:$0x1]
  %v10358 = vlaneseq
  %v10359 = vshrl.u32 %v10358, 7
  %v10360 = vsub.s32 0, %v10359
  %v10361 = vrot.slane %v10356, %v10360
  %v10363 = vadd.f32 %v10355, %v10361
  %v10364 = vmax.f32 %v10363, 0.0
  %v10365 = vpack.c.bf16 %v10364, %v10364
  %v10366 = vld [vmem:[%s14] sm:$0xf]
  %v10367 = vld [vmem:[%s14 + $0x4] sm:$0xf]
  %v10368 = vld [vmem:[%s14 + $0x8] sm:$0xf]
  %v10369 = vld [vmem:[%s14 + $0xc] sm:$0xf]
  %v10370 = vld [vmem:[%s14 + $0x10] sm:$0xf]
  %v10371 = vld [vmem:[%s14 + $0x14] sm:$0xf]
  %v10372 = vld [vmem:[%s14 + $0x18] sm:$0xf]
  %v10373 = vld [vmem:[%s14 + $0x1c] sm:$0xf]
  %v10374 = vld [vmem:[%s14 + $0x20] sm:$0xf]
  %v10375 = vld [vmem:[%s14 + $0x24] sm:$0xf]
  %v10376 = vld [vmem:[%s14 + $0x28] sm:$0xf]
  %v10377 = vld [vmem:[%s14 + $0x2c] sm:$0xf]
  %v10378 = vld [vmem:[%s14 + $0x30] sm:$0xf]
  %v10379 = vld [vmem:[%s14 + $0x34] sm:$0xf]
  %v10380 = vld [vmem:[%s14 + $0x38] sm:$0xf]
  %v10381 = vld [vmem:[%s14 + $0x3c] sm:$0xf]
  %v10382 = vld [vmem:[%s15] sm:$0x1]
  %v10384 = vlaneseq
  %v10385 = vshrl.u32 %v10384, 7
  %v10386 = vsub.s32 0, %v10385
  %v10387 = vrot.slane %v10382, %v10386
  %v10405 = vunpack.c.l.b16 %v10366
  %v10406 = vunpack.c.l.b16 %v10367
  %v10407 = vunpack.c.l.b16 %v10368
  %v10408 = vunpack.c.l.b16 %v10369
  %v10409 = vunpack.c.l.b16 %v10370
  %v10410 = vunpack.c.l.b16 %v10371
  %v10411 = vunpack.c.l.b16 %v10372
  %v10412 = vunpack.c.l.b16 %v10373
  %v10413 = vunpack.c.l.b16 %v10374
  %v10414 = vunpack.c.l.b16 %v10375
  %v10415 = vunpack.c.l.b16 %v10376
  %v10416 = vunpack.c.l.b16 %v10377
  %v10417 = vunpack.c.l.b16 %v10378
  %v10418 = vunpack.c.l.b16 %v10379
  %v10419 = vunpack.c.l.b16 %v10380
  %v10420 = vunpack.c.l.b16 %v10381
  %v10421 = vpack.c.b16 %v10406, %v10405
  %v10422 = vpack.c.b16 %v10408, %v10407
  %v10423 = vpack.c.b16 %v10410, %v10409
  %v10424 = vpack.c.b16 %v10412, %v10411
  %v10425 = vpack.c.b16 %v10414, %v10413
  %v10426 = vpack.c.b16 %v10416, %v10415
  %v10427 = vpack.c.b16 %v10418, %v10417
  %v10428 = vpack.c.b16 %v10420, %v10419
  %10437 = vmatprep.subr.bf16.mxu0 0
  %10438 = vmatpush1.bf16.msra.mxu0 %v10428
  %10439 = vmatprep.subr.bf16.mxu0 0
  %10440 = vmatpush1.bf16.msra.mxu0 %v10427
  %10441 = vmatprep.subr.bf16.mxu0 0
  %10442 = vmatpush1.bf16.msra.mxu0 %v10426
  %10443 = vmatprep.subr.bf16.mxu0 0
  %10444 = vmatpush1.bf16.msra.mxu0 %v10425
  %10445 = vmatprep.subr.bf16.mxu0 0
  %10446 = vmatpush1.bf16.msra.mxu0 %v10424
  %10447 = vmatprep.subr.bf16.mxu0 0
  %10448 = vmatpush1.bf16.msra.mxu0 %v10423
  %10449 = vmatprep.subr.bf16.mxu0 0
  %10450 = vmatpush1.bf16.msra.mxu0 %v10422
  %10451 = vmatprep.subr.bf16.mxu0 0
  %10452 = vmatpush1.bf16.msra.mxu0 %v10421
  %10453 = vmatprep.subr.bf16.mxu0 0
  %10454 = vmatpush2.bf16.msra.mxu0 0
  %10455 = vmatprep.subr.bf16.mxu0 0
  %10456 = vmatpush2.bf16.msra.mxu0 0
  %10457 = vmatprep.subr.bf16.mxu0 0
  %10458 = vmatpush2.bf16.msra.mxu0 0
  %10459 = vmatprep.subr.bf16.mxu0 0
  %10460 = vmatpush2.bf16.msra.mxu0 0
  %10461 = vmatprep.subr.bf16.mxu0 0
  %10462 = vmatpush2.bf16.msra.mxu0 0
  %10463 = vmatprep.subr.bf16.mxu0 0
  %10464 = vmatpush2.bf16.msra.mxu0 0
  %10465 = vmatprep.subr.bf16.mxu0 0
  %10466 = vmatpush2.bf16.msra.mxu0 0
  %10467 = vmatprep.subr.bf16.mxu0 0
  %10468 = vmatpush2.bf16.msra.mxu0 0
  %10469 = vmatprep.mubr.bf16.mxu0 0
  %10470 = vmatmul.mubr.bf16.gmra.mxu0 %v10365
  %v10471 = vpop.f32.mrf.mxu0
  %v10472 = vadd.f32 %v10387, %v10471
  %v10473 = vpop.f32.mrf.mxu0
  %v10474 = vpop.f32.mrf.mxu0
  %v10475 = vpop.f32.mrf.mxu0
  %10476 = vdwg.mxu0
  %v10477 = vmax.f32 %v10472, 0.0
  %10478 = vst [vmem:[%s16] sm:$0xf] %v10477
  // Predicated region
  $region66: #{fwd.1} parent=0 // pred_check
    _
  $region67: #{fwd.1} parent=0 // pred_check_branch
    %10480 = sbr.rel (0) target = $region69
  $region68: #{fwd.1} parent=0 // pred_region
    _
  $region69: #{fwd.1} parent=0 // pred_fallthru
    _
  // Predicated region
  $region70: #{fwd.1} parent=0 // pred_check
    _
  $region71: #{fwd.1} parent=0 // pred_check_branch
    %10482 = sbr.rel (0) target = $region73
  $region72: #{fwd.1} parent=0 // pred_region
    _
  $region73: #{fwd.1} parent=0 // pred_fallthru
    _

</llo_original>
